<compile_context>
chip_gen: v6e
topology: v6e:2x2x1
jax: 0.10.0
libtpu: 0.0.40
codegen_flags: <defaults>
</compile_context>

<pallas_src>
import functools

import numpy as np
import jax
import jax.numpy as jnp
from jax import lax
from jax.experimental import pallas as pl
from jax.experimental.pallas import tpu as pltpu


LANE = 128                    # Cout padded to a multiple of this -> lane-dense stores
ACC_BYTES_TARGET = 64 * 1024  # f32 accumulator budget per grid step (fits the vreg file)

_VMEM_LIMIT = None            # resolved lazily (needs an initialized TPU backend)


def _round_up(x, m):
    return ((x + m - 1) // m) * m


def _get_vmem_limit():
    """Scoped-VMEM limit: ~3/4 of physical, capped at 96 MiB (v5e/v6e); safe on v7x."""
    global _VMEM_LIMIT
    if _VMEM_LIMIT is None:
        try:
            cap = pltpu.get_tpu_info().vmem_capacity_bytes
            _VMEM_LIMIT = int(min(cap * 3 // 4, 96 * 1024 * 1024))
        except Exception:                       # hardware query unavailable -> safe default
            _VMEM_LIMIT = 64 * 1024 * 1024
    return _VMEM_LIMIT


def _pick_rows(rows, wcols, cblk):
    """Rows per grid step so the f32 accumulator stays ~ACC_BYTES_TARGET (no vreg spills)."""
    budget = max(1, ACC_BYTES_TARGET // (4 * cblk * max(wcols, 1)))
    th = max(1, min(rows, budget))
    return th, _round_up(rows, th)


# ----------------------------- Pallas kernels --------------------------------

def _accum_taps(acc, x_ref, w_ref, *, ksize, stride, off, r0, th, wcols, cin):
    """Accumulate a KxK stride-`stride` conv into acc ((th*wcols, cblk) f32).

    x_ref is a stride-phase-folded padded input block (1, Hc, stride, Wc, stride*cin).
    Output position (r0+i, j), tap (kh, kw) reads padded row (r0+i)*stride + kh + off
    and padded col j*stride + kw + off.  Taps that share a folded column cell
    (same (kw+off)//stride) are fused into ONE wider matmul (K = n_fused*cin), which
    fills more of the MXU K dimension and keeps the channel slice lane-0 aligned.
    """
    s = stride
    m = th * wcols
    wrow = 0
    for kh in range(ksize):
        dh = (kh + off) // s
        hp = (kh + off) % s
        kw = 0
        while kw < ksize:
            dw = (kw + off) // s
            wp = (kw + off) % s
            nf = 1
            while kw + nf < ksize and (kw + nf + off) // s == dw:
                nf += 1
            slab = x_ref[0,
                         pl.ds(r0 + dh, th),           # folded row cells
                         hp,                           # row phase
                         pl.ds(dw, wcols),             # folded col cells
                         pl.ds(wp * cin, nf * cin)]    # fused col-phase channel slots
            w_k = w_ref[pl.ds(wrow, nf * cin), :]
            acc = acc + jnp.dot(slab.reshape(m, nf * cin), w_k,
                                preferred_element_type=jnp.float32)
            wrow += nf * cin
            kw += nf
    return acc


def _conv1_kernel(x_ref, w_ref, b_ref, o_ref, *, stride, th, wcols, cin, ho, wo):
    """conv1 (3x3, stride) + folded BN + ReLU, written into a zero-bordered NHWC slab."""
    cblk = o_ref.shape[-1]
    r0 = pl.multiple_of(pl.program_id(2) * th, th)       # bordered output-row origin
    acc = jnp.zeros((th * wcols, cblk), jnp.float32)
    acc = _accum_taps(acc, x_ref, w_ref, ksize=3, stride=stride, off=0,
                      r0=r0, th=th, wcols=wcols, cin=cin)
    acc = jnp.maximum(acc + b_ref[...], 0.0)
    acc = acc.reshape(th, wcols, cblk)
    # Zero the 1-px border and any padded rows so this slab is directly usable as
    # conv2's zero-padded input (no XLA-side pad / slice pass between the kernels).
    row = r0 + lax.broadcasted_iota(jnp.int32, (th, wcols, 1), 0)
    col = lax.broadcasted_iota(jnp.int32, (th, wcols, 1), 1)
    valid = (row >= 1) & (row <= ho) & (col >= 1) & (col <= wo)
    o_ref[0] = jnp.where(valid, acc, 0.0).astype(o_ref.dtype)


def _conv2_kernel(r1_ref, x_ref, w2_ref, wsc_ref, b_ref, o_ref, *,
                  stride, off_sc, th, wo, cin, cp):
    """conv2 (3x3, s=1) + folded BN + fused shortcut (1x1 strided conv / identity) + ReLU."""
    cblk = o_ref.shape[-1]
    r0 = pl.multiple_of(pl.program_id(2) * th, th)
    acc = jnp.zeros((th * wo, cblk), jnp.float32)
    # main conv over the zero-bordered conv1 output (all cp input channels)
    acc = _accum_taps(acc, r1_ref, w2_ref, ksize=3, stride=1, off=0,
                      r0=r0, th=th, wcols=wo, cin=cp)
    # fused shortcut: 1x1 stride-s conv (or identity via an eye weight) over padded x
    acc = _accum_taps(acc, x_ref, wsc_ref, ksize=1, stride=stride, off=off_sc,
                      r0=r0, th=th, wcols=wo, cin=cin)
    acc = jnp.maximum(acc + b_ref[...], 0.0)              # b = bn2 shift + shortcut shift
    o_ref[0] = acc.reshape(th, wo, cblk).astype(o_ref.dtype)


# --------------------------- pallas_call wrappers -----------------------------

def _conv1_call(xv, w1, b1, *, stride, cin, cp, cblk, th, hot, wot, ho, wo):
    n, hc, s_, wc, sc = xv.shape
    grid = (n, cp // cblk, hot // th)
    kern = functools.partial(_conv1_kernel, stride=stride, th=th, wcols=wot,
                             cin=cin, ho=ho, wo=wo)
    out_bytes = n * hot * wot * cp * 2
    cost = pl.CostEstimate(
        flops=2 * n * hot * wot * 9 * cin * cp,
        transcendentals=0,
        bytes_accessed=int(xv.size * 2 + n * (w1.size * 2 + b1.size * 4) + out_bytes))
    return pl.pallas_call(
        kern,
        out_shape=jax.ShapeDtypeStruct((n, hot, wot, cp), jnp.bfloat16),
        grid_spec=pltpu.PrefetchScalarGridSpec(
            num_scalar_prefetch=0,
            grid=grid,
            in_specs=[
                # whole padded+folded image per batch element (constant index over c, r
                # -> DMA'd once per image; raw activation bytes only, never im2col)
                pl.BlockSpec((1, hc, s_, wc, sc), lambda bi, ci, ri: (bi, 0, 0, 0, 0)),
                pl.BlockSpec((9 * cin, cblk), lambda bi, ci, ri: (0, ci)),
                pl.BlockSpec((1, cblk), lambda bi, ci, ri: (0, ci)),
            ],
            out_specs=pl.BlockSpec((1, th, wot, cblk),
                                   lambda bi, ci, ri: (bi, ri, 0, ci)),
        ),
        compiler_params=pltpu.CompilerParams(
            # only batch is "parallel": sharding r/c across v7x's 2 TCs would make
            # both cores re-DMA the identical whole-image block.
            dimension_semantics=("parallel", "arbitrary", "arbitrary"),
            vmem_limit_bytes=_get_vmem_limit()),
        cost_estimate=cost,
    )(xv, w1, b1)


def _conv2_call(r1p, xv, w2, wsc, b2, *, stride, off_sc, cin, cp, cblk, th, ho2, ho, wo):
    n, hot, wot, _ = r1p.shape
    r1v = r1p.reshape(n, hot, 1, wot, cp)            # trivial s=1 "fold" (free view)
    _, hc, s_, wc, sc = xv.shape
    grid = (n, cp // cblk, ho2 // th)
    kern = functools.partial(_conv2_kernel, stride=stride, off_sc=off_sc, th=th,
                             wo=wo, cin=cin, cp=cp)
    out_bytes = n * ho2 * wo * cp * 2
    cost = pl.CostEstimate(
        flops=2 * n * ho2 * wo * (9 * cp + cin) * cp,
        transcendentals=0,
        bytes_accessed=int(r1p.size * 2 + xv.size * 2
                           + n * ((w2.size + wsc.size) * 2 + b2.size * 4) + out_bytes))
    return pl.pallas_call(
        kern,
        out_shape=jax.ShapeDtypeStruct((n, ho2, wo, cp), jnp.bfloat16),
        grid_spec=pltpu.PrefetchScalarGridSpec(
            num_scalar_prefetch=0,
            grid=grid,
            in_specs=[
                pl.BlockSpec((1, hot, 1, wot, cp), lambda bi, ci, ri: (bi, 0, 0, 0, 0)),
                pl.BlockSpec((1, hc, s_, wc, sc), lambda bi, ci, ri: (bi, 0, 0, 0, 0)),
                pl.BlockSpec((9 * cp, cblk), lambda bi, ci, ri: (0, ci)),
                pl.BlockSpec((cin, cblk), lambda bi, ci, ri: (0, ci)),
                pl.BlockSpec((1, cblk), lambda bi, ci, ri: (0, ci)),
            ],
            out_specs=pl.BlockSpec((1, th, wo, cblk),
                                   lambda bi, ci, ri: (bi, ri, 0, ci)),
        ),
        compiler_params=pltpu.CompilerParams(
            dimension_semantics=("parallel", "arbitrary", "arbitrary"),
            vmem_limit_bytes=_get_vmem_limit()),
        cost_estimate=cost,
    )(r1v, xv, w2, wsc, b2)


# ------------------------------- JAX glue ------------------------------------

def bn_fold(gamma, beta, mean, var, eps=1e-5):
    scale = gamma / jnp.sqrt(var + eps)
    return scale, beta - mean * scale


def prep_weight(w, scale, cout_pad, cin_pad=None):
    """(Cout,Cin,kh,kw) + BN scale -> (kh*kw*Cin_pad, Cout_pad) bf16 matmul weights."""
    cout, cin, kh, kw = w.shape
    cin_pad = cin if cin_pad is None else cin_pad
    wm = jnp.transpose(w, (2, 3, 1, 0)) * scale[None, None, None, :]   # fold BN scale
    wm = jnp.pad(wm, ((0, 0), (0, 0), (0, cin_pad - cin), (0, cout_pad - cout)))
    return wm.reshape(kh * kw * cin_pad, cout_pad).astype(jnp.bfloat16)


def prep_bias(b, cout_pad):
    return jnp.pad(b, (0, cout_pad - b.shape[0])).reshape(1, cout_pad).astype(jnp.float32)


def prepare_block_params(params, *, stride, eps=1e-5):
    """Fold BatchNorm into conv weights/biases ONCE (model-load time, not per forward)."""
    cout, cin = params["conv1"].shape[:2]
    cp = _round_up(cout, LANE)
    s1, b1 = bn_fold(*params["bn1"], eps)
    s2, b2 = bn_fold(*params["bn2"], eps)
    if params.get("down_conv") is not None:
        sd, bd = bn_fold(*params["down_bn"], eps)
        wsc = prep_weight(params["down_conv"], sd, cp)
    else:
        assert cin == cout and stride == 1, "identity shortcut needs Cin==Cout, stride==1"
        wsc = jnp.pad(jnp.eye(cin, dtype=jnp.float32),
                      ((0, 0), (0, cp - cin))).astype(jnp.bfloat16)
        bd = jnp.zeros((cout,), jnp.float32)
    return {
        "w1": prep_weight(params["conv1"], s1, cp),
        "b1": prep_bias(b1, cp),
        "w2": prep_weight(params["conv2"], s2, cp, cin_pad=cp),
        "wsc": wsc,
        "b2": prep_bias(b2 + bd, cp),          # bn2 shift + shortcut-BN shift, pre-summed
    }


def basic_block_forward(x_nchw, prep, *, stride, cout):
    """BasicBlock forward: NCHW f32 in -> NCHW f32 out (eval-mode BatchNorm)."""
    w1, b1, w2, wsc, b2 = prep["w1"], prep["b1"], prep["w2"], prep["wsc"], prep["b2"]
    cp = w1.shape[1]
    k, p, s = 3, 1, stride

    x = jnp.transpose(x_nchw, (0, 2, 3, 1)).astype(jnp.bfloat16)       # NCHW -> NHWC bf16
    n, h, w, cin = x.shape
    ho = (h + 2 * p - k) // s + 1
    wo = (w + 2 * p - k) // s + 1

    cblk = 256 if cp % 256 == 0 else 128                               # cout block (MXU N)
    th2, ho2 = _pick_rows(ho, wo, cblk)                                # conv2 row tile
    wot = wo + 2                                                       # conv1 out + border
    th1, hot = _pick_rows(ho2 + 2, wot, cblk)                          # conv1 row tile

    # Pad x ONCE (shared by conv1 and the fused shortcut), then stride-phase fold (a view).
    P = p + s
    h_need = max((hot - 1) * s + k, (ho2 - 1) * s + P + 1, h + P)
    w_need = max((wot - 1) * s + k, (wo - 1) * s + P + 1, w + P)
    h_need += (-h_need) % s
    w_need += (-w_need) % s
    xp = jnp.pad(x, ((0, 0), (P, h_need - h - P), (P, w_need - w - P), (0, 0)))
    xv = xp.reshape(n, h_need // s, s, w_need // s, s * cin)

    # conv1 + bn1 + relu -> zero-bordered slab (directly conv2's padded input)
    r1p = _conv1_call(xv, w1, b1, stride=s, cin=cin, cp=cp, cblk=cblk,
                      th=th1, hot=hot, wot=wot, ho=ho, wo=wo)
    # conv2 + bn2 + fused shortcut (downsample conv+bn or identity) + relu
    out = _conv2_call(r1p, xv, w2, wsc, b2, stride=s, off_sc=P, cin=cin, cp=cp,
                      cblk=cblk, th=th2, ho2=ho2, ho=ho, wo=wo)

    out = out[:, :ho, :, :cout]                                        # drop pad rows/chans
    return jnp.transpose(out, (0, 3, 1, 2)).astype(jnp.float32)        # NHWC -> NCHW


# --------------------------- pure-JAX reference -------------------------------

def ref_forward(x, params, stride, eps=1e-5):
    def conv(xx, w, s):
        pad = [(1, 1), (1, 1)] if w.shape[-1] == 3 else [(0, 0), (0, 0)]
        return lax.conv_general_dilated(
            xx, w, (s, s), pad, dimension_numbers=("NCHW", "OIHW", "NCHW"),
            precision=jax.lax.Precision.HIGHEST)

    def bn(xx, p):
        g, b, m, v = p
        return (g[None, :, None, None] * (xx - m[None, :, None, None])
                / jnp.sqrt(v[None, :, None, None] + eps) + b[None, :, None, None])

    r = jax.nn.relu(bn(conv(x, params["conv1"], stride), params["bn1"]))
    r = bn(conv(r, params["conv2"], 1), params["bn2"])
    sc = x
    if params.get("down_conv") is not None:
        sc = bn(conv(x, params["down_conv"], stride), params["down_bn"])
    return jax.nn.relu(sc + r)


# ----------------------------------- main -------------------------------------

if __name__ == "__main__":
    key = jax.random.PRNGKey(0)

    def bn_params(k, c):
        k1, k2, k3, k4 = jax.random.split(k, 4)
        gamma = 1.0 + 0.1 * jax.random.normal(k1, (c,), jnp.float32)
        beta = 0.1 * jax.random.normal(k2, (c,), jnp.float32)
        mean = 0.1 * jax.random.normal(k3, (c,), jnp.float32)
        var = jnp.abs(1.0 + 0.1 * jax.random.normal(k4, (c,), jnp.float32))
        return (gamma, beta, mean, var)

    def make_params(k, cin, cout, with_down):
        ks = jax.random.split(k, 6)
        prm = {
            "conv1": 0.1 * jax.random.normal(ks[0], (cout, cin, 3, 3), jnp.float32),
            "bn1": bn_params(ks[1], cout),
            "conv2": 0.1 * jax.random.normal(ks[2], (cout, cout, 3, 3), jnp.float32),
            "bn2": bn_params(ks[3], cout),
            "down_conv": None,
            "down_bn": None,
        }
        if with_down:
            prm["down_conv"] = 0.1 * jax.random.normal(ks[4], (cout, cin, 1, 1), jnp.float32)
            prm["down_bn"] = bn_params(ks[5], cout)
        return prm

    cases = [
        dict(name="stride2_downsample", cin=4, cout=8, stride=2, with_down=True),
        dict(name="stride1_identity", cin=8, cout=8, stride=1, with_down=False),
    ]

    for i, case in enumerate(cases):
        kp = jax.random.fold_in(key, 2 * i)
        kx = jax.random.fold_in(key, 2 * i + 1)
        params = make_params(kp, case["cin"], case["cout"], case["with_down"])
        x = jax.random.normal(kx, (2, case["cin"], 16, 16), jnp.float32)

        prep = prepare_block_params(params, stride=case["stride"])     # model-load time
        fwd = jax.jit(functools.partial(basic_block_forward,
                                        stride=case["stride"], cout=case["cout"]))
        out = jax.block_until_ready(fwd(x, prep))
        ref = jax.block_until_ready(ref_forward(x, params, case["stride"]))
        # bf16-in / f32-accumulate MXU path vs. f32 HIGHEST reference -> loosened tolerance.
        np.testing.assert_allclose(np.asarray(out), np.asarray(ref), rtol=5e-2, atol=5e-2)

    print("KERNEL_OK")
</pallas_src>

<mosaic_0001>
module attributes {stable_mosaic.version = 11 : i64} {
  func.func @_conv1_kernel(%arg0: i32, %arg1: i32, %arg2: i32, %arg3: memref<1x11x2x11x8xbf16, #tpu.memory_space<vmem>>, %arg4: memref<36x128xbf16, #tpu.memory_space<vmem>>, %arg5: memref<1x128xf32, #tpu.memory_space<vmem>>, %arg6: memref<1x10x10x128xbf16, #tpu.memory_space<vmem>>) attributes {dimension_semantics = [#tpu.dimension_semantics<parallel>, #tpu.dimension_semantics<arbitrary>, #tpu.dimension_semantics<arbitrary>], iteration_bounds = array<i64: 2, 1, 1>, scalar_prefetch = 0 : i64, scratch_operands = 0 : i64, tpu.core_type = #tpu.core_type<tc>, window_params = [{transform_indices = @transform_0, window_bounds = array<i64: 1, 11, 2, 11, 8>}, {transform_indices = @transform_1, window_bounds = array<i64: 36, 128>}, {transform_indices = @transform_2, window_bounds = array<i64: 1, 128>}, {transform_indices = @transform_3, window_bounds = array<i64: 1, 10, 10, 128>}]} {
    %c10_i32 = arith.constant 10 : i32
    %0 = arith.muli %arg2, %c10_i32 : i32
    %1 = tpu.assume_multiple %0, 10 : i32
    %cst = arith.constant 0.000000e+00 : f32
    %2 = vector.broadcast %cst : f32 to vector<100x128xf32>
    %c0_i32 = arith.constant 0 : i32
    %3 = arith.addi %1, %c0_i32 : i32
    %c0 = arith.constant 0 : index
    %4 = arith.index_cast %3 : i32 to index
    %c0_0 = arith.constant 0 : index
    %c0_1 = arith.constant 0 : index
    %c0_2 = arith.constant 0 : index
    %5 = vector.load %arg3[%c0, %4, %c0_0, %c0_1, %c0_2] : memref<1x11x2x11x8xbf16, #tpu.memory_space<vmem>>, vector<1x10x1x10x8xbf16>
    %6 = vector.shape_cast %5 : vector<1x10x1x10x8xbf16> to vector<10x10x8xbf16>
    %c0_3 = arith.constant 0 : index
    %c0_4 = arith.constant 0 : index
    %7 = vector.load %arg4[%c0_3, %c0_4] : memref<36x128xbf16, #tpu.memory_space<vmem>>, vector<8x128xbf16>
    %8 = vector.shape_cast %6 : vector<10x10x8xbf16> to vector<100x8xbf16>
    %cst_5 = arith.constant dense<0.000000e+00> : vector<100x128xf32>
    %9 = tpu.matmul %8, %7, %cst_5 {dimension_numbers = #tpu.dot_dimension_numbers<[1], [0], [0], [1], [0, 0, 1, 1], [], []>} : vector<100x8xbf16>, vector<8x128xbf16>, vector<100x128xf32> -> vector<100x128xf32>
    %10 = arith.addf %2, %9 : vector<100x128xf32>
    %c0_i32_6 = arith.constant 0 : i32
    %11 = arith.addi %1, %c0_i32_6 : i32
    %c0_7 = arith.constant 0 : index
    %12 = arith.index_cast %11 : i32 to index
    %c0_8 = arith.constant 0 : index
    %c1 = arith.constant 1 : index
    %c0_9 = arith.constant 0 : index
    %13 = vector.load %arg3[%c0_7, %12, %c0_8, %c1, %c0_9] : memref<1x11x2x11x8xbf16, #tpu.memory_space<vmem>>, vector<1x10x1x10x4xbf16>
    %14 = vector.shape_cast %13 : vector<1x10x1x10x4xbf16> to vector<10x10x4xbf16>
    %c8 = arith.constant 8 : index
    %c0_10 = arith.constant 0 : index
    %15 = vector.load %arg4[%c8, %c0_10] : memref<36x128xbf16, #tpu.memory_space<vmem>>, vector<4x128xbf16>
    %16 = vector.shape_cast %14 : vector<10x10x4xbf16> to vector<100x4xbf16>
    %cst_11 = arith.constant dense<0.000000e+00> : vector<100x128xf32>
    %17 = tpu.matmul %16, %15, %cst_11 {dimension_numbers = #tpu.dot_dimension_numbers<[1], [0], [0], [1], [0, 0, 1, 1], [], []>} : vector<100x4xbf16>, vector<4x128xbf16>, vector<100x128xf32> -> vector<100x128xf32>
    %18 = arith.addf %10, %17 : vector<100x128xf32>
    %c0_i32_12 = arith.constant 0 : i32
    %19 = arith.addi %1, %c0_i32_12 : i32
    %c0_13 = arith.constant 0 : index
    %20 = arith.index_cast %19 : i32 to index
    %c1_14 = arith.constant 1 : index
    %c0_15 = arith.constant 0 : index
    %c0_16 = arith.constant 0 : index
    %21 = vector.load %arg3[%c0_13, %20, %c1_14, %c0_15, %c0_16] : memref<1x11x2x11x8xbf16, #tpu.memory_space<vmem>>, vector<1x10x1x10x8xbf16>
    %22 = vector.shape_cast %21 : vector<1x10x1x10x8xbf16> to vector<10x10x8xbf16>
    %c12 = arith.constant 12 : index
    %c0_17 = arith.constant 0 : index
    %23 = vector.load %arg4[%c12, %c0_17] : memref<36x128xbf16, #tpu.memory_space<vmem>>, vector<8x128xbf16>
    %24 = vector.shape_cast %22 : vector<10x10x8xbf16> to vector<100x8xbf16>
    %cst_18 = arith.constant dense<0.000000e+00> : vector<100x128xf32>
    %25 = tpu.matmul %24, %23, %cst_18 {dimension_numbers = #tpu.dot_dimension_numbers<[1], [0], [0], [1], [0, 0, 1, 1], [], []>} : vector<100x8xbf16>, vector<8x128xbf16>, vector<100x128xf32> -> vector<100x128xf32>
    %26 = arith.addf %18, %25 : vector<100x128xf32>
    %c0_i32_19 = arith.constant 0 : i32
    %27 = arith.addi %1, %c0_i32_19 : i32
    %c0_20 = arith.constant 0 : index
    %28 = arith.index_cast %27 : i32 to index
    %c1_21 = arith.constant 1 : index
    %c1_22 = arith.constant 1 : index
    %c0_23 = arith.constant 0 : index
    %29 = vector.load %arg3[%c0_20, %28, %c1_21, %c1_22, %c0_23] : memref<1x11x2x11x8xbf16, #tpu.memory_space<vmem>>, vector<1x10x1x10x4xbf16>
    %30 = vector.shape_cast %29 : vector<1x10x1x10x4xbf16> to vector<10x10x4xbf16>
    %c20 = arith.constant 20 : index
    %c0_24 = arith.constant 0 : index
    %31 = vector.load %arg4[%c20, %c0_24] : memref<36x128xbf16, #tpu.memory_space<vmem>>, vector<4x128xbf16>
    %32 = vector.shape_cast %30 : vector<10x10x4xbf16> to vector<100x4xbf16>
    %cst_25 = arith.constant dense<0.000000e+00> : vector<100x128xf32>
    %33 = tpu.matmul %32, %31, %cst_25 {dimension_numbers = #tpu.dot_dimension_numbers<[1], [0], [0], [1], [0, 0, 1, 1], [], []>} : vector<100x4xbf16>, vector<4x128xbf16>, vector<100x128xf32> -> vector<100x128xf32>
    %34 = arith.addf %26, %33 : vector<100x128xf32>
    %c1_i32 = arith.constant 1 : i32
    %35 = arith.addi %1, %c1_i32 : i32
    %c0_26 = arith.constant 0 : index
    %36 = arith.index_cast %35 : i32 to index
    %c0_27 = arith.constant 0 : index
    %c0_28 = arith.constant 0 : index
    %c0_29 = arith.constant 0 : index
    %37 = vector.load %arg3[%c0_26, %36, %c0_27, %c0_28, %c0_29] : memref<1x11x2x11x8xbf16, #tpu.memory_space<vmem>>, vector<1x10x1x10x8xbf16>
    %38 = vector.shape_cast %37 : vector<1x10x1x10x8xbf16> to vector<10x10x8xbf16>
    %c24 = arith.constant 24 : index
    %c0_30 = arith.constant 0 : index
    %39 = vector.load %arg4[%c24, %c0_30] : memref<36x128xbf16, #tpu.memory_space<vmem>>, vector<8x128xbf16>
    %40 = vector.shape_cast %38 : vector<10x10x8xbf16> to vector<100x8xbf16>
    %cst_31 = arith.constant dense<0.000000e+00> : vector<100x128xf32>
    %41 = tpu.matmul %40, %39, %cst_31 {dimension_numbers = #tpu.dot_dimension_numbers<[1], [0], [0], [1], [0, 0, 1, 1], [], []>} : vector<100x8xbf16>, vector<8x128xbf16>, vector<100x128xf32> -> vector<100x128xf32>
    %42 = arith.addf %34, %41 : vector<100x128xf32>
    %c1_i32_32 = arith.constant 1 : i32
    %43 = arith.addi %1, %c1_i32_32 : i32
    %c0_33 = arith.constant 0 : index
    %44 = arith.index_cast %43 : i32 to index
    %c0_34 = arith.constant 0 : index
    %c1_35 = arith.constant 1 : index
    %c0_36 = arith.constant 0 : index
    %45 = vector.load %arg3[%c0_33, %44, %c0_34, %c1_35, %c0_36] : memref<1x11x2x11x8xbf16, #tpu.memory_space<vmem>>, vector<1x10x1x10x4xbf16>
    %46 = vector.shape_cast %45 : vector<1x10x1x10x4xbf16> to vector<10x10x4xbf16>
    %c32 = arith.constant 32 : index
    %c0_37 = arith.constant 0 : index
    %47 = vector.load %arg4[%c32, %c0_37] : memref<36x128xbf16, #tpu.memory_space<vmem>>, vector<4x128xbf16>
    %48 = vector.shape_cast %46 : vector<10x10x4xbf16> to vector<100x4xbf16>
    %cst_38 = arith.constant dense<0.000000e+00> : vector<100x128xf32>
    %49 = tpu.matmul %48, %47, %cst_38 {dimension_numbers = #tpu.dot_dimension_numbers<[1], [0], [0], [1], [0, 0, 1, 1], [], []>} : vector<100x4xbf16>, vector<4x128xbf16>, vector<100x128xf32> -> vector<100x128xf32>
    %50 = arith.addf %42, %49 : vector<100x128xf32>
    %c0_39 = arith.constant 0 : index
    %c0_40 = arith.constant 0 : index
    %51 = vector.load %arg5[%c0_39, %c0_40] : memref<1x128xf32, #tpu.memory_space<vmem>>, vector<1x128xf32>
    %52 = vector.broadcast %51 : vector<1x128xf32> to vector<100x128xf32>
    %53 = arith.addf %50, %52 : vector<100x128xf32>
    %cst_41 = arith.constant 0.000000e+00 : f32
    %54 = vector.broadcast %cst_41 : f32 to vector<100x128xf32>
    %55 = arith.maximumf %53, %54 : vector<100x128xf32>
    %56 = vector.shape_cast %55 : vector<100x128xf32> to vector<10x10x128xf32>
    %57 = tpu.iota {dimensions = array<i32: 0>} : vector<10x10x1xi32>
    %58 = vector.broadcast %1 : i32 to vector<10x10x1xi32>
    %59 = arith.addi %58, %57 : vector<10x10x1xi32>
    %60 = tpu.iota {dimensions = array<i32: 1>} : vector<10x10x1xi32>
    %c1_i32_42 = arith.constant 1 : i32
    %61 = vector.broadcast %c1_i32_42 : i32 to vector<10x10x1xi32>
    %62 = arith.cmpi sge, %59, %61 : vector<10x10x1xi32>
    %c8_i32 = arith.constant 8 : i32
    %63 = vector.broadcast %c8_i32 : i32 to vector<10x10x1xi32>
    %64 = arith.cmpi sle, %59, %63 : vector<10x10x1xi32>
    %65 = arith.andi %62, %64 : vector<10x10x1xi1>
    %c1_i32_43 = arith.constant 1 : i32
    %66 = vector.broadcast %c1_i32_43 : i32 to vector<10x10x1xi32>
    %67 = arith.cmpi sge, %60, %66 : vector<10x10x1xi32>
    %68 = arith.andi %65, %67 : vector<10x10x1xi1>
    %c8_i32_44 = arith.constant 8 : i32
    %69 = vector.broadcast %c8_i32_44 : i32 to vector<10x10x1xi32>
    %70 = arith.cmpi sle, %60, %69 : vector<10x10x1xi32>
    %71 = arith.andi %68, %70 : vector<10x10x1xi1>
    %cst_45 = arith.constant 0.000000e+00 : f32
    %72 = vector.shape_cast %71 : vector<10x10x1xi1> to vector<10x10x1xi1>
    %73 = vector.broadcast %72 : vector<10x10x1xi1> to vector<10x10x128xi1>
    %74 = vector.broadcast %cst_45 : f32 to vector<10x10x128xf32>
    %75 = arith.select %73, %56, %74 : vector<10x10x128xi1>, vector<10x10x128xf32>
    %76 = arith.truncf %75 : vector<10x10x128xf32> to vector<10x10x128xbf16>
    %c0_46 = arith.constant 0 : index
    %c0_47 = arith.constant 0 : index
    %c0_48 = arith.constant 0 : index
    %c0_49 = arith.constant 0 : index
    %77 = vector.load %arg6[%c0_46, %c0_47, %c0_48, %c0_49] : memref<1x10x10x128xbf16, #tpu.memory_space<vmem>>, vector<1x10x10x128xbf16>
    %78 = vector.shape_cast %77 : vector<1x10x10x128xbf16> to vector<10x10x128xbf16>
    %79 = vector.shape_cast %76 : vector<10x10x128xbf16> to vector<1x10x10x128xbf16>
    tpu.vector_store %arg6[%c0_46, %c0_47, %c0_48, %c0_49], %79 {strides = array<i32>} : memref<1x10x10x128xbf16, #tpu.memory_space<vmem>>, vector<1x10x10x128xbf16>,
    return
  }
  func.func @transform_0(%arg0: i32, %arg1: i32, %arg2: i32) -> (i32, i32, i32, i32, i32) {
    %c0_i32 = arith.constant 0 : i32
    %c0_i32_0 = arith.constant 0 : i32
    %c0_i32_1 = arith.constant 0 : i32
    %c0_i32_2 = arith.constant 0 : i32
    %c0_i32_3 = arith.constant 0 : i32
    return %arg0, %c0_i32, %c0_i32_0, %c0_i32_1, %c0_i32_2 : i32, i32, i32, i32, i32
  }
  func.func @transform_1(%arg0: i32, %arg1: i32, %arg2: i32) -> (i32, i32) {
    %c0_i32 = arith.constant 0 : i32
    %c0_i32_0 = arith.constant 0 : i32
    return %c0_i32, %arg1 : i32, i32
  }
  func.func @transform_2(%arg0: i32, %arg1: i32, %arg2: i32) -> (i32, i32) {
    %c0_i32 = arith.constant 0 : i32
    %c0_i32_0 = arith.constant 0 : i32
    return %c0_i32, %arg1 : i32, i32
  }
  func.func @transform_3(%arg0: i32, %arg1: i32, %arg2: i32) -> (i32, i32, i32, i32) {
    %c0_i32 = arith.constant 0 : i32
    %c0_i32_0 = arith.constant 0 : i32
    return %arg0, %arg2, %c0_i32, %arg1 : i32, i32, i32, i32
  }
}

module attributes {stable_mosaic.version = 11 : i64} {
  func.func @_conv2_kernel(%arg0: i32, %arg1: i32, %arg2: i32, %arg3: memref<1x10x1x10x128xbf16, #tpu.memory_space<vmem>>, %arg4: memref<1x11x2x11x8xbf16, #tpu.memory_space<vmem>>, %arg5: memref<1152x128xbf16, #tpu.memory_space<vmem>>, %arg6: memref<4x128xbf16, #tpu.memory_space<vmem>>, %arg7: memref<1x128xf32, #tpu.memory_space<vmem>>, %arg8: memref<1x8x8x128xbf16, #tpu.memory_space<vmem>>) attributes {dimension_semantics = [#tpu.dimension_semantics<parallel>, #tpu.dimension_semantics<arbitrary>, #tpu.dimension_semantics<arbitrary>], iteration_bounds = array<i64: 2, 1, 1>, scalar_prefetch = 0 : i64, scratch_operands = 0 : i64, tpu.core_type = #tpu.core_type<tc>, window_params = [{transform_indices = @transform_0, window_bounds = array<i64: 1, 10, 1, 10, 128>}, {transform_indices = @transform_1, window_bounds = array<i64: 1, 11, 2, 11, 8>}, {transform_indices = @transform_2, window_bounds = array<i64: 1152, 128>}, {transform_indices = @transform_3, window_bounds = array<i64: 4, 128>}, {transform_indices = @transform_4, window_bounds = array<i64: 1, 128>}, {transform_indices = @transform_5, window_bounds = array<i64: 1, 8, 8, 128>}]} {
    %c8_i32 = arith.constant 8 : i32
    %0 = arith.muli %arg2, %c8_i32 : i32
    %1 = tpu.assume_multiple %0, 8 : i32
    %cst = arith.constant 0.000000e+00 : f32
    %2 = vector.broadcast %cst : f32 to vector<64x128xf32>
    %c0_i32 = arith.constant 0 : i32
    %3 = arith.addi %1, %c0_i32 : i32
    %c0 = arith.constant 0 : index
    %4 = arith.index_cast %3 : i32 to index
    %c0_0 = arith.constant 0 : index
    %c0_1 = arith.constant 0 : index
    %c0_2 = arith.constant 0 : index
    %5 = vector.load %arg3[%c0, %4, %c0_0, %c0_1, %c0_2] : memref<1x10x1x10x128xbf16, #tpu.memory_space<vmem>>, vector<1x8x1x8x128xbf16>
    %6 = vector.shape_cast %5 : vector<1x8x1x8x128xbf16> to vector<8x8x128xbf16>
    %c0_3 = arith.constant 0 : index
    %c0_4 = arith.constant 0 : index
    %7 = vector.load %arg5[%c0_3, %c0_4] : memref<1152x128xbf16, #tpu.memory_space<vmem>>, vector<128x128xbf16>
    %8 = vector.shape_cast %6 : vector<8x8x128xbf16> to vector<64x128xbf16>
    %cst_5 = arith.constant dense<0.000000e+00> : vector<64x128xf32>
    %9 = tpu.matmul %8, %7, %cst_5 {dimension_numbers = #tpu.dot_dimension_numbers<[1], [0], [0], [1], [0, 0, 1, 1], [], []>} : vector<64x128xbf16>, vector<128x128xbf16>, vector<64x128xf32> -> vector<64x128xf32>
    %10 = arith.addf %2, %9 : vector<64x128xf32>
    %c0_i32_6 = arith.constant 0 : i32
    %11 = arith.addi %1, %c0_i32_6 : i32
    %c0_7 = arith.constant 0 : index
    %12 = arith.index_cast %11 : i32 to index
    %c0_8 = arith.constant 0 : index
    %c1 = arith.constant 1 : index
    %c0_9 = arith.constant 0 : index
    %13 = vector.load %arg3[%c0_7, %12, %c0_8, %c1, %c0_9] : memref<1x10x1x10x128xbf16, #tpu.memory_space<vmem>>, vector<1x8x1x8x128xbf16>
    %14 = vector.shape_cast %13 : vector<1x8x1x8x128xbf16> to vector<8x8x128xbf16>
    %c128 = arith.constant 128 : index
    %c0_10 = arith.constant 0 : index
    %15 = vector.load %arg5[%c128, %c0_10] : memref<1152x128xbf16, #tpu.memory_space<vmem>>, vector<128x128xbf16>
    %16 = vector.shape_cast %14 : vector<8x8x128xbf16> to vector<64x128xbf16>
    %cst_11 = arith.constant dense<0.000000e+00> : vector<64x128xf32>
    %17 = tpu.matmul %16, %15, %cst_11 {dimension_numbers = #tpu.dot_dimension_numbers<[1], [0], [0], [1], [0, 0, 1, 1], [], []>} : vector<64x128xbf16>, vector<128x128xbf16>, vector<64x128xf32> -> vector<64x128xf32>
    %18 = arith.addf %10, %17 : vector<64x128xf32>
    %c0_i32_12 = arith.constant 0 : i32
    %19 = arith.addi %1, %c0_i32_12 : i32
    %c0_13 = arith.constant 0 : index
    %20 = arith.index_cast %19 : i32 to index
    %c0_14 = arith.constant 0 : index
    %c2 = arith.constant 2 : index
    %c0_15 = arith.constant 0 : index
    %21 = vector.load %arg3[%c0_13, %20, %c0_14, %c2, %c0_15] : memref<1x10x1x10x128xbf16, #tpu.memory_space<vmem>>, vector<1x8x1x8x128xbf16>
    %22 = vector.shape_cast %21 : vector<1x8x1x8x128xbf16> to vector<8x8x128xbf16>
    %c256 = arith.constant 256 : index
    %c0_16 = arith.constant 0 : index
    %23 = vector.load %arg5[%c256, %c0_16] : memref<1152x128xbf16, #tpu.memory_space<vmem>>, vector<128x128xbf16>
    %24 = vector.shape_cast %22 : vector<8x8x128xbf16> to vector<64x128xbf16>
    %cst_17 = arith.constant dense<0.000000e+00> : vector<64x128xf32>
    %25 = tpu.matmul %24, %23, %cst_17 {dimension_numbers = #tpu.dot_dimension_numbers<[1], [0], [0], [1], [0, 0, 1, 1], [], []>} : vector<64x128xbf16>, vector<128x128xbf16>, vector<64x128xf32> -> vector<64x128xf32>
    %26 = arith.addf %18, %25 : vector<64x128xf32>
    %c1_i32 = arith.constant 1 : i32
    %27 = arith.addi %1, %c1_i32 : i32
    %c0_18 = arith.constant 0 : index
    %28 = arith.index_cast %27 : i32 to index
    %c0_19 = arith.constant 0 : index
    %c0_20 = arith.constant 0 : index
    %c0_21 = arith.constant 0 : index
    %29 = vector.load %arg3[%c0_18, %28, %c0_19, %c0_20, %c0_21] : memref<1x10x1x10x128xbf16, #tpu.memory_space<vmem>>, vector<1x8x1x8x128xbf16>
    %30 = vector.shape_cast %29 : vector<1x8x1x8x128xbf16> to vector<8x8x128xbf16>
    %c384 = arith.constant 384 : index
    %c0_22 = arith.constant 0 : index
    %31 = vector.load %arg5[%c384, %c0_22] : memref<1152x128xbf16, #tpu.memory_space<vmem>>, vector<128x128xbf16>
    %32 = vector.shape_cast %30 : vector<8x8x128xbf16> to vector<64x128xbf16>
    %cst_23 = arith.constant dense<0.000000e+00> : vector<64x128xf32>
    %33 = tpu.matmul %32, %31, %cst_23 {dimension_numbers = #tpu.dot_dimension_numbers<[1], [0], [0], [1], [0, 0, 1, 1], [], []>} : vector<64x128xbf16>, vector<128x128xbf16>, vector<64x128xf32> -> vector<64x128xf32>
    %34 = arith.addf %26, %33 : vector<64x128xf32>
    %c1_i32_24 = arith.constant 1 : i32
    %35 = arith.addi %1, %c1_i32_24 : i32
    %c0_25 = arith.constant 0 : index
    %36 = arith.index_cast %35 : i32 to index
    %c0_26 = arith.constant 0 : index
    %c1_27 = arith.constant 1 : index
    %c0_28 = arith.constant 0 : index
    %37 = vector.load %arg3[%c0_25, %36, %c0_26, %c1_27, %c0_28] : memref<1x10x1x10x128xbf16, #tpu.memory_space<vmem>>, vector<1x8x1x8x128xbf16>
    %38 = vector.shape_cast %37 : vector<1x8x1x8x128xbf16> to vector<8x8x128xbf16>
    %c512 = arith.constant 512 : index
    %c0_29 = arith.constant 0 : index
    %39 = vector.load %arg5[%c512, %c0_29] : memref<1152x128xbf16, #tpu.memory_space<vmem>>, vector<128x128xbf16>
    %40 = vector.shape_cast %38 : vector<8x8x128xbf16> to vector<64x128xbf16>
    %cst_30 = arith.constant dense<0.000000e+00> : vector<64x128xf32>
    %41 = tpu.matmul %40, %39, %cst_30 {dimension_numbers = #tpu.dot_dimension_numbers<[1], [0], [0], [1], [0, 0, 1, 1], [], []>} : vector<64x128xbf16>, vector<128x128xbf16>, vector<64x128xf32> -> vector<64x128xf32>
    %42 = arith.addf %34, %41 : vector<64x128xf32>
    %c1_i32_31 = arith.constant 1 : i32
    %43 = arith.addi %1, %c1_i32_31 : i32
    %c0_32 = arith.constant 0 : index
    %44 = arith.index_cast %43 : i32 to index
    %c0_33 = arith.constant 0 : index
    %c2_34 = arith.constant 2 : index
    %c0_35 = arith.constant 0 : index
    %45 = vector.load %arg3[%c0_32, %44, %c0_33, %c2_34, %c0_35] : memref<1x10x1x10x128xbf16, #tpu.memory_space<vmem>>, vector<1x8x1x8x128xbf16>
    %46 = vector.shape_cast %45 : vector<1x8x1x8x128xbf16> to vector<8x8x128xbf16>
    %c640 = arith.constant 640 : index
    %c0_36 = arith.constant 0 : index
    %47 = vector.load %arg5[%c640, %c0_36] : memref<1152x128xbf16, #tpu.memory_space<vmem>>, vector<128x128xbf16>
    %48 = vector.shape_cast %46 : vector<8x8x128xbf16> to vector<64x128xbf16>
    %cst_37 = arith.constant dense<0.000000e+00> : vector<64x128xf32>
    %49 = tpu.matmul %48, %47, %cst_37 {dimension_numbers = #tpu.dot_dimension_numbers<[1], [0], [0], [1], [0, 0, 1, 1], [], []>} : vector<64x128xbf16>, vector<128x128xbf16>, vector<64x128xf32> -> vector<64x128xf32>
    %50 = arith.addf %42, %49 : vector<64x128xf32>
    %c2_i32 = arith.constant 2 : i32
    %51 = arith.addi %1, %c2_i32 : i32
    %c0_38 = arith.constant 0 : index
    %52 = arith.index_cast %51 : i32 to index
    %c0_39 = arith.constant 0 : index
    %c0_40 = arith.constant 0 : index
    %c0_41 = arith.constant 0 : index
    %53 = vector.load %arg3[%c0_38, %52, %c0_39, %c0_40, %c0_41] : memref<1x10x1x10x128xbf16, #tpu.memory_space<vmem>>, vector<1x8x1x8x128xbf16>
    %54 = vector.shape_cast %53 : vector<1x8x1x8x128xbf16> to vector<8x8x128xbf16>
    %c768 = arith.constant 768 : index
    %c0_42 = arith.constant 0 : index
    %55 = vector.load %arg5[%c768, %c0_42] : memref<1152x128xbf16, #tpu.memory_space<vmem>>, vector<128x128xbf16>
    %56 = vector.shape_cast %54 : vector<8x8x128xbf16> to vector<64x128xbf16>
    %cst_43 = arith.constant dense<0.000000e+00> : vector<64x128xf32>
    %57 = tpu.matmul %56, %55, %cst_43 {dimension_numbers = #tpu.dot_dimension_numbers<[1], [0], [0], [1], [0, 0, 1, 1], [], []>} : vector<64x128xbf16>, vector<128x128xbf16>, vector<64x128xf32> -> vector<64x128xf32>
    %58 = arith.addf %50, %57 : vector<64x128xf32>
    %c2_i32_44 = arith.constant 2 : i32
    %59 = arith.addi %1, %c2_i32_44 : i32
    %c0_45 = arith.constant 0 : index
    %60 = arith.index_cast %59 : i32 to index
    %c0_46 = arith.constant 0 : index
    %c1_47 = arith.constant 1 : index
    %c0_48 = arith.constant 0 : index
    %61 = vector.load %arg3[%c0_45, %60, %c0_46, %c1_47, %c0_48] : memref<1x10x1x10x128xbf16, #tpu.memory_space<vmem>>, vector<1x8x1x8x128xbf16>
    %62 = vector.shape_cast %61 : vector<1x8x1x8x128xbf16> to vector<8x8x128xbf16>
    %c896 = arith.constant 896 : index
    %c0_49 = arith.constant 0 : index
    %63 = vector.load %arg5[%c896, %c0_49] : memref<1152x128xbf16, #tpu.memory_space<vmem>>, vector<128x128xbf16>
    %64 = vector.shape_cast %62 : vector<8x8x128xbf16> to vector<64x128xbf16>
    %cst_50 = arith.constant dense<0.000000e+00> : vector<64x128xf32>
    %65 = tpu.matmul %64, %63, %cst_50 {dimension_numbers = #tpu.dot_dimension_numbers<[1], [0], [0], [1], [0, 0, 1, 1], [], []>} : vector<64x128xbf16>, vector<128x128xbf16>, vector<64x128xf32> -> vector<64x128xf32>
    %66 = arith.addf %58, %65 : vector<64x128xf32>
    %c2_i32_51 = arith.constant 2 : i32
    %67 = arith.addi %1, %c2_i32_51 : i32
    %c0_52 = arith.constant 0 : index
    %68 = arith.index_cast %67 : i32 to index
    %c0_53 = arith.constant 0 : index
    %c2_54 = arith.constant 2 : index
    %c0_55 = arith.constant 0 : index
    %69 = vector.load %arg3[%c0_52, %68, %c0_53, %c2_54, %c0_55] : memref<1x10x1x10x128xbf16, #tpu.memory_space<vmem>>, vector<1x8x1x8x128xbf16>
    %70 = vector.shape_cast %69 : vector<1x8x1x8x128xbf16> to vector<8x8x128xbf16>
    %c1024 = arith.constant 1024 : index
    %c0_56 = arith.constant 0 : index
    %71 = vector.load %arg5[%c1024, %c0_56] : memref<1152x128xbf16, #tpu.memory_space<vmem>>, vector<128x128xbf16>
    %72 = vector.shape_cast %70 : vector<8x8x128xbf16> to vector<64x128xbf16>
    %cst_57 = arith.constant dense<0.000000e+00> : vector<64x128xf32>
    %73 = tpu.matmul %72, %71, %cst_57 {dimension_numbers = #tpu.dot_dimension_numbers<[1], [0], [0], [1], [0, 0, 1, 1], [], []>} : vector<64x128xbf16>, vector<128x128xbf16>, vector<64x128xf32> -> vector<64x128xf32>
    %74 = arith.addf %66, %73 : vector<64x128xf32>
    %c1_i32_58 = arith.constant 1 : i32
    %75 = arith.addi %1, %c1_i32_58 : i32
    %c0_59 = arith.constant 0 : index
    %76 = arith.index_cast %75 : i32 to index
    %c1_60 = arith.constant 1 : index
    %c1_61 = arith.constant 1 : index
    %c4 = arith.constant 4 : index
    %77 = vector.load %arg4[%c0_59, %76, %c1_60, %c1_61, %c4] : memref<1x11x2x11x8xbf16, #tpu.memory_space<vmem>>, vector<1x8x1x8x4xbf16>
    %78 = vector.shape_cast %77 : vector<1x8x1x8x4xbf16> to vector<8x8x4xbf16>
    %c0_62 = arith.constant 0 : index
    %c0_63 = arith.constant 0 : index
    %79 = vector.load %arg6[%c0_62, %c0_63] : memref<4x128xbf16, #tpu.memory_space<vmem>>, vector<4x128xbf16>
    %80 = vector.shape_cast %78 : vector<8x8x4xbf16> to vector<64x4xbf16>
    %cst_64 = arith.constant dense<0.000000e+00> : vector<64x128xf32>
    %81 = tpu.matmul %80, %79, %cst_64 {dimension_numbers = #tpu.dot_dimension_numbers<[1], [0], [0], [1], [0, 0, 1, 1], [], []>} : vector<64x4xbf16>, vector<4x128xbf16>, vector<64x128xf32> -> vector<64x128xf32>
    %82 = arith.addf %74, %81 : vector<64x128xf32>
    %c0_65 = arith.constant 0 : index
    %c0_66 = arith.constant 0 : index
    %83 = vector.load %arg7[%c0_65, %c0_66] : memref<1x128xf32, #tpu.memory_space<vmem>>, vector<1x128xf32>
    %84 = vector.broadcast %83 : vector<1x128xf32> to vector<64x128xf32>
    %85 = arith.addf %82, %84 : vector<64x128xf32>
    %cst_67 = arith.constant 0.000000e+00 : f32
    %86 = vector.broadcast %cst_67 : f32 to vector<64x128xf32>
    %87 = arith.maximumf %85, %86 : vector<64x128xf32>
    %88 = vector.shape_cast %87 : vector<64x128xf32> to vector<8x8x128xf32>
    %89 = arith.truncf %88 : vector<8x8x128xf32> to vector<8x8x128xbf16>
    %c0_68 = arith.constant 0 : index
    %c0_69 = arith.constant 0 : index
    %c0_70 = arith.constant 0 : index
    %c0_71 = arith.constant 0 : index
    %90 = vector.load %arg8[%c0_68, %c0_69, %c0_70, %c0_71] : memref<1x8x8x128xbf16, #tpu.memory_space<vmem>>, vector<1x8x8x128xbf16>
    %91 = vector.shape_cast %90 : vector<1x8x8x128xbf16> to vector<8x8x128xbf16>
    %92 = vector.shape_cast %89 : vector<8x8x128xbf16> to vector<1x8x8x128xbf16>
    tpu.vector_store %arg8[%c0_68, %c0_69, %c0_70, %c0_71], %92 {strides = array<i32>} : memref<1x8x8x128xbf16, #tpu.memory_space<vmem>>, vector<1x8x8x128xbf16>,
    return
  }
  func.func @transform_0(%arg0: i32, %arg1: i32, %arg2: i32) -> (i32, i32, i32, i32, i32) {
    %c0_i32 = arith.constant 0 : i32
    %c0_i32_0 = arith.constant 0 : i32
    %c0_i32_1 = arith.constant 0 : i32
    %c0_i32_2 = arith.constant 0 : i32
    %c0_i32_3 = arith.constant 0 : i32
    return %arg0, %c0_i32, %c0_i32_0, %c0_i32_1, %c0_i32_2 : i32, i32, i32, i32, i32
  }
  func.func @transform_1(%arg0: i32, %arg1: i32, %arg2: i32) -> (i32, i32, i32, i32, i32) {
    %c0_i32 = arith.constant 0 : i32
    %c0_i32_0 = arith.constant 0 : i32
    %c0_i32_1 = arith.constant 0 : i32
    %c0_i32_2 = arith.constant 0 : i32
    %c0_i32_3 = arith.constant 0 : i32
    return %arg0, %c0_i32, %c0_i32_0, %c0_i32_1, %c0_i32_2 : i32, i32, i32, i32, i32
  }
  func.func @transform_2(%arg0: i32, %arg1: i32, %arg2: i32) -> (i32, i32) {
    %c0_i32 = arith.constant 0 : i32
    %c0_i32_0 = arith.constant 0 : i32
    return %c0_i32, %arg1 : i32, i32
  }
  func.func @transform_3(%arg0: i32, %arg1: i32, %arg2: i32) -> (i32, i32) {
    %c0_i32 = arith.constant 0 : i32
    %c0_i32_0 = arith.constant 0 : i32
    return %c0_i32, %arg1 : i32, i32
  }
  func.func @transform_4(%arg0: i32, %arg1: i32, %arg2: i32) -> (i32, i32) {
    %c0_i32 = arith.constant 0 : i32
    %c0_i32_0 = arith.constant 0 : i32
    return %c0_i32, %arg1 : i32, i32
  }
  func.func @transform_5(%arg0: i32, %arg1: i32, %arg2: i32) -> (i32, i32, i32, i32) {
    %c0_i32 = arith.constant 0 : i32
    %c0_i32_0 = arith.constant 0 : i32
    return %arg0, %arg2, %c0_i32, %arg1 : i32, i32, i32, i32
  }
}

</mosaic_0001>

<llo_original>
// kernel: basic_block_forward.3
$region0: #{basic_block_forward.3}
  #allocation0 [shape = 'u32[]', space=smem, size = 0x4, offset = 0x4, fixed_abs, tag = 'smem constant byte address 0x4 - core index']
  #allocation1 [shape = 'u32[144,128]{1,0:T(1,128)}', space=vmem, size = 0x12000, scoped, tag = 'internal scratch']
  %s0 = inlined_call_operand.vmem [shape: bf16[2,10,1,10,128], index: 0, kind: input, shape index: {}]
  %s1 = inlined_call_operand.vmem [shape: bf16[2,11,2,11,8], index: 1, kind: input, shape index: {}]
  %s2 = inlined_call_operand.vmem [shape: bf16[1152,128], index: 2, kind: input, shape index: {}]
  %s3 = inlined_call_operand.vmem [shape: bf16[4,128], index: 3, kind: input, shape index: {}]
  %s4 = inlined_call_operand.vmem [shape: f32[1,128], index: 4, kind: input, shape index: {}]
  %s5 = inlined_call_operand.vmem [shape: bf16[2,8,8,128], index: 5, kind: output, shape index: {}]
  %s6 = sld [smem:[#allocation0]]
  $region53: #{basic_block_forward.3} parent=0
    _
  %s8 = ssub.s32 1, %s6
  %s9 = scalar_select 0, %s8, %s6
  loop: start=0, step=1, limit=4
  $region2: #{basic_block_forward.3} parent=0 // loop_pre_header
    _
  $region3: #{basic_block_forward.3} parent=0 // loop_header
    %s11 = sphi 0, %s15
    %p12 = scmp.ge.s32.totalorder %s11, 4
    %s18 = sphi 0, %s37
    %s19 = sphi 0, %s33
    %s20 = sphi 0, %s29
    %s21 = sphi 0, %s18
    %s22 = sphi 0, %s19
    %s23 = sphi 0, %s20
    %s24 = sphi 0, %s21
    %s25 = sphi 0, %s22
    %s26 = sphi 0, %s23
    %s40 = sphi 0, %s42
    %s43 = sphi 0, %s40
    %s44 = sphi 0, %s43
    %s60 = sphi 0, %s44
    %s66 = sphi 0, %s68
    %s69 = sphi 0, %s66
    %s70 = sphi 0, %s69
    %s86 = sphi 0, %s70
    %s92 = sphi 0, %s94
    %s95 = sphi 0, %s92
    %s96 = sphi 0, %s95
    %s112 = sphi 0, %s96
    %s118 = sphi 0, %s120
    %s121 = sphi 0, %s118
    %s122 = sphi 0, %s121
    %s138 = sphi 0, %s122
    %s144 = sphi 0, %s146
    %s147 = sphi 0, %s144
    %s148 = sphi 0, %s147
    %s164 = sphi 0, %s148
    %s174 = sphi 0, %s176
    %s177 = sphi 0, %s174
    %s178 = sphi 0, %s177
    %s194 = sphi 0, %s178
  $region4: #{basic_block_forward.3} parent=0 // loop_header_branch
    %14 = sbr.rel (%p12) target = $region8
  $region5: #{basic_block_forward.3} parent=0 // loop_body
    %s16 = ssub.s32 %s11, 1
    %s17 = ssub.s32 %s11, 2
    %s27 = sadd.s32 1, %s20
    %p28 = scmp.ge.s32.totalorder %s27, 1
    %s29 = scalar_select %p28, 0, %s27
    %s30 = sadd.s32 1, %s19
    %s31 = scalar_select %p28, %s30, %s19
    %p32 = scmp.ge.s32.totalorder %s31, 1
    %s33 = scalar_select %p32, 0, %s31
    %s34 = sadd.s32 1, %s18
    %s35 = scalar_select %p32, %s34, %s18
    %p36 = scmp.ge.s32.totalorder %s35, 2
    %s37 = scalar_select %p36, 0, %s35
    %s38 = ssub.s32 %s18, %s37
    %p39 = scmp.eq.s32.totalorder %s38, 0
    %s41 = sadd.s32 %s40, 1
    %s42 = scalar_select %p39, %s40, %s41
    %p45 = pneg %p39
    %p46 = scmp.eq.s32.totalorder %s11, 1
    %p47 = por %p45, %p46
    %p48 = scmp.ne.s32.totalorder %s40, %s43
    %p49 = scmp.eq.s32.totalorder %s11, 0
    %p50 = por %p48, %p49
    %p51 = scmp.ne.s32.totalorder %s40, %s43
    %p52 = scmp.eq.s32.totalorder %s16, 1
    %p53 = por %p51, %p52
    %p54 = scmp.ne.s32.totalorder %s43, %s44
    %p55 = scmp.eq.s32.totalorder %s16, 0
    %p56 = por %p54, %p55
    %p57 = scmp.ne.s32.totalorder %s43, %s44
    %p58 = scmp.eq.s32.totalorder %s17, 1
    %p59 = por %p57, %p58
    %p61 = scmp.ne.s32.totalorder %s44, %s60
    %p62 = scmp.eq.s32.totalorder %s17, 0
    %p63 = por %p61, %p62
    %s64 = ssub.s32 %s18, %s37
    %p65 = scmp.eq.s32.totalorder %s64, 0
    %s67 = sadd.s32 %s66, 1
    %s68 = scalar_select %p65, %s66, %s67
    %p71 = pneg %p65
    %p72 = scmp.eq.s32.totalorder %s11, 1
    %p73 = por %p71, %p72
    %p74 = scmp.ne.s32.totalorder %s66, %s69
    %p75 = scmp.eq.s32.totalorder %s11, 0
    %p76 = por %p74, %p75
    %p77 = scmp.ne.s32.totalorder %s66, %s69
    %p78 = scmp.eq.s32.totalorder %s16, 1
    %p79 = por %p77, %p78
    %p80 = scmp.ne.s32.totalorder %s69, %s70
    %p81 = scmp.eq.s32.totalorder %s16, 0
    %p82 = por %p80, %p81
    %p83 = scmp.ne.s32.totalorder %s69, %s70
    %p84 = scmp.eq.s32.totalorder %s17, 1
    %p85 = por %p83, %p84
    %p87 = scmp.ne.s32.totalorder %s70, %s86
    %p88 = scmp.eq.s32.totalorder %s17, 0
    %p89 = por %p87, %p88
    %s90 = ssub.s32 %s19, %s33
    %p91 = scmp.eq.s32.totalorder %s90, 0
    %s93 = sadd.s32 %s92, 1
    %s94 = scalar_select %p91, %s92, %s93
    %p97 = pneg %p91
    %p98 = scmp.eq.s32.totalorder %s11, 1
    %p99 = por %p97, %p98
    %p100 = scmp.ne.s32.totalorder %s92, %s95
    %p101 = scmp.eq.s32.totalorder %s11, 0
    %p102 = por %p100, %p101
    %p103 = scmp.ne.s32.totalorder %s92, %s95
    %p104 = scmp.eq.s32.totalorder %s16, 1
    %p105 = por %p103, %p104
    %p106 = scmp.ne.s32.totalorder %s95, %s96
    %p107 = scmp.eq.s32.totalorder %s16, 0
    %p108 = por %p106, %p107
    %p109 = scmp.ne.s32.totalorder %s95, %s96
    %p110 = scmp.eq.s32.totalorder %s17, 1
    %p111 = por %p109, %p110
    %p113 = scmp.ne.s32.totalorder %s96, %s112
    %p114 = scmp.eq.s32.totalorder %s17, 0
    %p115 = por %p113, %p114
    %s116 = ssub.s32 %s19, %s33
    %p117 = scmp.eq.s32.totalorder %s116, 0
    %s119 = sadd.s32 %s118, 1
    %s120 = scalar_select %p117, %s118, %s119
    %p123 = pneg %p117
    %p124 = scmp.eq.s32.totalorder %s11, 1
    %p125 = por %p123, %p124
    %p126 = scmp.ne.s32.totalorder %s118, %s121
    %p127 = scmp.eq.s32.totalorder %s11, 0
    %p128 = por %p126, %p127
    %p129 = scmp.ne.s32.totalorder %s118, %s121
    %p130 = scmp.eq.s32.totalorder %s16, 1
    %p131 = por %p129, %p130
    %p132 = scmp.ne.s32.totalorder %s121, %s122
    %p133 = scmp.eq.s32.totalorder %s16, 0
    %p134 = por %p132, %p133
    %p135 = scmp.ne.s32.totalorder %s121, %s122
    %p136 = scmp.eq.s32.totalorder %s17, 1
    %p137 = por %p135, %p136
    %p139 = scmp.ne.s32.totalorder %s122, %s138
    %p140 = scmp.eq.s32.totalorder %s17, 0
    %p141 = por %p139, %p140
    %s142 = ssub.s32 %s19, %s33
    %p143 = scmp.eq.s32.totalorder %s142, 0
    %s145 = sadd.s32 %s144, 1
    %s146 = scalar_select %p143, %s144, %s145
    %p149 = pneg %p143
    %p150 = scmp.eq.s32.totalorder %s11, 1
    %p151 = por %p149, %p150
    %p152 = scmp.ne.s32.totalorder %s144, %s147
    %p153 = scmp.eq.s32.totalorder %s11, 0
    %p154 = por %p152, %p153
    %p155 = scmp.ne.s32.totalorder %s144, %s147
    %p156 = scmp.eq.s32.totalorder %s16, 1
    %p157 = por %p155, %p156
    %p158 = scmp.ne.s32.totalorder %s147, %s148
    %p159 = scmp.eq.s32.totalorder %s16, 0
    %p160 = por %p158, %p159
    %p161 = scmp.ne.s32.totalorder %s147, %s148
    %p162 = scmp.eq.s32.totalorder %s17, 1
    %p163 = por %p161, %p162
    %p165 = scmp.ne.s32.totalorder %s148, %s164
    %p166 = scmp.eq.s32.totalorder %s17, 0
    %p167 = por %p165, %p166
    %s168 = ssub.s32 %s18, %s37
    %s169 = ssub.s32 %s20, %s29
    %s170 = sor.u32 %s168, %s169
    %s171 = ssub.s32 %s19, %s33
    %s172 = sor.u32 %s170, %s171
    %p173 = scmp.eq.s32.totalorder %s172, 0
    %s175 = sadd.s32 %s174, 1
    %s176 = scalar_select %p173, %s174, %s175
    %p179 = pneg %p173
    %p180 = scmp.eq.s32.totalorder %s11, 1
    %p181 = por %p179, %p180
    %p182 = scmp.ne.s32.totalorder %s174, %s177
    %p183 = scmp.eq.s32.totalorder %s11, 0
    %p184 = por %p182, %p183
    %p185 = scmp.ne.s32.totalorder %s174, %s177
    %p186 = scmp.eq.s32.totalorder %s16, 1
    %p187 = por %p185, %p186
    %p188 = scmp.ne.s32.totalorder %s177, %s178
    %p189 = scmp.eq.s32.totalorder %s16, 0
    %p190 = por %p188, %p189
    %p191 = scmp.ne.s32.totalorder %s177, %s178
    %p192 = scmp.eq.s32.totalorder %s17, 1
    %p193 = por %p191, %p192
    %p195 = scmp.ne.s32.totalorder %s178, %s194
    %p196 = scmp.eq.s32.totalorder %s17, 0
    %p197 = por %p195, %p196
    %p198 = scmp.le.s32.totalorder 1, %s11
    %p199 = scmp.lt.s32.totalorder %s11, 3
    %p200 = pnand %p198, %p199
    %p201 = pneg %p200
    // Predicated region
    $region9: #{basic_block_forward.3} parent=5 // pred_check
      _
    $region10: #{basic_block_forward.3} parent=5 // pred_check_branch
      %203 = sbr.rel (%p200) target = $region12
    $region11: #{basic_block_forward.3} parent=5 // pred_region
      %s204 = ssub.s32 %s11, 1
      // Predicated region
      $region13: #{basic_block_forward.3} parent=11 // pred_check
        %p205 = pneg %p108
      $region14: #{basic_block_forward.3} parent=11 // pred_check_branch
        %207 = sbr.rel (%p205) target = $region16
      $region15: #{basic_block_forward.3} parent=11 // pred_region
        %p208 = scmp.lt.s32.totalorder %s22, 0
        %s209 = scalar_select %p208, %s22, 0
        %s210 = smul.addr %s209, 4
        %s211 = scalar_lea.vmem %s2, %s210
      $region16: #{basic_block_forward.3} parent=11 // pred_fallthru
        _
      // Predicated region
      $region17: #{basic_block_forward.3} parent=11 // pred_check
        %p212 = pneg %p134
      $region18: #{basic_block_forward.3} parent=11 // pred_check_branch
        %214 = sbr.rel (%p212) target = $region20
      $region19: #{basic_block_forward.3} parent=11 // pred_region
        %p215 = scmp.lt.s32.totalorder %s22, 0
        %s216 = scalar_select %p215, %s22, 0
        %s217 = smul.addr %s216, 2
        %s218 = scalar_lea.vmem %s3, %s217
      $region20: #{basic_block_forward.3} parent=11 // pred_fallthru
        _
      // Predicated region
      $region21: #{basic_block_forward.3} parent=11 // pred_check
        %p219 = pneg %p160
      $region22: #{basic_block_forward.3} parent=11 // pred_check_branch
        %221 = sbr.rel (%p219) target = $region24
      $region23: #{basic_block_forward.3} parent=11 // pred_region
        %p222 = scmp.lt.s32.totalorder %s22, 0
        %s223 = scalar_select %p222, %s22, 0
        %s224 = scalar_lea.vmem %s4, %s223
      $region24: #{basic_block_forward.3} parent=11 // pred_fallthru
        _
    $region12: #{basic_block_forward.3} parent=5 // pred_fallthru
      _
    %p225 = scmp.lt.s32.totalorder %s11, 2
    // Predicated region
    $region25: #{basic_block_forward.3} parent=5 // pred_check
      %p226 = pneg %p225
    $region26: #{basic_block_forward.3} parent=5 // pred_check_branch
      %228 = sbr.rel (%p226) target = $region28
    $region27: #{basic_block_forward.3} parent=5 // pred_region
      // Predicated region
      $region29: #{basic_block_forward.3} parent=27 // pred_check
        %p229 = pneg %p50
      $region30: #{basic_block_forward.3} parent=27 // pred_check_branch
        %231 = sbr.rel (%p229) target = $region32
      $region31: #{basic_block_forward.3} parent=27 // pred_region
        %p232 = scmp.lt.s32.totalorder %s18, 1
        %s233 = scalar_select %p232, %s18, 1
        %s234 = smul.addr %s233, 20
        %s235 = smul.addr %s234, 4
        %s236 = scalar_lea.vmem %s0, %s235
      $region32: #{basic_block_forward.3} parent=27 // pred_fallthru
        _
      // Predicated region
      $region33: #{basic_block_forward.3} parent=27 // pred_check
        %p237 = pneg %p76
      $region34: #{basic_block_forward.3} parent=27 // pred_check_branch
        %239 = sbr.rel (%p237) target = $region36
      $region35: #{basic_block_forward.3} parent=27 // pred_region
        %p240 = scmp.lt.s32.totalorder %s18, 1
        %s241 = scalar_select %p240, %s18, 1
        %s242 = smul.addr %s241, 44
        %s243 = smul.addr %s242, 4
        %s244 = scalar_lea.vmem %s1, %s243
      $region36: #{basic_block_forward.3} parent=27 // pred_fallthru
        _
    $region28: #{basic_block_forward.3} parent=5 // pred_fallthru
      _
    %p245 = scmp.le.s32.totalorder 1, %s11
    %p246 = scmp.lt.s32.totalorder %s11, 3
    %p247 = pnand %p245, %p246
    %p248 = pneg %p247
    // Predicated region
    $region37: #{basic_block_forward.3} parent=5 // pred_check
      _
    $region38: #{basic_block_forward.3} parent=5 // pred_check_branch
      %250 = sbr.rel (%p247) target = $region40
    $region39: #{basic_block_forward.3} parent=5 // pred_region
      %s251 = ssub.s32 %s11, 1
      %p252 = scmp.lt.s32.totalorder %s21, 1
      %s253 = scalar_select %p252, %s21, 1
      %s254 = smul.addr %s253, 20
      %s255 = smul.addr %s254, 4
      %s256 = scalar_lea.vmem %s0, %s255
      %p257 = pneg %p56
      %p258 = pneg %p53
      %p259 = scmp.lt.s32.totalorder %s21, 1
      %s260 = scalar_select %p259, %s21, 1
      %s261 = smul.addr %s260, 44
      %s262 = smul.addr %s261, 4
      %s263 = scalar_lea.vmem %s1, %s262
      %p264 = pneg %p82
      %p265 = pneg %p79
      %p266 = scmp.lt.s32.totalorder %s22, 0
      %s267 = scalar_select %p266, %s22, 0
      %s268 = smul.addr %s267, 4
      %s269 = scalar_lea.vmem %s2, %s268
      %p270 = pneg %p108
      %p271 = pneg %p105
      %p272 = scmp.lt.s32.totalorder %s22, 0
      %s273 = scalar_select %p272, %s22, 0
      %s274 = smul.addr %s273, 2
      %s275 = scalar_lea.vmem %s3, %s274
      %p276 = pneg %p134
      %p277 = pneg %p131
      %p278 = scmp.lt.s32.totalorder %s22, 0
      %s279 = scalar_select %p278, %s22, 0
      %s280 = scalar_lea.vmem %s4, %s279
      %p281 = pneg %p160
      %p282 = pneg %p157
      %p283 = pneg %p190
      %p284 = pneg %p187
      %s285 = smul.u32 8, %s23
      %p286 = scmp.lt.s32.totalorder %s21, 1
      %s287 = scalar_select %p286, %s21, 1
      %p288 = scmp.lt.s32.totalorder %s285, 7
      %s289 = scalar_select %p288, %s285, 7
      %p290 = scmp.lt.s32.totalorder %s22, 0
      %s291 = scalar_select %p290, %s22, 0
      %s292 = sadd.s32 %s291, %s289
      %s293 = smul.addr %s287, 8
      %s294 = sadd.s32 %s292, %s293
      %s295 = smul.addr %s294, 4
      %s296 = scalar_lea.vmem %s5, %s295
      %p297 = scmp.lt.s32.totalorder %s21, 1
      %s298 = scalar_select %p297, %s21, 1
      %s299 = smul.addr %s298, 20
      %s300 = smul.addr %s299, 4
      %s301 = scalar_lea.vmem %s0, %s300
      %p302 = scmp.lt.s32.totalorder %s21, 1
      %s303 = scalar_select %p302, %s21, 1
      %s304 = smul.addr %s303, 44
      %s305 = smul.addr %s304, 4
      %s306 = scalar_lea.vmem %s1, %s305
      %p307 = scmp.lt.s32.totalorder %s22, 0
      %s308 = scalar_select %p307, %s22, 0
      %s309 = smul.addr %s308, 4
      %s310 = scalar_lea.vmem %s2, %s309
      %p311 = scmp.lt.s32.totalorder %s22, 0
      %s312 = scalar_select %p311, %s22, 0
      %s313 = smul.addr %s312, 2
      %s314 = scalar_lea.vmem %s3, %s313
      %p315 = scmp.lt.s32.totalorder %s22, 0
      %s316 = scalar_select %p315, %s22, 0
      %s317 = scalar_lea.vmem %s4, %s316
      %s318 = smul.u32 8, %s23
      %p319 = scmp.lt.s32.totalorder %s21, 1
      %s320 = scalar_select %p319, %s21, 1
      %p321 = scmp.lt.s32.totalorder %s318, 7
      %s322 = scalar_select %p321, %s318, 7
      %p323 = scmp.lt.s32.totalorder %s22, 0
      %s324 = scalar_select %p323, %s22, 0
      %s325 = sadd.s32 %s324, %s322
      %s326 = smul.addr %s320, 8
      %s327 = sadd.s32 %s325, %s326
      %s328 = smul.addr %s327, 4
      %s329 = scalar_lea.vmem %s5, %s328
      %s330 = smul.u32 8, %s23
      %s332 = smul.u32 %s23, 8
      %s333 = smul.u32 %s332, 2
      %s334 = smul.addr %s333, 4
      %s335 = scalar_lea.vmem %s301, %s334
      %v336 = vld [vmem:[%s335] sm:$0xf]
      %v337 = vld [vmem:[%s335 + $0x8] sm:$0xf]
      %v338 = vld [vmem:[%s335 + $0x10] sm:$0xf]
      %v339 = vld [vmem:[%s335 + $0x18] sm:$0xf]
      %v340 = vld [vmem:[%s335 + $0x20] sm:$0xf]
      %v341 = vld [vmem:[%s335 + $0x28] sm:$0xf]
      %v342 = vld [vmem:[%s335 + $0x30] sm:$0xf]
      %v343 = vld [vmem:[%s335 + $0x38] sm:$0xf]
      %v344 = vld [vmem:[%s310] sm:$0xf]
      %v345 = vld [vmem:[%s310 + $0x4] sm:$0xf]
      %v346 = vld [vmem:[%s310 + $0x8] sm:$0xf]
      %v347 = vld [vmem:[%s310 + $0xc] sm:$0xf]
      %v348 = vld [vmem:[%s310 + $0x10] sm:$0xf]
      %v349 = vld [vmem:[%s310 + $0x14] sm:$0xf]
      %v350 = vld [vmem:[%s310 + $0x18] sm:$0xf]
      %v351 = vld [vmem:[%s310 + $0x1c] sm:$0xf]
      %v352 = vld [vmem:[%s310 + $0x20] sm:$0xf]
      %v353 = vld [vmem:[%s310 + $0x24] sm:$0xf]
      %v354 = vld [vmem:[%s310 + $0x28] sm:$0xf]
      %v355 = vld [vmem:[%s310 + $0x2c] sm:$0xf]
      %v356 = vld [vmem:[%s310 + $0x30] sm:$0xf]
      %v357 = vld [vmem:[%s310 + $0x34] sm:$0xf]
      %v358 = vld [vmem:[%s310 + $0x38] sm:$0xf]
      %v359 = vld [vmem:[%s310 + $0x3c] sm:$0xf]
      %v360 = vld [vmem:[%s335 + $0x4] sm:$0x1]
      %v361 = vld [vmem:[%s335 + $0xc] sm:$0x1]
      %v362 = vld [vmem:[%s335 + $0x14] sm:$0x1]
      %v363 = vld [vmem:[%s335 + $0x1c] sm:$0x1]
      %v364 = vld [vmem:[%s335 + $0x24] sm:$0x1]
      %v365 = vld [vmem:[%s335 + $0x2c] sm:$0x1]
      %v366 = vld [vmem:[%s335 + $0x34] sm:$0x1]
      %v367 = vld [vmem:[%s335 + $0x3c] sm:$0x1]
      %v368 = vld [vmem:[%s310 + $0x40] sm:$0xf]
      %v369 = vld [vmem:[%s310 + $0x44] sm:$0xf]
      %v370 = vld [vmem:[%s310 + $0x48] sm:$0xf]
      %v371 = vld [vmem:[%s310 + $0x4c] sm:$0xf]
      %v372 = vld [vmem:[%s310 + $0x50] sm:$0xf]
      %v373 = vld [vmem:[%s310 + $0x54] sm:$0xf]
      %v374 = vld [vmem:[%s310 + $0x58] sm:$0xf]
      %v375 = vld [vmem:[%s310 + $0x5c] sm:$0xf]
      %v376 = vld [vmem:[%s310 + $0x60] sm:$0xf]
      %v377 = vld [vmem:[%s310 + $0x64] sm:$0xf]
      %v378 = vld [vmem:[%s310 + $0x68] sm:$0xf]
      %v379 = vld [vmem:[%s310 + $0x6c] sm:$0xf]
      %v380 = vld [vmem:[%s310 + $0x70] sm:$0xf]
      %v381 = vld [vmem:[%s310 + $0x74] sm:$0xf]
      %v382 = vld [vmem:[%s310 + $0x78] sm:$0xf]
      %v383 = vld [vmem:[%s310 + $0x7c] sm:$0xf]
      %vm384 = vsmask.f32 3328
      %vm385 = vsmask.f32 7440
      %vm386 = vmor %vm384, %vm385
      %v388 = vshrl.u32 %v336, 16
      %v390 = vrot.slane %v388, 4
      %v391 = vshll.u32 %v336, 16
      %v393 = vrot.slane %v391, 5
      %v394 = vor.u32 %v390, %v393
      %v395 = vrot.slane %v394, 4
      %v397 = vshll.u32 %v360, 16
      %v399 = vrot.slane %v397, 5
      %v400 = vsel %vm386, %v395, %v399
      %v402 = vshrl.u32 %v337, 16
      %v404 = vrot.slane %v402, 4
      %v405 = vshll.u32 %v337, 16
      %v407 = vrot.slane %v405, 5
      %v408 = vor.u32 %v404, %v407
      %v409 = vrot.slane %v408, 4
      %v411 = vshll.u32 %v361, 16
      %v413 = vrot.slane %v411, 5
      %v414 = vsel %vm386, %v409, %v413
      %v416 = vshrl.u32 %v338, 16
      %v418 = vrot.slane %v416, 4
      %v419 = vshll.u32 %v338, 16
      %v421 = vrot.slane %v419, 5
      %v422 = vor.u32 %v418, %v421
      %v423 = vrot.slane %v422, 4
      %v425 = vshll.u32 %v362, 16
      %v427 = vrot.slane %v425, 5
      %v428 = vsel %vm386, %v423, %v427
      %v430 = vshrl.u32 %v339, 16
      %v432 = vrot.slane %v430, 4
      %v433 = vshll.u32 %v339, 16
      %v435 = vrot.slane %v433, 5
      %v436 = vor.u32 %v432, %v435
      %v437 = vrot.slane %v436, 4
      %v439 = vshll.u32 %v363, 16
      %v441 = vrot.slane %v439, 5
      %v442 = vsel %vm386, %v437, %v441
      %v444 = vshrl.u32 %v340, 16
      %v446 = vrot.slane %v444, 4
      %v447 = vshll.u32 %v340, 16
      %v449 = vrot.slane %v447, 5
      %v450 = vor.u32 %v446, %v449
      %v451 = vrot.slane %v450, 4
      %v453 = vshll.u32 %v364, 16
      %v455 = vrot.slane %v453, 5
      %v456 = vsel %vm386, %v451, %v455
      %v458 = vshrl.u32 %v341, 16
      %v460 = vrot.slane %v458, 4
      %v461 = vshll.u32 %v341, 16
      %v463 = vrot.slane %v461, 5
      %v464 = vor.u32 %v460, %v463
      %v465 = vrot.slane %v464, 4
      %v467 = vshll.u32 %v365, 16
      %v469 = vrot.slane %v467, 5
      %v470 = vsel %vm386, %v465, %v469
      %v472 = vshrl.u32 %v342, 16
      %v474 = vrot.slane %v472, 4
      %v475 = vshll.u32 %v342, 16
      %v477 = vrot.slane %v475, 5
      %v478 = vor.u32 %v474, %v477
      %v479 = vrot.slane %v478, 4
      %v481 = vshll.u32 %v366, 16
      %v483 = vrot.slane %v481, 5
      %v484 = vsel %vm386, %v479, %v483
      %v486 = vshrl.u32 %v343, 16
      %v488 = vrot.slane %v486, 4
      %v489 = vshll.u32 %v343, 16
      %v491 = vrot.slane %v489, 5
      %v492 = vor.u32 %v488, %v491
      %v493 = vrot.slane %v492, 4
      %v495 = vshll.u32 %v367, 16
      %v497 = vrot.slane %v495, 5
      %v498 = vsel %vm386, %v493, %v497
      %v499 = vunpack.c.l.b16 %v400
      %v500 = vunpack.c.l.b16 %v414
      %v501 = vunpack.c.l.b16 %v428
      %v502 = vunpack.c.l.b16 %v442
      %v503 = vunpack.c.l.b16 %v456
      %v504 = vunpack.c.l.b16 %v470
      %v505 = vunpack.c.l.b16 %v484
      %v506 = vunpack.c.l.b16 %v498
      %v507 = vpack.c.b16 %v500, %v499
      %v508 = vpack.c.b16 %v502, %v501
      %v509 = vpack.c.b16 %v504, %v503
      %v510 = vpack.c.b16 %v506, %v505
      %v531 = vunpack.c.l.b16 %v368
      %v532 = vunpack.c.l.b16 %v369
      %v533 = vunpack.c.l.b16 %v370
      %v534 = vunpack.c.l.b16 %v371
      %v535 = vunpack.c.l.b16 %v372
      %v536 = vunpack.c.l.b16 %v373
      %v537 = vunpack.c.l.b16 %v374
      %v538 = vunpack.c.l.b16 %v375
      %v539 = vunpack.c.l.b16 %v376
      %v540 = vunpack.c.l.b16 %v377
      %v541 = vunpack.c.l.b16 %v378
      %v542 = vunpack.c.l.b16 %v379
      %v543 = vunpack.c.l.b16 %v380
      %v544 = vunpack.c.l.b16 %v381
      %v545 = vunpack.c.l.b16 %v382
      %v546 = vunpack.c.l.b16 %v383
      %v547 = vpack.c.b16 %v532, %v531
      %v548 = vpack.c.b16 %v534, %v533
      %v549 = vpack.c.b16 %v536, %v535
      %v550 = vpack.c.b16 %v538, %v537
      %v551 = vpack.c.b16 %v540, %v539
      %v552 = vpack.c.b16 %v542, %v541
      %v553 = vpack.c.b16 %v544, %v543
      %v554 = vpack.c.b16 %v546, %v545
      %563 = vmatprep.subr.bf16.mxu0 0
      %564 = vmatpush1.bf16.msra.mxu0 %v554
      %565 = vmatprep.subr.bf16.mxu0 0
      %566 = vmatpush1.bf16.msra.mxu0 %v553
      %567 = vmatprep.subr.bf16.mxu0 0
      %568 = vmatpush1.bf16.msra.mxu0 %v552
      %569 = vmatprep.subr.bf16.mxu0 0
      %570 = vmatpush1.bf16.msra.mxu0 %v551
      %571 = vmatprep.subr.bf16.mxu0 0
      %572 = vmatpush1.bf16.msra.mxu0 %v550
      %573 = vmatprep.subr.bf16.mxu0 0
      %574 = vmatpush1.bf16.msra.mxu0 %v549
      %575 = vmatprep.subr.bf16.mxu0 0
      %576 = vmatpush1.bf16.msra.mxu0 %v548
      %577 = vmatprep.subr.bf16.mxu0 0
      %578 = vmatpush1.bf16.msra.mxu0 %v547
      %579 = vmatprep.subr.bf16.mxu0 0
      %580 = vmatpush2.bf16.msra.mxu0 0
      %581 = vmatprep.subr.bf16.mxu0 0
      %582 = vmatpush2.bf16.msra.mxu0 0
      %583 = vmatprep.subr.bf16.mxu0 0
      %584 = vmatpush2.bf16.msra.mxu0 0
      %585 = vmatprep.subr.bf16.mxu0 0
      %586 = vmatpush2.bf16.msra.mxu0 0
      %587 = vmatprep.subr.bf16.mxu0 0
      %588 = vmatpush2.bf16.msra.mxu0 0
      %589 = vmatprep.subr.bf16.mxu0 0
      %590 = vmatpush2.bf16.msra.mxu0 0
      %591 = vmatprep.subr.bf16.mxu0 0
      %592 = vmatpush2.bf16.msra.mxu0 0
      %593 = vmatprep.subr.bf16.mxu0 0
      %594 = vmatpush2.bf16.msra.mxu0 0
      %595 = vmatprep.mubr.bf16.mxu0 0
      %596 = vmatmul.mubr.bf16.gmra.mxu0 %v507
      %v597 = vpop.f32.mrf.mxu0
      %v598 = vadd.f32 0.0, %v597
      %v599 = vpop.f32.mrf.mxu0
      %v600 = vpop.f32.mrf.mxu0
      %v601 = vadd.f32 0.0, %v600
      %v602 = vpop.f32.mrf.mxu0
      %603 = vmatprep.mubr.bf16.mxu0 0
      %604 = vmatmul.mubr.bf16.gmra.mxu0 %v508
      %v605 = vpop.f32.mrf.mxu0
      %v606 = vadd.f32 0.0, %v605
      %v607 = vpop.f32.mrf.mxu0
      %v608 = vpop.f32.mrf.mxu0
      %v609 = vadd.f32 0.0, %v608
      %v610 = vpop.f32.mrf.mxu0
      %611 = vmatprep.mubr.bf16.mxu0 0
      %612 = vmatmul.mubr.bf16.gmra.mxu0 %v509
      %v613 = vpop.f32.mrf.mxu0
      %v614 = vadd.f32 0.0, %v613
      %v615 = vpop.f32.mrf.mxu0
      %v616 = vpop.f32.mrf.mxu0
      %v617 = vadd.f32 0.0, %v616
      %v618 = vpop.f32.mrf.mxu0
      %619 = vmatprep.mubr.bf16.mxu0 0
      %620 = vmatmul.mubr.bf16.gmra.mxu0 %v510
      %v621 = vpop.f32.mrf.mxu0
      %v622 = vadd.f32 0.0, %v621
      %v623 = vpop.f32.mrf.mxu0
      %v624 = vpop.f32.mrf.mxu0
      %v625 = vadd.f32 0.0, %v624
      %v626 = vpop.f32.mrf.mxu0
      %627 = vdwg.mxu0
      %v636 = vunpack.c.l.b16 %v336
      %v637 = vunpack.c.l.b16 %v337
      %v638 = vunpack.c.l.b16 %v338
      %v639 = vunpack.c.l.b16 %v339
      %v640 = vunpack.c.l.b16 %v340
      %v641 = vunpack.c.l.b16 %v341
      %v642 = vunpack.c.l.b16 %v342
      %v643 = vunpack.c.l.b16 %v343
      %v644 = vpack.c.b16 %v637, %v636
      %v645 = vpack.c.b16 %v639, %v638
      %v646 = vpack.c.b16 %v641, %v640
      %v647 = vpack.c.b16 %v643, %v642
      %v668 = vunpack.c.l.b16 %v344
      %v669 = vunpack.c.l.b16 %v345
      %v670 = vunpack.c.l.b16 %v346
      %v671 = vunpack.c.l.b16 %v347
      %v672 = vunpack.c.l.b16 %v348
      %v673 = vunpack.c.l.b16 %v349
      %v674 = vunpack.c.l.b16 %v350
      %v675 = vunpack.c.l.b16 %v351
      %v676 = vunpack.c.l.b16 %v352
      %v677 = vunpack.c.l.b16 %v353
      %v678 = vunpack.c.l.b16 %v354
      %v679 = vunpack.c.l.b16 %v355
      %v680 = vunpack.c.l.b16 %v356
      %v681 = vunpack.c.l.b16 %v357
      %v682 = vunpack.c.l.b16 %v358
      %v683 = vunpack.c.l.b16 %v359
      %v684 = vpack.c.b16 %v669, %v668
      %v685 = vpack.c.b16 %v671, %v670
      %v686 = vpack.c.b16 %v673, %v672
      %v687 = vpack.c.b16 %v675, %v674
      %v688 = vpack.c.b16 %v677, %v676
      %v689 = vpack.c.b16 %v679, %v678
      %v690 = vpack.c.b16 %v681, %v680
      %v691 = vpack.c.b16 %v683, %v682
      %700 = vmatprep.subr.bf16.mxu0 0
      %701 = vmatpush1.bf16.msra.mxu0 %v691
      %702 = vmatprep.subr.bf16.mxu0 0
      %703 = vmatpush1.bf16.msra.mxu0 %v690
      %704 = vmatprep.subr.bf16.mxu0 0
      %705 = vmatpush1.bf16.msra.mxu0 %v689
      %706 = vmatprep.subr.bf16.mxu0 0
      %707 = vmatpush1.bf16.msra.mxu0 %v688
      %708 = vmatprep.subr.bf16.mxu0 0
      %709 = vmatpush1.bf16.msra.mxu0 %v687
      %710 = vmatprep.subr.bf16.mxu0 0
      %711 = vmatpush1.bf16.msra.mxu0 %v686
      %712 = vmatprep.subr.bf16.mxu0 0
      %713 = vmatpush1.bf16.msra.mxu0 %v685
      %714 = vmatprep.subr.bf16.mxu0 0
      %715 = vmatpush1.bf16.msra.mxu0 %v684
      %716 = vmatprep.subr.bf16.mxu0 0
      %717 = vmatpush2.bf16.msra.mxu0 0
      %718 = vmatprep.subr.bf16.mxu0 0
      %719 = vmatpush2.bf16.msra.mxu0 0
      %720 = vmatprep.subr.bf16.mxu0 0
      %721 = vmatpush2.bf16.msra.mxu0 0
      %722 = vmatprep.subr.bf16.mxu0 0
      %723 = vmatpush2.bf16.msra.mxu0 0
      %724 = vmatprep.subr.bf16.mxu0 0
      %725 = vmatpush2.bf16.msra.mxu0 0
      %726 = vmatprep.subr.bf16.mxu0 0
      %727 = vmatpush2.bf16.msra.mxu0 0
      %728 = vmatprep.subr.bf16.mxu0 0
      %729 = vmatpush2.bf16.msra.mxu0 0
      %730 = vmatprep.subr.bf16.mxu0 0
      %731 = vmatpush2.bf16.msra.mxu0 0
      %732 = vmatprep.mubr.bf16.mxu0 0
      %733 = vmatmul.mubr.bf16.gmra.mxu0 %v644
      %v734 = vpop.f32.mrf.mxu0
      %v735 = vadd.f32 %v598, %v734
      %v736 = vpop.f32.mrf.mxu0
      %v737 = vpop.f32.mrf.mxu0
      %v738 = vadd.f32 %v601, %v737
      %v739 = vpop.f32.mrf.mxu0
      %740 = vmatprep.mubr.bf16.mxu0 0
      %741 = vmatmul.mubr.bf16.gmra.mxu0 %v645
      %v742 = vpop.f32.mrf.mxu0
      %v743 = vadd.f32 %v606, %v742
      %v744 = vpop.f32.mrf.mxu0
      %v745 = vpop.f32.mrf.mxu0
      %v746 = vadd.f32 %v609, %v745
      %v747 = vpop.f32.mrf.mxu0
      %748 = vmatprep.mubr.bf16.mxu0 0
      %749 = vmatmul.mubr.bf16.gmra.mxu0 %v646
      %v750 = vpop.f32.mrf.mxu0
      %v751 = vadd.f32 %v614, %v750
      %v752 = vpop.f32.mrf.mxu0
      %v753 = vpop.f32.mrf.mxu0
      %v754 = vadd.f32 %v617, %v753
      %v755 = vpop.f32.mrf.mxu0
      %756 = vmatprep.mubr.bf16.mxu0 0
      %757 = vmatmul.mubr.bf16.gmra.mxu0 %v647
      %v758 = vpop.f32.mrf.mxu0
      %v759 = vadd.f32 %v622, %v758
      %v760 = vpop.f32.mrf.mxu0
      %v761 = vpop.f32.mrf.mxu0
      %v762 = vadd.f32 %v625, %v761
      %v763 = vpop.f32.mrf.mxu0
      %764 = vdwg.mxu0
      %v765 = vld [vmem:[%s335] sm:$0xe]
      %v766 = vld [vmem:[%s335 + $0x8] sm:$0xe]
      %v767 = vld [vmem:[%s335 + $0x10] sm:$0xe]
      %v768 = vld [vmem:[%s335 + $0x18] sm:$0xe]
      %v769 = vld [vmem:[%s335 + $0x20] sm:$0xe]
      %v770 = vld [vmem:[%s335 + $0x28] sm:$0xe]
      %v771 = vld [vmem:[%s335 + $0x30] sm:$0xe]
      %v772 = vld [vmem:[%s335 + $0x38] sm:$0xe]
      %v773 = vld [vmem:[%s310 + $0x80] sm:$0xf]
      %v774 = vld [vmem:[%s310 + $0x84] sm:$0xf]
      %v775 = vld [vmem:[%s310 + $0x88] sm:$0xf]
      %v776 = vld [vmem:[%s310 + $0x8c] sm:$0xf]
      %v777 = vld [vmem:[%s310 + $0x90] sm:$0xf]
      %v778 = vld [vmem:[%s310 + $0x94] sm:$0xf]
      %v779 = vld [vmem:[%s310 + $0x98] sm:$0xf]
      %v780 = vld [vmem:[%s310 + $0x9c] sm:$0xf]
      %v781 = vld [vmem:[%s310 + $0xa0] sm:$0xf]
      %v782 = vld [vmem:[%s310 + $0xa4] sm:$0xf]
      %v783 = vld [vmem:[%s310 + $0xa8] sm:$0xf]
      %v784 = vld [vmem:[%s310 + $0xac] sm:$0xf]
      %v785 = vld [vmem:[%s310 + $0xb0] sm:$0xf]
      %v786 = vld [vmem:[%s310 + $0xb4] sm:$0xf]
      %v787 = vld [vmem:[%s310 + $0xb8] sm:$0xf]
      %v788 = vld [vmem:[%s310 + $0xbc] sm:$0xf]
      %vm805 = vcmask 1042432
      %vm806 = vcmask 1046532
      %vm807 = vmor %vm805, %vm806
      %v808 = vrot.slane %v765, 5
      %v809 = vrot.slane %v808, 4
      %v810 = vrot.slane %v360, 5
      %v811 = vsel %vm807, %v809, %v810
      %v812 = vrot.slane %v766, 5
      %v813 = vrot.slane %v812, 4
      %v814 = vrot.slane %v361, 5
      %v815 = vsel %vm807, %v813, %v814
      %v816 = vrot.slane %v767, 5
      %v817 = vrot.slane %v816, 4
      %v818 = vrot.slane %v362, 5
      %v819 = vsel %vm807, %v817, %v818
      %v820 = vrot.slane %v768, 5
      %v821 = vrot.slane %v820, 4
      %v822 = vrot.slane %v363, 5
      %v823 = vsel %vm807, %v821, %v822
      %v824 = vrot.slane %v769, 5
      %v825 = vrot.slane %v824, 4
      %v826 = vrot.slane %v364, 5
      %v827 = vsel %vm807, %v825, %v826
      %v828 = vrot.slane %v770, 5
      %v829 = vrot.slane %v828, 4
      %v830 = vrot.slane %v365, 5
      %v831 = vsel %vm807, %v829, %v830
      %v832 = vrot.slane %v771, 5
      %v833 = vrot.slane %v832, 4
      %v834 = vrot.slane %v366, 5
      %v835 = vsel %vm807, %v833, %v834
      %v836 = vrot.slane %v772, 5
      %v837 = vrot.slane %v836, 4
      %v838 = vrot.slane %v367, 5
      %v839 = vsel %vm807, %v837, %v838
      %v840 = vunpack.c.l.b16 %v811
      %v841 = vunpack.c.l.b16 %v815
      %v842 = vunpack.c.l.b16 %v819
      %v843 = vunpack.c.l.b16 %v823
      %v844 = vunpack.c.l.b16 %v827
      %v845 = vunpack.c.l.b16 %v831
      %v846 = vunpack.c.l.b16 %v835
      %v847 = vunpack.c.l.b16 %v839
      %v848 = vpack.c.b16 %v841, %v840
      %v849 = vpack.c.b16 %v843, %v842
      %v850 = vpack.c.b16 %v845, %v844
      %v851 = vpack.c.b16 %v847, %v846
      %v872 = vunpack.c.l.b16 %v773
      %v873 = vunpack.c.l.b16 %v774
      %v874 = vunpack.c.l.b16 %v775
      %v875 = vunpack.c.l.b16 %v776
      %v876 = vunpack.c.l.b16 %v777
      %v877 = vunpack.c.l.b16 %v778
      %v878 = vunpack.c.l.b16 %v779
      %v879 = vunpack.c.l.b16 %v780
      %v880 = vunpack.c.l.b16 %v781
      %v881 = vunpack.c.l.b16 %v782
      %v882 = vunpack.c.l.b16 %v783
      %v883 = vunpack.c.l.b16 %v784
      %v884 = vunpack.c.l.b16 %v785
      %v885 = vunpack.c.l.b16 %v786
      %v886 = vunpack.c.l.b16 %v787
      %v887 = vunpack.c.l.b16 %v788
      %v888 = vpack.c.b16 %v873, %v872
      %v889 = vpack.c.b16 %v875, %v874
      %v890 = vpack.c.b16 %v877, %v876
      %v891 = vpack.c.b16 %v879, %v878
      %v892 = vpack.c.b16 %v881, %v880
      %v893 = vpack.c.b16 %v883, %v882
      %v894 = vpack.c.b16 %v885, %v884
      %v895 = vpack.c.b16 %v887, %v886
      %904 = vmatprep.subr.bf16.mxu0 0
      %905 = vmatpush1.bf16.msra.mxu0 %v895
      %906 = vmatprep.subr.bf16.mxu0 0
      %907 = vmatpush1.bf16.msra.mxu0 %v894
      %908 = vmatprep.subr.bf16.mxu0 0
      %909 = vmatpush1.bf16.msra.mxu0 %v893
      %910 = vmatprep.subr.bf16.mxu0 0
      %911 = vmatpush1.bf16.msra.mxu0 %v892
      %912 = vmatprep.subr.bf16.mxu0 0
      %913 = vmatpush1.bf16.msra.mxu0 %v891
      %914 = vmatprep.subr.bf16.mxu0 0
      %915 = vmatpush1.bf16.msra.mxu0 %v890
      %916 = vmatprep.subr.bf16.mxu0 0
      %917 = vmatpush1.bf16.msra.mxu0 %v889
      %918 = vmatprep.subr.bf16.mxu0 0
      %919 = vmatpush1.bf16.msra.mxu0 %v888
      %920 = vmatprep.subr.bf16.mxu0 0
      %921 = vmatpush2.bf16.msra.mxu0 0
      %922 = vmatprep.subr.bf16.mxu0 0
      %923 = vmatpush2.bf16.msra.mxu0 0
      %924 = vmatprep.subr.bf16.mxu0 0
      %925 = vmatpush2.bf16.msra.mxu0 0
      %926 = vmatprep.subr.bf16.mxu0 0
      %927 = vmatpush2.bf16.msra.mxu0 0
      %928 = vmatprep.subr.bf16.mxu0 0
      %929 = vmatpush2.bf16.msra.mxu0 0
      %930 = vmatprep.subr.bf16.mxu0 0
      %931 = vmatpush2.bf16.msra.mxu0 0
      %932 = vmatprep.subr.bf16.mxu0 0
      %933 = vmatpush2.bf16.msra.mxu0 0
      %934 = vmatprep.subr.bf16.mxu0 0
      %935 = vmatpush2.bf16.msra.mxu0 0
      %936 = vmatprep.mubr.bf16.mxu0 0
      %937 = vmatmul.mubr.bf16.gmra.mxu0 %v848
      %v938 = vpop.f32.mrf.mxu0
      %v939 = vadd.f32 0.0, %v938
      %v940 = vpop.f32.mrf.mxu0
      %v941 = vpop.f32.mrf.mxu0
      %v942 = vadd.f32 0.0, %v941
      %v943 = vpop.f32.mrf.mxu0
      %944 = vmatprep.mubr.bf16.mxu0 0
      %945 = vmatmul.mubr.bf16.gmra.mxu0 %v849
      %v946 = vpop.f32.mrf.mxu0
      %v947 = vadd.f32 0.0, %v946
      %v948 = vpop.f32.mrf.mxu0
      %v949 = vpop.f32.mrf.mxu0
      %v950 = vadd.f32 0.0, %v949
      %v951 = vpop.f32.mrf.mxu0
      %952 = vmatprep.mubr.bf16.mxu0 0
      %953 = vmatmul.mubr.bf16.gmra.mxu0 %v850
      %v954 = vpop.f32.mrf.mxu0
      %v955 = vadd.f32 0.0, %v954
      %v956 = vpop.f32.mrf.mxu0
      %v957 = vpop.f32.mrf.mxu0
      %v958 = vadd.f32 0.0, %v957
      %v959 = vpop.f32.mrf.mxu0
      %960 = vmatprep.mubr.bf16.mxu0 0
      %961 = vmatmul.mubr.bf16.gmra.mxu0 %v851
      %v962 = vpop.f32.mrf.mxu0
      %v963 = vadd.f32 0.0, %v962
      %v964 = vpop.f32.mrf.mxu0
      %v965 = vpop.f32.mrf.mxu0
      %v966 = vadd.f32 0.0, %v965
      %v967 = vpop.f32.mrf.mxu0
      %968 = vdwg.mxu0
      %v969 = vadd.f32 %v735, %v939
      %v970 = vadd.f32 %v738, %v942
      %v971 = vadd.f32 %v743, %v947
      %v972 = vadd.f32 %v746, %v950
      %v973 = vadd.f32 %v751, %v955
      %v974 = vadd.f32 %v754, %v958
      %v975 = vadd.f32 %v759, %v963
      %v976 = vadd.f32 %v762, %v966
      %s977 = sadd.s32 %s332, 1
      %s978 = smul.u32 %s977, 2
      %s979 = smul.addr %s978, 4
      %s980 = scalar_lea.vmem %s301, %s979
      %v981 = vld [vmem:[%s980] sm:$0xf]
      %v982 = vld [vmem:[%s980 + $0x8] sm:$0xf]
      %v983 = vld [vmem:[%s980 + $0x10] sm:$0xf]
      %v984 = vld [vmem:[%s980 + $0x18] sm:$0xf]
      %v985 = vld [vmem:[%s980 + $0x20] sm:$0xf]
      %v986 = vld [vmem:[%s980 + $0x28] sm:$0xf]
      %v987 = vld [vmem:[%s980 + $0x30] sm:$0xf]
      %v988 = vld [vmem:[%s980 + $0x38] sm:$0xf]
      %v989 = vld [vmem:[%s310 + $0xc0] sm:$0xf]
      %v990 = vld [vmem:[%s310 + $0xc4] sm:$0xf]
      %v991 = vld [vmem:[%s310 + $0xc8] sm:$0xf]
      %v992 = vld [vmem:[%s310 + $0xcc] sm:$0xf]
      %v993 = vld [vmem:[%s310 + $0xd0] sm:$0xf]
      %v994 = vld [vmem:[%s310 + $0xd4] sm:$0xf]
      %v995 = vld [vmem:[%s310 + $0xd8] sm:$0xf]
      %v996 = vld [vmem:[%s310 + $0xdc] sm:$0xf]
      %v997 = vld [vmem:[%s310 + $0xe0] sm:$0xf]
      %v998 = vld [vmem:[%s310 + $0xe4] sm:$0xf]
      %v999 = vld [vmem:[%s310 + $0xe8] sm:$0xf]
      %v1000 = vld [vmem:[%s310 + $0xec] sm:$0xf]
      %v1001 = vld [vmem:[%s310 + $0xf0] sm:$0xf]
      %v1002 = vld [vmem:[%s310 + $0xf4] sm:$0xf]
      %v1003 = vld [vmem:[%s310 + $0xf8] sm:$0xf]
      %v1004 = vld [vmem:[%s310 + $0xfc] sm:$0xf]
      %v1013 = vunpack.c.l.b16 %v981
      %v1014 = vunpack.c.l.b16 %v982
      %v1015 = vunpack.c.l.b16 %v983
      %v1016 = vunpack.c.l.b16 %v984
      %v1017 = vunpack.c.l.b16 %v985
      %v1018 = vunpack.c.l.b16 %v986
      %v1019 = vunpack.c.l.b16 %v987
      %v1020 = vunpack.c.l.b16 %v988
      %v1021 = vpack.c.b16 %v1014, %v1013
      %v1022 = vpack.c.b16 %v1016, %v1015
      %v1023 = vpack.c.b16 %v1018, %v1017
      %v1024 = vpack.c.b16 %v1020, %v1019
      %v1045 = vunpack.c.l.b16 %v989
      %v1046 = vunpack.c.l.b16 %v990
      %v1047 = vunpack.c.l.b16 %v991
      %v1048 = vunpack.c.l.b16 %v992
      %v1049 = vunpack.c.l.b16 %v993
      %v1050 = vunpack.c.l.b16 %v994
      %v1051 = vunpack.c.l.b16 %v995
      %v1052 = vunpack.c.l.b16 %v996
      %v1053 = vunpack.c.l.b16 %v997
      %v1054 = vunpack.c.l.b16 %v998
      %v1055 = vunpack.c.l.b16 %v999
      %v1056 = vunpack.c.l.b16 %v1000
      %v1057 = vunpack.c.l.b16 %v1001
      %v1058 = vunpack.c.l.b16 %v1002
      %v1059 = vunpack.c.l.b16 %v1003
      %v1060 = vunpack.c.l.b16 %v1004
      %v1061 = vpack.c.b16 %v1046, %v1045
      %v1062 = vpack.c.b16 %v1048, %v1047
      %v1063 = vpack.c.b16 %v1050, %v1049
      %v1064 = vpack.c.b16 %v1052, %v1051
      %v1065 = vpack.c.b16 %v1054, %v1053
      %v1066 = vpack.c.b16 %v1056, %v1055
      %v1067 = vpack.c.b16 %v1058, %v1057
      %v1068 = vpack.c.b16 %v1060, %v1059
      %1077 = vmatprep.subr.bf16.mxu0 0
      %1078 = vmatpush1.bf16.msra.mxu0 %v1068
      %1079 = vmatprep.subr.bf16.mxu0 0
      %1080 = vmatpush1.bf16.msra.mxu0 %v1067
      %1081 = vmatprep.subr.bf16.mxu0 0
      %1082 = vmatpush1.bf16.msra.mxu0 %v1066
      %1083 = vmatprep.subr.bf16.mxu0 0
      %1084 = vmatpush1.bf16.msra.mxu0 %v1065
      %1085 = vmatprep.subr.bf16.mxu0 0
      %1086 = vmatpush1.bf16.msra.mxu0 %v1064
      %1087 = vmatprep.subr.bf16.mxu0 0
      %1088 = vmatpush1.bf16.msra.mxu0 %v1063
      %1089 = vmatprep.subr.bf16.mxu0 0
      %1090 = vmatpush1.bf16.msra.mxu0 %v1062
      %1091 = vmatprep.subr.bf16.mxu0 0
      %1092 = vmatpush1.bf16.msra.mxu0 %v1061
      %1093 = vmatprep.subr.bf16.mxu0 0
      %1094 = vmatpush2.bf16.msra.mxu0 0
      %1095 = vmatprep.subr.bf16.mxu0 0
      %1096 = vmatpush2.bf16.msra.mxu0 0
      %1097 = vmatprep.subr.bf16.mxu0 0
      %1098 = vmatpush2.bf16.msra.mxu0 0
      %1099 = vmatprep.subr.bf16.mxu0 0
      %1100 = vmatpush2.bf16.msra.mxu0 0
      %1101 = vmatprep.subr.bf16.mxu0 0
      %1102 = vmatpush2.bf16.msra.mxu0 0
      %1103 = vmatprep.subr.bf16.mxu0 0
      %1104 = vmatpush2.bf16.msra.mxu0 0
      %1105 = vmatprep.subr.bf16.mxu0 0
      %1106 = vmatpush2.bf16.msra.mxu0 0
      %1107 = vmatprep.subr.bf16.mxu0 0
      %1108 = vmatpush2.bf16.msra.mxu0 0
      %1109 = vmatprep.mubr.bf16.mxu0 0
      %1110 = vmatmul.mubr.bf16.gmra.mxu0 %v1021
      %v1111 = vpop.f32.mrf.mxu0
      %v1112 = vadd.f32 0.0, %v1111
      %v1113 = vpop.f32.mrf.mxu0
      %v1114 = vpop.f32.mrf.mxu0
      %v1115 = vadd.f32 0.0, %v1114
      %v1116 = vpop.f32.mrf.mxu0
      %1117 = vmatprep.mubr.bf16.mxu0 0
      %1118 = vmatmul.mubr.bf16.gmra.mxu0 %v1022
      %v1119 = vpop.f32.mrf.mxu0
      %v1120 = vadd.f32 0.0, %v1119
      %v1121 = vpop.f32.mrf.mxu0
      %v1122 = vpop.f32.mrf.mxu0
      %v1123 = vadd.f32 0.0, %v1122
      %v1124 = vpop.f32.mrf.mxu0
      %1125 = vmatprep.mubr.bf16.mxu0 0
      %1126 = vmatmul.mubr.bf16.gmra.mxu0 %v1023
      %v1127 = vpop.f32.mrf.mxu0
      %v1128 = vadd.f32 0.0, %v1127
      %v1129 = vpop.f32.mrf.mxu0
      %v1130 = vpop.f32.mrf.mxu0
      %v1131 = vadd.f32 0.0, %v1130
      %v1132 = vpop.f32.mrf.mxu0
      %1133 = vmatprep.mubr.bf16.mxu0 0
      %1134 = vmatmul.mubr.bf16.gmra.mxu0 %v1024
      %v1135 = vpop.f32.mrf.mxu0
      %v1136 = vadd.f32 0.0, %v1135
      %v1137 = vpop.f32.mrf.mxu0
      %v1138 = vpop.f32.mrf.mxu0
      %v1139 = vadd.f32 0.0, %v1138
      %v1140 = vpop.f32.mrf.mxu0
      %1141 = vdwg.mxu0
      %v1142 = vadd.f32 %v969, %v1112
      %v1143 = vadd.f32 %v970, %v1115
      %v1144 = vadd.f32 %v971, %v1120
      %v1145 = vadd.f32 %v972, %v1123
      %v1146 = vadd.f32 %v973, %v1128
      %v1147 = vadd.f32 %v974, %v1131
      %v1148 = vadd.f32 %v975, %v1136
      %v1149 = vadd.f32 %v976, %v1139
      %v1150 = vld [vmem:[%s980] sm:$0xf]
      %v1151 = vld [vmem:[%s980 + $0x4] sm:$0x1]
      %v1152 = vld [vmem:[%s980 + $0x8] sm:$0xf]
      %v1153 = vld [vmem:[%s980 + $0xc] sm:$0x1]
      %v1154 = vld [vmem:[%s980 + $0x10] sm:$0xf]
      %v1155 = vld [vmem:[%s980 + $0x14] sm:$0x1]
      %v1156 = vld [vmem:[%s980 + $0x18] sm:$0xf]
      %v1157 = vld [vmem:[%s980 + $0x1c] sm:$0x1]
      %v1158 = vld [vmem:[%s980 + $0x20] sm:$0xf]
      %v1159 = vld [vmem:[%s980 + $0x24] sm:$0x1]
      %v1160 = vld [vmem:[%s980 + $0x28] sm:$0xf]
      %v1161 = vld [vmem:[%s980 + $0x2c] sm:$0x1]
      %v1162 = vld [vmem:[%s980 + $0x30] sm:$0xf]
      %v1163 = vld [vmem:[%s980 + $0x34] sm:$0x1]
      %v1164 = vld [vmem:[%s980 + $0x38] sm:$0xf]
      %v1165 = vld [vmem:[%s980 + $0x3c] sm:$0x1]
      %v1166 = vld [vmem:[%s310 + $0x100] sm:$0xf]
      %v1167 = vld [vmem:[%s310 + $0x104] sm:$0xf]
      %v1168 = vld [vmem:[%s310 + $0x108] sm:$0xf]
      %v1169 = vld [vmem:[%s310 + $0x10c] sm:$0xf]
      %v1170 = vld [vmem:[%s310 + $0x110] sm:$0xf]
      %v1171 = vld [vmem:[%s310 + $0x114] sm:$0xf]
      %v1172 = vld [vmem:[%s310 + $0x118] sm:$0xf]
      %v1173 = vld [vmem:[%s310 + $0x11c] sm:$0xf]
      %v1174 = vld [vmem:[%s310 + $0x120] sm:$0xf]
      %v1175 = vld [vmem:[%s310 + $0x124] sm:$0xf]
      %v1176 = vld [vmem:[%s310 + $0x128] sm:$0xf]
      %v1177 = vld [vmem:[%s310 + $0x12c] sm:$0xf]
      %v1178 = vld [vmem:[%s310 + $0x130] sm:$0xf]
      %v1179 = vld [vmem:[%s310 + $0x134] sm:$0xf]
      %v1180 = vld [vmem:[%s310 + $0x138] sm:$0xf]
      %v1181 = vld [vmem:[%s310 + $0x13c] sm:$0xf]
      %v1183 = vshrl.u32 %v1150, 16
      %v1185 = vrot.slane %v1183, 4
      %v1186 = vshll.u32 %v1150, 16
      %v1188 = vrot.slane %v1186, 5
      %v1189 = vor.u32 %v1185, %v1188
      %v1190 = vrot.slane %v1189, 4
      %v1192 = vshll.u32 %v1151, 16
      %v1194 = vrot.slane %v1192, 5
      %v1195 = vsel %vm386, %v1190, %v1194
      %v1197 = vshrl.u32 %v1152, 16
      %v1199 = vrot.slane %v1197, 4
      %v1200 = vshll.u32 %v1152, 16
      %v1202 = vrot.slane %v1200, 5
      %v1203 = vor.u32 %v1199, %v1202
      %v1204 = vrot.slane %v1203, 4
      %v1206 = vshll.u32 %v1153, 16
      %v1208 = vrot.slane %v1206, 5
      %v1209 = vsel %vm386, %v1204, %v1208
      %v1211 = vshrl.u32 %v1154, 16
      %v1213 = vrot.slane %v1211, 4
      %v1214 = vshll.u32 %v1154, 16
      %v1216 = vrot.slane %v1214, 5
      %v1217 = vor.u32 %v1213, %v1216
      %v1218 = vrot.slane %v1217, 4
      %v1220 = vshll.u32 %v1155, 16
      %v1222 = vrot.slane %v1220, 5
      %v1223 = vsel %vm386, %v1218, %v1222
      %v1225 = vshrl.u32 %v1156, 16
      %v1227 = vrot.slane %v1225, 4
      %v1228 = vshll.u32 %v1156, 16
      %v1230 = vrot.slane %v1228, 5
      %v1231 = vor.u32 %v1227, %v1230
      %v1232 = vrot.slane %v1231, 4
      %v1234 = vshll.u32 %v1157, 16
      %v1236 = vrot.slane %v1234, 5
      %v1237 = vsel %vm386, %v1232, %v1236
      %v1239 = vshrl.u32 %v1158, 16
      %v1241 = vrot.slane %v1239, 4
      %v1242 = vshll.u32 %v1158, 16
      %v1244 = vrot.slane %v1242, 5
      %v1245 = vor.u32 %v1241, %v1244
      %v1246 = vrot.slane %v1245, 4
      %v1248 = vshll.u32 %v1159, 16
      %v1250 = vrot.slane %v1248, 5
      %v1251 = vsel %vm386, %v1246, %v1250
      %v1253 = vshrl.u32 %v1160, 16
      %v1255 = vrot.slane %v1253, 4
      %v1256 = vshll.u32 %v1160, 16
      %v1258 = vrot.slane %v1256, 5
      %v1259 = vor.u32 %v1255, %v1258
      %v1260 = vrot.slane %v1259, 4
      %v1262 = vshll.u32 %v1161, 16
      %v1264 = vrot.slane %v1262, 5
      %v1265 = vsel %vm386, %v1260, %v1264
      %v1267 = vshrl.u32 %v1162, 16
      %v1269 = vrot.slane %v1267, 4
      %v1270 = vshll.u32 %v1162, 16
      %v1272 = vrot.slane %v1270, 5
      %v1273 = vor.u32 %v1269, %v1272
      %v1274 = vrot.slane %v1273, 4
      %v1276 = vshll.u32 %v1163, 16
      %v1278 = vrot.slane %v1276, 5
      %v1279 = vsel %vm386, %v1274, %v1278
      %v1281 = vshrl.u32 %v1164, 16
      %v1283 = vrot.slane %v1281, 4
      %v1284 = vshll.u32 %v1164, 16
      %v1286 = vrot.slane %v1284, 5
      %v1287 = vor.u32 %v1283, %v1286
      %v1288 = vrot.slane %v1287, 4
      %v1290 = vshll.u32 %v1165, 16
      %v1292 = vrot.slane %v1290, 5
      %v1293 = vsel %vm386, %v1288, %v1292
      %v1294 = vunpack.c.l.b16 %v1195
      %v1295 = vunpack.c.l.b16 %v1209
      %v1296 = vunpack.c.l.b16 %v1223
      %v1297 = vunpack.c.l.b16 %v1237
      %v1298 = vunpack.c.l.b16 %v1251
      %v1299 = vunpack.c.l.b16 %v1265
      %v1300 = vunpack.c.l.b16 %v1279
      %v1301 = vunpack.c.l.b16 %v1293
      %v1302 = vpack.c.b16 %v1295, %v1294
      %v1303 = vpack.c.b16 %v1297, %v1296
      %v1304 = vpack.c.b16 %v1299, %v1298
      %v1305 = vpack.c.b16 %v1301, %v1300
      %v1326 = vunpack.c.l.b16 %v1166
      %v1327 = vunpack.c.l.b16 %v1167
      %v1328 = vunpack.c.l.b16 %v1168
      %v1329 = vunpack.c.l.b16 %v1169
      %v1330 = vunpack.c.l.b16 %v1170
      %v1331 = vunpack.c.l.b16 %v1171
      %v1332 = vunpack.c.l.b16 %v1172
      %v1333 = vunpack.c.l.b16 %v1173
      %v1334 = vunpack.c.l.b16 %v1174
      %v1335 = vunpack.c.l.b16 %v1175
      %v1336 = vunpack.c.l.b16 %v1176
      %v1337 = vunpack.c.l.b16 %v1177
      %v1338 = vunpack.c.l.b16 %v1178
      %v1339 = vunpack.c.l.b16 %v1179
      %v1340 = vunpack.c.l.b16 %v1180
      %v1341 = vunpack.c.l.b16 %v1181
      %v1342 = vpack.c.b16 %v1327, %v1326
      %v1343 = vpack.c.b16 %v1329, %v1328
      %v1344 = vpack.c.b16 %v1331, %v1330
      %v1345 = vpack.c.b16 %v1333, %v1332
      %v1346 = vpack.c.b16 %v1335, %v1334
      %v1347 = vpack.c.b16 %v1337, %v1336
      %v1348 = vpack.c.b16 %v1339, %v1338
      %v1349 = vpack.c.b16 %v1341, %v1340
      %1358 = vmatprep.subr.bf16.mxu0 0
      %1359 = vmatpush1.bf16.msra.mxu0 %v1349
      %1360 = vmatprep.subr.bf16.mxu0 0
      %1361 = vmatpush1.bf16.msra.mxu0 %v1348
      %1362 = vmatprep.subr.bf16.mxu0 0
      %1363 = vmatpush1.bf16.msra.mxu0 %v1347
      %1364 = vmatprep.subr.bf16.mxu0 0
      %1365 = vmatpush1.bf16.msra.mxu0 %v1346
      %1366 = vmatprep.subr.bf16.mxu0 0
      %1367 = vmatpush1.bf16.msra.mxu0 %v1345
      %1368 = vmatprep.subr.bf16.mxu0 0
      %1369 = vmatpush1.bf16.msra.mxu0 %v1344
      %1370 = vmatprep.subr.bf16.mxu0 0
      %1371 = vmatpush1.bf16.msra.mxu0 %v1343
      %1372 = vmatprep.subr.bf16.mxu0 0
      %1373 = vmatpush1.bf16.msra.mxu0 %v1342
      %1374 = vmatprep.subr.bf16.mxu0 0
      %1375 = vmatpush2.bf16.msra.mxu0 0
      %1376 = vmatprep.subr.bf16.mxu0 0
      %1377 = vmatpush2.bf16.msra.mxu0 0
      %1378 = vmatprep.subr.bf16.mxu0 0
      %1379 = vmatpush2.bf16.msra.mxu0 0
      %1380 = vmatprep.subr.bf16.mxu0 0
      %1381 = vmatpush2.bf16.msra.mxu0 0
      %1382 = vmatprep.subr.bf16.mxu0 0
      %1383 = vmatpush2.bf16.msra.mxu0 0
      %1384 = vmatprep.subr.bf16.mxu0 0
      %1385 = vmatpush2.bf16.msra.mxu0 0
      %1386 = vmatprep.subr.bf16.mxu0 0
      %1387 = vmatpush2.bf16.msra.mxu0 0
      %1388 = vmatprep.subr.bf16.mxu0 0
      %1389 = vmatpush2.bf16.msra.mxu0 0
      %1390 = vmatprep.mubr.bf16.mxu0 0
      %1391 = vmatmul.mubr.bf16.gmra.mxu0 %v1302
      %v1392 = vpop.f32.mrf.mxu0
      %v1393 = vadd.f32 0.0, %v1392
      %v1394 = vpop.f32.mrf.mxu0
      %v1395 = vpop.f32.mrf.mxu0
      %v1396 = vadd.f32 0.0, %v1395
      %v1397 = vpop.f32.mrf.mxu0
      %1398 = vmatprep.mubr.bf16.mxu0 0
      %1399 = vmatmul.mubr.bf16.gmra.mxu0 %v1303
      %v1400 = vpop.f32.mrf.mxu0
      %v1401 = vadd.f32 0.0, %v1400
      %v1402 = vpop.f32.mrf.mxu0
      %v1403 = vpop.f32.mrf.mxu0
      %v1404 = vadd.f32 0.0, %v1403
      %v1405 = vpop.f32.mrf.mxu0
      %1406 = vmatprep.mubr.bf16.mxu0 0
      %1407 = vmatmul.mubr.bf16.gmra.mxu0 %v1304
      %v1408 = vpop.f32.mrf.mxu0
      %v1409 = vadd.f32 0.0, %v1408
      %v1410 = vpop.f32.mrf.mxu0
      %v1411 = vpop.f32.mrf.mxu0
      %v1412 = vadd.f32 0.0, %v1411
      %v1413 = vpop.f32.mrf.mxu0
      %1414 = vmatprep.mubr.bf16.mxu0 0
      %1415 = vmatmul.mubr.bf16.gmra.mxu0 %v1305
      %v1416 = vpop.f32.mrf.mxu0
      %v1417 = vadd.f32 0.0, %v1416
      %v1418 = vpop.f32.mrf.mxu0
      %v1419 = vpop.f32.mrf.mxu0
      %v1420 = vadd.f32 0.0, %v1419
      %v1421 = vpop.f32.mrf.mxu0
      %1422 = vdwg.mxu0
      %v1423 = vadd.f32 %v1142, %v1393
      %v1424 = vadd.f32 %v1143, %v1396
      %v1425 = vadd.f32 %v1144, %v1401
      %v1426 = vadd.f32 %v1145, %v1404
      %v1427 = vadd.f32 %v1146, %v1409
      %v1428 = vadd.f32 %v1147, %v1412
      %v1429 = vadd.f32 %v1148, %v1417
      %v1430 = vadd.f32 %v1149, %v1420
      %v1431 = vld [vmem:[%s980] sm:$0xe]
      %v1432 = vld [vmem:[%s980 + $0x8] sm:$0xe]
      %v1433 = vld [vmem:[%s980 + $0x10] sm:$0xe]
      %v1434 = vld [vmem:[%s980 + $0x18] sm:$0xe]
      %v1435 = vld [vmem:[%s980 + $0x20] sm:$0xe]
      %v1436 = vld [vmem:[%s980 + $0x28] sm:$0xe]
      %v1437 = vld [vmem:[%s980 + $0x30] sm:$0xe]
      %v1438 = vld [vmem:[%s980 + $0x38] sm:$0xe]
      %v1439 = vld [vmem:[%s310 + $0x140] sm:$0xf]
      %v1440 = vld [vmem:[%s310 + $0x144] sm:$0xf]
      %v1441 = vld [vmem:[%s310 + $0x148] sm:$0xf]
      %v1442 = vld [vmem:[%s310 + $0x14c] sm:$0xf]
      %v1443 = vld [vmem:[%s310 + $0x150] sm:$0xf]
      %v1444 = vld [vmem:[%s310 + $0x154] sm:$0xf]
      %v1445 = vld [vmem:[%s310 + $0x158] sm:$0xf]
      %v1446 = vld [vmem:[%s310 + $0x15c] sm:$0xf]
      %v1447 = vld [vmem:[%s310 + $0x160] sm:$0xf]
      %v1448 = vld [vmem:[%s310 + $0x164] sm:$0xf]
      %v1449 = vld [vmem:[%s310 + $0x168] sm:$0xf]
      %v1450 = vld [vmem:[%s310 + $0x16c] sm:$0xf]
      %v1451 = vld [vmem:[%s310 + $0x170] sm:$0xf]
      %v1452 = vld [vmem:[%s310 + $0x174] sm:$0xf]
      %v1453 = vld [vmem:[%s310 + $0x178] sm:$0xf]
      %v1454 = vld [vmem:[%s310 + $0x17c] sm:$0xf]
      %v1471 = vrot.slane %v1431, 5
      %v1472 = vrot.slane %v1471, 4
      %v1473 = vrot.slane %v1151, 5
      %v1474 = vsel %vm807, %v1472, %v1473
      %v1475 = vrot.slane %v1432, 5
      %v1476 = vrot.slane %v1475, 4
      %v1477 = vrot.slane %v1153, 5
      %v1478 = vsel %vm807, %v1476, %v1477
      %v1479 = vrot.slane %v1433, 5
      %v1480 = vrot.slane %v1479, 4
      %v1481 = vrot.slane %v1155, 5
      %v1482 = vsel %vm807, %v1480, %v1481
      %v1483 = vrot.slane %v1434, 5
      %v1484 = vrot.slane %v1483, 4
      %v1485 = vrot.slane %v1157, 5
      %v1486 = vsel %vm807, %v1484, %v1485
      %v1487 = vrot.slane %v1435, 5
      %v1488 = vrot.slane %v1487, 4
      %v1489 = vrot.slane %v1159, 5
      %v1490 = vsel %vm807, %v1488, %v1489
      %v1491 = vrot.slane %v1436, 5
      %v1492 = vrot.slane %v1491, 4
      %v1493 = vrot.slane %v1161, 5
      %v1494 = vsel %vm807, %v1492, %v1493
      %v1495 = vrot.slane %v1437, 5
      %v1496 = vrot.slane %v1495, 4
      %v1497 = vrot.slane %v1163, 5
      %v1498 = vsel %vm807, %v1496, %v1497
      %v1499 = vrot.slane %v1438, 5
      %v1500 = vrot.slane %v1499, 4
      %v1501 = vrot.slane %v1165, 5
      %v1502 = vsel %vm807, %v1500, %v1501
      %v1503 = vunpack.c.l.b16 %v1474
      %v1504 = vunpack.c.l.b16 %v1478
      %v1505 = vunpack.c.l.b16 %v1482
      %v1506 = vunpack.c.l.b16 %v1486
      %v1507 = vunpack.c.l.b16 %v1490
      %v1508 = vunpack.c.l.b16 %v1494
      %v1509 = vunpack.c.l.b16 %v1498
      %v1510 = vunpack.c.l.b16 %v1502
      %v1511 = vpack.c.b16 %v1504, %v1503
      %v1512 = vpack.c.b16 %v1506, %v1505
      %v1513 = vpack.c.b16 %v1508, %v1507
      %v1514 = vpack.c.b16 %v1510, %v1509
      %v1535 = vunpack.c.l.b16 %v1439
      %v1536 = vunpack.c.l.b16 %v1440
      %v1537 = vunpack.c.l.b16 %v1441
      %v1538 = vunpack.c.l.b16 %v1442
      %v1539 = vunpack.c.l.b16 %v1443
      %v1540 = vunpack.c.l.b16 %v1444
      %v1541 = vunpack.c.l.b16 %v1445
      %v1542 = vunpack.c.l.b16 %v1446
      %v1543 = vunpack.c.l.b16 %v1447
      %v1544 = vunpack.c.l.b16 %v1448
      %v1545 = vunpack.c.l.b16 %v1449
      %v1546 = vunpack.c.l.b16 %v1450
      %v1547 = vunpack.c.l.b16 %v1451
      %v1548 = vunpack.c.l.b16 %v1452
      %v1549 = vunpack.c.l.b16 %v1453
      %v1550 = vunpack.c.l.b16 %v1454
      %v1551 = vpack.c.b16 %v1536, %v1535
      %v1552 = vpack.c.b16 %v1538, %v1537
      %v1553 = vpack.c.b16 %v1540, %v1539
      %v1554 = vpack.c.b16 %v1542, %v1541
      %v1555 = vpack.c.b16 %v1544, %v1543
      %v1556 = vpack.c.b16 %v1546, %v1545
      %v1557 = vpack.c.b16 %v1548, %v1547
      %v1558 = vpack.c.b16 %v1550, %v1549
      %1567 = vmatprep.subr.bf16.mxu0 0
      %1568 = vmatpush1.bf16.msra.mxu0 %v1558
      %1569 = vmatprep.subr.bf16.mxu0 0
      %1570 = vmatpush1.bf16.msra.mxu0 %v1557
      %1571 = vmatprep.subr.bf16.mxu0 0
      %1572 = vmatpush1.bf16.msra.mxu0 %v1556
      %1573 = vmatprep.subr.bf16.mxu0 0
      %1574 = vmatpush1.bf16.msra.mxu0 %v1555
      %1575 = vmatprep.subr.bf16.mxu0 0
      %1576 = vmatpush1.bf16.msra.mxu0 %v1554
      %1577 = vmatprep.subr.bf16.mxu0 0
      %1578 = vmatpush1.bf16.msra.mxu0 %v1553
      %1579 = vmatprep.subr.bf16.mxu0 0
      %1580 = vmatpush1.bf16.msra.mxu0 %v1552
      %1581 = vmatprep.subr.bf16.mxu0 0
      %1582 = vmatpush1.bf16.msra.mxu0 %v1551
      %1583 = vmatprep.subr.bf16.mxu0 0
      %1584 = vmatpush2.bf16.msra.mxu0 0
      %1585 = vmatprep.subr.bf16.mxu0 0
      %1586 = vmatpush2.bf16.msra.mxu0 0
      %1587 = vmatprep.subr.bf16.mxu0 0
      %1588 = vmatpush2.bf16.msra.mxu0 0
      %1589 = vmatprep.subr.bf16.mxu0 0
      %1590 = vmatpush2.bf16.msra.mxu0 0
      %1591 = vmatprep.subr.bf16.mxu0 0
      %1592 = vmatpush2.bf16.msra.mxu0 0
      %1593 = vmatprep.subr.bf16.mxu0 0
      %1594 = vmatpush2.bf16.msra.mxu0 0
      %1595 = vmatprep.subr.bf16.mxu0 0
      %1596 = vmatpush2.bf16.msra.mxu0 0
      %1597 = vmatprep.subr.bf16.mxu0 0
      %1598 = vmatpush2.bf16.msra.mxu0 0
      %1599 = vmatprep.mubr.bf16.mxu0 0
      %1600 = vmatmul.mubr.bf16.gmra.mxu0 %v1511
      %v1601 = vpop.f32.mrf.mxu0
      %v1602 = vadd.f32 0.0, %v1601
      %v1603 = vpop.f32.mrf.mxu0
      %v1604 = vpop.f32.mrf.mxu0
      %v1605 = vadd.f32 0.0, %v1604
      %v1606 = vpop.f32.mrf.mxu0
      %1607 = vmatprep.mubr.bf16.mxu0 0
      %1608 = vmatmul.mubr.bf16.gmra.mxu0 %v1512
      %v1609 = vpop.f32.mrf.mxu0
      %v1610 = vadd.f32 0.0, %v1609
      %v1611 = vpop.f32.mrf.mxu0
      %v1612 = vpop.f32.mrf.mxu0
      %v1613 = vadd.f32 0.0, %v1612
      %v1614 = vpop.f32.mrf.mxu0
      %1615 = vmatprep.mubr.bf16.mxu0 0
      %1616 = vmatmul.mubr.bf16.gmra.mxu0 %v1513
      %v1617 = vpop.f32.mrf.mxu0
      %v1618 = vadd.f32 0.0, %v1617
      %v1619 = vpop.f32.mrf.mxu0
      %v1620 = vpop.f32.mrf.mxu0
      %v1621 = vadd.f32 0.0, %v1620
      %v1622 = vpop.f32.mrf.mxu0
      %1623 = vmatprep.mubr.bf16.mxu0 0
      %1624 = vmatmul.mubr.bf16.gmra.mxu0 %v1514
      %v1625 = vpop.f32.mrf.mxu0
      %v1626 = vadd.f32 0.0, %v1625
      %v1627 = vpop.f32.mrf.mxu0
      %v1628 = vpop.f32.mrf.mxu0
      %v1629 = vadd.f32 0.0, %v1628
      %v1630 = vpop.f32.mrf.mxu0
      %1631 = vdwg.mxu0
      %v1632 = vadd.f32 %v1423, %v1602
      %v1633 = vadd.f32 %v1424, %v1605
      %v1634 = vadd.f32 %v1425, %v1610
      %v1635 = vadd.f32 %v1426, %v1613
      %v1636 = vadd.f32 %v1427, %v1618
      %v1637 = vadd.f32 %v1428, %v1621
      %v1638 = vadd.f32 %v1429, %v1626
      %v1639 = vadd.f32 %v1430, %v1629
      %s1640 = sadd.s32 %s332, 2
      %s1641 = smul.u32 %s1640, 2
      %s1642 = smul.addr %s1641, 4
      %s1643 = scalar_lea.vmem %s301, %s1642
      %v1644 = vld [vmem:[%s1643] sm:$0xf]
      %v1645 = vld [vmem:[%s1643 + $0x8] sm:$0xf]
      %v1646 = vld [vmem:[%s1643 + $0x10] sm:$0xf]
      %v1647 = vld [vmem:[%s1643 + $0x18] sm:$0xf]
      %v1648 = vld [vmem:[%s1643 + $0x20] sm:$0xf]
      %v1649 = vld [vmem:[%s1643 + $0x28] sm:$0xf]
      %v1650 = vld [vmem:[%s1643 + $0x30] sm:$0xf]
      %v1651 = vld [vmem:[%s1643 + $0x38] sm:$0xf]
      %v1652 = vld [vmem:[%s310 + $0x180] sm:$0xf]
      %v1653 = vld [vmem:[%s310 + $0x184] sm:$0xf]
      %v1654 = vld [vmem:[%s310 + $0x188] sm:$0xf]
      %v1655 = vld [vmem:[%s310 + $0x18c] sm:$0xf]
      %v1656 = vld [vmem:[%s310 + $0x190] sm:$0xf]
      %v1657 = vld [vmem:[%s310 + $0x194] sm:$0xf]
      %v1658 = vld [vmem:[%s310 + $0x198] sm:$0xf]
      %v1659 = vld [vmem:[%s310 + $0x19c] sm:$0xf]
      %v1660 = vld [vmem:[%s310 + $0x1a0] sm:$0xf]
      %v1661 = vld [vmem:[%s310 + $0x1a4] sm:$0xf]
      %v1662 = vld [vmem:[%s310 + $0x1a8] sm:$0xf]
      %v1663 = vld [vmem:[%s310 + $0x1ac] sm:$0xf]
      %v1664 = vld [vmem:[%s310 + $0x1b0] sm:$0xf]
      %v1665 = vld [vmem:[%s310 + $0x1b4] sm:$0xf]
      %v1666 = vld [vmem:[%s310 + $0x1b8] sm:$0xf]
      %v1667 = vld [vmem:[%s310 + $0x1bc] sm:$0xf]
      %v1676 = vunpack.c.l.b16 %v1644
      %v1677 = vunpack.c.l.b16 %v1645
      %v1678 = vunpack.c.l.b16 %v1646
      %v1679 = vunpack.c.l.b16 %v1647
      %v1680 = vunpack.c.l.b16 %v1648
      %v1681 = vunpack.c.l.b16 %v1649
      %v1682 = vunpack.c.l.b16 %v1650
      %v1683 = vunpack.c.l.b16 %v1651
      %v1684 = vpack.c.b16 %v1677, %v1676
      %v1685 = vpack.c.b16 %v1679, %v1678
      %v1686 = vpack.c.b16 %v1681, %v1680
      %v1687 = vpack.c.b16 %v1683, %v1682
      %v1708 = vunpack.c.l.b16 %v1652
      %v1709 = vunpack.c.l.b16 %v1653
      %v1710 = vunpack.c.l.b16 %v1654
      %v1711 = vunpack.c.l.b16 %v1655
      %v1712 = vunpack.c.l.b16 %v1656
      %v1713 = vunpack.c.l.b16 %v1657
      %v1714 = vunpack.c.l.b16 %v1658
      %v1715 = vunpack.c.l.b16 %v1659
      %v1716 = vunpack.c.l.b16 %v1660
      %v1717 = vunpack.c.l.b16 %v1661
      %v1718 = vunpack.c.l.b16 %v1662
      %v1719 = vunpack.c.l.b16 %v1663
      %v1720 = vunpack.c.l.b16 %v1664
      %v1721 = vunpack.c.l.b16 %v1665
      %v1722 = vunpack.c.l.b16 %v1666
      %v1723 = vunpack.c.l.b16 %v1667
      %v1724 = vpack.c.b16 %v1709, %v1708
      %v1725 = vpack.c.b16 %v1711, %v1710
      %v1726 = vpack.c.b16 %v1713, %v1712
      %v1727 = vpack.c.b16 %v1715, %v1714
      %v1728 = vpack.c.b16 %v1717, %v1716
      %v1729 = vpack.c.b16 %v1719, %v1718
      %v1730 = vpack.c.b16 %v1721, %v1720
      %v1731 = vpack.c.b16 %v1723, %v1722
      %1740 = vmatprep.subr.bf16.mxu0 0
      %1741 = vmatpush1.bf16.msra.mxu0 %v1731
      %1742 = vmatprep.subr.bf16.mxu0 0
      %1743 = vmatpush1.bf16.msra.mxu0 %v1730
      %1744 = vmatprep.subr.bf16.mxu0 0
      %1745 = vmatpush1.bf16.msra.mxu0 %v1729
      %1746 = vmatprep.subr.bf16.mxu0 0
      %1747 = vmatpush1.bf16.msra.mxu0 %v1728
      %1748 = vmatprep.subr.bf16.mxu0 0
      %1749 = vmatpush1.bf16.msra.mxu0 %v1727
      %1750 = vmatprep.subr.bf16.mxu0 0
      %1751 = vmatpush1.bf16.msra.mxu0 %v1726
      %1752 = vmatprep.subr.bf16.mxu0 0
      %1753 = vmatpush1.bf16.msra.mxu0 %v1725
      %1754 = vmatprep.subr.bf16.mxu0 0
      %1755 = vmatpush1.bf16.msra.mxu0 %v1724
      %1756 = vmatprep.subr.bf16.mxu0 0
      %1757 = vmatpush2.bf16.msra.mxu0 0
      %1758 = vmatprep.subr.bf16.mxu0 0
      %1759 = vmatpush2.bf16.msra.mxu0 0
      %1760 = vmatprep.subr.bf16.mxu0 0
      %1761 = vmatpush2.bf16.msra.mxu0 0
      %1762 = vmatprep.subr.bf16.mxu0 0
      %1763 = vmatpush2.bf16.msra.mxu0 0
      %1764 = vmatprep.subr.bf16.mxu0 0
      %1765 = vmatpush2.bf16.msra.mxu0 0
      %1766 = vmatprep.subr.bf16.mxu0 0
      %1767 = vmatpush2.bf16.msra.mxu0 0
      %1768 = vmatprep.subr.bf16.mxu0 0
      %1769 = vmatpush2.bf16.msra.mxu0 0
      %1770 = vmatprep.subr.bf16.mxu0 0
      %1771 = vmatpush2.bf16.msra.mxu0 0
      %1772 = vmatprep.mubr.bf16.mxu0 0
      %1773 = vmatmul.mubr.bf16.gmra.mxu0 %v1684
      %v1774 = vpop.f32.mrf.mxu0
      %v1775 = vadd.f32 0.0, %v1774
      %v1776 = vpop.f32.mrf.mxu0
      %v1777 = vpop.f32.mrf.mxu0
      %v1778 = vadd.f32 0.0, %v1777
      %v1779 = vpop.f32.mrf.mxu0
      %1780 = vmatprep.mubr.bf16.mxu0 0
      %1781 = vmatmul.mubr.bf16.gmra.mxu0 %v1685
      %v1782 = vpop.f32.mrf.mxu0
      %v1783 = vadd.f32 0.0, %v1782
      %v1784 = vpop.f32.mrf.mxu0
      %v1785 = vpop.f32.mrf.mxu0
      %v1786 = vadd.f32 0.0, %v1785
      %v1787 = vpop.f32.mrf.mxu0
      %1788 = vmatprep.mubr.bf16.mxu0 0
      %1789 = vmatmul.mubr.bf16.gmra.mxu0 %v1686
      %v1790 = vpop.f32.mrf.mxu0
      %v1791 = vadd.f32 0.0, %v1790
      %v1792 = vpop.f32.mrf.mxu0
      %v1793 = vpop.f32.mrf.mxu0
      %v1794 = vadd.f32 0.0, %v1793
      %v1795 = vpop.f32.mrf.mxu0
      %1796 = vmatprep.mubr.bf16.mxu0 0
      %1797 = vmatmul.mubr.bf16.gmra.mxu0 %v1687
      %v1798 = vpop.f32.mrf.mxu0
      %v1799 = vadd.f32 0.0, %v1798
      %v1800 = vpop.f32.mrf.mxu0
      %v1801 = vpop.f32.mrf.mxu0
      %v1802 = vadd.f32 0.0, %v1801
      %v1803 = vpop.f32.mrf.mxu0
      %1804 = vdwg.mxu0
      %v1805 = vadd.f32 %v1632, %v1775
      %v1806 = vadd.f32 %v1633, %v1778
      %v1807 = vadd.f32 %v1634, %v1783
      %v1808 = vadd.f32 %v1635, %v1786
      %v1809 = vadd.f32 %v1636, %v1791
      %v1810 = vadd.f32 %v1637, %v1794
      %v1811 = vadd.f32 %v1638, %v1799
      %v1812 = vadd.f32 %v1639, %v1802
      %v1813 = vld [vmem:[%s1643] sm:$0xf]
      %v1814 = vld [vmem:[%s1643 + $0x4] sm:$0x1]
      %v1815 = vld [vmem:[%s1643 + $0x8] sm:$0xf]
      %v1816 = vld [vmem:[%s1643 + $0xc] sm:$0x1]
      %v1817 = vld [vmem:[%s1643 + $0x10] sm:$0xf]
      %v1818 = vld [vmem:[%s1643 + $0x14] sm:$0x1]
      %v1819 = vld [vmem:[%s1643 + $0x18] sm:$0xf]
      %v1820 = vld [vmem:[%s1643 + $0x1c] sm:$0x1]
      %v1821 = vld [vmem:[%s1643 + $0x20] sm:$0xf]
      %v1822 = vld [vmem:[%s1643 + $0x24] sm:$0x1]
      %v1823 = vld [vmem:[%s1643 + $0x28] sm:$0xf]
      %v1824 = vld [vmem:[%s1643 + $0x2c] sm:$0x1]
      %v1825 = vld [vmem:[%s1643 + $0x30] sm:$0xf]
      %v1826 = vld [vmem:[%s1643 + $0x34] sm:$0x1]
      %v1827 = vld [vmem:[%s1643 + $0x38] sm:$0xf]
      %v1828 = vld [vmem:[%s1643 + $0x3c] sm:$0x1]
      %v1829 = vld [vmem:[%s310 + $0x1c0] sm:$0xf]
      %v1830 = vld [vmem:[%s310 + $0x1c4] sm:$0xf]
      %v1831 = vld [vmem:[%s310 + $0x1c8] sm:$0xf]
      %v1832 = vld [vmem:[%s310 + $0x1cc] sm:$0xf]
      %v1833 = vld [vmem:[%s310 + $0x1d0] sm:$0xf]
      %v1834 = vld [vmem:[%s310 + $0x1d4] sm:$0xf]
      %v1835 = vld [vmem:[%s310 + $0x1d8] sm:$0xf]
      %v1836 = vld [vmem:[%s310 + $0x1dc] sm:$0xf]
      %v1837 = vld [vmem:[%s310 + $0x1e0] sm:$0xf]
      %v1838 = vld [vmem:[%s310 + $0x1e4] sm:$0xf]
      %v1839 = vld [vmem:[%s310 + $0x1e8] sm:$0xf]
      %v1840 = vld [vmem:[%s310 + $0x1ec] sm:$0xf]
      %v1841 = vld [vmem:[%s310 + $0x1f0] sm:$0xf]
      %v1842 = vld [vmem:[%s310 + $0x1f4] sm:$0xf]
      %v1843 = vld [vmem:[%s310 + $0x1f8] sm:$0xf]
      %v1844 = vld [vmem:[%s310 + $0x1fc] sm:$0xf]
      %v1846 = vshrl.u32 %v1813, 16
      %v1848 = vrot.slane %v1846, 4
      %v1849 = vshll.u32 %v1813, 16
      %v1851 = vrot.slane %v1849, 5
      %v1852 = vor.u32 %v1848, %v1851
      %v1853 = vrot.slane %v1852, 4
      %v1855 = vshll.u32 %v1814, 16
      %v1857 = vrot.slane %v1855, 5
      %v1858 = vsel %vm386, %v1853, %v1857
      %v1860 = vshrl.u32 %v1815, 16
      %v1862 = vrot.slane %v1860, 4
      %v1863 = vshll.u32 %v1815, 16
      %v1865 = vrot.slane %v1863, 5
      %v1866 = vor.u32 %v1862, %v1865
      %v1867 = vrot.slane %v1866, 4
      %v1869 = vshll.u32 %v1816, 16
      %v1871 = vrot.slane %v1869, 5
      %v1872 = vsel %vm386, %v1867, %v1871
      %v1874 = vshrl.u32 %v1817, 16
      %v1876 = vrot.slane %v1874, 4
      %v1877 = vshll.u32 %v1817, 16
      %v1879 = vrot.slane %v1877, 5
      %v1880 = vor.u32 %v1876, %v1879
      %v1881 = vrot.slane %v1880, 4
      %v1883 = vshll.u32 %v1818, 16
      %v1885 = vrot.slane %v1883, 5
      %v1886 = vsel %vm386, %v1881, %v1885
      %v1888 = vshrl.u32 %v1819, 16
      %v1890 = vrot.slane %v1888, 4
      %v1891 = vshll.u32 %v1819, 16
      %v1893 = vrot.slane %v1891, 5
      %v1894 = vor.u32 %v1890, %v1893
      %v1895 = vrot.slane %v1894, 4
      %v1897 = vshll.u32 %v1820, 16
      %v1899 = vrot.slane %v1897, 5
      %v1900 = vsel %vm386, %v1895, %v1899
      %v1902 = vshrl.u32 %v1821, 16
      %v1904 = vrot.slane %v1902, 4
      %v1905 = vshll.u32 %v1821, 16
      %v1907 = vrot.slane %v1905, 5
      %v1908 = vor.u32 %v1904, %v1907
      %v1909 = vrot.slane %v1908, 4
      %v1911 = vshll.u32 %v1822, 16
      %v1913 = vrot.slane %v1911, 5
      %v1914 = vsel %vm386, %v1909, %v1913
      %v1916 = vshrl.u32 %v1823, 16
      %v1918 = vrot.slane %v1916, 4
      %v1919 = vshll.u32 %v1823, 16
      %v1921 = vrot.slane %v1919, 5
      %v1922 = vor.u32 %v1918, %v1921
      %v1923 = vrot.slane %v1922, 4
      %v1925 = vshll.u32 %v1824, 16
      %v1927 = vrot.slane %v1925, 5
      %v1928 = vsel %vm386, %v1923, %v1927
      %v1930 = vshrl.u32 %v1825, 16
      %v1932 = vrot.slane %v1930, 4
      %v1933 = vshll.u32 %v1825, 16
      %v1935 = vrot.slane %v1933, 5
      %v1936 = vor.u32 %v1932, %v1935
      %v1937 = vrot.slane %v1936, 4
      %v1939 = vshll.u32 %v1826, 16
      %v1941 = vrot.slane %v1939, 5
      %v1942 = vsel %vm386, %v1937, %v1941
      %v1944 = vshrl.u32 %v1827, 16
      %v1946 = vrot.slane %v1944, 4
      %v1947 = vshll.u32 %v1827, 16
      %v1949 = vrot.slane %v1947, 5
      %v1950 = vor.u32 %v1946, %v1949
      %v1951 = vrot.slane %v1950, 4
      %v1953 = vshll.u32 %v1828, 16
      %v1955 = vrot.slane %v1953, 5
      %v1956 = vsel %vm386, %v1951, %v1955
      %v1957 = vunpack.c.l.b16 %v1858
      %v1958 = vunpack.c.l.b16 %v1872
      %v1959 = vunpack.c.l.b16 %v1886
      %v1960 = vunpack.c.l.b16 %v1900
      %v1961 = vunpack.c.l.b16 %v1914
      %v1962 = vunpack.c.l.b16 %v1928
      %v1963 = vunpack.c.l.b16 %v1942
      %v1964 = vunpack.c.l.b16 %v1956
      %v1965 = vpack.c.b16 %v1958, %v1957
      %v1966 = vpack.c.b16 %v1960, %v1959
      %v1967 = vpack.c.b16 %v1962, %v1961
      %v1968 = vpack.c.b16 %v1964, %v1963
      %v1989 = vunpack.c.l.b16 %v1829
      %v1990 = vunpack.c.l.b16 %v1830
      %v1991 = vunpack.c.l.b16 %v1831
      %v1992 = vunpack.c.l.b16 %v1832
      %v1993 = vunpack.c.l.b16 %v1833
      %v1994 = vunpack.c.l.b16 %v1834
      %v1995 = vunpack.c.l.b16 %v1835
      %v1996 = vunpack.c.l.b16 %v1836
      %v1997 = vunpack.c.l.b16 %v1837
      %v1998 = vunpack.c.l.b16 %v1838
      %v1999 = vunpack.c.l.b16 %v1839
      %v2000 = vunpack.c.l.b16 %v1840
      %v2001 = vunpack.c.l.b16 %v1841
      %v2002 = vunpack.c.l.b16 %v1842
      %v2003 = vunpack.c.l.b16 %v1843
      %v2004 = vunpack.c.l.b16 %v1844
      %v2005 = vpack.c.b16 %v1990, %v1989
      %v2006 = vpack.c.b16 %v1992, %v1991
      %v2007 = vpack.c.b16 %v1994, %v1993
      %v2008 = vpack.c.b16 %v1996, %v1995
      %v2009 = vpack.c.b16 %v1998, %v1997
      %v2010 = vpack.c.b16 %v2000, %v1999
      %v2011 = vpack.c.b16 %v2002, %v2001
      %v2012 = vpack.c.b16 %v2004, %v2003
      %2021 = vmatprep.subr.bf16.mxu0 0
      %2022 = vmatpush1.bf16.msra.mxu0 %v2012
      %2023 = vmatprep.subr.bf16.mxu0 0
      %2024 = vmatpush1.bf16.msra.mxu0 %v2011
      %2025 = vmatprep.subr.bf16.mxu0 0
      %2026 = vmatpush1.bf16.msra.mxu0 %v2010
      %2027 = vmatprep.subr.bf16.mxu0 0
      %2028 = vmatpush1.bf16.msra.mxu0 %v2009
      %2029 = vmatprep.subr.bf16.mxu0 0
      %2030 = vmatpush1.bf16.msra.mxu0 %v2008
      %2031 = vmatprep.subr.bf16.mxu0 0
      %2032 = vmatpush1.bf16.msra.mxu0 %v2007
      %2033 = vmatprep.subr.bf16.mxu0 0
      %2034 = vmatpush1.bf16.msra.mxu0 %v2006
      %2035 = vmatprep.subr.bf16.mxu0 0
      %2036 = vmatpush1.bf16.msra.mxu0 %v2005
      %2037 = vmatprep.subr.bf16.mxu0 0
      %2038 = vmatpush2.bf16.msra.mxu0 0
      %2039 = vmatprep.subr.bf16.mxu0 0
      %2040 = vmatpush2.bf16.msra.mxu0 0
      %2041 = vmatprep.subr.bf16.mxu0 0
      %2042 = vmatpush2.bf16.msra.mxu0 0
      %2043 = vmatprep.subr.bf16.mxu0 0
      %2044 = vmatpush2.bf16.msra.mxu0 0
      %2045 = vmatprep.subr.bf16.mxu0 0
      %2046 = vmatpush2.bf16.msra.mxu0 0
      %2047 = vmatprep.subr.bf16.mxu0 0
      %2048 = vmatpush2.bf16.msra.mxu0 0
      %2049 = vmatprep.subr.bf16.mxu0 0
      %2050 = vmatpush2.bf16.msra.mxu0 0
      %2051 = vmatprep.subr.bf16.mxu0 0
      %2052 = vmatpush2.bf16.msra.mxu0 0
      %2053 = vmatprep.mubr.bf16.mxu0 0
      %2054 = vmatmul.mubr.bf16.gmra.mxu0 %v1965
      %v2055 = vpop.f32.mrf.mxu0
      %v2056 = vadd.f32 0.0, %v2055
      %v2057 = vpop.f32.mrf.mxu0
      %v2058 = vpop.f32.mrf.mxu0
      %v2059 = vadd.f32 0.0, %v2058
      %v2060 = vpop.f32.mrf.mxu0
      %2061 = vmatprep.mubr.bf16.mxu0 0
      %2062 = vmatmul.mubr.bf16.gmra.mxu0 %v1966
      %v2063 = vpop.f32.mrf.mxu0
      %v2064 = vadd.f32 0.0, %v2063
      %v2065 = vpop.f32.mrf.mxu0
      %v2066 = vpop.f32.mrf.mxu0
      %v2067 = vadd.f32 0.0, %v2066
      %v2068 = vpop.f32.mrf.mxu0
      %2069 = vmatprep.mubr.bf16.mxu0 0
      %2070 = vmatmul.mubr.bf16.gmra.mxu0 %v1967
      %v2071 = vpop.f32.mrf.mxu0
      %v2072 = vadd.f32 0.0, %v2071
      %v2073 = vpop.f32.mrf.mxu0
      %v2074 = vpop.f32.mrf.mxu0
      %v2075 = vadd.f32 0.0, %v2074
      %v2076 = vpop.f32.mrf.mxu0
      %2077 = vmatprep.mubr.bf16.mxu0 0
      %2078 = vmatmul.mubr.bf16.gmra.mxu0 %v1968
      %v2079 = vpop.f32.mrf.mxu0
      %v2080 = vadd.f32 0.0, %v2079
      %v2081 = vpop.f32.mrf.mxu0
      %v2082 = vpop.f32.mrf.mxu0
      %v2083 = vadd.f32 0.0, %v2082
      %v2084 = vpop.f32.mrf.mxu0
      %2085 = vdwg.mxu0
      %v2086 = vadd.f32 %v1805, %v2056
      %v2087 = vadd.f32 %v1806, %v2059
      %v2088 = vadd.f32 %v1807, %v2064
      %v2089 = vadd.f32 %v1808, %v2067
      %v2090 = vadd.f32 %v1809, %v2072
      %v2091 = vadd.f32 %v1810, %v2075
      %v2092 = vadd.f32 %v1811, %v2080
      %v2093 = vadd.f32 %v1812, %v2083
      %v2094 = vld [vmem:[%s1643] sm:$0xe]
      %v2095 = vld [vmem:[%s1643 + $0x8] sm:$0xe]
      %v2096 = vld [vmem:[%s1643 + $0x10] sm:$0xe]
      %v2097 = vld [vmem:[%s1643 + $0x18] sm:$0xe]
      %v2098 = vld [vmem:[%s1643 + $0x20] sm:$0xe]
      %v2099 = vld [vmem:[%s1643 + $0x28] sm:$0xe]
      %v2100 = vld [vmem:[%s1643 + $0x30] sm:$0xe]
      %v2101 = vld [vmem:[%s1643 + $0x38] sm:$0xe]
      %v2102 = vld [vmem:[%s310 + $0x200] sm:$0xf]
      %v2103 = vld [vmem:[%s310 + $0x204] sm:$0xf]
      %v2104 = vld [vmem:[%s310 + $0x208] sm:$0xf]
      %v2105 = vld [vmem:[%s310 + $0x20c] sm:$0xf]
      %v2106 = vld [vmem:[%s310 + $0x210] sm:$0xf]
      %v2107 = vld [vmem:[%s310 + $0x214] sm:$0xf]
      %v2108 = vld [vmem:[%s310 + $0x218] sm:$0xf]
      %v2109 = vld [vmem:[%s310 + $0x21c] sm:$0xf]
      %v2110 = vld [vmem:[%s310 + $0x220] sm:$0xf]
      %v2111 = vld [vmem:[%s310 + $0x224] sm:$0xf]
      %v2112 = vld [vmem:[%s310 + $0x228] sm:$0xf]
      %v2113 = vld [vmem:[%s310 + $0x22c] sm:$0xf]
      %v2114 = vld [vmem:[%s310 + $0x230] sm:$0xf]
      %v2115 = vld [vmem:[%s310 + $0x234] sm:$0xf]
      %v2116 = vld [vmem:[%s310 + $0x238] sm:$0xf]
      %v2117 = vld [vmem:[%s310 + $0x23c] sm:$0xf]
      %v2134 = vrot.slane %v2094, 5
      %v2135 = vrot.slane %v2134, 4
      %v2136 = vrot.slane %v1814, 5
      %v2137 = vsel %vm807, %v2135, %v2136
      %v2138 = vrot.slane %v2095, 5
      %v2139 = vrot.slane %v2138, 4
      %v2140 = vrot.slane %v1816, 5
      %v2141 = vsel %vm807, %v2139, %v2140
      %v2142 = vrot.slane %v2096, 5
      %v2143 = vrot.slane %v2142, 4
      %v2144 = vrot.slane %v1818, 5
      %v2145 = vsel %vm807, %v2143, %v2144
      %v2146 = vrot.slane %v2097, 5
      %v2147 = vrot.slane %v2146, 4
      %v2148 = vrot.slane %v1820, 5
      %v2149 = vsel %vm807, %v2147, %v2148
      %v2150 = vrot.slane %v2098, 5
      %v2151 = vrot.slane %v2150, 4
      %v2152 = vrot.slane %v1822, 5
      %v2153 = vsel %vm807, %v2151, %v2152
      %v2154 = vrot.slane %v2099, 5
      %v2155 = vrot.slane %v2154, 4
      %v2156 = vrot.slane %v1824, 5
      %v2157 = vsel %vm807, %v2155, %v2156
      %v2158 = vrot.slane %v2100, 5
      %v2159 = vrot.slane %v2158, 4
      %v2160 = vrot.slane %v1826, 5
      %v2161 = vsel %vm807, %v2159, %v2160
      %v2162 = vrot.slane %v2101, 5
      %v2163 = vrot.slane %v2162, 4
      %v2164 = vrot.slane %v1828, 5
      %v2165 = vsel %vm807, %v2163, %v2164
      %v2166 = vunpack.c.l.b16 %v2137
      %v2167 = vunpack.c.l.b16 %v2141
      %v2168 = vunpack.c.l.b16 %v2145
      %v2169 = vunpack.c.l.b16 %v2149
      %v2170 = vunpack.c.l.b16 %v2153
      %v2171 = vunpack.c.l.b16 %v2157
      %v2172 = vunpack.c.l.b16 %v2161
      %v2173 = vunpack.c.l.b16 %v2165
      %v2174 = vpack.c.b16 %v2167, %v2166
      %v2175 = vpack.c.b16 %v2169, %v2168
      %v2176 = vpack.c.b16 %v2171, %v2170
      %v2177 = vpack.c.b16 %v2173, %v2172
      %v2198 = vunpack.c.l.b16 %v2102
      %v2199 = vunpack.c.l.b16 %v2103
      %v2200 = vunpack.c.l.b16 %v2104
      %v2201 = vunpack.c.l.b16 %v2105
      %v2202 = vunpack.c.l.b16 %v2106
      %v2203 = vunpack.c.l.b16 %v2107
      %v2204 = vunpack.c.l.b16 %v2108
      %v2205 = vunpack.c.l.b16 %v2109
      %v2206 = vunpack.c.l.b16 %v2110
      %v2207 = vunpack.c.l.b16 %v2111
      %v2208 = vunpack.c.l.b16 %v2112
      %v2209 = vunpack.c.l.b16 %v2113
      %v2210 = vunpack.c.l.b16 %v2114
      %v2211 = vunpack.c.l.b16 %v2115
      %v2212 = vunpack.c.l.b16 %v2116
      %v2213 = vunpack.c.l.b16 %v2117
      %v2214 = vpack.c.b16 %v2199, %v2198
      %v2215 = vpack.c.b16 %v2201, %v2200
      %v2216 = vpack.c.b16 %v2203, %v2202
      %v2217 = vpack.c.b16 %v2205, %v2204
      %v2218 = vpack.c.b16 %v2207, %v2206
      %v2219 = vpack.c.b16 %v2209, %v2208
      %v2220 = vpack.c.b16 %v2211, %v2210
      %v2221 = vpack.c.b16 %v2213, %v2212
      %2230 = vmatprep.subr.bf16.mxu0 0
      %2231 = vmatpush1.bf16.msra.mxu0 %v2221
      %2232 = vmatprep.subr.bf16.mxu0 0
      %2233 = vmatpush1.bf16.msra.mxu0 %v2220
      %2234 = vmatprep.subr.bf16.mxu0 0
      %2235 = vmatpush1.bf16.msra.mxu0 %v2219
      %2236 = vmatprep.subr.bf16.mxu0 0
      %2237 = vmatpush1.bf16.msra.mxu0 %v2218
      %2238 = vmatprep.subr.bf16.mxu0 0
      %2239 = vmatpush1.bf16.msra.mxu0 %v2217
      %2240 = vmatprep.subr.bf16.mxu0 0
      %2241 = vmatpush1.bf16.msra.mxu0 %v2216
      %2242 = vmatprep.subr.bf16.mxu0 0
      %2243 = vmatpush1.bf16.msra.mxu0 %v2215
      %2244 = vmatprep.subr.bf16.mxu0 0
      %2245 = vmatpush1.bf16.msra.mxu0 %v2214
      %2246 = vmatprep.subr.bf16.mxu0 0
      %2247 = vmatpush2.bf16.msra.mxu0 0
      %2248 = vmatprep.subr.bf16.mxu0 0
      %2249 = vmatpush2.bf16.msra.mxu0 0
      %2250 = vmatprep.subr.bf16.mxu0 0
      %2251 = vmatpush2.bf16.msra.mxu0 0
      %2252 = vmatprep.subr.bf16.mxu0 0
      %2253 = vmatpush2.bf16.msra.mxu0 0
      %2254 = vmatprep.subr.bf16.mxu0 0
      %2255 = vmatpush2.bf16.msra.mxu0 0
      %2256 = vmatprep.subr.bf16.mxu0 0
      %2257 = vmatpush2.bf16.msra.mxu0 0
      %2258 = vmatprep.subr.bf16.mxu0 0
      %2259 = vmatpush2.bf16.msra.mxu0 0
      %2260 = vmatprep.subr.bf16.mxu0 0
      %2261 = vmatpush2.bf16.msra.mxu0 0
      %2262 = vmatprep.mubr.bf16.mxu0 0
      %2263 = vmatmul.mubr.bf16.gmra.mxu0 %v2174
      %v2264 = vpop.f32.mrf.mxu0
      %v2265 = vadd.f32 0.0, %v2264
      %v2266 = vpop.f32.mrf.mxu0
      %v2267 = vpop.f32.mrf.mxu0
      %v2268 = vadd.f32 0.0, %v2267
      %v2269 = vpop.f32.mrf.mxu0
      %2270 = vmatprep.mubr.bf16.mxu0 0
      %2271 = vmatmul.mubr.bf16.gmra.mxu0 %v2175
      %v2272 = vpop.f32.mrf.mxu0
      %v2273 = vadd.f32 0.0, %v2272
      %v2274 = vpop.f32.mrf.mxu0
      %v2275 = vpop.f32.mrf.mxu0
      %v2276 = vadd.f32 0.0, %v2275
      %v2277 = vpop.f32.mrf.mxu0
      %2278 = vmatprep.mubr.bf16.mxu0 0
      %2279 = vmatmul.mubr.bf16.gmra.mxu0 %v2176
      %v2280 = vpop.f32.mrf.mxu0
      %v2281 = vadd.f32 0.0, %v2280
      %v2282 = vpop.f32.mrf.mxu0
      %v2283 = vpop.f32.mrf.mxu0
      %v2284 = vadd.f32 0.0, %v2283
      %v2285 = vpop.f32.mrf.mxu0
      %2286 = vmatprep.mubr.bf16.mxu0 0
      %2287 = vmatmul.mubr.bf16.gmra.mxu0 %v2177
      %v2288 = vpop.f32.mrf.mxu0
      %v2289 = vadd.f32 0.0, %v2288
      %v2290 = vpop.f32.mrf.mxu0
      %v2291 = vpop.f32.mrf.mxu0
      %v2292 = vadd.f32 0.0, %v2291
      %v2293 = vpop.f32.mrf.mxu0
      %2294 = vdwg.mxu0
      %v2295 = vadd.f32 %v2086, %v2265
      %v2296 = vadd.f32 %v2087, %v2268
      %v2297 = vadd.f32 %v2088, %v2273
      %v2298 = vadd.f32 %v2089, %v2276
      %v2299 = vadd.f32 %v2090, %v2281
      %v2300 = vadd.f32 %v2091, %v2284
      %v2301 = vadd.f32 %v2092, %v2289
      %v2302 = vadd.f32 %v2093, %v2292
      %s2303 = smul.u32 %s977, 4
      %s2304 = sadd.s32 2, %s2303
      %s2305 = smul.addr %s2304, 4
      %s2306 = scalar_lea.vmem %s306, %s2305
      %v2307 = vld [vmem:[%s2306] sm:$0xf]
      %v2308 = vld [vmem:[%s2306 + $0x4] sm:$0x1]
      %v2309 = vld [vmem:[%s2306 + $0x10] sm:$0xf]
      %v2310 = vld [vmem:[%s2306 + $0x14] sm:$0x1]
      %v2311 = vld [vmem:[%s2306 + $0x20] sm:$0xf]
      %v2312 = vld [vmem:[%s2306 + $0x24] sm:$0x1]
      %v2313 = vld [vmem:[%s2306 + $0x30] sm:$0xf]
      %v2314 = vld [vmem:[%s2306 + $0x34] sm:$0x1]
      %v2315 = vld [vmem:[%s2306 + $0x40] sm:$0xf]
      %v2316 = vld [vmem:[%s2306 + $0x44] sm:$0x1]
      %v2317 = vld [vmem:[%s2306 + $0x50] sm:$0xf]
      %v2318 = vld [vmem:[%s2306 + $0x54] sm:$0x1]
      %v2319 = vld [vmem:[%s2306 + $0x60] sm:$0xf]
      %v2320 = vld [vmem:[%s2306 + $0x64] sm:$0x1]
      %v2321 = vld [vmem:[%s2306 + $0x70] sm:$0xf]
      %v2322 = vld [vmem:[%s2306 + $0x74] sm:$0x1]
      %v2323 = vld [vmem:[%s314] sm:$0x3]
      %v2325 = vshrl.u32 %v2307, 16
      %v2327 = vrot.slane %v2325, 4
      %v2328 = vshll.u32 %v2307, 16
      %v2330 = vrot.slane %v2328, 5
      %v2331 = vor.u32 %v2327, %v2330
      %v2332 = vrot.slane %v2331, 4
      %v2334 = vshll.u32 %v2308, 16
      %v2336 = vrot.slane %v2334, 5
      %v2337 = vsel %vm386, %v2332, %v2336
      %v2339 = vshrl.u32 %v2309, 16
      %v2341 = vrot.slane %v2339, 4
      %v2342 = vshll.u32 %v2309, 16
      %v2344 = vrot.slane %v2342, 5
      %v2345 = vor.u32 %v2341, %v2344
      %v2346 = vrot.slane %v2345, 4
      %v2348 = vshll.u32 %v2310, 16
      %v2350 = vrot.slane %v2348, 5
      %v2351 = vsel %vm386, %v2346, %v2350
      %v2353 = vshrl.u32 %v2311, 16
      %v2355 = vrot.slane %v2353, 4
      %v2356 = vshll.u32 %v2311, 16
      %v2358 = vrot.slane %v2356, 5
      %v2359 = vor.u32 %v2355, %v2358
      %v2360 = vrot.slane %v2359, 4
      %v2362 = vshll.u32 %v2312, 16
      %v2364 = vrot.slane %v2362, 5
      %v2365 = vsel %vm386, %v2360, %v2364
      %v2367 = vshrl.u32 %v2313, 16
      %v2369 = vrot.slane %v2367, 4
      %v2370 = vshll.u32 %v2313, 16
      %v2372 = vrot.slane %v2370, 5
      %v2373 = vor.u32 %v2369, %v2372
      %v2374 = vrot.slane %v2373, 4
      %v2376 = vshll.u32 %v2314, 16
      %v2378 = vrot.slane %v2376, 5
      %v2379 = vsel %vm386, %v2374, %v2378
      %v2381 = vshrl.u32 %v2315, 16
      %v2383 = vrot.slane %v2381, 4
      %v2384 = vshll.u32 %v2315, 16
      %v2386 = vrot.slane %v2384, 5
      %v2387 = vor.u32 %v2383, %v2386
      %v2388 = vrot.slane %v2387, 4
      %v2390 = vshll.u32 %v2316, 16
      %v2392 = vrot.slane %v2390, 5
      %v2393 = vsel %vm386, %v2388, %v2392
      %v2395 = vshrl.u32 %v2317, 16
      %v2397 = vrot.slane %v2395, 4
      %v2398 = vshll.u32 %v2317, 16
      %v2400 = vrot.slane %v2398, 5
      %v2401 = vor.u32 %v2397, %v2400
      %v2402 = vrot.slane %v2401, 4
      %v2404 = vshll.u32 %v2318, 16
      %v2406 = vrot.slane %v2404, 5
      %v2407 = vsel %vm386, %v2402, %v2406
      %v2409 = vshrl.u32 %v2319, 16
      %v2411 = vrot.slane %v2409, 4
      %v2412 = vshll.u32 %v2319, 16
      %v2414 = vrot.slane %v2412, 5
      %v2415 = vor.u32 %v2411, %v2414
      %v2416 = vrot.slane %v2415, 4
      %v2418 = vshll.u32 %v2320, 16
      %v2420 = vrot.slane %v2418, 5
      %v2421 = vsel %vm386, %v2416, %v2420
      %v2423 = vshrl.u32 %v2321, 16
      %v2425 = vrot.slane %v2423, 4
      %v2426 = vshll.u32 %v2321, 16
      %v2428 = vrot.slane %v2426, 5
      %v2429 = vor.u32 %v2425, %v2428
      %v2430 = vrot.slane %v2429, 4
      %v2432 = vshll.u32 %v2322, 16
      %v2434 = vrot.slane %v2432, 5
      %v2435 = vsel %vm386, %v2430, %v2434
      %v2436 = vunpack.c.l.b16 %v2337
      %v2437 = vunpack.c.l.b16 %v2351
      %v2438 = vunpack.c.l.b16 %v2365
      %v2439 = vunpack.c.l.b16 %v2379
      %v2440 = vunpack.c.l.b16 %v2393
      %v2441 = vunpack.c.l.b16 %v2407
      %v2442 = vunpack.c.l.b16 %v2421
      %v2443 = vunpack.c.l.b16 %v2435
      %v2444 = vpack.c.b16 %v2437, %v2436
      %v2445 = vpack.c.b16 %v2439, %v2438
      %v2446 = vpack.c.b16 %v2441, %v2440
      %v2447 = vpack.c.b16 %v2443, %v2442
      %2448 = vrot.lane.b32.xlu0 %v2444, 124
      %v2449 = vpop.permute.xlu0 %2448
      %2450 = vrot.lane.b32.xlu0 %v2445, 124
      %v2451 = vpop.permute.xlu0 %2450
      %2452 = vrot.lane.b32.xlu0 %v2446, 124
      %v2453 = vpop.permute.xlu0 %2452
      %2454 = vrot.lane.b32.xlu0 %v2447, 124
      %v2455 = vpop.permute.xlu0 %2454
      %vm2456 = vcmask 31744
      %v2458 = vsel %vm2456, %v2449, 0
      %v2461 = vsel %vm2456, %v2451, 0
      %v2464 = vsel %vm2456, %v2453, 0
      %v2467 = vsel %vm2456, %v2455, 0
      %vm2469 = vcmask 1041408
      %v2471 = vsel %vm2469, %v2323, 0
      %2473 = vmatprep.subr.bf16.mxu0 0
      %2474 = vmatpush1.bf16.msra.mxu0 0
      %2475 = vmatprep.subr.bf16.mxu0 0
      %2476 = vmatpush1.bf16.msra.mxu0 0
      %2477 = vmatprep.subr.bf16.mxu0 0
      %2478 = vmatpush1.bf16.msra.mxu0 0
      %2479 = vmatprep.subr.bf16.mxu0 0
      %2480 = vmatpush1.bf16.msra.mxu0 0
      %2481 = vmatprep.subr.bf16.mxu0 0
      %2482 = vmatpush1.bf16.msra.mxu0 0
      %2483 = vmatprep.subr.bf16.mxu0 0
      %2484 = vmatpush1.bf16.msra.mxu0 0
      %2485 = vmatprep.subr.bf16.mxu0 0
      %2486 = vmatpush1.bf16.msra.mxu0 0
      %2487 = vmatprep.subr.bf16.mxu0 0
      %2488 = vmatpush1.bf16.msra.mxu0 %v2471
      %2489 = vmatprep.subr.bf16.mxu0 0
      %2490 = vmatpush2.bf16.msra.mxu0 0
      %2491 = vmatprep.subr.bf16.mxu0 0
      %2492 = vmatpush2.bf16.msra.mxu0 0
      %2493 = vmatprep.subr.bf16.mxu0 0
      %2494 = vmatpush2.bf16.msra.mxu0 0
      %2495 = vmatprep.subr.bf16.mxu0 0
      %2496 = vmatpush2.bf16.msra.mxu0 0
      %2497 = vmatprep.subr.bf16.mxu0 0
      %2498 = vmatpush2.bf16.msra.mxu0 0
      %2499 = vmatprep.subr.bf16.mxu0 0
      %2500 = vmatpush2.bf16.msra.mxu0 0
      %2501 = vmatprep.subr.bf16.mxu0 0
      %2502 = vmatpush2.bf16.msra.mxu0 0
      %2503 = vmatprep.subr.bf16.mxu0 0
      %2504 = vmatpush2.bf16.msra.mxu0 0
      %2505 = vmatprep.mubr.bf16.mxu0 0
      %2506 = vmatmul.mubr.bf16.gmra.mxu0 %v2458
      %v2507 = vpop.f32.mrf.mxu0
      %v2508 = vadd.f32 0.0, %v2507
      %v2509 = vpop.f32.mrf.mxu0
      %v2510 = vpop.f32.mrf.mxu0
      %v2511 = vadd.f32 0.0, %v2510
      %v2512 = vpop.f32.mrf.mxu0
      %2513 = vmatprep.mubr.bf16.mxu0 0
      %2514 = vmatmul.mubr.bf16.gmra.mxu0 %v2461
      %v2515 = vpop.f32.mrf.mxu0
      %v2516 = vadd.f32 0.0, %v2515
      %v2517 = vpop.f32.mrf.mxu0
      %v2518 = vpop.f32.mrf.mxu0
      %v2519 = vadd.f32 0.0, %v2518
      %v2520 = vpop.f32.mrf.mxu0
      %2521 = vmatprep.mubr.bf16.mxu0 0
      %2522 = vmatmul.mubr.bf16.gmra.mxu0 %v2464
      %v2523 = vpop.f32.mrf.mxu0
      %v2524 = vadd.f32 0.0, %v2523
      %v2525 = vpop.f32.mrf.mxu0
      %v2526 = vpop.f32.mrf.mxu0
      %v2527 = vadd.f32 0.0, %v2526
      %v2528 = vpop.f32.mrf.mxu0
      %2529 = vmatprep.mubr.bf16.mxu0 0
      %2530 = vmatmul.mubr.bf16.gmra.mxu0 %v2467
      %v2531 = vpop.f32.mrf.mxu0
      %v2532 = vadd.f32 0.0, %v2531
      %v2533 = vpop.f32.mrf.mxu0
      %v2534 = vpop.f32.mrf.mxu0
      %v2535 = vadd.f32 0.0, %v2534
      %v2536 = vpop.f32.mrf.mxu0
      %2537 = vdwg.mxu0
      %v2538 = vadd.f32 %v2295, %v2508
      %v2539 = vadd.f32 %v2296, %v2511
      %v2540 = vadd.f32 %v2297, %v2516
      %v2541 = vadd.f32 %v2298, %v2519
      %v2542 = vadd.f32 %v2299, %v2524
      %v2543 = vadd.f32 %v2300, %v2527
      %v2544 = vadd.f32 %v2301, %v2532
      %v2545 = vadd.f32 %v2302, %v2535
      %v2546 = vld [vmem:[%s317] sm:$0x1]
      %v2548 = vlaneseq
      %v2549 = vshrl.u32 %v2548, 7
      %v2550 = vsub.s32 0, %v2549
      %v2551 = vrot.slane %v2546, %v2550
      %v2553 = vadd.f32 %v2538, %v2551
      %v2554 = vadd.f32 %v2539, %v2551
      %v2555 = vadd.f32 %v2540, %v2551
      %v2556 = vadd.f32 %v2541, %v2551
      %v2557 = vadd.f32 %v2542, %v2551
      %v2558 = vadd.f32 %v2543, %v2551
      %v2559 = vadd.f32 %v2544, %v2551
      %v2560 = vadd.f32 %v2545, %v2551
      %v2561 = vmax.f32 %v2553, 0.0
      %v2562 = vmax.f32 %v2554, 0.0
      %v2563 = vmax.f32 %v2555, 0.0
      %v2564 = vmax.f32 %v2556, 0.0
      %v2565 = vmax.f32 %v2557, 0.0
      %v2566 = vmax.f32 %v2558, 0.0
      %v2567 = vmax.f32 %v2559, 0.0
      %v2568 = vmax.f32 %v2560, 0.0
      %v2569 = vpack.c.bf16 %v2561, %v2561
      %v2570 = vpack.c.bf16 %v2562, %v2562
      %v2571 = vpack.c.bf16 %v2563, %v2563
      %v2572 = vpack.c.bf16 %v2564, %v2564
      %v2573 = vpack.c.bf16 %v2565, %v2565
      %v2574 = vpack.c.bf16 %v2566, %v2566
      %v2575 = vpack.c.bf16 %v2567, %v2567
      %v2576 = vpack.c.bf16 %v2568, %v2568
      %2577 = vst [vmem:[%s329] sm:$0xf] %v2569
      %2578 = vst [vmem:[%s329 + $0x4] sm:$0xf] %v2570
      %2579 = vst [vmem:[%s329 + $0x8] sm:$0xf] %v2571
      %2580 = vst [vmem:[%s329 + $0xc] sm:$0xf] %v2572
      %2581 = vst [vmem:[%s329 + $0x10] sm:$0xf] %v2573
      %2582 = vst [vmem:[%s329 + $0x14] sm:$0xf] %v2574
      %2583 = vst [vmem:[%s329 + $0x18] sm:$0xf] %v2575
      %2584 = vst [vmem:[%s329 + $0x1c] sm:$0xf] %v2576
      %s2585 = smul.u32 8, %s23
      %p2586 = scmp.lt.s32.totalorder %s21, 1
      %s2587 = scalar_select %p2586, %s21, 1
      %p2588 = scmp.lt.s32.totalorder %s2585, 7
      %s2589 = scalar_select %p2588, %s2585, 7
      %p2590 = scmp.lt.s32.totalorder %s22, 0
      %s2591 = scalar_select %p2590, %s22, 0
      %s2592 = sadd.s32 %s2591, %s2589
      %s2593 = smul.addr %s2587, 8
      %s2594 = sadd.s32 %s2592, %s2593
      %s2595 = smul.addr %s2594, 4
      %s2596 = scalar_lea.vmem %s5, %s2595
      // Predicated region
      $region41: #{basic_block_forward.3} parent=39 // pred_check
        %p2597 = pneg %p187
      $region42: #{basic_block_forward.3} parent=39 // pred_check_branch
        %2599 = sbr.rel (%p2597) target = $region44
      $region43: #{basic_block_forward.3} parent=39 // pred_region
        %s2600 = smul.u32 8, %s23
      $region44: #{basic_block_forward.3} parent=39 // pred_fallthru
        _
    $region40: #{basic_block_forward.3} parent=5 // pred_fallthru
      _
    %p2601 = scmp.le.s32.totalorder 2, %s11
    // Predicated region
    $region45: #{basic_block_forward.3} parent=5 // pred_check
      %p2602 = pneg %p2601
    $region46: #{basic_block_forward.3} parent=5 // pred_check_branch
      %2604 = sbr.rel (%p2602) target = $region48
    $region47: #{basic_block_forward.3} parent=5 // pred_region
      %s2605 = ssub.s32 %s11, 2
      // Predicated region
      $region49: #{basic_block_forward.3} parent=47 // pred_check
        %p2606 = pneg %p193
      $region50: #{basic_block_forward.3} parent=47 // pred_check_branch
        %2608 = sbr.rel (%p2606) target = $region52
      $region51: #{basic_block_forward.3} parent=47 // pred_region
        %s2609 = smul.u32 8, %s26
        %p2610 = scmp.lt.s32.totalorder %s24, 1
        %s2611 = scalar_select %p2610, %s24, 1
        %p2612 = scmp.lt.s32.totalorder %s2609, 7
        %s2613 = scalar_select %p2612, %s2609, 7
        %p2614 = scmp.lt.s32.totalorder %s25, 0
        %s2615 = scalar_select %p2614, %s25, 0
        %s2616 = sadd.s32 %s2615, %s2613
        %s2617 = smul.addr %s2611, 8
        %s2618 = sadd.s32 %s2616, %s2617
        %s2619 = smul.addr %s2618, 4
        %s2620 = scalar_lea.vmem %s5, %s2619
      $region52: #{basic_block_forward.3} parent=47 // pred_fallthru
        _
    $region48: #{basic_block_forward.3} parent=5 // pred_fallthru
      _
  $region6: #{basic_block_forward.3} parent=0 // loop_footer
    %s15 = sadd.s32 1, %s11
  $region7: #{basic_block_forward.3} parent=0 // loop_footer_branch
    %10 = sbr.rel target = $region3
  $region8: #{basic_block_forward.3} parent=0 // loop_exit
    _

// kernel: basic_block_forward.2
$region0: #{basic_block_forward.2}
  #allocation0 [shape = 'u32[]', space=smem, size = 0x4, offset = 0x4, fixed_abs, tag = 'smem constant byte address 0x4 - core index']
  #allocation1 [shape = 'u32[144,128]{1,0:T(1,128)}', space=vmem, size = 0x12000, scoped, tag = 'internal scratch']
  %s0 = inlined_call_operand.vmem [shape: bf16[2,11,2,11,8], index: 0, kind: input, shape index: {}]
  %s1 = inlined_call_operand.vmem [shape: bf16[36,128], index: 1, kind: input, shape index: {}]
  %s2 = inlined_call_operand.vmem [shape: f32[1,128], index: 2, kind: input, shape index: {}]
  %s3 = inlined_call_operand.vmem [shape: bf16[2,10,10,128], index: 3, kind: output, shape index: {}]
  %s4 = sld [smem:[#allocation0]]
  $region45: #{basic_block_forward.2} parent=0
    _
  %s6 = ssub.s32 1, %s4
  %s7 = scalar_select 0, %s6, %s4
  loop: start=0, step=1, limit=4
  $region2: #{basic_block_forward.2} parent=0 // loop_pre_header
    _
  $region3: #{basic_block_forward.2} parent=0 // loop_header
    %s9 = sphi 0, %s13
    %p10 = scmp.ge.s32.totalorder %s9, 4
    %s16 = sphi 0, %s35
    %s17 = sphi 0, %s31
    %s18 = sphi 0, %s27
    %s19 = sphi 0, %s16
    %s20 = sphi 0, %s17
    %s21 = sphi 0, %s18
    %s22 = sphi 0, %s19
    %s23 = sphi 0, %s20
    %s24 = sphi 0, %s21
    %s38 = sphi 0, %s40
    %s41 = sphi 0, %s38
    %s42 = sphi 0, %s41
    %s58 = sphi 0, %s42
    %s64 = sphi 0, %s66
    %s67 = sphi 0, %s64
    %s68 = sphi 0, %s67
    %s84 = sphi 0, %s68
    %s90 = sphi 0, %s92
    %s93 = sphi 0, %s90
    %s94 = sphi 0, %s93
    %s110 = sphi 0, %s94
    %s120 = sphi 0, %s122
    %s123 = sphi 0, %s120
    %s124 = sphi 0, %s123
    %s140 = sphi 0, %s124
  $region4: #{basic_block_forward.2} parent=0 // loop_header_branch
    %12 = sbr.rel (%p10) target = $region8
  $region5: #{basic_block_forward.2} parent=0 // loop_body
    %s14 = ssub.s32 %s9, 1
    %s15 = ssub.s32 %s9, 2
    %s25 = sadd.s32 1, %s18
    %p26 = scmp.ge.s32.totalorder %s25, 1
    %s27 = scalar_select %p26, 0, %s25
    %s28 = sadd.s32 1, %s17
    %s29 = scalar_select %p26, %s28, %s17
    %p30 = scmp.ge.s32.totalorder %s29, 1
    %s31 = scalar_select %p30, 0, %s29
    %s32 = sadd.s32 1, %s16
    %s33 = scalar_select %p30, %s32, %s16
    %p34 = scmp.ge.s32.totalorder %s33, 2
    %s35 = scalar_select %p34, 0, %s33
    %s36 = ssub.s32 %s16, %s35
    %p37 = scmp.eq.s32.totalorder %s36, 0
    %s39 = sadd.s32 %s38, 1
    %s40 = scalar_select %p37, %s38, %s39
    %p43 = pneg %p37
    %p44 = scmp.eq.s32.totalorder %s9, 1
    %p45 = por %p43, %p44
    %p46 = scmp.ne.s32.totalorder %s38, %s41
    %p47 = scmp.eq.s32.totalorder %s9, 0
    %p48 = por %p46, %p47
    %p49 = scmp.ne.s32.totalorder %s38, %s41
    %p50 = scmp.eq.s32.totalorder %s14, 1
    %p51 = por %p49, %p50
    %p52 = scmp.ne.s32.totalorder %s41, %s42
    %p53 = scmp.eq.s32.totalorder %s14, 0
    %p54 = por %p52, %p53
    %p55 = scmp.ne.s32.totalorder %s41, %s42
    %p56 = scmp.eq.s32.totalorder %s15, 1
    %p57 = por %p55, %p56
    %p59 = scmp.ne.s32.totalorder %s42, %s58
    %p60 = scmp.eq.s32.totalorder %s15, 0
    %p61 = por %p59, %p60
    %s62 = ssub.s32 %s17, %s31
    %p63 = scmp.eq.s32.totalorder %s62, 0
    %s65 = sadd.s32 %s64, 1
    %s66 = scalar_select %p63, %s64, %s65
    %p69 = pneg %p63
    %p70 = scmp.eq.s32.totalorder %s9, 1
    %p71 = por %p69, %p70
    %p72 = scmp.ne.s32.totalorder %s64, %s67
    %p73 = scmp.eq.s32.totalorder %s9, 0
    %p74 = por %p72, %p73
    %p75 = scmp.ne.s32.totalorder %s64, %s67
    %p76 = scmp.eq.s32.totalorder %s14, 1
    %p77 = por %p75, %p76
    %p78 = scmp.ne.s32.totalorder %s67, %s68
    %p79 = scmp.eq.s32.totalorder %s14, 0
    %p80 = por %p78, %p79
    %p81 = scmp.ne.s32.totalorder %s67, %s68
    %p82 = scmp.eq.s32.totalorder %s15, 1
    %p83 = por %p81, %p82
    %p85 = scmp.ne.s32.totalorder %s68, %s84
    %p86 = scmp.eq.s32.totalorder %s15, 0
    %p87 = por %p85, %p86
    %s88 = ssub.s32 %s17, %s31
    %p89 = scmp.eq.s32.totalorder %s88, 0
    %s91 = sadd.s32 %s90, 1
    %s92 = scalar_select %p89, %s90, %s91
    %p95 = pneg %p89
    %p96 = scmp.eq.s32.totalorder %s9, 1
    %p97 = por %p95, %p96
    %p98 = scmp.ne.s32.totalorder %s90, %s93
    %p99 = scmp.eq.s32.totalorder %s9, 0
    %p100 = por %p98, %p99
    %p101 = scmp.ne.s32.totalorder %s90, %s93
    %p102 = scmp.eq.s32.totalorder %s14, 1
    %p103 = por %p101, %p102
    %p104 = scmp.ne.s32.totalorder %s93, %s94
    %p105 = scmp.eq.s32.totalorder %s14, 0
    %p106 = por %p104, %p105
    %p107 = scmp.ne.s32.totalorder %s93, %s94
    %p108 = scmp.eq.s32.totalorder %s15, 1
    %p109 = por %p107, %p108
    %p111 = scmp.ne.s32.totalorder %s94, %s110
    %p112 = scmp.eq.s32.totalorder %s15, 0
    %p113 = por %p111, %p112
    %s114 = ssub.s32 %s16, %s35
    %s115 = ssub.s32 %s18, %s27
    %s116 = sor.u32 %s114, %s115
    %s117 = ssub.s32 %s17, %s31
    %s118 = sor.u32 %s116, %s117
    %p119 = scmp.eq.s32.totalorder %s118, 0
    %s121 = sadd.s32 %s120, 1
    %s122 = scalar_select %p119, %s120, %s121
    %p125 = pneg %p119
    %p126 = scmp.eq.s32.totalorder %s9, 1
    %p127 = por %p125, %p126
    %p128 = scmp.ne.s32.totalorder %s120, %s123
    %p129 = scmp.eq.s32.totalorder %s9, 0
    %p130 = por %p128, %p129
    %p131 = scmp.ne.s32.totalorder %s120, %s123
    %p132 = scmp.eq.s32.totalorder %s14, 1
    %p133 = por %p131, %p132
    %p134 = scmp.ne.s32.totalorder %s123, %s124
    %p135 = scmp.eq.s32.totalorder %s14, 0
    %p136 = por %p134, %p135
    %p137 = scmp.ne.s32.totalorder %s123, %s124
    %p138 = scmp.eq.s32.totalorder %s15, 1
    %p139 = por %p137, %p138
    %p141 = scmp.ne.s32.totalorder %s124, %s140
    %p142 = scmp.eq.s32.totalorder %s15, 0
    %p143 = por %p141, %p142
    %p144 = scmp.le.s32.totalorder 1, %s9
    %p145 = scmp.lt.s32.totalorder %s9, 3
    %p146 = pnand %p144, %p145
    %p147 = pneg %p146
    // Predicated region
    $region9: #{basic_block_forward.2} parent=5 // pred_check
      _
    $region10: #{basic_block_forward.2} parent=5 // pred_check_branch
      %149 = sbr.rel (%p146) target = $region12
    $region11: #{basic_block_forward.2} parent=5 // pred_region
      %s150 = ssub.s32 %s9, 1
      // Predicated region
      $region13: #{basic_block_forward.2} parent=11 // pred_check
        %p151 = pneg %p80
      $region14: #{basic_block_forward.2} parent=11 // pred_check_branch
        %153 = sbr.rel (%p151) target = $region16
      $region15: #{basic_block_forward.2} parent=11 // pred_region
        %p154 = scmp.lt.s32.totalorder %s20, 0
        %s155 = scalar_select %p154, %s20, 0
        %s156 = smul.addr %s155, 4
        %s157 = scalar_lea.vmem %s1, %s156
      $region16: #{basic_block_forward.2} parent=11 // pred_fallthru
        _
      // Predicated region
      $region17: #{basic_block_forward.2} parent=11 // pred_check
        %p158 = pneg %p106
      $region18: #{basic_block_forward.2} parent=11 // pred_check_branch
        %160 = sbr.rel (%p158) target = $region20
      $region19: #{basic_block_forward.2} parent=11 // pred_region
        %p161 = scmp.lt.s32.totalorder %s20, 0
        %s162 = scalar_select %p161, %s20, 0
        %s163 = scalar_lea.vmem %s2, %s162
      $region20: #{basic_block_forward.2} parent=11 // pred_fallthru
        _
    $region12: #{basic_block_forward.2} parent=5 // pred_fallthru
      _
    %p164 = scmp.lt.s32.totalorder %s9, 2
    // Predicated region
    $region21: #{basic_block_forward.2} parent=5 // pred_check
      %p165 = pneg %p164
    $region22: #{basic_block_forward.2} parent=5 // pred_check_branch
      %167 = sbr.rel (%p165) target = $region24
    $region23: #{basic_block_forward.2} parent=5 // pred_region
      // Predicated region
      $region25: #{basic_block_forward.2} parent=23 // pred_check
        %p168 = pneg %p48
      $region26: #{basic_block_forward.2} parent=23 // pred_check_branch
        %170 = sbr.rel (%p168) target = $region28
      $region27: #{basic_block_forward.2} parent=23 // pred_region
        %p171 = scmp.lt.s32.totalorder %s16, 1
        %s172 = scalar_select %p171, %s16, 1
        %s173 = smul.addr %s172, 44
        %s174 = smul.addr %s173, 4
        %s175 = scalar_lea.vmem %s0, %s174
      $region28: #{basic_block_forward.2} parent=23 // pred_fallthru
        _
    $region24: #{basic_block_forward.2} parent=5 // pred_fallthru
      _
    %p176 = scmp.le.s32.totalorder 1, %s9
    %p177 = scmp.lt.s32.totalorder %s9, 3
    %p178 = pnand %p176, %p177
    %p179 = pneg %p178
    // Predicated region
    $region29: #{basic_block_forward.2} parent=5 // pred_check
      _
    $region30: #{basic_block_forward.2} parent=5 // pred_check_branch
      %181 = sbr.rel (%p178) target = $region32
    $region31: #{basic_block_forward.2} parent=5 // pred_region
      %s182 = ssub.s32 %s9, 1
      %p183 = scmp.lt.s32.totalorder %s19, 1
      %s184 = scalar_select %p183, %s19, 1
      %s185 = smul.addr %s184, 44
      %s186 = smul.addr %s185, 4
      %s187 = scalar_lea.vmem %s0, %s186
      %p188 = pneg %p54
      %p189 = pneg %p51
      %p190 = scmp.lt.s32.totalorder %s20, 0
      %s191 = scalar_select %p190, %s20, 0
      %s192 = smul.addr %s191, 4
      %s193 = scalar_lea.vmem %s1, %s192
      %p194 = pneg %p80
      %p195 = pneg %p77
      %p196 = scmp.lt.s32.totalorder %s20, 0
      %s197 = scalar_select %p196, %s20, 0
      %s198 = scalar_lea.vmem %s2, %s197
      %p199 = pneg %p106
      %p200 = pneg %p103
      %p201 = pneg %p136
      %p202 = pneg %p133
      %s203 = smul.u32 10, %s21
      %p204 = scmp.lt.s32.totalorder %s19, 1
      %s205 = scalar_select %p204, %s19, 1
      %p206 = scmp.lt.s32.totalorder %s203, 9
      %s207 = scalar_select %p206, %s203, 9
      %p208 = scmp.lt.s32.totalorder %s20, 0
      %s209 = scalar_select %p208, %s20, 0
      %s210 = smul.addr %s207, 2
      %s211 = sadd.s32 %s209, %s210
      %s212 = smul.addr %s205, 20
      %s213 = sadd.s32 %s211, %s212
      %s214 = smul.addr %s213, 4
      %s215 = scalar_lea.vmem %s3, %s214
      %p216 = scmp.lt.s32.totalorder %s19, 1
      %s217 = scalar_select %p216, %s19, 1
      %s218 = smul.addr %s217, 44
      %s219 = smul.addr %s218, 4
      %s220 = scalar_lea.vmem %s0, %s219
      %p221 = scmp.lt.s32.totalorder %s20, 0
      %s222 = scalar_select %p221, %s20, 0
      %s223 = smul.addr %s222, 4
      %s224 = scalar_lea.vmem %s1, %s223
      %p225 = scmp.lt.s32.totalorder %s20, 0
      %s226 = scalar_select %p225, %s20, 0
      %s227 = scalar_lea.vmem %s2, %s226
      %s228 = smul.u32 10, %s21
      %p229 = scmp.lt.s32.totalorder %s19, 1
      %s230 = scalar_select %p229, %s19, 1
      %p231 = scmp.lt.s32.totalorder %s228, 9
      %s232 = scalar_select %p231, %s228, 9
      %p233 = scmp.lt.s32.totalorder %s20, 0
      %s234 = scalar_select %p233, %s20, 0
      %s235 = smul.addr %s232, 2
      %s236 = sadd.s32 %s234, %s235
      %s237 = smul.addr %s230, 20
      %s238 = sadd.s32 %s236, %s237
      %s239 = smul.addr %s238, 4
      %s240 = scalar_lea.vmem %s3, %s239
      %s241 = smul.u32 10, %s21
      %s243 = smul.u32 %s21, 10
      %s244 = smul.u32 %s243, 4
      %s245 = smul.addr %s244, 4
      %s246 = scalar_lea.vmem %s220, %s245
      %v247 = vld [vmem:[%s246] sm:$0xf]
      %v248 = vld [vmem:[%s246 + $0x4] sm:$0x1]
      %v249 = vld [vmem:[%s246 + $0x10] sm:$0xf]
      %v250 = vld [vmem:[%s246 + $0x14] sm:$0x1]
      %v251 = vld [vmem:[%s246 + $0x20] sm:$0xf]
      %v252 = vld [vmem:[%s246 + $0x24] sm:$0x1]
      %v253 = vld [vmem:[%s246 + $0x30] sm:$0xf]
      %v254 = vld [vmem:[%s246 + $0x34] sm:$0x1]
      %v255 = vld [vmem:[%s246 + $0x40] sm:$0xf]
      %v256 = vld [vmem:[%s246 + $0x44] sm:$0x1]
      %v257 = vld [vmem:[%s246 + $0x50] sm:$0xf]
      %v258 = vld [vmem:[%s246 + $0x54] sm:$0x1]
      %v259 = vld [vmem:[%s246 + $0x60] sm:$0xf]
      %v260 = vld [vmem:[%s246 + $0x64] sm:$0x1]
      %v261 = vld [vmem:[%s246 + $0x70] sm:$0xf]
      %v262 = vld [vmem:[%s246 + $0x74] sm:$0x1]
      %v263 = vld [vmem:[%s246 + $0x80] sm:$0xf]
      %v264 = vld [vmem:[%s246 + $0x84] sm:$0x1]
      %v265 = vld [vmem:[%s246 + $0x90] sm:$0xf]
      %v266 = vld [vmem:[%s246 + $0x94] sm:$0x1]
      %v267 = vld [vmem:[%s224] sm:$0xf]
      %v289 = vunpack.c.l.s4 1966171168
      %v290 = vunpack.c.0.s8 %v289
      %v291 = vlaneseq
      %v292 = vshrl.u32 %v291, 7
      %v293 = vsub.s32 %v290, %v292
      %v294 = vrot.slane %v247, %v293
      %v295 = vcombine.high %v294, %v294
      %v297 = vunpack.c.l.s4 1966171168
      %v298 = vunpack.c.0.s8 %v297
      %v299 = vlaneseq
      %v300 = vshrl.u32 %v299, 7
      %v301 = vsub.s32 %v298, %v300
      %v302 = vrot.slane %v294, %v301
      %v304 = vunpack.c.l.s4 1966171168
      %v305 = vunpack.c.0.s8 %v304
      %v306 = vlaneseq
      %v307 = vshrl.u32 %v306, 7
      %v308 = vsub.s32 %v305, %v307
      %v309 = vrot.slane %v295, %v308
      %v310 = vcombine.high %v302, %v302
      %v311 = vcombine.high %v309, %v309
      %v313 = vunpack.c.l.s4 1966171168
      %v314 = vunpack.c.0.s8 %v313
      %v315 = vlaneseq
      %v316 = vshrl.u32 %v315, 7
      %v317 = vsub.s32 %v314, %v316
      %v318 = vrot.slane %v248, %v317
      %v320 = vunpack.c.l.s4 1966171168
      %v321 = vunpack.c.0.s8 %v320
      %v322 = vlaneseq
      %v323 = vshrl.u32 %v322, 7
      %v324 = vsub.s32 %v321, %v323
      %v325 = vrot.slane %v318, %v324
      %v327 = vunpack.c.l.s4 1966171168
      %v328 = vunpack.c.0.s8 %v327
      %v329 = vlaneseq
      %v330 = vshrl.u32 %v329, 7
      %v331 = vsub.s32 %v328, %v330
      %v332 = vrot.slane %v249, %v331
      %v333 = vcombine.high %v332, %v332
      %v335 = vunpack.c.l.s4 1966171168
      %v336 = vunpack.c.0.s8 %v335
      %v337 = vlaneseq
      %v338 = vshrl.u32 %v337, 7
      %v339 = vsub.s32 %v336, %v338
      %v340 = vrot.slane %v332, %v339
      %v342 = vunpack.c.l.s4 1966171168
      %v343 = vunpack.c.0.s8 %v342
      %v344 = vlaneseq
      %v345 = vshrl.u32 %v344, 7
      %v346 = vsub.s32 %v343, %v345
      %v347 = vrot.slane %v333, %v346
      %v348 = vcombine.high %v340, %v340
      %v349 = vcombine.high %v347, %v347
      %v351 = vunpack.c.l.s4 1966171168
      %v352 = vunpack.c.0.s8 %v351
      %v353 = vlaneseq
      %v354 = vshrl.u32 %v353, 7
      %v355 = vsub.s32 %v352, %v354
      %v356 = vrot.slane %v250, %v355
      %v358 = vunpack.c.l.s4 1966171168
      %v359 = vunpack.c.0.s8 %v358
      %v360 = vlaneseq
      %v361 = vshrl.u32 %v360, 7
      %v362 = vsub.s32 %v359, %v361
      %v363 = vrot.slane %v356, %v362
      %v365 = vunpack.c.l.s4 1966171168
      %v366 = vunpack.c.0.s8 %v365
      %v367 = vlaneseq
      %v368 = vshrl.u32 %v367, 7
      %v369 = vsub.s32 %v366, %v368
      %v370 = vrot.slane %v251, %v369
      %v371 = vcombine.high %v370, %v370
      %v373 = vunpack.c.l.s4 1966171168
      %v374 = vunpack.c.0.s8 %v373
      %v375 = vlaneseq
      %v376 = vshrl.u32 %v375, 7
      %v377 = vsub.s32 %v374, %v376
      %v378 = vrot.slane %v370, %v377
      %v380 = vunpack.c.l.s4 1966171168
      %v381 = vunpack.c.0.s8 %v380
      %v382 = vlaneseq
      %v383 = vshrl.u32 %v382, 7
      %v384 = vsub.s32 %v381, %v383
      %v385 = vrot.slane %v371, %v384
      %v386 = vcombine.high %v378, %v378
      %v387 = vcombine.high %v385, %v385
      %v389 = vunpack.c.l.s4 1966171168
      %v390 = vunpack.c.0.s8 %v389
      %v391 = vlaneseq
      %v392 = vshrl.u32 %v391, 7
      %v393 = vsub.s32 %v390, %v392
      %v394 = vrot.slane %v252, %v393
      %v396 = vunpack.c.l.s4 1966171168
      %v397 = vunpack.c.0.s8 %v396
      %v398 = vlaneseq
      %v399 = vshrl.u32 %v398, 7
      %v400 = vsub.s32 %v397, %v399
      %v401 = vrot.slane %v394, %v400
      %v403 = vunpack.c.l.s4 1966171168
      %v404 = vunpack.c.0.s8 %v403
      %v405 = vlaneseq
      %v406 = vshrl.u32 %v405, 7
      %v407 = vsub.s32 %v404, %v406
      %v408 = vrot.slane %v253, %v407
      %v409 = vcombine.high %v408, %v408
      %v411 = vunpack.c.l.s4 1966171168
      %v412 = vunpack.c.0.s8 %v411
      %v413 = vlaneseq
      %v414 = vshrl.u32 %v413, 7
      %v415 = vsub.s32 %v412, %v414
      %v416 = vrot.slane %v408, %v415
      %v418 = vunpack.c.l.s4 1966171168
      %v419 = vunpack.c.0.s8 %v418
      %v420 = vlaneseq
      %v421 = vshrl.u32 %v420, 7
      %v422 = vsub.s32 %v419, %v421
      %v423 = vrot.slane %v409, %v422
      %v424 = vcombine.high %v416, %v416
      %v425 = vcombine.high %v423, %v423
      %v427 = vunpack.c.l.s4 1966171168
      %v428 = vunpack.c.0.s8 %v427
      %v429 = vlaneseq
      %v430 = vshrl.u32 %v429, 7
      %v431 = vsub.s32 %v428, %v430
      %v432 = vrot.slane %v254, %v431
      %v434 = vunpack.c.l.s4 1966171168
      %v435 = vunpack.c.0.s8 %v434
      %v436 = vlaneseq
      %v437 = vshrl.u32 %v436, 7
      %v438 = vsub.s32 %v435, %v437
      %v439 = vrot.slane %v432, %v438
      %v441 = vunpack.c.l.s4 1966171168
      %v442 = vunpack.c.0.s8 %v441
      %v443 = vlaneseq
      %v444 = vshrl.u32 %v443, 7
      %v445 = vsub.s32 %v442, %v444
      %v446 = vrot.slane %v255, %v445
      %v447 = vcombine.high %v446, %v446
      %v449 = vunpack.c.l.s4 1966171168
      %v450 = vunpack.c.0.s8 %v449
      %v451 = vlaneseq
      %v452 = vshrl.u32 %v451, 7
      %v453 = vsub.s32 %v450, %v452
      %v454 = vrot.slane %v446, %v453
      %v456 = vunpack.c.l.s4 1966171168
      %v457 = vunpack.c.0.s8 %v456
      %v458 = vlaneseq
      %v459 = vshrl.u32 %v458, 7
      %v460 = vsub.s32 %v457, %v459
      %v461 = vrot.slane %v447, %v460
      %v462 = vcombine.high %v454, %v454
      %v463 = vcombine.high %v461, %v461
      %v465 = vunpack.c.l.s4 1966171168
      %v466 = vunpack.c.0.s8 %v465
      %v467 = vlaneseq
      %v468 = vshrl.u32 %v467, 7
      %v469 = vsub.s32 %v466, %v468
      %v470 = vrot.slane %v256, %v469
      %v472 = vunpack.c.l.s4 1966171168
      %v473 = vunpack.c.0.s8 %v472
      %v474 = vlaneseq
      %v475 = vshrl.u32 %v474, 7
      %v476 = vsub.s32 %v473, %v475
      %v477 = vrot.slane %v470, %v476
      %v479 = vunpack.c.l.s4 1966171168
      %v480 = vunpack.c.0.s8 %v479
      %v481 = vlaneseq
      %v482 = vshrl.u32 %v481, 7
      %v483 = vsub.s32 %v480, %v482
      %v484 = vrot.slane %v257, %v483
      %v485 = vcombine.high %v484, %v484
      %v487 = vunpack.c.l.s4 1966171168
      %v488 = vunpack.c.0.s8 %v487
      %v489 = vlaneseq
      %v490 = vshrl.u32 %v489, 7
      %v491 = vsub.s32 %v488, %v490
      %v492 = vrot.slane %v484, %v491
      %v494 = vunpack.c.l.s4 1966171168
      %v495 = vunpack.c.0.s8 %v494
      %v496 = vlaneseq
      %v497 = vshrl.u32 %v496, 7
      %v498 = vsub.s32 %v495, %v497
      %v499 = vrot.slane %v485, %v498
      %v500 = vcombine.high %v492, %v492
      %v501 = vcombine.high %v499, %v499
      %v503 = vunpack.c.l.s4 1966171168
      %v504 = vunpack.c.0.s8 %v503
      %v505 = vlaneseq
      %v506 = vshrl.u32 %v505, 7
      %v507 = vsub.s32 %v504, %v506
      %v508 = vrot.slane %v258, %v507
      %v510 = vunpack.c.l.s4 1966171168
      %v511 = vunpack.c.0.s8 %v510
      %v512 = vlaneseq
      %v513 = vshrl.u32 %v512, 7
      %v514 = vsub.s32 %v511, %v513
      %v515 = vrot.slane %v508, %v514
      %v517 = vunpack.c.l.s4 1966171168
      %v518 = vunpack.c.0.s8 %v517
      %v519 = vlaneseq
      %v520 = vshrl.u32 %v519, 7
      %v521 = vsub.s32 %v518, %v520
      %v522 = vrot.slane %v259, %v521
      %v523 = vcombine.high %v522, %v522
      %v525 = vunpack.c.l.s4 1966171168
      %v526 = vunpack.c.0.s8 %v525
      %v527 = vlaneseq
      %v528 = vshrl.u32 %v527, 7
      %v529 = vsub.s32 %v526, %v528
      %v530 = vrot.slane %v522, %v529
      %v532 = vunpack.c.l.s4 1966171168
      %v533 = vunpack.c.0.s8 %v532
      %v534 = vlaneseq
      %v535 = vshrl.u32 %v534, 7
      %v536 = vsub.s32 %v533, %v535
      %v537 = vrot.slane %v523, %v536
      %v538 = vcombine.high %v530, %v530
      %v539 = vcombine.high %v537, %v537
      %v541 = vunpack.c.l.s4 1966171168
      %v542 = vunpack.c.0.s8 %v541
      %v543 = vlaneseq
      %v544 = vshrl.u32 %v543, 7
      %v545 = vsub.s32 %v542, %v544
      %v546 = vrot.slane %v260, %v545
      %v548 = vunpack.c.l.s4 1966171168
      %v549 = vunpack.c.0.s8 %v548
      %v550 = vlaneseq
      %v551 = vshrl.u32 %v550, 7
      %v552 = vsub.s32 %v549, %v551
      %v553 = vrot.slane %v546, %v552
      %v555 = vunpack.c.l.s4 1966171168
      %v556 = vunpack.c.0.s8 %v555
      %v557 = vlaneseq
      %v558 = vshrl.u32 %v557, 7
      %v559 = vsub.s32 %v556, %v558
      %v560 = vrot.slane %v261, %v559
      %v561 = vcombine.high %v560, %v560
      %v563 = vunpack.c.l.s4 1966171168
      %v564 = vunpack.c.0.s8 %v563
      %v565 = vlaneseq
      %v566 = vshrl.u32 %v565, 7
      %v567 = vsub.s32 %v564, %v566
      %v568 = vrot.slane %v560, %v567
      %v570 = vunpack.c.l.s4 1966171168
      %v571 = vunpack.c.0.s8 %v570
      %v572 = vlaneseq
      %v573 = vshrl.u32 %v572, 7
      %v574 = vsub.s32 %v571, %v573
      %v575 = vrot.slane %v561, %v574
      %v576 = vcombine.high %v568, %v568
      %v577 = vcombine.high %v575, %v575
      %v579 = vunpack.c.l.s4 1966171168
      %v580 = vunpack.c.0.s8 %v579
      %v581 = vlaneseq
      %v582 = vshrl.u32 %v581, 7
      %v583 = vsub.s32 %v580, %v582
      %v584 = vrot.slane %v262, %v583
      %v586 = vunpack.c.l.s4 1966171168
      %v587 = vunpack.c.0.s8 %v586
      %v588 = vlaneseq
      %v589 = vshrl.u32 %v588, 7
      %v590 = vsub.s32 %v587, %v589
      %v591 = vrot.slane %v584, %v590
      %v593 = vunpack.c.l.s4 1966171168
      %v594 = vunpack.c.0.s8 %v593
      %v595 = vlaneseq
      %v596 = vshrl.u32 %v595, 7
      %v597 = vsub.s32 %v594, %v596
      %v598 = vrot.slane %v263, %v597
      %v599 = vcombine.high %v598, %v598
      %v601 = vunpack.c.l.s4 1966171168
      %v602 = vunpack.c.0.s8 %v601
      %v603 = vlaneseq
      %v604 = vshrl.u32 %v603, 7
      %v605 = vsub.s32 %v602, %v604
      %v606 = vrot.slane %v598, %v605
      %v608 = vunpack.c.l.s4 1966171168
      %v609 = vunpack.c.0.s8 %v608
      %v610 = vlaneseq
      %v611 = vshrl.u32 %v610, 7
      %v612 = vsub.s32 %v609, %v611
      %v613 = vrot.slane %v599, %v612
      %v614 = vcombine.high %v606, %v606
      %v615 = vcombine.high %v613, %v613
      %v617 = vunpack.c.l.s4 1966171168
      %v618 = vunpack.c.0.s8 %v617
      %v619 = vlaneseq
      %v620 = vshrl.u32 %v619, 7
      %v621 = vsub.s32 %v618, %v620
      %v622 = vrot.slane %v264, %v621
      %v624 = vunpack.c.l.s4 1966171168
      %v625 = vunpack.c.0.s8 %v624
      %v626 = vlaneseq
      %v627 = vshrl.u32 %v626, 7
      %v628 = vsub.s32 %v625, %v627
      %v629 = vrot.slane %v622, %v628
      %v631 = vunpack.c.l.s4 1966171168
      %v632 = vunpack.c.0.s8 %v631
      %v633 = vlaneseq
      %v634 = vshrl.u32 %v633, 7
      %v635 = vsub.s32 %v632, %v634
      %v636 = vrot.slane %v265, %v635
      %v637 = vcombine.high %v636, %v636
      %v639 = vunpack.c.l.s4 1966171168
      %v640 = vunpack.c.0.s8 %v639
      %v641 = vlaneseq
      %v642 = vshrl.u32 %v641, 7
      %v643 = vsub.s32 %v640, %v642
      %v644 = vrot.slane %v636, %v643
      %v646 = vunpack.c.l.s4 1966171168
      %v647 = vunpack.c.0.s8 %v646
      %v648 = vlaneseq
      %v649 = vshrl.u32 %v648, 7
      %v650 = vsub.s32 %v647, %v649
      %v651 = vrot.slane %v637, %v650
      %v652 = vcombine.high %v644, %v644
      %v653 = vcombine.high %v651, %v651
      %v655 = vunpack.c.l.s4 1966171168
      %v656 = vunpack.c.0.s8 %v655
      %v657 = vlaneseq
      %v658 = vshrl.u32 %v657, 7
      %v659 = vsub.s32 %v656, %v658
      %v660 = vrot.slane %v266, %v659
      %v662 = vunpack.c.l.s4 1966171168
      %v663 = vunpack.c.0.s8 %v662
      %v664 = vlaneseq
      %v665 = vshrl.u32 %v664, 7
      %v666 = vsub.s32 %v663, %v665
      %v667 = vrot.slane %v660, %v666
      %v668 = vld [vmem:[%s246 + $0x4] sm:$0x3]
      %v669 = vld [vmem:[%s246 + $0x14] sm:$0x3]
      %v670 = vld [vmem:[%s246 + $0x24] sm:$0x3]
      %v671 = vld [vmem:[%s246 + $0x34] sm:$0x3]
      %v672 = vld [vmem:[%s246 + $0x44] sm:$0x3]
      %v673 = vld [vmem:[%s246 + $0x54] sm:$0x3]
      %v674 = vld [vmem:[%s246 + $0x64] sm:$0x3]
      %v675 = vld [vmem:[%s246 + $0x74] sm:$0x3]
      %v676 = vld [vmem:[%s246 + $0x84] sm:$0x3]
      %v677 = vld [vmem:[%s246 + $0x94] sm:$0x3]
      %v678 = vld [vmem:[%s224 + $0x4] sm:$0x3]
      %v690 = vunpack.c.l.s4 1966171168
      %v691 = vunpack.c.0.s8 %v690
      %v692 = vlaneseq
      %v693 = vshrl.u32 %v692, 7
      %v694 = vsub.s32 %v691, %v693
      %v695 = vrot.slane %v668, %v694
      %v696 = vcombine.high %v695, %v695
      %v698 = vunpack.c.l.s4 1966171168
      %v699 = vunpack.c.0.s8 %v698
      %v700 = vlaneseq
      %v701 = vshrl.u32 %v700, 7
      %v702 = vsub.s32 %v699, %v701
      %v703 = vrot.slane %v695, %v702
      %v705 = vunpack.c.l.s4 1966171168
      %v706 = vunpack.c.0.s8 %v705
      %v707 = vlaneseq
      %v708 = vshrl.u32 %v707, 7
      %v709 = vsub.s32 %v706, %v708
      %v710 = vrot.slane %v696, %v709
      %v712 = vunpack.c.l.s4 1966171168
      %v713 = vunpack.c.0.s8 %v712
      %v714 = vlaneseq
      %v715 = vshrl.u32 %v714, 7
      %v716 = vsub.s32 %v713, %v715
      %v717 = vrot.slane %v669, %v716
      %v718 = vcombine.high %v717, %v717
      %v720 = vunpack.c.l.s4 1966171168
      %v721 = vunpack.c.0.s8 %v720
      %v722 = vlaneseq
      %v723 = vshrl.u32 %v722, 7
      %v724 = vsub.s32 %v721, %v723
      %v725 = vrot.slane %v717, %v724
      %v727 = vunpack.c.l.s4 1966171168
      %v728 = vunpack.c.0.s8 %v727
      %v729 = vlaneseq
      %v730 = vshrl.u32 %v729, 7
      %v731 = vsub.s32 %v728, %v730
      %v732 = vrot.slane %v718, %v731
      %v734 = vunpack.c.l.s4 1966171168
      %v735 = vunpack.c.0.s8 %v734
      %v736 = vlaneseq
      %v737 = vshrl.u32 %v736, 7
      %v738 = vsub.s32 %v735, %v737
      %v739 = vrot.slane %v670, %v738
      %v740 = vcombine.high %v739, %v739
      %v742 = vunpack.c.l.s4 1966171168
      %v743 = vunpack.c.0.s8 %v742
      %v744 = vlaneseq
      %v745 = vshrl.u32 %v744, 7
      %v746 = vsub.s32 %v743, %v745
      %v747 = vrot.slane %v739, %v746
      %v749 = vunpack.c.l.s4 1966171168
      %v750 = vunpack.c.0.s8 %v749
      %v751 = vlaneseq
      %v752 = vshrl.u32 %v751, 7
      %v753 = vsub.s32 %v750, %v752
      %v754 = vrot.slane %v740, %v753
      %v756 = vunpack.c.l.s4 1966171168
      %v757 = vunpack.c.0.s8 %v756
      %v758 = vlaneseq
      %v759 = vshrl.u32 %v758, 7
      %v760 = vsub.s32 %v757, %v759
      %v761 = vrot.slane %v671, %v760
      %v762 = vcombine.high %v761, %v761
      %v764 = vunpack.c.l.s4 1966171168
      %v765 = vunpack.c.0.s8 %v764
      %v766 = vlaneseq
      %v767 = vshrl.u32 %v766, 7
      %v768 = vsub.s32 %v765, %v767
      %v769 = vrot.slane %v761, %v768
      %v771 = vunpack.c.l.s4 1966171168
      %v772 = vunpack.c.0.s8 %v771
      %v773 = vlaneseq
      %v774 = vshrl.u32 %v773, 7
      %v775 = vsub.s32 %v772, %v774
      %v776 = vrot.slane %v762, %v775
      %v778 = vunpack.c.l.s4 1966171168
      %v779 = vunpack.c.0.s8 %v778
      %v780 = vlaneseq
      %v781 = vshrl.u32 %v780, 7
      %v782 = vsub.s32 %v779, %v781
      %v783 = vrot.slane %v672, %v782
      %v784 = vcombine.high %v783, %v783
      %v786 = vunpack.c.l.s4 1966171168
      %v787 = vunpack.c.0.s8 %v786
      %v788 = vlaneseq
      %v789 = vshrl.u32 %v788, 7
      %v790 = vsub.s32 %v787, %v789
      %v791 = vrot.slane %v783, %v790
      %v793 = vunpack.c.l.s4 1966171168
      %v794 = vunpack.c.0.s8 %v793
      %v795 = vlaneseq
      %v796 = vshrl.u32 %v795, 7
      %v797 = vsub.s32 %v794, %v796
      %v798 = vrot.slane %v784, %v797
      %v800 = vunpack.c.l.s4 1966171168
      %v801 = vunpack.c.0.s8 %v800
      %v802 = vlaneseq
      %v803 = vshrl.u32 %v802, 7
      %v804 = vsub.s32 %v801, %v803
      %v805 = vrot.slane %v673, %v804
      %v806 = vcombine.high %v805, %v805
      %v808 = vunpack.c.l.s4 1966171168
      %v809 = vunpack.c.0.s8 %v808
      %v810 = vlaneseq
      %v811 = vshrl.u32 %v810, 7
      %v812 = vsub.s32 %v809, %v811
      %v813 = vrot.slane %v805, %v812
      %v815 = vunpack.c.l.s4 1966171168
      %v816 = vunpack.c.0.s8 %v815
      %v817 = vlaneseq
      %v818 = vshrl.u32 %v817, 7
      %v819 = vsub.s32 %v816, %v818
      %v820 = vrot.slane %v806, %v819
      %v822 = vunpack.c.l.s4 1966171168
      %v823 = vunpack.c.0.s8 %v822
      %v824 = vlaneseq
      %v825 = vshrl.u32 %v824, 7
      %v826 = vsub.s32 %v823, %v825
      %v827 = vrot.slane %v674, %v826
      %v828 = vcombine.high %v827, %v827
      %v830 = vunpack.c.l.s4 1966171168
      %v831 = vunpack.c.0.s8 %v830
      %v832 = vlaneseq
      %v833 = vshrl.u32 %v832, 7
      %v834 = vsub.s32 %v831, %v833
      %v835 = vrot.slane %v827, %v834
      %v837 = vunpack.c.l.s4 1966171168
      %v838 = vunpack.c.0.s8 %v837
      %v839 = vlaneseq
      %v840 = vshrl.u32 %v839, 7
      %v841 = vsub.s32 %v838, %v840
      %v842 = vrot.slane %v828, %v841
      %v844 = vunpack.c.l.s4 1966171168
      %v845 = vunpack.c.0.s8 %v844
      %v846 = vlaneseq
      %v847 = vshrl.u32 %v846, 7
      %v848 = vsub.s32 %v845, %v847
      %v849 = vrot.slane %v675, %v848
      %v850 = vcombine.high %v849, %v849
      %v852 = vunpack.c.l.s4 1966171168
      %v853 = vunpack.c.0.s8 %v852
      %v854 = vlaneseq
      %v855 = vshrl.u32 %v854, 7
      %v856 = vsub.s32 %v853, %v855
      %v857 = vrot.slane %v849, %v856
      %v859 = vunpack.c.l.s4 1966171168
      %v860 = vunpack.c.0.s8 %v859
      %v861 = vlaneseq
      %v862 = vshrl.u32 %v861, 7
      %v863 = vsub.s32 %v860, %v862
      %v864 = vrot.slane %v850, %v863
      %v866 = vunpack.c.l.s4 1966171168
      %v867 = vunpack.c.0.s8 %v866
      %v868 = vlaneseq
      %v869 = vshrl.u32 %v868, 7
      %v870 = vsub.s32 %v867, %v869
      %v871 = vrot.slane %v676, %v870
      %v872 = vcombine.high %v871, %v871
      %v874 = vunpack.c.l.s4 1966171168
      %v875 = vunpack.c.0.s8 %v874
      %v876 = vlaneseq
      %v877 = vshrl.u32 %v876, 7
      %v878 = vsub.s32 %v875, %v877
      %v879 = vrot.slane %v871, %v878
      %v881 = vunpack.c.l.s4 1966171168
      %v882 = vunpack.c.0.s8 %v881
      %v883 = vlaneseq
      %v884 = vshrl.u32 %v883, 7
      %v885 = vsub.s32 %v882, %v884
      %v886 = vrot.slane %v872, %v885
      %v888 = vunpack.c.l.s4 1966171168
      %v889 = vunpack.c.0.s8 %v888
      %v890 = vlaneseq
      %v891 = vshrl.u32 %v890, 7
      %v892 = vsub.s32 %v889, %v891
      %v893 = vrot.slane %v677, %v892
      %v894 = vcombine.high %v893, %v893
      %v896 = vunpack.c.l.s4 1966171168
      %v897 = vunpack.c.0.s8 %v896
      %v898 = vlaneseq
      %v899 = vshrl.u32 %v898, 7
      %v900 = vsub.s32 %v897, %v899
      %v901 = vrot.slane %v893, %v900
      %v903 = vunpack.c.l.s4 1966171168
      %v904 = vunpack.c.0.s8 %v903
      %v905 = vlaneseq
      %v906 = vshrl.u32 %v905, 7
      %v907 = vsub.s32 %v904, %v906
      %v908 = vrot.slane %v894, %v907
      %vm909 = vsmask.f32 256
      %vm910 = vsmask.f32 1284
      %vm911 = vmor %vm909, %vm910
      %vm912 = vsmask.f32 2312
      %vm913 = vmor %vm911, %vm912
      %vm914 = vsmask.f32 3340
      %vm915 = vmor %vm913, %vm914
      %vm916 = vsmask.f32 4368
      %vm917 = vmor %vm915, %vm916
      %vm918 = vsmask.f32 5396
      %vm919 = vmor %vm917, %vm918
      %vm920 = vsmask.f32 6424
      %vm921 = vmor %vm919, %vm920
      %vm922 = vsmask.f32 7452
      %vm923 = vmor %vm921, %vm922
      %v925 = vshrl.u32 %v302, 16
      %v927 = vrot.slane %v925, 7
      %v928 = vrot.slane %v927, 1
      %v930 = vshll.u32 %v309, 16
      %v932 = vsel %vm923, %v928, %v930
      %v933 = vshrl.u32 %v309, 16
      %v935 = vrot.slane %v933, 7
      %v936 = vrot.slane %v935, 1
      %v938 = vshll.u32 %v310, 16
      %v940 = vsel %vm923, %v936, %v938
      %v941 = vshrl.u32 %v310, 16
      %v943 = vrot.slane %v941, 7
      %v944 = vrot.slane %v943, 1
      %v946 = vshll.u32 %v311, 16
      %v948 = vsel %vm923, %v944, %v946
      %v949 = vshrl.u32 %v311, 16
      %v951 = vrot.slane %v949, 7
      %v952 = vrot.slane %v951, 1
      %v954 = vshll.u32 %v703, 16
      %v956 = vsel %vm923, %v952, %v954
      %v957 = vshrl.u32 %v703, 16
      %v959 = vrot.slane %v957, 7
      %v960 = vrot.slane %v959, 1
      %v962 = vshll.u32 %v710, 16
      %v964 = vsel %vm923, %v960, %v962
      %v966 = vshrl.u32 %v340, 16
      %v968 = vrot.slane %v966, 7
      %v969 = vrot.slane %v968, 1
      %v971 = vshll.u32 %v347, 16
      %v973 = vsel %vm923, %v969, %v971
      %v974 = vshrl.u32 %v347, 16
      %v976 = vrot.slane %v974, 7
      %v977 = vrot.slane %v976, 1
      %v979 = vshll.u32 %v348, 16
      %v981 = vsel %vm923, %v977, %v979
      %v982 = vshrl.u32 %v348, 16
      %v984 = vrot.slane %v982, 7
      %v985 = vrot.slane %v984, 1
      %v987 = vshll.u32 %v349, 16
      %v989 = vsel %vm923, %v985, %v987
      %v990 = vshrl.u32 %v349, 16
      %v992 = vrot.slane %v990, 7
      %v993 = vrot.slane %v992, 1
      %v995 = vshll.u32 %v725, 16
      %v997 = vsel %vm923, %v993, %v995
      %v998 = vshrl.u32 %v725, 16
      %v1000 = vrot.slane %v998, 7
      %v1001 = vrot.slane %v1000, 1
      %v1003 = vshll.u32 %v732, 16
      %v1005 = vsel %vm923, %v1001, %v1003
      %v1007 = vshrl.u32 %v378, 16
      %v1009 = vrot.slane %v1007, 7
      %v1010 = vrot.slane %v1009, 1
      %v1012 = vshll.u32 %v385, 16
      %v1014 = vsel %vm923, %v1010, %v1012
      %v1015 = vshrl.u32 %v385, 16
      %v1017 = vrot.slane %v1015, 7
      %v1018 = vrot.slane %v1017, 1
      %v1020 = vshll.u32 %v386, 16
      %v1022 = vsel %vm923, %v1018, %v1020
      %v1023 = vshrl.u32 %v386, 16
      %v1025 = vrot.slane %v1023, 7
      %v1026 = vrot.slane %v1025, 1
      %v1028 = vshll.u32 %v387, 16
      %v1030 = vsel %vm923, %v1026, %v1028
      %v1031 = vshrl.u32 %v387, 16
      %v1033 = vrot.slane %v1031, 7
      %v1034 = vrot.slane %v1033, 1
      %v1036 = vshll.u32 %v747, 16
      %v1038 = vsel %vm923, %v1034, %v1036
      %v1039 = vshrl.u32 %v747, 16
      %v1041 = vrot.slane %v1039, 7
      %v1042 = vrot.slane %v1041, 1
      %v1044 = vshll.u32 %v754, 16
      %v1046 = vsel %vm923, %v1042, %v1044
      %v1048 = vshrl.u32 %v416, 16
      %v1050 = vrot.slane %v1048, 7
      %v1051 = vrot.slane %v1050, 1
      %v1053 = vshll.u32 %v423, 16
      %v1055 = vsel %vm923, %v1051, %v1053
      %v1056 = vshrl.u32 %v423, 16
      %v1058 = vrot.slane %v1056, 7
      %v1059 = vrot.slane %v1058, 1
      %v1061 = vshll.u32 %v424, 16
      %v1063 = vsel %vm923, %v1059, %v1061
      %v1064 = vshrl.u32 %v424, 16
      %v1066 = vrot.slane %v1064, 7
      %v1067 = vrot.slane %v1066, 1
      %v1069 = vshll.u32 %v425, 16
      %v1071 = vsel %vm923, %v1067, %v1069
      %v1072 = vshrl.u32 %v425, 16
      %v1074 = vrot.slane %v1072, 7
      %v1075 = vrot.slane %v1074, 1
      %v1077 = vshll.u32 %v769, 16
      %v1079 = vsel %vm923, %v1075, %v1077
      %v1080 = vshrl.u32 %v769, 16
      %v1082 = vrot.slane %v1080, 7
      %v1083 = vrot.slane %v1082, 1
      %v1085 = vshll.u32 %v776, 16
      %v1087 = vsel %vm923, %v1083, %v1085
      %v1089 = vshrl.u32 %v454, 16
      %v1091 = vrot.slane %v1089, 7
      %v1092 = vrot.slane %v1091, 1
      %v1094 = vshll.u32 %v461, 16
      %v1096 = vsel %vm923, %v1092, %v1094
      %v1097 = vshrl.u32 %v461, 16
      %v1099 = vrot.slane %v1097, 7
      %v1100 = vrot.slane %v1099, 1
      %v1102 = vshll.u32 %v462, 16
      %v1104 = vsel %vm923, %v1100, %v1102
      %v1105 = vshrl.u32 %v462, 16
      %v1107 = vrot.slane %v1105, 7
      %v1108 = vrot.slane %v1107, 1
      %v1110 = vshll.u32 %v463, 16
      %v1112 = vsel %vm923, %v1108, %v1110
      %v1113 = vshrl.u32 %v463, 16
      %v1115 = vrot.slane %v1113, 7
      %v1116 = vrot.slane %v1115, 1
      %v1118 = vshll.u32 %v791, 16
      %v1120 = vsel %vm923, %v1116, %v1118
      %v1121 = vshrl.u32 %v791, 16
      %v1123 = vrot.slane %v1121, 7
      %v1124 = vrot.slane %v1123, 1
      %v1126 = vshll.u32 %v798, 16
      %v1128 = vsel %vm923, %v1124, %v1126
      %v1130 = vshrl.u32 %v492, 16
      %v1132 = vrot.slane %v1130, 7
      %v1133 = vrot.slane %v1132, 1
      %v1135 = vshll.u32 %v499, 16
      %v1137 = vsel %vm923, %v1133, %v1135
      %v1138 = vshrl.u32 %v499, 16
      %v1140 = vrot.slane %v1138, 7
      %v1141 = vrot.slane %v1140, 1
      %v1143 = vshll.u32 %v500, 16
      %v1145 = vsel %vm923, %v1141, %v1143
      %v1146 = vshrl.u32 %v500, 16
      %v1148 = vrot.slane %v1146, 7
      %v1149 = vrot.slane %v1148, 1
      %v1151 = vshll.u32 %v501, 16
      %v1153 = vsel %vm923, %v1149, %v1151
      %v1154 = vshrl.u32 %v501, 16
      %v1156 = vrot.slane %v1154, 7
      %v1157 = vrot.slane %v1156, 1
      %v1159 = vshll.u32 %v813, 16
      %v1161 = vsel %vm923, %v1157, %v1159
      %v1162 = vshrl.u32 %v813, 16
      %v1164 = vrot.slane %v1162, 7
      %v1165 = vrot.slane %v1164, 1
      %v1167 = vshll.u32 %v820, 16
      %v1169 = vsel %vm923, %v1165, %v1167
      %v1171 = vshrl.u32 %v530, 16
      %v1173 = vrot.slane %v1171, 7
      %v1174 = vrot.slane %v1173, 1
      %v1176 = vshll.u32 %v537, 16
      %v1178 = vsel %vm923, %v1174, %v1176
      %v1179 = vshrl.u32 %v537, 16
      %v1181 = vrot.slane %v1179, 7
      %v1182 = vrot.slane %v1181, 1
      %v1184 = vshll.u32 %v538, 16
      %v1186 = vsel %vm923, %v1182, %v1184
      %v1187 = vshrl.u32 %v538, 16
      %v1189 = vrot.slane %v1187, 7
      %v1190 = vrot.slane %v1189, 1
      %v1192 = vshll.u32 %v539, 16
      %v1194 = vsel %vm923, %v1190, %v1192
      %v1195 = vshrl.u32 %v539, 16
      %v1197 = vrot.slane %v1195, 7
      %v1198 = vrot.slane %v1197, 1
      %v1200 = vshll.u32 %v835, 16
      %v1202 = vsel %vm923, %v1198, %v1200
      %v1203 = vshrl.u32 %v835, 16
      %v1205 = vrot.slane %v1203, 7
      %v1206 = vrot.slane %v1205, 1
      %v1208 = vshll.u32 %v842, 16
      %v1210 = vsel %vm923, %v1206, %v1208
      %v1212 = vshrl.u32 %v568, 16
      %v1214 = vrot.slane %v1212, 7
      %v1215 = vrot.slane %v1214, 1
      %v1217 = vshll.u32 %v575, 16
      %v1219 = vsel %vm923, %v1215, %v1217
      %v1220 = vshrl.u32 %v575, 16
      %v1222 = vrot.slane %v1220, 7
      %v1223 = vrot.slane %v1222, 1
      %v1225 = vshll.u32 %v576, 16
      %v1227 = vsel %vm923, %v1223, %v1225
      %v1228 = vshrl.u32 %v576, 16
      %v1230 = vrot.slane %v1228, 7
      %v1231 = vrot.slane %v1230, 1
      %v1233 = vshll.u32 %v577, 16
      %v1235 = vsel %vm923, %v1231, %v1233
      %v1236 = vshrl.u32 %v577, 16
      %v1238 = vrot.slane %v1236, 7
      %v1239 = vrot.slane %v1238, 1
      %v1241 = vshll.u32 %v857, 16
      %v1243 = vsel %vm923, %v1239, %v1241
      %v1244 = vshrl.u32 %v857, 16
      %v1246 = vrot.slane %v1244, 7
      %v1247 = vrot.slane %v1246, 1
      %v1249 = vshll.u32 %v864, 16
      %v1251 = vsel %vm923, %v1247, %v1249
      %v1253 = vshrl.u32 %v606, 16
      %v1255 = vrot.slane %v1253, 7
      %v1256 = vrot.slane %v1255, 1
      %v1258 = vshll.u32 %v613, 16
      %v1260 = vsel %vm923, %v1256, %v1258
      %v1261 = vshrl.u32 %v613, 16
      %v1263 = vrot.slane %v1261, 7
      %v1264 = vrot.slane %v1263, 1
      %v1266 = vshll.u32 %v614, 16
      %v1268 = vsel %vm923, %v1264, %v1266
      %v1269 = vshrl.u32 %v614, 16
      %v1271 = vrot.slane %v1269, 7
      %v1272 = vrot.slane %v1271, 1
      %v1274 = vshll.u32 %v615, 16
      %v1276 = vsel %vm923, %v1272, %v1274
      %v1277 = vshrl.u32 %v615, 16
      %v1279 = vrot.slane %v1277, 7
      %v1280 = vrot.slane %v1279, 1
      %v1282 = vshll.u32 %v879, 16
      %v1284 = vsel %vm923, %v1280, %v1282
      %v1285 = vshrl.u32 %v879, 16
      %v1287 = vrot.slane %v1285, 7
      %v1288 = vrot.slane %v1287, 1
      %v1290 = vshll.u32 %v886, 16
      %v1292 = vsel %vm923, %v1288, %v1290
      %v1294 = vshrl.u32 %v644, 16
      %v1296 = vrot.slane %v1294, 7
      %v1297 = vrot.slane %v1296, 1
      %v1299 = vshll.u32 %v651, 16
      %v1301 = vsel %vm923, %v1297, %v1299
      %v1302 = vshrl.u32 %v651, 16
      %v1304 = vrot.slane %v1302, 7
      %v1305 = vrot.slane %v1304, 1
      %v1307 = vshll.u32 %v652, 16
      %v1309 = vsel %vm923, %v1305, %v1307
      %v1310 = vshrl.u32 %v652, 16
      %v1312 = vrot.slane %v1310, 7
      %v1313 = vrot.slane %v1312, 1
      %v1315 = vshll.u32 %v653, 16
      %v1317 = vsel %vm923, %v1313, %v1315
      %v1318 = vshrl.u32 %v653, 16
      %v1320 = vrot.slane %v1318, 7
      %v1321 = vrot.slane %v1320, 1
      %v1323 = vshll.u32 %v901, 16
      %v1325 = vsel %vm923, %v1321, %v1323
      %v1326 = vshrl.u32 %v901, 16
      %v1328 = vrot.slane %v1326, 7
      %v1329 = vrot.slane %v1328, 1
      %v1331 = vshll.u32 %v908, 16
      %v1333 = vsel %vm923, %v1329, %v1331
      %v1334 = vcombine.low %v932, %v940
      %v1335 = vcombine.low %v948, %v956
      %v1336 = vcombine.low %v964, %v973
      %v1337 = vcombine.low %v981, %v989
      %v1339 = vunpack.c.l.s4 1966171168
      %v1340 = vunpack.c.0.s8 %v1339
      %v1341 = vlaneseq
      %v1342 = vshrl.u32 %v1341, 7
      %v1343 = vsub.s32 %v1340, %v1342
      %v1344 = vrot.slane %v1334, %v1343
      %v1346 = vunpack.c.l.s4 1966171168
      %v1347 = vunpack.c.0.s8 %v1346
      %v1348 = vlaneseq
      %v1349 = vshrl.u32 %v1348, 7
      %v1350 = vsub.s32 %v1347, %v1349
      %v1351 = vrot.slane %v1335, %v1350
      %v1353 = vunpack.c.l.s4 1966171168
      %v1354 = vunpack.c.0.s8 %v1353
      %v1355 = vlaneseq
      %v1356 = vshrl.u32 %v1355, 7
      %v1357 = vsub.s32 %v1354, %v1356
      %v1358 = vrot.slane %v1336, %v1357
      %v1360 = vunpack.c.l.s4 1966171168
      %v1361 = vunpack.c.0.s8 %v1360
      %v1362 = vlaneseq
      %v1363 = vshrl.u32 %v1362, 7
      %v1364 = vsub.s32 %v1361, %v1363
      %v1365 = vrot.slane %v1337, %v1364
      %v1366 = vcombine.low %v1344, %v1351
      %v1367 = vcombine.low %v1358, %v1365
      %v1369 = vunpack.c.l.s4 1966171168
      %v1370 = vunpack.c.0.s8 %v1369
      %v1371 = vlaneseq
      %v1372 = vshrl.u32 %v1371, 7
      %v1373 = vsub.s32 %v1370, %v1372
      %v1374 = vrot.slane %v1366, %v1373
      %v1376 = vunpack.c.l.s4 1966171168
      %v1377 = vunpack.c.0.s8 %v1376
      %v1378 = vlaneseq
      %v1379 = vshrl.u32 %v1378, 7
      %v1380 = vsub.s32 %v1377, %v1379
      %v1381 = vrot.slane %v1367, %v1380
      %v1382 = vcombine.low %v1374, %v1381
      %v1383 = vcombine.low %v997, %v1005
      %v1384 = vcombine.low %v1014, %v1022
      %v1385 = vcombine.low %v1030, %v1038
      %v1386 = vcombine.low %v1046, %v1055
      %v1388 = vunpack.c.l.s4 1966171168
      %v1389 = vunpack.c.0.s8 %v1388
      %v1390 = vlaneseq
      %v1391 = vshrl.u32 %v1390, 7
      %v1392 = vsub.s32 %v1389, %v1391
      %v1393 = vrot.slane %v1383, %v1392
      %v1395 = vunpack.c.l.s4 1966171168
      %v1396 = vunpack.c.0.s8 %v1395
      %v1397 = vlaneseq
      %v1398 = vshrl.u32 %v1397, 7
      %v1399 = vsub.s32 %v1396, %v1398
      %v1400 = vrot.slane %v1384, %v1399
      %v1402 = vunpack.c.l.s4 1966171168
      %v1403 = vunpack.c.0.s8 %v1402
      %v1404 = vlaneseq
      %v1405 = vshrl.u32 %v1404, 7
      %v1406 = vsub.s32 %v1403, %v1405
      %v1407 = vrot.slane %v1385, %v1406
      %v1409 = vunpack.c.l.s4 1966171168
      %v1410 = vunpack.c.0.s8 %v1409
      %v1411 = vlaneseq
      %v1412 = vshrl.u32 %v1411, 7
      %v1413 = vsub.s32 %v1410, %v1412
      %v1414 = vrot.slane %v1386, %v1413
      %v1415 = vcombine.low %v1393, %v1400
      %v1416 = vcombine.low %v1407, %v1414
      %v1418 = vunpack.c.l.s4 1966171168
      %v1419 = vunpack.c.0.s8 %v1418
      %v1420 = vlaneseq
      %v1421 = vshrl.u32 %v1420, 7
      %v1422 = vsub.s32 %v1419, %v1421
      %v1423 = vrot.slane %v1415, %v1422
      %v1425 = vunpack.c.l.s4 1966171168
      %v1426 = vunpack.c.0.s8 %v1425
      %v1427 = vlaneseq
      %v1428 = vshrl.u32 %v1427, 7
      %v1429 = vsub.s32 %v1426, %v1428
      %v1430 = vrot.slane %v1416, %v1429
      %v1431 = vcombine.low %v1423, %v1430
      %v1432 = vcombine.low %v1063, %v1071
      %v1433 = vcombine.low %v1079, %v1087
      %v1434 = vcombine.low %v1096, %v1104
      %v1435 = vcombine.low %v1112, %v1120
      %v1437 = vunpack.c.l.s4 1966171168
      %v1438 = vunpack.c.0.s8 %v1437
      %v1439 = vlaneseq
      %v1440 = vshrl.u32 %v1439, 7
      %v1441 = vsub.s32 %v1438, %v1440
      %v1442 = vrot.slane %v1432, %v1441
      %v1444 = vunpack.c.l.s4 1966171168
      %v1445 = vunpack.c.0.s8 %v1444
      %v1446 = vlaneseq
      %v1447 = vshrl.u32 %v1446, 7
      %v1448 = vsub.s32 %v1445, %v1447
      %v1449 = vrot.slane %v1433, %v1448
      %v1451 = vunpack.c.l.s4 1966171168
      %v1452 = vunpack.c.0.s8 %v1451
      %v1453 = vlaneseq
      %v1454 = vshrl.u32 %v1453, 7
      %v1455 = vsub.s32 %v1452, %v1454
      %v1456 = vrot.slane %v1434, %v1455
      %v1458 = vunpack.c.l.s4 1966171168
      %v1459 = vunpack.c.0.s8 %v1458
      %v1460 = vlaneseq
      %v1461 = vshrl.u32 %v1460, 7
      %v1462 = vsub.s32 %v1459, %v1461
      %v1463 = vrot.slane %v1435, %v1462
      %v1464 = vcombine.low %v1442, %v1449
      %v1465 = vcombine.low %v1456, %v1463
      %v1467 = vunpack.c.l.s4 1966171168
      %v1468 = vunpack.c.0.s8 %v1467
      %v1469 = vlaneseq
      %v1470 = vshrl.u32 %v1469, 7
      %v1471 = vsub.s32 %v1468, %v1470
      %v1472 = vrot.slane %v1464, %v1471
      %v1474 = vunpack.c.l.s4 1966171168
      %v1475 = vunpack.c.0.s8 %v1474
      %v1476 = vlaneseq
      %v1477 = vshrl.u32 %v1476, 7
      %v1478 = vsub.s32 %v1475, %v1477
      %v1479 = vrot.slane %v1465, %v1478
      %v1480 = vcombine.low %v1472, %v1479
      %v1481 = vcombine.low %v1128, %v1137
      %v1482 = vcombine.low %v1145, %v1153
      %v1483 = vcombine.low %v1161, %v1169
      %v1484 = vcombine.low %v1178, %v1186
      %v1486 = vunpack.c.l.s4 1966171168
      %v1487 = vunpack.c.0.s8 %v1486
      %v1488 = vlaneseq
      %v1489 = vshrl.u32 %v1488, 7
      %v1490 = vsub.s32 %v1487, %v1489
      %v1491 = vrot.slane %v1481, %v1490
      %v1493 = vunpack.c.l.s4 1966171168
      %v1494 = vunpack.c.0.s8 %v1493
      %v1495 = vlaneseq
      %v1496 = vshrl.u32 %v1495, 7
      %v1497 = vsub.s32 %v1494, %v1496
      %v1498 = vrot.slane %v1482, %v1497
      %v1500 = vunpack.c.l.s4 1966171168
      %v1501 = vunpack.c.0.s8 %v1500
      %v1502 = vlaneseq
      %v1503 = vshrl.u32 %v1502, 7
      %v1504 = vsub.s32 %v1501, %v1503
      %v1505 = vrot.slane %v1483, %v1504
      %v1507 = vunpack.c.l.s4 1966171168
      %v1508 = vunpack.c.0.s8 %v1507
      %v1509 = vlaneseq
      %v1510 = vshrl.u32 %v1509, 7
      %v1511 = vsub.s32 %v1508, %v1510
      %v1512 = vrot.slane %v1484, %v1511
      %v1513 = vcombine.low %v1491, %v1498
      %v1514 = vcombine.low %v1505, %v1512
      %v1516 = vunpack.c.l.s4 1966171168
      %v1517 = vunpack.c.0.s8 %v1516
      %v1518 = vlaneseq
      %v1519 = vshrl.u32 %v1518, 7
      %v1520 = vsub.s32 %v1517, %v1519
      %v1521 = vrot.slane %v1513, %v1520
      %v1523 = vunpack.c.l.s4 1966171168
      %v1524 = vunpack.c.0.s8 %v1523
      %v1525 = vlaneseq
      %v1526 = vshrl.u32 %v1525, 7
      %v1527 = vsub.s32 %v1524, %v1526
      %v1528 = vrot.slane %v1514, %v1527
      %v1529 = vcombine.low %v1521, %v1528
      %v1530 = vcombine.low %v1194, %v1202
      %v1531 = vcombine.low %v1210, %v1219
      %v1532 = vcombine.low %v1227, %v1235
      %v1533 = vcombine.low %v1243, %v1251
      %v1535 = vunpack.c.l.s4 1966171168
      %v1536 = vunpack.c.0.s8 %v1535
      %v1537 = vlaneseq
      %v1538 = vshrl.u32 %v1537, 7
      %v1539 = vsub.s32 %v1536, %v1538
      %v1540 = vrot.slane %v1530, %v1539
      %v1542 = vunpack.c.l.s4 1966171168
      %v1543 = vunpack.c.0.s8 %v1542
      %v1544 = vlaneseq
      %v1545 = vshrl.u32 %v1544, 7
      %v1546 = vsub.s32 %v1543, %v1545
      %v1547 = vrot.slane %v1531, %v1546
      %v1549 = vunpack.c.l.s4 1966171168
      %v1550 = vunpack.c.0.s8 %v1549
      %v1551 = vlaneseq
      %v1552 = vshrl.u32 %v1551, 7
      %v1553 = vsub.s32 %v1550, %v1552
      %v1554 = vrot.slane %v1532, %v1553
      %v1556 = vunpack.c.l.s4 1966171168
      %v1557 = vunpack.c.0.s8 %v1556
      %v1558 = vlaneseq
      %v1559 = vshrl.u32 %v1558, 7
      %v1560 = vsub.s32 %v1557, %v1559
      %v1561 = vrot.slane %v1533, %v1560
      %v1562 = vcombine.low %v1540, %v1547
      %v1563 = vcombine.low %v1554, %v1561
      %v1565 = vunpack.c.l.s4 1966171168
      %v1566 = vunpack.c.0.s8 %v1565
      %v1567 = vlaneseq
      %v1568 = vshrl.u32 %v1567, 7
      %v1569 = vsub.s32 %v1566, %v1568
      %v1570 = vrot.slane %v1562, %v1569
      %v1572 = vunpack.c.l.s4 1966171168
      %v1573 = vunpack.c.0.s8 %v1572
      %v1574 = vlaneseq
      %v1575 = vshrl.u32 %v1574, 7
      %v1576 = vsub.s32 %v1573, %v1575
      %v1577 = vrot.slane %v1563, %v1576
      %v1578 = vcombine.low %v1570, %v1577
      %v1579 = vcombine.low %v1260, %v1268
      %v1580 = vcombine.low %v1276, %v1284
      %v1581 = vcombine.low %v1292, %v1301
      %v1582 = vcombine.low %v1309, %v1317
      %v1584 = vunpack.c.l.s4 1966171168
      %v1585 = vunpack.c.0.s8 %v1584
      %v1586 = vlaneseq
      %v1587 = vshrl.u32 %v1586, 7
      %v1588 = vsub.s32 %v1585, %v1587
      %v1589 = vrot.slane %v1579, %v1588
      %v1591 = vunpack.c.l.s4 1966171168
      %v1592 = vunpack.c.0.s8 %v1591
      %v1593 = vlaneseq
      %v1594 = vshrl.u32 %v1593, 7
      %v1595 = vsub.s32 %v1592, %v1594
      %v1596 = vrot.slane %v1580, %v1595
      %v1598 = vunpack.c.l.s4 1966171168
      %v1599 = vunpack.c.0.s8 %v1598
      %v1600 = vlaneseq
      %v1601 = vshrl.u32 %v1600, 7
      %v1602 = vsub.s32 %v1599, %v1601
      %v1603 = vrot.slane %v1581, %v1602
      %v1605 = vunpack.c.l.s4 1966171168
      %v1606 = vunpack.c.0.s8 %v1605
      %v1607 = vlaneseq
      %v1608 = vshrl.u32 %v1607, 7
      %v1609 = vsub.s32 %v1606, %v1608
      %v1610 = vrot.slane %v1582, %v1609
      %v1611 = vcombine.low %v1589, %v1596
      %v1612 = vcombine.low %v1603, %v1610
      %v1614 = vunpack.c.l.s4 1966171168
      %v1615 = vunpack.c.0.s8 %v1614
      %v1616 = vlaneseq
      %v1617 = vshrl.u32 %v1616, 7
      %v1618 = vsub.s32 %v1615, %v1617
      %v1619 = vrot.slane %v1611, %v1618
      %v1621 = vunpack.c.l.s4 1966171168
      %v1622 = vunpack.c.0.s8 %v1621
      %v1623 = vlaneseq
      %v1624 = vshrl.u32 %v1623, 7
      %v1625 = vsub.s32 %v1622, %v1624
      %v1626 = vrot.slane %v1612, %v1625
      %v1627 = vcombine.low %v1619, %v1626
      %v1628 = vcombine.low %v1325, %v1333
      %v1630 = vunpack.c.l.s4 1966171168
      %v1631 = vunpack.c.0.s8 %v1630
      %v1632 = vlaneseq
      %v1633 = vshrl.u32 %v1632, 7
      %v1634 = vsub.s32 %v1631, %v1633
      %v1635 = vrot.slane %v1628, %v1634
      %v1637 = vunpack.c.l.s4 1966171168
      %v1638 = vunpack.c.0.s8 %v1637
      %v1639 = vlaneseq
      %v1640 = vshrl.u32 %v1639, 7
      %v1641 = vsub.s32 %v1638, %v1640
      %v1642 = vrot.slane %v1635, %v1641
      %vm1643 = vcmask 31744
      %v1645 = vsel %vm1643, %v1382, 0
      %v1648 = vsel %vm1643, %v1431, 0
      %v1651 = vsel %vm1643, %v1480, 0
      %v1654 = vsel %vm1643, %v1529, 0
      %v1657 = vsel %vm1643, %v1578, 0
      %v1660 = vsel %vm1643, %v1627, 0
      %v1663 = vsel %vm1643, %v1642, 0
      %vm1665 = vcmask 1041408
      %v1667 = vsel %vm1665, %v678, 0
      %1669 = vmatprep.subr.bf16.mxu0 0
      %1670 = vmatpush1.bf16.msra.mxu0 0
      %1671 = vmatprep.subr.bf16.mxu0 0
      %1672 = vmatpush1.bf16.msra.mxu0 0
      %1673 = vmatprep.subr.bf16.mxu0 0
      %1674 = vmatpush1.bf16.msra.mxu0 0
      %1675 = vmatprep.subr.bf16.mxu0 0
      %1676 = vmatpush1.bf16.msra.mxu0 0
      %1677 = vmatprep.subr.bf16.mxu0 0
      %1678 = vmatpush1.bf16.msra.mxu0 0
      %1679 = vmatprep.subr.bf16.mxu0 0
      %1680 = vmatpush1.bf16.msra.mxu0 0
      %1681 = vmatprep.subr.bf16.mxu0 0
      %1682 = vmatpush1.bf16.msra.mxu0 0
      %1683 = vmatprep.subr.bf16.mxu0 0
      %1684 = vmatpush1.bf16.msra.mxu0 %v1667
      %1685 = vmatprep.subr.bf16.mxu0 0
      %1686 = vmatpush2.bf16.msra.mxu0 0
      %1687 = vmatprep.subr.bf16.mxu0 0
      %1688 = vmatpush2.bf16.msra.mxu0 0
      %1689 = vmatprep.subr.bf16.mxu0 0
      %1690 = vmatpush2.bf16.msra.mxu0 0
      %1691 = vmatprep.subr.bf16.mxu0 0
      %1692 = vmatpush2.bf16.msra.mxu0 0
      %1693 = vmatprep.subr.bf16.mxu0 0
      %1694 = vmatpush2.bf16.msra.mxu0 0
      %1695 = vmatprep.subr.bf16.mxu0 0
      %1696 = vmatpush2.bf16.msra.mxu0 0
      %1697 = vmatprep.subr.bf16.mxu0 0
      %1698 = vmatpush2.bf16.msra.mxu0 0
      %1699 = vmatprep.subr.bf16.mxu0 0
      %1700 = vmatpush2.bf16.msra.mxu0 0
      %1701 = vmatprep.mubr.bf16.mxu0 0
      %1702 = vmatmul.mubr.bf16.gmra.mxu0 %v1645
      %v1703 = vpop.f32.mrf.mxu0
      %v1704 = vadd.f32 0.0, %v1703
      %v1705 = vpop.f32.mrf.mxu0
      %v1706 = vpop.f32.mrf.mxu0
      %v1707 = vadd.f32 0.0, %v1706
      %v1708 = vpop.f32.mrf.mxu0
      %1709 = vmatprep.mubr.bf16.mxu0 0
      %1710 = vmatmul.mubr.bf16.gmra.mxu0 %v1648
      %v1711 = vpop.f32.mrf.mxu0
      %v1712 = vadd.f32 0.0, %v1711
      %v1713 = vpop.f32.mrf.mxu0
      %v1714 = vpop.f32.mrf.mxu0
      %v1715 = vadd.f32 0.0, %v1714
      %v1716 = vpop.f32.mrf.mxu0
      %1717 = vmatprep.mubr.bf16.mxu0 0
      %1718 = vmatmul.mubr.bf16.gmra.mxu0 %v1651
      %v1719 = vpop.f32.mrf.mxu0
      %v1720 = vadd.f32 0.0, %v1719
      %v1721 = vpop.f32.mrf.mxu0
      %v1722 = vpop.f32.mrf.mxu0
      %v1723 = vadd.f32 0.0, %v1722
      %v1724 = vpop.f32.mrf.mxu0
      %1725 = vmatprep.mubr.bf16.mxu0 0
      %1726 = vmatmul.mubr.bf16.gmra.mxu0 %v1654
      %v1727 = vpop.f32.mrf.mxu0
      %v1728 = vadd.f32 0.0, %v1727
      %v1729 = vpop.f32.mrf.mxu0
      %v1730 = vpop.f32.mrf.mxu0
      %v1731 = vadd.f32 0.0, %v1730
      %v1732 = vpop.f32.mrf.mxu0
      %1733 = vmatprep.mubr.bf16.mxu0 0
      %1734 = vmatmul.mubr.bf16.gmra.mxu0 %v1657
      %v1735 = vpop.f32.mrf.mxu0
      %v1736 = vadd.f32 0.0, %v1735
      %v1737 = vpop.f32.mrf.mxu0
      %v1738 = vpop.f32.mrf.mxu0
      %v1739 = vadd.f32 0.0, %v1738
      %v1740 = vpop.f32.mrf.mxu0
      %1741 = vmatprep.mubr.bf16.mxu0 0
      %1742 = vmatmul.mubr.bf16.gmra.mxu0 %v1660
      %v1743 = vpop.f32.mrf.mxu0
      %v1744 = vadd.f32 0.0, %v1743
      %v1745 = vpop.f32.mrf.mxu0
      %v1746 = vpop.f32.mrf.mxu0
      %v1747 = vadd.f32 0.0, %v1746
      %v1748 = vpop.f32.mrf.mxu0
      %1749 = vmatprep.mubr.bf16.mxu0 0
      %1750 = vmatmul.mubr.bf16.gmra.mxu0 %v1663
      %v1751 = vpop.f32.mrf.mxu0
      %v1752 = vadd.f32 0.0, %v1751
      %v1753 = vpop.f32.mrf.mxu0
      %v1754 = vpop.f32.mrf.mxu0
      %v1755 = vpop.f32.mrf.mxu0
      %1756 = vdwg.mxu0
      %v1757 = vcombine.low %v302, %v309
      %v1758 = vcombine.low %v310, %v311
      %v1759 = vcombine.low %v325, %v340
      %v1760 = vcombine.low %v347, %v348
      %v1762 = vunpack.c.l.s4 1966171168
      %v1763 = vunpack.c.0.s8 %v1762
      %v1764 = vlaneseq
      %v1765 = vshrl.u32 %v1764, 7
      %v1766 = vsub.s32 %v1763, %v1765
      %v1767 = vrot.slane %v1757, %v1766
      %v1769 = vunpack.c.l.s4 1966171168
      %v1770 = vunpack.c.0.s8 %v1769
      %v1771 = vlaneseq
      %v1772 = vshrl.u32 %v1771, 7
      %v1773 = vsub.s32 %v1770, %v1772
      %v1774 = vrot.slane %v1758, %v1773
      %v1776 = vunpack.c.l.s4 1966171168
      %v1777 = vunpack.c.0.s8 %v1776
      %v1778 = vlaneseq
      %v1779 = vshrl.u32 %v1778, 7
      %v1780 = vsub.s32 %v1777, %v1779
      %v1781 = vrot.slane %v1759, %v1780
      %v1783 = vunpack.c.l.s4 1966171168
      %v1784 = vunpack.c.0.s8 %v1783
      %v1785 = vlaneseq
      %v1786 = vshrl.u32 %v1785, 7
      %v1787 = vsub.s32 %v1784, %v1786
      %v1788 = vrot.slane %v1760, %v1787
      %v1789 = vcombine.low %v1767, %v1774
      %v1790 = vcombine.low %v1781, %v1788
      %v1792 = vunpack.c.l.s4 1966171168
      %v1793 = vunpack.c.0.s8 %v1792
      %v1794 = vlaneseq
      %v1795 = vshrl.u32 %v1794, 7
      %v1796 = vsub.s32 %v1793, %v1795
      %v1797 = vrot.slane %v1789, %v1796
      %v1799 = vunpack.c.l.s4 1966171168
      %v1800 = vunpack.c.0.s8 %v1799
      %v1801 = vlaneseq
      %v1802 = vshrl.u32 %v1801, 7
      %v1803 = vsub.s32 %v1800, %v1802
      %v1804 = vrot.slane %v1790, %v1803
      %v1805 = vcombine.low %v1797, %v1804
      %v1806 = vcombine.low %v349, %v363
      %v1807 = vcombine.low %v378, %v385
      %v1808 = vcombine.low %v386, %v387
      %v1809 = vcombine.low %v401, %v416
      %v1811 = vunpack.c.l.s4 1966171168
      %v1812 = vunpack.c.0.s8 %v1811
      %v1813 = vlaneseq
      %v1814 = vshrl.u32 %v1813, 7
      %v1815 = vsub.s32 %v1812, %v1814
      %v1816 = vrot.slane %v1806, %v1815
      %v1818 = vunpack.c.l.s4 1966171168
      %v1819 = vunpack.c.0.s8 %v1818
      %v1820 = vlaneseq
      %v1821 = vshrl.u32 %v1820, 7
      %v1822 = vsub.s32 %v1819, %v1821
      %v1823 = vrot.slane %v1807, %v1822
      %v1825 = vunpack.c.l.s4 1966171168
      %v1826 = vunpack.c.0.s8 %v1825
      %v1827 = vlaneseq
      %v1828 = vshrl.u32 %v1827, 7
      %v1829 = vsub.s32 %v1826, %v1828
      %v1830 = vrot.slane %v1808, %v1829
      %v1832 = vunpack.c.l.s4 1966171168
      %v1833 = vunpack.c.0.s8 %v1832
      %v1834 = vlaneseq
      %v1835 = vshrl.u32 %v1834, 7
      %v1836 = vsub.s32 %v1833, %v1835
      %v1837 = vrot.slane %v1809, %v1836
      %v1838 = vcombine.low %v1816, %v1823
      %v1839 = vcombine.low %v1830, %v1837
      %v1841 = vunpack.c.l.s4 1966171168
      %v1842 = vunpack.c.0.s8 %v1841
      %v1843 = vlaneseq
      %v1844 = vshrl.u32 %v1843, 7
      %v1845 = vsub.s32 %v1842, %v1844
      %v1846 = vrot.slane %v1838, %v1845
      %v1848 = vunpack.c.l.s4 1966171168
      %v1849 = vunpack.c.0.s8 %v1848
      %v1850 = vlaneseq
      %v1851 = vshrl.u32 %v1850, 7
      %v1852 = vsub.s32 %v1849, %v1851
      %v1853 = vrot.slane %v1839, %v1852
      %v1854 = vcombine.low %v1846, %v1853
      %v1855 = vcombine.low %v423, %v424
      %v1856 = vcombine.low %v425, %v439
      %v1857 = vcombine.low %v454, %v461
      %v1858 = vcombine.low %v462, %v463
      %v1860 = vunpack.c.l.s4 1966171168
      %v1861 = vunpack.c.0.s8 %v1860
      %v1862 = vlaneseq
      %v1863 = vshrl.u32 %v1862, 7
      %v1864 = vsub.s32 %v1861, %v1863
      %v1865 = vrot.slane %v1855, %v1864
      %v1867 = vunpack.c.l.s4 1966171168
      %v1868 = vunpack.c.0.s8 %v1867
      %v1869 = vlaneseq
      %v1870 = vshrl.u32 %v1869, 7
      %v1871 = vsub.s32 %v1868, %v1870
      %v1872 = vrot.slane %v1856, %v1871
      %v1874 = vunpack.c.l.s4 1966171168
      %v1875 = vunpack.c.0.s8 %v1874
      %v1876 = vlaneseq
      %v1877 = vshrl.u32 %v1876, 7
      %v1878 = vsub.s32 %v1875, %v1877
      %v1879 = vrot.slane %v1857, %v1878
      %v1881 = vunpack.c.l.s4 1966171168
      %v1882 = vunpack.c.0.s8 %v1881
      %v1883 = vlaneseq
      %v1884 = vshrl.u32 %v1883, 7
      %v1885 = vsub.s32 %v1882, %v1884
      %v1886 = vrot.slane %v1858, %v1885
      %v1887 = vcombine.low %v1865, %v1872
      %v1888 = vcombine.low %v1879, %v1886
      %v1890 = vunpack.c.l.s4 1966171168
      %v1891 = vunpack.c.0.s8 %v1890
      %v1892 = vlaneseq
      %v1893 = vshrl.u32 %v1892, 7
      %v1894 = vsub.s32 %v1891, %v1893
      %v1895 = vrot.slane %v1887, %v1894
      %v1897 = vunpack.c.l.s4 1966171168
      %v1898 = vunpack.c.0.s8 %v1897
      %v1899 = vlaneseq
      %v1900 = vshrl.u32 %v1899, 7
      %v1901 = vsub.s32 %v1898, %v1900
      %v1902 = vrot.slane %v1888, %v1901
      %v1903 = vcombine.low %v1895, %v1902
      %v1904 = vcombine.low %v477, %v492
      %v1905 = vcombine.low %v499, %v500
      %v1906 = vcombine.low %v501, %v515
      %v1907 = vcombine.low %v530, %v537
      %v1909 = vunpack.c.l.s4 1966171168
      %v1910 = vunpack.c.0.s8 %v1909
      %v1911 = vlaneseq
      %v1912 = vshrl.u32 %v1911, 7
      %v1913 = vsub.s32 %v1910, %v1912
      %v1914 = vrot.slane %v1904, %v1913
      %v1916 = vunpack.c.l.s4 1966171168
      %v1917 = vunpack.c.0.s8 %v1916
      %v1918 = vlaneseq
      %v1919 = vshrl.u32 %v1918, 7
      %v1920 = vsub.s32 %v1917, %v1919
      %v1921 = vrot.slane %v1905, %v1920
      %v1923 = vunpack.c.l.s4 1966171168
      %v1924 = vunpack.c.0.s8 %v1923
      %v1925 = vlaneseq
      %v1926 = vshrl.u32 %v1925, 7
      %v1927 = vsub.s32 %v1924, %v1926
      %v1928 = vrot.slane %v1906, %v1927
      %v1930 = vunpack.c.l.s4 1966171168
      %v1931 = vunpack.c.0.s8 %v1930
      %v1932 = vlaneseq
      %v1933 = vshrl.u32 %v1932, 7
      %v1934 = vsub.s32 %v1931, %v1933
      %v1935 = vrot.slane %v1907, %v1934
      %v1936 = vcombine.low %v1914, %v1921
      %v1937 = vcombine.low %v1928, %v1935
      %v1939 = vunpack.c.l.s4 1966171168
      %v1940 = vunpack.c.0.s8 %v1939
      %v1941 = vlaneseq
      %v1942 = vshrl.u32 %v1941, 7
      %v1943 = vsub.s32 %v1940, %v1942
      %v1944 = vrot.slane %v1936, %v1943
      %v1946 = vunpack.c.l.s4 1966171168
      %v1947 = vunpack.c.0.s8 %v1946
      %v1948 = vlaneseq
      %v1949 = vshrl.u32 %v1948, 7
      %v1950 = vsub.s32 %v1947, %v1949
      %v1951 = vrot.slane %v1937, %v1950
      %v1952 = vcombine.low %v1944, %v1951
      %v1953 = vcombine.low %v538, %v539
      %v1954 = vcombine.low %v553, %v568
      %v1955 = vcombine.low %v575, %v576
      %v1956 = vcombine.low %v577, %v591
      %v1958 = vunpack.c.l.s4 1966171168
      %v1959 = vunpack.c.0.s8 %v1958
      %v1960 = vlaneseq
      %v1961 = vshrl.u32 %v1960, 7
      %v1962 = vsub.s32 %v1959, %v1961
      %v1963 = vrot.slane %v1953, %v1962
      %v1965 = vunpack.c.l.s4 1966171168
      %v1966 = vunpack.c.0.s8 %v1965
      %v1967 = vlaneseq
      %v1968 = vshrl.u32 %v1967, 7
      %v1969 = vsub.s32 %v1966, %v1968
      %v1970 = vrot.slane %v1954, %v1969
      %v1972 = vunpack.c.l.s4 1966171168
      %v1973 = vunpack.c.0.s8 %v1972
      %v1974 = vlaneseq
      %v1975 = vshrl.u32 %v1974, 7
      %v1976 = vsub.s32 %v1973, %v1975
      %v1977 = vrot.slane %v1955, %v1976
      %v1979 = vunpack.c.l.s4 1966171168
      %v1980 = vunpack.c.0.s8 %v1979
      %v1981 = vlaneseq
      %v1982 = vshrl.u32 %v1981, 7
      %v1983 = vsub.s32 %v1980, %v1982
      %v1984 = vrot.slane %v1956, %v1983
      %v1985 = vcombine.low %v1963, %v1970
      %v1986 = vcombine.low %v1977, %v1984
      %v1988 = vunpack.c.l.s4 1966171168
      %v1989 = vunpack.c.0.s8 %v1988
      %v1990 = vlaneseq
      %v1991 = vshrl.u32 %v1990, 7
      %v1992 = vsub.s32 %v1989, %v1991
      %v1993 = vrot.slane %v1985, %v1992
      %v1995 = vunpack.c.l.s4 1966171168
      %v1996 = vunpack.c.0.s8 %v1995
      %v1997 = vlaneseq
      %v1998 = vshrl.u32 %v1997, 7
      %v1999 = vsub.s32 %v1996, %v1998
      %v2000 = vrot.slane %v1986, %v1999
      %v2001 = vcombine.low %v1993, %v2000
      %v2002 = vcombine.low %v606, %v613
      %v2003 = vcombine.low %v614, %v615
      %v2004 = vcombine.low %v629, %v644
      %v2005 = vcombine.low %v651, %v652
      %v2007 = vunpack.c.l.s4 1966171168
      %v2008 = vunpack.c.0.s8 %v2007
      %v2009 = vlaneseq
      %v2010 = vshrl.u32 %v2009, 7
      %v2011 = vsub.s32 %v2008, %v2010
      %v2012 = vrot.slane %v2002, %v2011
      %v2014 = vunpack.c.l.s4 1966171168
      %v2015 = vunpack.c.0.s8 %v2014
      %v2016 = vlaneseq
      %v2017 = vshrl.u32 %v2016, 7
      %v2018 = vsub.s32 %v2015, %v2017
      %v2019 = vrot.slane %v2003, %v2018
      %v2021 = vunpack.c.l.s4 1966171168
      %v2022 = vunpack.c.0.s8 %v2021
      %v2023 = vlaneseq
      %v2024 = vshrl.u32 %v2023, 7
      %v2025 = vsub.s32 %v2022, %v2024
      %v2026 = vrot.slane %v2004, %v2025
      %v2028 = vunpack.c.l.s4 1966171168
      %v2029 = vunpack.c.0.s8 %v2028
      %v2030 = vlaneseq
      %v2031 = vshrl.u32 %v2030, 7
      %v2032 = vsub.s32 %v2029, %v2031
      %v2033 = vrot.slane %v2005, %v2032
      %v2034 = vcombine.low %v2012, %v2019
      %v2035 = vcombine.low %v2026, %v2033
      %v2037 = vunpack.c.l.s4 1966171168
      %v2038 = vunpack.c.0.s8 %v2037
      %v2039 = vlaneseq
      %v2040 = vshrl.u32 %v2039, 7
      %v2041 = vsub.s32 %v2038, %v2040
      %v2042 = vrot.slane %v2034, %v2041
      %v2044 = vunpack.c.l.s4 1966171168
      %v2045 = vunpack.c.0.s8 %v2044
      %v2046 = vlaneseq
      %v2047 = vshrl.u32 %v2046, 7
      %v2048 = vsub.s32 %v2045, %v2047
      %v2049 = vrot.slane %v2035, %v2048
      %v2050 = vcombine.low %v2042, %v2049
      %v2051 = vcombine.low %v653, %v667
      %v2053 = vunpack.c.l.s4 1966171168
      %v2054 = vunpack.c.0.s8 %v2053
      %v2055 = vlaneseq
      %v2056 = vshrl.u32 %v2055, 7
      %v2057 = vsub.s32 %v2054, %v2056
      %v2058 = vrot.slane %v2051, %v2057
      %v2060 = vunpack.c.l.s4 1966171168
      %v2061 = vunpack.c.0.s8 %v2060
      %v2062 = vlaneseq
      %v2063 = vshrl.u32 %v2062, 7
      %v2064 = vsub.s32 %v2061, %v2063
      %v2065 = vrot.slane %v2058, %v2064
      %vm2066 = vcmask 64512
      %v2068 = vsel %vm2066, %v1805, 0
      %v2071 = vsel %vm2066, %v1854, 0
      %v2074 = vsel %vm2066, %v1903, 0
      %v2077 = vsel %vm2066, %v1952, 0
      %v2080 = vsel %vm2066, %v2001, 0
      %v2083 = vsel %vm2066, %v2050, 0
      %v2086 = vsel %vm2066, %v2065, 0
      %vm2088 = vcmask 1043456
      %v2090 = vsel %vm2088, %v267, 0
      %2092 = vmatprep.subr.bf16.mxu0 0
      %2093 = vmatpush1.bf16.msra.mxu0 0
      %2094 = vmatprep.subr.bf16.mxu0 0
      %2095 = vmatpush1.bf16.msra.mxu0 0
      %2096 = vmatprep.subr.bf16.mxu0 0
      %2097 = vmatpush1.bf16.msra.mxu0 0
      %2098 = vmatprep.subr.bf16.mxu0 0
      %2099 = vmatpush1.bf16.msra.mxu0 0
      %2100 = vmatprep.subr.bf16.mxu0 0
      %2101 = vmatpush1.bf16.msra.mxu0 0
      %2102 = vmatprep.subr.bf16.mxu0 0
      %2103 = vmatpush1.bf16.msra.mxu0 0
      %2104 = vmatprep.subr.bf16.mxu0 0
      %2105 = vmatpush1.bf16.msra.mxu0 0
      %2106 = vmatprep.subr.bf16.mxu0 0
      %2107 = vmatpush1.bf16.msra.mxu0 %v2090
      %2108 = vmatprep.subr.bf16.mxu0 0
      %2109 = vmatpush2.bf16.msra.mxu0 0
      %2110 = vmatprep.subr.bf16.mxu0 0
      %2111 = vmatpush2.bf16.msra.mxu0 0
      %2112 = vmatprep.subr.bf16.mxu0 0
      %2113 = vmatpush2.bf16.msra.mxu0 0
      %2114 = vmatprep.subr.bf16.mxu0 0
      %2115 = vmatpush2.bf16.msra.mxu0 0
      %2116 = vmatprep.subr.bf16.mxu0 0
      %2117 = vmatpush2.bf16.msra.mxu0 0
      %2118 = vmatprep.subr.bf16.mxu0 0
      %2119 = vmatpush2.bf16.msra.mxu0 0
      %2120 = vmatprep.subr.bf16.mxu0 0
      %2121 = vmatpush2.bf16.msra.mxu0 0
      %2122 = vmatprep.subr.bf16.mxu0 0
      %2123 = vmatpush2.bf16.msra.mxu0 0
      %2124 = vmatprep.mubr.bf16.mxu0 0
      %2125 = vmatmul.mubr.bf16.gmra.mxu0 %v2068
      %v2126 = vpop.f32.mrf.mxu0
      %v2127 = vadd.f32 %v1704, %v2126
      %v2128 = vpop.f32.mrf.mxu0
      %v2129 = vpop.f32.mrf.mxu0
      %v2130 = vadd.f32 %v1707, %v2129
      %v2131 = vpop.f32.mrf.mxu0
      %2132 = vmatprep.mubr.bf16.mxu0 0
      %2133 = vmatmul.mubr.bf16.gmra.mxu0 %v2071
      %v2134 = vpop.f32.mrf.mxu0
      %v2135 = vadd.f32 %v1712, %v2134
      %v2136 = vpop.f32.mrf.mxu0
      %v2137 = vpop.f32.mrf.mxu0
      %v2138 = vadd.f32 %v1715, %v2137
      %v2139 = vpop.f32.mrf.mxu0
      %2140 = vmatprep.mubr.bf16.mxu0 0
      %2141 = vmatmul.mubr.bf16.gmra.mxu0 %v2074
      %v2142 = vpop.f32.mrf.mxu0
      %v2143 = vadd.f32 %v1720, %v2142
      %v2144 = vpop.f32.mrf.mxu0
      %v2145 = vpop.f32.mrf.mxu0
      %v2146 = vadd.f32 %v1723, %v2145
      %v2147 = vpop.f32.mrf.mxu0
      %2148 = vmatprep.mubr.bf16.mxu0 0
      %2149 = vmatmul.mubr.bf16.gmra.mxu0 %v2077
      %v2150 = vpop.f32.mrf.mxu0
      %v2151 = vadd.f32 %v1728, %v2150
      %v2152 = vpop.f32.mrf.mxu0
      %v2153 = vpop.f32.mrf.mxu0
      %v2154 = vadd.f32 %v1731, %v2153
      %v2155 = vpop.f32.mrf.mxu0
      %2156 = vmatprep.mubr.bf16.mxu0 0
      %2157 = vmatmul.mubr.bf16.gmra.mxu0 %v2080
      %v2158 = vpop.f32.mrf.mxu0
      %v2159 = vadd.f32 %v1736, %v2158
      %v2160 = vpop.f32.mrf.mxu0
      %v2161 = vpop.f32.mrf.mxu0
      %v2162 = vadd.f32 %v1739, %v2161
      %v2163 = vpop.f32.mrf.mxu0
      %2164 = vmatprep.mubr.bf16.mxu0 0
      %2165 = vmatmul.mubr.bf16.gmra.mxu0 %v2083
      %v2166 = vpop.f32.mrf.mxu0
      %v2167 = vadd.f32 %v1744, %v2166
      %v2168 = vpop.f32.mrf.mxu0
      %v2169 = vpop.f32.mrf.mxu0
      %v2170 = vadd.f32 %v1747, %v2169
      %v2171 = vpop.f32.mrf.mxu0
      %2172 = vmatprep.mubr.bf16.mxu0 0
      %2173 = vmatmul.mubr.bf16.gmra.mxu0 %v2086
      %v2174 = vpop.f32.mrf.mxu0
      %v2175 = vadd.f32 %v1752, %v2174
      %v2176 = vpop.f32.mrf.mxu0
      %v2177 = vpop.f32.mrf.mxu0
      %v2178 = vpop.f32.mrf.mxu0
      %2179 = vdwg.mxu0
      %s2180 = sadd.s32 2, %s244
      %s2181 = smul.addr %s2180, 4
      %s2182 = scalar_lea.vmem %s220, %s2181
      %v2183 = vld [vmem:[%s2182] sm:$0xf]
      %v2184 = vld [vmem:[%s2182 + $0x4] sm:$0x1]
      %v2185 = vld [vmem:[%s2182 + $0x10] sm:$0xf]
      %v2186 = vld [vmem:[%s2182 + $0x14] sm:$0x1]
      %v2187 = vld [vmem:[%s2182 + $0x20] sm:$0xf]
      %v2188 = vld [vmem:[%s2182 + $0x24] sm:$0x1]
      %v2189 = vld [vmem:[%s2182 + $0x30] sm:$0xf]
      %v2190 = vld [vmem:[%s2182 + $0x34] sm:$0x1]
      %v2191 = vld [vmem:[%s2182 + $0x40] sm:$0xf]
      %v2192 = vld [vmem:[%s2182 + $0x44] sm:$0x1]
      %v2193 = vld [vmem:[%s2182 + $0x50] sm:$0xf]
      %v2194 = vld [vmem:[%s2182 + $0x54] sm:$0x1]
      %v2195 = vld [vmem:[%s2182 + $0x60] sm:$0xf]
      %v2196 = vld [vmem:[%s2182 + $0x64] sm:$0x1]
      %v2197 = vld [vmem:[%s2182 + $0x70] sm:$0xf]
      %v2198 = vld [vmem:[%s2182 + $0x74] sm:$0x1]
      %v2199 = vld [vmem:[%s2182 + $0x80] sm:$0xf]
      %v2200 = vld [vmem:[%s2182 + $0x84] sm:$0x1]
      %v2201 = vld [vmem:[%s2182 + $0x90] sm:$0xf]
      %v2202 = vld [vmem:[%s2182 + $0x94] sm:$0x1]
      %v2203 = vld [vmem:[%s224 + $0x4] sm:$0xc]
      %v2204 = vld [vmem:[%s224 + $0x8] sm:$0x3]
      %v2226 = vunpack.c.l.s4 1966171168
      %v2227 = vunpack.c.0.s8 %v2226
      %v2228 = vlaneseq
      %v2229 = vshrl.u32 %v2228, 7
      %v2230 = vsub.s32 %v2227, %v2229
      %v2231 = vrot.slane %v2183, %v2230
      %v2232 = vcombine.high %v2231, %v2231
      %v2234 = vunpack.c.l.s4 1966171168
      %v2235 = vunpack.c.0.s8 %v2234
      %v2236 = vlaneseq
      %v2237 = vshrl.u32 %v2236, 7
      %v2238 = vsub.s32 %v2235, %v2237
      %v2239 = vrot.slane %v2231, %v2238
      %v2241 = vunpack.c.l.s4 1966171168
      %v2242 = vunpack.c.0.s8 %v2241
      %v2243 = vlaneseq
      %v2244 = vshrl.u32 %v2243, 7
      %v2245 = vsub.s32 %v2242, %v2244
      %v2246 = vrot.slane %v2232, %v2245
      %v2247 = vcombine.high %v2239, %v2239
      %v2248 = vcombine.high %v2246, %v2246
      %v2250 = vunpack.c.l.s4 1966171168
      %v2251 = vunpack.c.0.s8 %v2250
      %v2252 = vlaneseq
      %v2253 = vshrl.u32 %v2252, 7
      %v2254 = vsub.s32 %v2251, %v2253
      %v2255 = vrot.slane %v2184, %v2254
      %v2257 = vunpack.c.l.s4 1966171168
      %v2258 = vunpack.c.0.s8 %v2257
      %v2259 = vlaneseq
      %v2260 = vshrl.u32 %v2259, 7
      %v2261 = vsub.s32 %v2258, %v2260
      %v2262 = vrot.slane %v2255, %v2261
      %v2264 = vunpack.c.l.s4 1966171168
      %v2265 = vunpack.c.0.s8 %v2264
      %v2266 = vlaneseq
      %v2267 = vshrl.u32 %v2266, 7
      %v2268 = vsub.s32 %v2265, %v2267
      %v2269 = vrot.slane %v2185, %v2268
      %v2270 = vcombine.high %v2269, %v2269
      %v2272 = vunpack.c.l.s4 1966171168
      %v2273 = vunpack.c.0.s8 %v2272
      %v2274 = vlaneseq
      %v2275 = vshrl.u32 %v2274, 7
      %v2276 = vsub.s32 %v2273, %v2275
      %v2277 = vrot.slane %v2269, %v2276
      %v2279 = vunpack.c.l.s4 1966171168
      %v2280 = vunpack.c.0.s8 %v2279
      %v2281 = vlaneseq
      %v2282 = vshrl.u32 %v2281, 7
      %v2283 = vsub.s32 %v2280, %v2282
      %v2284 = vrot.slane %v2270, %v2283
      %v2285 = vcombine.high %v2277, %v2277
      %v2286 = vcombine.high %v2284, %v2284
      %v2288 = vunpack.c.l.s4 1966171168
      %v2289 = vunpack.c.0.s8 %v2288
      %v2290 = vlaneseq
      %v2291 = vshrl.u32 %v2290, 7
      %v2292 = vsub.s32 %v2289, %v2291
      %v2293 = vrot.slane %v2186, %v2292
      %v2295 = vunpack.c.l.s4 1966171168
      %v2296 = vunpack.c.0.s8 %v2295
      %v2297 = vlaneseq
      %v2298 = vshrl.u32 %v2297, 7
      %v2299 = vsub.s32 %v2296, %v2298
      %v2300 = vrot.slane %v2293, %v2299
      %v2302 = vunpack.c.l.s4 1966171168
      %v2303 = vunpack.c.0.s8 %v2302
      %v2304 = vlaneseq
      %v2305 = vshrl.u32 %v2304, 7
      %v2306 = vsub.s32 %v2303, %v2305
      %v2307 = vrot.slane %v2187, %v2306
      %v2308 = vcombine.high %v2307, %v2307
      %v2310 = vunpack.c.l.s4 1966171168
      %v2311 = vunpack.c.0.s8 %v2310
      %v2312 = vlaneseq
      %v2313 = vshrl.u32 %v2312, 7
      %v2314 = vsub.s32 %v2311, %v2313
      %v2315 = vrot.slane %v2307, %v2314
      %v2317 = vunpack.c.l.s4 1966171168
      %v2318 = vunpack.c.0.s8 %v2317
      %v2319 = vlaneseq
      %v2320 = vshrl.u32 %v2319, 7
      %v2321 = vsub.s32 %v2318, %v2320
      %v2322 = vrot.slane %v2308, %v2321
      %v2323 = vcombine.high %v2315, %v2315
      %v2324 = vcombine.high %v2322, %v2322
      %v2326 = vunpack.c.l.s4 1966171168
      %v2327 = vunpack.c.0.s8 %v2326
      %v2328 = vlaneseq
      %v2329 = vshrl.u32 %v2328, 7
      %v2330 = vsub.s32 %v2327, %v2329
      %v2331 = vrot.slane %v2188, %v2330
      %v2333 = vunpack.c.l.s4 1966171168
      %v2334 = vunpack.c.0.s8 %v2333
      %v2335 = vlaneseq
      %v2336 = vshrl.u32 %v2335, 7
      %v2337 = vsub.s32 %v2334, %v2336
      %v2338 = vrot.slane %v2331, %v2337
      %v2340 = vunpack.c.l.s4 1966171168
      %v2341 = vunpack.c.0.s8 %v2340
      %v2342 = vlaneseq
      %v2343 = vshrl.u32 %v2342, 7
      %v2344 = vsub.s32 %v2341, %v2343
      %v2345 = vrot.slane %v2189, %v2344
      %v2346 = vcombine.high %v2345, %v2345
      %v2348 = vunpack.c.l.s4 1966171168
      %v2349 = vunpack.c.0.s8 %v2348
      %v2350 = vlaneseq
      %v2351 = vshrl.u32 %v2350, 7
      %v2352 = vsub.s32 %v2349, %v2351
      %v2353 = vrot.slane %v2345, %v2352
      %v2355 = vunpack.c.l.s4 1966171168
      %v2356 = vunpack.c.0.s8 %v2355
      %v2357 = vlaneseq
      %v2358 = vshrl.u32 %v2357, 7
      %v2359 = vsub.s32 %v2356, %v2358
      %v2360 = vrot.slane %v2346, %v2359
      %v2361 = vcombine.high %v2353, %v2353
      %v2362 = vcombine.high %v2360, %v2360
      %v2364 = vunpack.c.l.s4 1966171168
      %v2365 = vunpack.c.0.s8 %v2364
      %v2366 = vlaneseq
      %v2367 = vshrl.u32 %v2366, 7
      %v2368 = vsub.s32 %v2365, %v2367
      %v2369 = vrot.slane %v2190, %v2368
      %v2371 = vunpack.c.l.s4 1966171168
      %v2372 = vunpack.c.0.s8 %v2371
      %v2373 = vlaneseq
      %v2374 = vshrl.u32 %v2373, 7
      %v2375 = vsub.s32 %v2372, %v2374
      %v2376 = vrot.slane %v2369, %v2375
      %v2378 = vunpack.c.l.s4 1966171168
      %v2379 = vunpack.c.0.s8 %v2378
      %v2380 = vlaneseq
      %v2381 = vshrl.u32 %v2380, 7
      %v2382 = vsub.s32 %v2379, %v2381
      %v2383 = vrot.slane %v2191, %v2382
      %v2384 = vcombine.high %v2383, %v2383
      %v2386 = vunpack.c.l.s4 1966171168
      %v2387 = vunpack.c.0.s8 %v2386
      %v2388 = vlaneseq
      %v2389 = vshrl.u32 %v2388, 7
      %v2390 = vsub.s32 %v2387, %v2389
      %v2391 = vrot.slane %v2383, %v2390
      %v2393 = vunpack.c.l.s4 1966171168
      %v2394 = vunpack.c.0.s8 %v2393
      %v2395 = vlaneseq
      %v2396 = vshrl.u32 %v2395, 7
      %v2397 = vsub.s32 %v2394, %v2396
      %v2398 = vrot.slane %v2384, %v2397
      %v2399 = vcombine.high %v2391, %v2391
      %v2400 = vcombine.high %v2398, %v2398
      %v2402 = vunpack.c.l.s4 1966171168
      %v2403 = vunpack.c.0.s8 %v2402
      %v2404 = vlaneseq
      %v2405 = vshrl.u32 %v2404, 7
      %v2406 = vsub.s32 %v2403, %v2405
      %v2407 = vrot.slane %v2192, %v2406
      %v2409 = vunpack.c.l.s4 1966171168
      %v2410 = vunpack.c.0.s8 %v2409
      %v2411 = vlaneseq
      %v2412 = vshrl.u32 %v2411, 7
      %v2413 = vsub.s32 %v2410, %v2412
      %v2414 = vrot.slane %v2407, %v2413
      %v2416 = vunpack.c.l.s4 1966171168
      %v2417 = vunpack.c.0.s8 %v2416
      %v2418 = vlaneseq
      %v2419 = vshrl.u32 %v2418, 7
      %v2420 = vsub.s32 %v2417, %v2419
      %v2421 = vrot.slane %v2193, %v2420
      %v2422 = vcombine.high %v2421, %v2421
      %v2424 = vunpack.c.l.s4 1966171168
      %v2425 = vunpack.c.0.s8 %v2424
      %v2426 = vlaneseq
      %v2427 = vshrl.u32 %v2426, 7
      %v2428 = vsub.s32 %v2425, %v2427
      %v2429 = vrot.slane %v2421, %v2428
      %v2431 = vunpack.c.l.s4 1966171168
      %v2432 = vunpack.c.0.s8 %v2431
      %v2433 = vlaneseq
      %v2434 = vshrl.u32 %v2433, 7
      %v2435 = vsub.s32 %v2432, %v2434
      %v2436 = vrot.slane %v2422, %v2435
      %v2437 = vcombine.high %v2429, %v2429
      %v2438 = vcombine.high %v2436, %v2436
      %v2440 = vunpack.c.l.s4 1966171168
      %v2441 = vunpack.c.0.s8 %v2440
      %v2442 = vlaneseq
      %v2443 = vshrl.u32 %v2442, 7
      %v2444 = vsub.s32 %v2441, %v2443
      %v2445 = vrot.slane %v2194, %v2444
      %v2447 = vunpack.c.l.s4 1966171168
      %v2448 = vunpack.c.0.s8 %v2447
      %v2449 = vlaneseq
      %v2450 = vshrl.u32 %v2449, 7
      %v2451 = vsub.s32 %v2448, %v2450
      %v2452 = vrot.slane %v2445, %v2451
      %v2454 = vunpack.c.l.s4 1966171168
      %v2455 = vunpack.c.0.s8 %v2454
      %v2456 = vlaneseq
      %v2457 = vshrl.u32 %v2456, 7
      %v2458 = vsub.s32 %v2455, %v2457
      %v2459 = vrot.slane %v2195, %v2458
      %v2460 = vcombine.high %v2459, %v2459
      %v2462 = vunpack.c.l.s4 1966171168
      %v2463 = vunpack.c.0.s8 %v2462
      %v2464 = vlaneseq
      %v2465 = vshrl.u32 %v2464, 7
      %v2466 = vsub.s32 %v2463, %v2465
      %v2467 = vrot.slane %v2459, %v2466
      %v2469 = vunpack.c.l.s4 1966171168
      %v2470 = vunpack.c.0.s8 %v2469
      %v2471 = vlaneseq
      %v2472 = vshrl.u32 %v2471, 7
      %v2473 = vsub.s32 %v2470, %v2472
      %v2474 = vrot.slane %v2460, %v2473
      %v2475 = vcombine.high %v2467, %v2467
      %v2476 = vcombine.high %v2474, %v2474
      %v2478 = vunpack.c.l.s4 1966171168
      %v2479 = vunpack.c.0.s8 %v2478
      %v2480 = vlaneseq
      %v2481 = vshrl.u32 %v2480, 7
      %v2482 = vsub.s32 %v2479, %v2481
      %v2483 = vrot.slane %v2196, %v2482
      %v2485 = vunpack.c.l.s4 1966171168
      %v2486 = vunpack.c.0.s8 %v2485
      %v2487 = vlaneseq
      %v2488 = vshrl.u32 %v2487, 7
      %v2489 = vsub.s32 %v2486, %v2488
      %v2490 = vrot.slane %v2483, %v2489
      %v2492 = vunpack.c.l.s4 1966171168
      %v2493 = vunpack.c.0.s8 %v2492
      %v2494 = vlaneseq
      %v2495 = vshrl.u32 %v2494, 7
      %v2496 = vsub.s32 %v2493, %v2495
      %v2497 = vrot.slane %v2197, %v2496
      %v2498 = vcombine.high %v2497, %v2497
      %v2500 = vunpack.c.l.s4 1966171168
      %v2501 = vunpack.c.0.s8 %v2500
      %v2502 = vlaneseq
      %v2503 = vshrl.u32 %v2502, 7
      %v2504 = vsub.s32 %v2501, %v2503
      %v2505 = vrot.slane %v2497, %v2504
      %v2507 = vunpack.c.l.s4 1966171168
      %v2508 = vunpack.c.0.s8 %v2507
      %v2509 = vlaneseq
      %v2510 = vshrl.u32 %v2509, 7
      %v2511 = vsub.s32 %v2508, %v2510
      %v2512 = vrot.slane %v2498, %v2511
      %v2513 = vcombine.high %v2505, %v2505
      %v2514 = vcombine.high %v2512, %v2512
      %v2516 = vunpack.c.l.s4 1966171168
      %v2517 = vunpack.c.0.s8 %v2516
      %v2518 = vlaneseq
      %v2519 = vshrl.u32 %v2518, 7
      %v2520 = vsub.s32 %v2517, %v2519
      %v2521 = vrot.slane %v2198, %v2520
      %v2523 = vunpack.c.l.s4 1966171168
      %v2524 = vunpack.c.0.s8 %v2523
      %v2525 = vlaneseq
      %v2526 = vshrl.u32 %v2525, 7
      %v2527 = vsub.s32 %v2524, %v2526
      %v2528 = vrot.slane %v2521, %v2527
      %v2530 = vunpack.c.l.s4 1966171168
      %v2531 = vunpack.c.0.s8 %v2530
      %v2532 = vlaneseq
      %v2533 = vshrl.u32 %v2532, 7
      %v2534 = vsub.s32 %v2531, %v2533
      %v2535 = vrot.slane %v2199, %v2534
      %v2536 = vcombine.high %v2535, %v2535
      %v2538 = vunpack.c.l.s4 1966171168
      %v2539 = vunpack.c.0.s8 %v2538
      %v2540 = vlaneseq
      %v2541 = vshrl.u32 %v2540, 7
      %v2542 = vsub.s32 %v2539, %v2541
      %v2543 = vrot.slane %v2535, %v2542
      %v2545 = vunpack.c.l.s4 1966171168
      %v2546 = vunpack.c.0.s8 %v2545
      %v2547 = vlaneseq
      %v2548 = vshrl.u32 %v2547, 7
      %v2549 = vsub.s32 %v2546, %v2548
      %v2550 = vrot.slane %v2536, %v2549
      %v2551 = vcombine.high %v2543, %v2543
      %v2552 = vcombine.high %v2550, %v2550
      %v2554 = vunpack.c.l.s4 1966171168
      %v2555 = vunpack.c.0.s8 %v2554
      %v2556 = vlaneseq
      %v2557 = vshrl.u32 %v2556, 7
      %v2558 = vsub.s32 %v2555, %v2557
      %v2559 = vrot.slane %v2200, %v2558
      %v2561 = vunpack.c.l.s4 1966171168
      %v2562 = vunpack.c.0.s8 %v2561
      %v2563 = vlaneseq
      %v2564 = vshrl.u32 %v2563, 7
      %v2565 = vsub.s32 %v2562, %v2564
      %v2566 = vrot.slane %v2559, %v2565
      %v2568 = vunpack.c.l.s4 1966171168
      %v2569 = vunpack.c.0.s8 %v2568
      %v2570 = vlaneseq
      %v2571 = vshrl.u32 %v2570, 7
      %v2572 = vsub.s32 %v2569, %v2571
      %v2573 = vrot.slane %v2201, %v2572
      %v2574 = vcombine.high %v2573, %v2573
      %v2576 = vunpack.c.l.s4 1966171168
      %v2577 = vunpack.c.0.s8 %v2576
      %v2578 = vlaneseq
      %v2579 = vshrl.u32 %v2578, 7
      %v2580 = vsub.s32 %v2577, %v2579
      %v2581 = vrot.slane %v2573, %v2580
      %v2583 = vunpack.c.l.s4 1966171168
      %v2584 = vunpack.c.0.s8 %v2583
      %v2585 = vlaneseq
      %v2586 = vshrl.u32 %v2585, 7
      %v2587 = vsub.s32 %v2584, %v2586
      %v2588 = vrot.slane %v2574, %v2587
      %v2589 = vcombine.high %v2581, %v2581
      %v2590 = vcombine.high %v2588, %v2588
      %v2592 = vunpack.c.l.s4 1966171168
      %v2593 = vunpack.c.0.s8 %v2592
      %v2594 = vlaneseq
      %v2595 = vshrl.u32 %v2594, 7
      %v2596 = vsub.s32 %v2593, %v2595
      %v2597 = vrot.slane %v2202, %v2596
      %v2599 = vunpack.c.l.s4 1966171168
      %v2600 = vunpack.c.0.s8 %v2599
      %v2601 = vlaneseq
      %v2602 = vshrl.u32 %v2601, 7
      %v2603 = vsub.s32 %v2600, %v2602
      %v2604 = vrot.slane %v2597, %v2603
      %v2605 = vcombine.low %v2239, %v2246
      %v2606 = vcombine.low %v2247, %v2248
      %v2607 = vcombine.low %v2262, %v2277
      %v2608 = vcombine.low %v2284, %v2285
      %v2610 = vunpack.c.l.s4 1966171168
      %v2611 = vunpack.c.0.s8 %v2610
      %v2612 = vlaneseq
      %v2613 = vshrl.u32 %v2612, 7
      %v2614 = vsub.s32 %v2611, %v2613
      %v2615 = vrot.slane %v2605, %v2614
      %v2617 = vunpack.c.l.s4 1966171168
      %v2618 = vunpack.c.0.s8 %v2617
      %v2619 = vlaneseq
      %v2620 = vshrl.u32 %v2619, 7
      %v2621 = vsub.s32 %v2618, %v2620
      %v2622 = vrot.slane %v2606, %v2621
      %v2624 = vunpack.c.l.s4 1966171168
      %v2625 = vunpack.c.0.s8 %v2624
      %v2626 = vlaneseq
      %v2627 = vshrl.u32 %v2626, 7
      %v2628 = vsub.s32 %v2625, %v2627
      %v2629 = vrot.slane %v2607, %v2628
      %v2631 = vunpack.c.l.s4 1966171168
      %v2632 = vunpack.c.0.s8 %v2631
      %v2633 = vlaneseq
      %v2634 = vshrl.u32 %v2633, 7
      %v2635 = vsub.s32 %v2632, %v2634
      %v2636 = vrot.slane %v2608, %v2635
      %v2637 = vcombine.low %v2615, %v2622
      %v2638 = vcombine.low %v2629, %v2636
      %v2640 = vunpack.c.l.s4 1966171168
      %v2641 = vunpack.c.0.s8 %v2640
      %v2642 = vlaneseq
      %v2643 = vshrl.u32 %v2642, 7
      %v2644 = vsub.s32 %v2641, %v2643
      %v2645 = vrot.slane %v2637, %v2644
      %v2647 = vunpack.c.l.s4 1966171168
      %v2648 = vunpack.c.0.s8 %v2647
      %v2649 = vlaneseq
      %v2650 = vshrl.u32 %v2649, 7
      %v2651 = vsub.s32 %v2648, %v2650
      %v2652 = vrot.slane %v2638, %v2651
      %v2653 = vcombine.low %v2645, %v2652
      %v2654 = vcombine.low %v2286, %v2300
      %v2655 = vcombine.low %v2315, %v2322
      %v2656 = vcombine.low %v2323, %v2324
      %v2657 = vcombine.low %v2338, %v2353
      %v2659 = vunpack.c.l.s4 1966171168
      %v2660 = vunpack.c.0.s8 %v2659
      %v2661 = vlaneseq
      %v2662 = vshrl.u32 %v2661, 7
      %v2663 = vsub.s32 %v2660, %v2662
      %v2664 = vrot.slane %v2654, %v2663
      %v2666 = vunpack.c.l.s4 1966171168
      %v2667 = vunpack.c.0.s8 %v2666
      %v2668 = vlaneseq
      %v2669 = vshrl.u32 %v2668, 7
      %v2670 = vsub.s32 %v2667, %v2669
      %v2671 = vrot.slane %v2655, %v2670
      %v2673 = vunpack.c.l.s4 1966171168
      %v2674 = vunpack.c.0.s8 %v2673
      %v2675 = vlaneseq
      %v2676 = vshrl.u32 %v2675, 7
      %v2677 = vsub.s32 %v2674, %v2676
      %v2678 = vrot.slane %v2656, %v2677
      %v2680 = vunpack.c.l.s4 1966171168
      %v2681 = vunpack.c.0.s8 %v2680
      %v2682 = vlaneseq
      %v2683 = vshrl.u32 %v2682, 7
      %v2684 = vsub.s32 %v2681, %v2683
      %v2685 = vrot.slane %v2657, %v2684
      %v2686 = vcombine.low %v2664, %v2671
      %v2687 = vcombine.low %v2678, %v2685
      %v2689 = vunpack.c.l.s4 1966171168
      %v2690 = vunpack.c.0.s8 %v2689
      %v2691 = vlaneseq
      %v2692 = vshrl.u32 %v2691, 7
      %v2693 = vsub.s32 %v2690, %v2692
      %v2694 = vrot.slane %v2686, %v2693
      %v2696 = vunpack.c.l.s4 1966171168
      %v2697 = vunpack.c.0.s8 %v2696
      %v2698 = vlaneseq
      %v2699 = vshrl.u32 %v2698, 7
      %v2700 = vsub.s32 %v2697, %v2699
      %v2701 = vrot.slane %v2687, %v2700
      %v2702 = vcombine.low %v2694, %v2701
      %v2703 = vcombine.low %v2360, %v2361
      %v2704 = vcombine.low %v2362, %v2376
      %v2705 = vcombine.low %v2391, %v2398
      %v2706 = vcombine.low %v2399, %v2400
      %v2708 = vunpack.c.l.s4 1966171168
      %v2709 = vunpack.c.0.s8 %v2708
      %v2710 = vlaneseq
      %v2711 = vshrl.u32 %v2710, 7
      %v2712 = vsub.s32 %v2709, %v2711
      %v2713 = vrot.slane %v2703, %v2712
      %v2715 = vunpack.c.l.s4 1966171168
      %v2716 = vunpack.c.0.s8 %v2715
      %v2717 = vlaneseq
      %v2718 = vshrl.u32 %v2717, 7
      %v2719 = vsub.s32 %v2716, %v2718
      %v2720 = vrot.slane %v2704, %v2719
      %v2722 = vunpack.c.l.s4 1966171168
      %v2723 = vunpack.c.0.s8 %v2722
      %v2724 = vlaneseq
      %v2725 = vshrl.u32 %v2724, 7
      %v2726 = vsub.s32 %v2723, %v2725
      %v2727 = vrot.slane %v2705, %v2726
      %v2729 = vunpack.c.l.s4 1966171168
      %v2730 = vunpack.c.0.s8 %v2729
      %v2731 = vlaneseq
      %v2732 = vshrl.u32 %v2731, 7
      %v2733 = vsub.s32 %v2730, %v2732
      %v2734 = vrot.slane %v2706, %v2733
      %v2735 = vcombine.low %v2713, %v2720
      %v2736 = vcombine.low %v2727, %v2734
      %v2738 = vunpack.c.l.s4 1966171168
      %v2739 = vunpack.c.0.s8 %v2738
      %v2740 = vlaneseq
      %v2741 = vshrl.u32 %v2740, 7
      %v2742 = vsub.s32 %v2739, %v2741
      %v2743 = vrot.slane %v2735, %v2742
      %v2745 = vunpack.c.l.s4 1966171168
      %v2746 = vunpack.c.0.s8 %v2745
      %v2747 = vlaneseq
      %v2748 = vshrl.u32 %v2747, 7
      %v2749 = vsub.s32 %v2746, %v2748
      %v2750 = vrot.slane %v2736, %v2749
      %v2751 = vcombine.low %v2743, %v2750
      %v2752 = vcombine.low %v2414, %v2429
      %v2753 = vcombine.low %v2436, %v2437
      %v2754 = vcombine.low %v2438, %v2452
      %v2755 = vcombine.low %v2467, %v2474
      %v2757 = vunpack.c.l.s4 1966171168
      %v2758 = vunpack.c.0.s8 %v2757
      %v2759 = vlaneseq
      %v2760 = vshrl.u32 %v2759, 7
      %v2761 = vsub.s32 %v2758, %v2760
      %v2762 = vrot.slane %v2752, %v2761
      %v2764 = vunpack.c.l.s4 1966171168
      %v2765 = vunpack.c.0.s8 %v2764
      %v2766 = vlaneseq
      %v2767 = vshrl.u32 %v2766, 7
      %v2768 = vsub.s32 %v2765, %v2767
      %v2769 = vrot.slane %v2753, %v2768
      %v2771 = vunpack.c.l.s4 1966171168
      %v2772 = vunpack.c.0.s8 %v2771
      %v2773 = vlaneseq
      %v2774 = vshrl.u32 %v2773, 7
      %v2775 = vsub.s32 %v2772, %v2774
      %v2776 = vrot.slane %v2754, %v2775
      %v2778 = vunpack.c.l.s4 1966171168
      %v2779 = vunpack.c.0.s8 %v2778
      %v2780 = vlaneseq
      %v2781 = vshrl.u32 %v2780, 7
      %v2782 = vsub.s32 %v2779, %v2781
      %v2783 = vrot.slane %v2755, %v2782
      %v2784 = vcombine.low %v2762, %v2769
      %v2785 = vcombine.low %v2776, %v2783
      %v2787 = vunpack.c.l.s4 1966171168
      %v2788 = vunpack.c.0.s8 %v2787
      %v2789 = vlaneseq
      %v2790 = vshrl.u32 %v2789, 7
      %v2791 = vsub.s32 %v2788, %v2790
      %v2792 = vrot.slane %v2784, %v2791
      %v2794 = vunpack.c.l.s4 1966171168
      %v2795 = vunpack.c.0.s8 %v2794
      %v2796 = vlaneseq
      %v2797 = vshrl.u32 %v2796, 7
      %v2798 = vsub.s32 %v2795, %v2797
      %v2799 = vrot.slane %v2785, %v2798
      %v2800 = vcombine.low %v2792, %v2799
      %v2801 = vcombine.low %v2475, %v2476
      %v2802 = vcombine.low %v2490, %v2505
      %v2803 = vcombine.low %v2512, %v2513
      %v2804 = vcombine.low %v2514, %v2528
      %v2806 = vunpack.c.l.s4 1966171168
      %v2807 = vunpack.c.0.s8 %v2806
      %v2808 = vlaneseq
      %v2809 = vshrl.u32 %v2808, 7
      %v2810 = vsub.s32 %v2807, %v2809
      %v2811 = vrot.slane %v2801, %v2810
      %v2813 = vunpack.c.l.s4 1966171168
      %v2814 = vunpack.c.0.s8 %v2813
      %v2815 = vlaneseq
      %v2816 = vshrl.u32 %v2815, 7
      %v2817 = vsub.s32 %v2814, %v2816
      %v2818 = vrot.slane %v2802, %v2817
      %v2820 = vunpack.c.l.s4 1966171168
      %v2821 = vunpack.c.0.s8 %v2820
      %v2822 = vlaneseq
      %v2823 = vshrl.u32 %v2822, 7
      %v2824 = vsub.s32 %v2821, %v2823
      %v2825 = vrot.slane %v2803, %v2824
      %v2827 = vunpack.c.l.s4 1966171168
      %v2828 = vunpack.c.0.s8 %v2827
      %v2829 = vlaneseq
      %v2830 = vshrl.u32 %v2829, 7
      %v2831 = vsub.s32 %v2828, %v2830
      %v2832 = vrot.slane %v2804, %v2831
      %v2833 = vcombine.low %v2811, %v2818
      %v2834 = vcombine.low %v2825, %v2832
      %v2836 = vunpack.c.l.s4 1966171168
      %v2837 = vunpack.c.0.s8 %v2836
      %v2838 = vlaneseq
      %v2839 = vshrl.u32 %v2838, 7
      %v2840 = vsub.s32 %v2837, %v2839
      %v2841 = vrot.slane %v2833, %v2840
      %v2843 = vunpack.c.l.s4 1966171168
      %v2844 = vunpack.c.0.s8 %v2843
      %v2845 = vlaneseq
      %v2846 = vshrl.u32 %v2845, 7
      %v2847 = vsub.s32 %v2844, %v2846
      %v2848 = vrot.slane %v2834, %v2847
      %v2849 = vcombine.low %v2841, %v2848
      %v2850 = vcombine.low %v2543, %v2550
      %v2851 = vcombine.low %v2551, %v2552
      %v2852 = vcombine.low %v2566, %v2581
      %v2853 = vcombine.low %v2588, %v2589
      %v2855 = vunpack.c.l.s4 1966171168
      %v2856 = vunpack.c.0.s8 %v2855
      %v2857 = vlaneseq
      %v2858 = vshrl.u32 %v2857, 7
      %v2859 = vsub.s32 %v2856, %v2858
      %v2860 = vrot.slane %v2850, %v2859
      %v2862 = vunpack.c.l.s4 1966171168
      %v2863 = vunpack.c.0.s8 %v2862
      %v2864 = vlaneseq
      %v2865 = vshrl.u32 %v2864, 7
      %v2866 = vsub.s32 %v2863, %v2865
      %v2867 = vrot.slane %v2851, %v2866
      %v2869 = vunpack.c.l.s4 1966171168
      %v2870 = vunpack.c.0.s8 %v2869
      %v2871 = vlaneseq
      %v2872 = vshrl.u32 %v2871, 7
      %v2873 = vsub.s32 %v2870, %v2872
      %v2874 = vrot.slane %v2852, %v2873
      %v2876 = vunpack.c.l.s4 1966171168
      %v2877 = vunpack.c.0.s8 %v2876
      %v2878 = vlaneseq
      %v2879 = vshrl.u32 %v2878, 7
      %v2880 = vsub.s32 %v2877, %v2879
      %v2881 = vrot.slane %v2853, %v2880
      %v2882 = vcombine.low %v2860, %v2867
      %v2883 = vcombine.low %v2874, %v2881
      %v2885 = vunpack.c.l.s4 1966171168
      %v2886 = vunpack.c.0.s8 %v2885
      %v2887 = vlaneseq
      %v2888 = vshrl.u32 %v2887, 7
      %v2889 = vsub.s32 %v2886, %v2888
      %v2890 = vrot.slane %v2882, %v2889
      %v2892 = vunpack.c.l.s4 1966171168
      %v2893 = vunpack.c.0.s8 %v2892
      %v2894 = vlaneseq
      %v2895 = vshrl.u32 %v2894, 7
      %v2896 = vsub.s32 %v2893, %v2895
      %v2897 = vrot.slane %v2883, %v2896
      %v2898 = vcombine.low %v2890, %v2897
      %v2899 = vcombine.low %v2590, %v2604
      %v2901 = vunpack.c.l.s4 1966171168
      %v2902 = vunpack.c.0.s8 %v2901
      %v2903 = vlaneseq
      %v2904 = vshrl.u32 %v2903, 7
      %v2905 = vsub.s32 %v2902, %v2904
      %v2906 = vrot.slane %v2899, %v2905
      %v2908 = vunpack.c.l.s4 1966171168
      %v2909 = vunpack.c.0.s8 %v2908
      %v2910 = vlaneseq
      %v2911 = vshrl.u32 %v2910, 7
      %v2912 = vsub.s32 %v2909, %v2911
      %v2913 = vrot.slane %v2906, %v2912
      %v2916 = vunpack.c.l.b16 %v2203
      %v2917 = vunpack.c.l.b16 %v2204
      %v2918 = vpack.c.b16 %v2917, %v2916
      %v2919 = vrot.slane %v2918, 2
      %v2921 = vsel %vm2066, %v2653, 0
      %v2924 = vsel %vm2066, %v2702, 0
      %v2927 = vsel %vm2066, %v2751, 0
      %v2930 = vsel %vm2066, %v2800, 0
      %v2933 = vsel %vm2066, %v2849, 0
      %v2936 = vsel %vm2066, %v2898, 0
      %v2939 = vsel %vm2066, %v2913, 0
      %v2942 = vsel %vm2088, %v2919, 0
      %2944 = vmatprep.subr.bf16.mxu0 0
      %2945 = vmatpush1.bf16.msra.mxu0 0
      %2946 = vmatprep.subr.bf16.mxu0 0
      %2947 = vmatpush1.bf16.msra.mxu0 0
      %2948 = vmatprep.subr.bf16.mxu0 0
      %2949 = vmatpush1.bf16.msra.mxu0 0
      %2950 = vmatprep.subr.bf16.mxu0 0
      %2951 = vmatpush1.bf16.msra.mxu0 0
      %2952 = vmatprep.subr.bf16.mxu0 0
      %2953 = vmatpush1.bf16.msra.mxu0 0
      %2954 = vmatprep.subr.bf16.mxu0 0
      %2955 = vmatpush1.bf16.msra.mxu0 0
      %2956 = vmatprep.subr.bf16.mxu0 0
      %2957 = vmatpush1.bf16.msra.mxu0 0
      %2958 = vmatprep.subr.bf16.mxu0 0
      %2959 = vmatpush1.bf16.msra.mxu0 %v2942
      %2960 = vmatprep.subr.bf16.mxu0 0
      %2961 = vmatpush2.bf16.msra.mxu0 0
      %2962 = vmatprep.subr.bf16.mxu0 0
      %2963 = vmatpush2.bf16.msra.mxu0 0
      %2964 = vmatprep.subr.bf16.mxu0 0
      %2965 = vmatpush2.bf16.msra.mxu0 0
      %2966 = vmatprep.subr.bf16.mxu0 0
      %2967 = vmatpush2.bf16.msra.mxu0 0
      %2968 = vmatprep.subr.bf16.mxu0 0
      %2969 = vmatpush2.bf16.msra.mxu0 0
      %2970 = vmatprep.subr.bf16.mxu0 0
      %2971 = vmatpush2.bf16.msra.mxu0 0
      %2972 = vmatprep.subr.bf16.mxu0 0
      %2973 = vmatpush2.bf16.msra.mxu0 0
      %2974 = vmatprep.subr.bf16.mxu0 0
      %2975 = vmatpush2.bf16.msra.mxu0 0
      %2976 = vmatprep.mubr.bf16.mxu0 0
      %2977 = vmatmul.mubr.bf16.gmra.mxu0 %v2921
      %v2978 = vpop.f32.mrf.mxu0
      %v2979 = vadd.f32 0.0, %v2978
      %v2980 = vpop.f32.mrf.mxu0
      %v2981 = vpop.f32.mrf.mxu0
      %v2982 = vadd.f32 0.0, %v2981
      %v2983 = vpop.f32.mrf.mxu0
      %2984 = vmatprep.mubr.bf16.mxu0 0
      %2985 = vmatmul.mubr.bf16.gmra.mxu0 %v2924
      %v2986 = vpop.f32.mrf.mxu0
      %v2987 = vadd.f32 0.0, %v2986
      %v2988 = vpop.f32.mrf.mxu0
      %v2989 = vpop.f32.mrf.mxu0
      %v2990 = vadd.f32 0.0, %v2989
      %v2991 = vpop.f32.mrf.mxu0
      %2992 = vmatprep.mubr.bf16.mxu0 0
      %2993 = vmatmul.mubr.bf16.gmra.mxu0 %v2927
      %v2994 = vpop.f32.mrf.mxu0
      %v2995 = vadd.f32 0.0, %v2994
      %v2996 = vpop.f32.mrf.mxu0
      %v2997 = vpop.f32.mrf.mxu0
      %v2998 = vadd.f32 0.0, %v2997
      %v2999 = vpop.f32.mrf.mxu0
      %3000 = vmatprep.mubr.bf16.mxu0 0
      %3001 = vmatmul.mubr.bf16.gmra.mxu0 %v2930
      %v3002 = vpop.f32.mrf.mxu0
      %v3003 = vadd.f32 0.0, %v3002
      %v3004 = vpop.f32.mrf.mxu0
      %v3005 = vpop.f32.mrf.mxu0
      %v3006 = vadd.f32 0.0, %v3005
      %v3007 = vpop.f32.mrf.mxu0
      %3008 = vmatprep.mubr.bf16.mxu0 0
      %3009 = vmatmul.mubr.bf16.gmra.mxu0 %v2933
      %v3010 = vpop.f32.mrf.mxu0
      %v3011 = vadd.f32 0.0, %v3010
      %v3012 = vpop.f32.mrf.mxu0
      %v3013 = vpop.f32.mrf.mxu0
      %v3014 = vadd.f32 0.0, %v3013
      %v3015 = vpop.f32.mrf.mxu0
      %3016 = vmatprep.mubr.bf16.mxu0 0
      %3017 = vmatmul.mubr.bf16.gmra.mxu0 %v2936
      %v3018 = vpop.f32.mrf.mxu0
      %v3019 = vadd.f32 0.0, %v3018
      %v3020 = vpop.f32.mrf.mxu0
      %v3021 = vpop.f32.mrf.mxu0
      %v3022 = vadd.f32 0.0, %v3021
      %v3023 = vpop.f32.mrf.mxu0
      %3024 = vmatprep.mubr.bf16.mxu0 0
      %3025 = vmatmul.mubr.bf16.gmra.mxu0 %v2939
      %v3026 = vpop.f32.mrf.mxu0
      %v3027 = vadd.f32 0.0, %v3026
      %v3028 = vpop.f32.mrf.mxu0
      %v3029 = vpop.f32.mrf.mxu0
      %v3030 = vpop.f32.mrf.mxu0
      %3031 = vdwg.mxu0
      %v3032 = vadd.f32 %v2127, %v2979
      %v3033 = vadd.f32 %v2130, %v2982
      %v3034 = vadd.f32 %v2135, %v2987
      %v3035 = vadd.f32 %v2138, %v2990
      %v3036 = vadd.f32 %v2143, %v2995
      %v3037 = vadd.f32 %v2146, %v2998
      %v3038 = vadd.f32 %v2151, %v3003
      %v3039 = vadd.f32 %v2154, %v3006
      %v3040 = vadd.f32 %v2159, %v3011
      %v3041 = vadd.f32 %v2162, %v3014
      %v3042 = vadd.f32 %v2167, %v3019
      %v3043 = vadd.f32 %v2170, %v3022
      %v3044 = vadd.f32 %v2175, %v3027
      %v3045 = vld [vmem:[%s2182] sm:$0xf]
      %v3046 = vld [vmem:[%s2182 + $0x4] sm:$0x3]
      %v3047 = vld [vmem:[%s2182 + $0x10] sm:$0xf]
      %v3048 = vld [vmem:[%s2182 + $0x14] sm:$0x3]
      %v3049 = vld [vmem:[%s2182 + $0x20] sm:$0xf]
      %v3050 = vld [vmem:[%s2182 + $0x24] sm:$0x3]
      %v3051 = vld [vmem:[%s2182 + $0x30] sm:$0xf]
      %v3052 = vld [vmem:[%s2182 + $0x34] sm:$0x3]
      %v3053 = vld [vmem:[%s2182 + $0x40] sm:$0xf]
      %v3054 = vld [vmem:[%s2182 + $0x44] sm:$0x3]
      %v3055 = vld [vmem:[%s2182 + $0x50] sm:$0xf]
      %v3056 = vld [vmem:[%s2182 + $0x54] sm:$0x3]
      %v3057 = vld [vmem:[%s2182 + $0x60] sm:$0xf]
      %v3058 = vld [vmem:[%s2182 + $0x64] sm:$0x3]
      %v3059 = vld [vmem:[%s2182 + $0x70] sm:$0xf]
      %v3060 = vld [vmem:[%s2182 + $0x74] sm:$0x3]
      %v3061 = vld [vmem:[%s2182 + $0x80] sm:$0xf]
      %v3062 = vld [vmem:[%s2182 + $0x84] sm:$0x3]
      %v3063 = vld [vmem:[%s2182 + $0x90] sm:$0xf]
      %v3064 = vld [vmem:[%s2182 + $0x94] sm:$0x3]
      %v3065 = vld [vmem:[%s224 + $0x8] sm:$0xc]
      %v3087 = vunpack.c.l.s4 1966171168
      %v3088 = vunpack.c.0.s8 %v3087
      %v3089 = vlaneseq
      %v3090 = vshrl.u32 %v3089, 7
      %v3091 = vsub.s32 %v3088, %v3090
      %v3092 = vrot.slane %v3045, %v3091
      %v3093 = vcombine.high %v3092, %v3092
      %v3095 = vunpack.c.l.s4 1966171168
      %v3096 = vunpack.c.0.s8 %v3095
      %v3097 = vlaneseq
      %v3098 = vshrl.u32 %v3097, 7
      %v3099 = vsub.s32 %v3096, %v3098
      %v3100 = vrot.slane %v3092, %v3099
      %v3102 = vunpack.c.l.s4 1966171168
      %v3103 = vunpack.c.0.s8 %v3102
      %v3104 = vlaneseq
      %v3105 = vshrl.u32 %v3104, 7
      %v3106 = vsub.s32 %v3103, %v3105
      %v3107 = vrot.slane %v3093, %v3106
      %v3108 = vcombine.high %v3100, %v3100
      %v3109 = vcombine.high %v3107, %v3107
      %v3111 = vunpack.c.l.s4 1966171168
      %v3112 = vunpack.c.0.s8 %v3111
      %v3113 = vlaneseq
      %v3114 = vshrl.u32 %v3113, 7
      %v3115 = vsub.s32 %v3112, %v3114
      %v3116 = vrot.slane %v3046, %v3115
      %v3117 = vcombine.high %v3116, %v3116
      %v3119 = vunpack.c.l.s4 1966171168
      %v3120 = vunpack.c.0.s8 %v3119
      %v3121 = vlaneseq
      %v3122 = vshrl.u32 %v3121, 7
      %v3123 = vsub.s32 %v3120, %v3122
      %v3124 = vrot.slane %v3116, %v3123
      %v3126 = vunpack.c.l.s4 1966171168
      %v3127 = vunpack.c.0.s8 %v3126
      %v3128 = vlaneseq
      %v3129 = vshrl.u32 %v3128, 7
      %v3130 = vsub.s32 %v3127, %v3129
      %v3131 = vrot.slane %v3117, %v3130
      %v3133 = vunpack.c.l.s4 1966171168
      %v3134 = vunpack.c.0.s8 %v3133
      %v3135 = vlaneseq
      %v3136 = vshrl.u32 %v3135, 7
      %v3137 = vsub.s32 %v3134, %v3136
      %v3138 = vrot.slane %v3047, %v3137
      %v3139 = vcombine.high %v3138, %v3138
      %v3141 = vunpack.c.l.s4 1966171168
      %v3142 = vunpack.c.0.s8 %v3141
      %v3143 = vlaneseq
      %v3144 = vshrl.u32 %v3143, 7
      %v3145 = vsub.s32 %v3142, %v3144
      %v3146 = vrot.slane %v3138, %v3145
      %v3148 = vunpack.c.l.s4 1966171168
      %v3149 = vunpack.c.0.s8 %v3148
      %v3150 = vlaneseq
      %v3151 = vshrl.u32 %v3150, 7
      %v3152 = vsub.s32 %v3149, %v3151
      %v3153 = vrot.slane %v3139, %v3152
      %v3154 = vcombine.high %v3146, %v3146
      %v3155 = vcombine.high %v3153, %v3153
      %v3157 = vunpack.c.l.s4 1966171168
      %v3158 = vunpack.c.0.s8 %v3157
      %v3159 = vlaneseq
      %v3160 = vshrl.u32 %v3159, 7
      %v3161 = vsub.s32 %v3158, %v3160
      %v3162 = vrot.slane %v3048, %v3161
      %v3163 = vcombine.high %v3162, %v3162
      %v3165 = vunpack.c.l.s4 1966171168
      %v3166 = vunpack.c.0.s8 %v3165
      %v3167 = vlaneseq
      %v3168 = vshrl.u32 %v3167, 7
      %v3169 = vsub.s32 %v3166, %v3168
      %v3170 = vrot.slane %v3162, %v3169
      %v3172 = vunpack.c.l.s4 1966171168
      %v3173 = vunpack.c.0.s8 %v3172
      %v3174 = vlaneseq
      %v3175 = vshrl.u32 %v3174, 7
      %v3176 = vsub.s32 %v3173, %v3175
      %v3177 = vrot.slane %v3163, %v3176
      %v3179 = vunpack.c.l.s4 1966171168
      %v3180 = vunpack.c.0.s8 %v3179
      %v3181 = vlaneseq
      %v3182 = vshrl.u32 %v3181, 7
      %v3183 = vsub.s32 %v3180, %v3182
      %v3184 = vrot.slane %v3049, %v3183
      %v3185 = vcombine.high %v3184, %v3184
      %v3187 = vunpack.c.l.s4 1966171168
      %v3188 = vunpack.c.0.s8 %v3187
      %v3189 = vlaneseq
      %v3190 = vshrl.u32 %v3189, 7
      %v3191 = vsub.s32 %v3188, %v3190
      %v3192 = vrot.slane %v3184, %v3191
      %v3194 = vunpack.c.l.s4 1966171168
      %v3195 = vunpack.c.0.s8 %v3194
      %v3196 = vlaneseq
      %v3197 = vshrl.u32 %v3196, 7
      %v3198 = vsub.s32 %v3195, %v3197
      %v3199 = vrot.slane %v3185, %v3198
      %v3200 = vcombine.high %v3192, %v3192
      %v3201 = vcombine.high %v3199, %v3199
      %v3203 = vunpack.c.l.s4 1966171168
      %v3204 = vunpack.c.0.s8 %v3203
      %v3205 = vlaneseq
      %v3206 = vshrl.u32 %v3205, 7
      %v3207 = vsub.s32 %v3204, %v3206
      %v3208 = vrot.slane %v3050, %v3207
      %v3209 = vcombine.high %v3208, %v3208
      %v3211 = vunpack.c.l.s4 1966171168
      %v3212 = vunpack.c.0.s8 %v3211
      %v3213 = vlaneseq
      %v3214 = vshrl.u32 %v3213, 7
      %v3215 = vsub.s32 %v3212, %v3214
      %v3216 = vrot.slane %v3208, %v3215
      %v3218 = vunpack.c.l.s4 1966171168
      %v3219 = vunpack.c.0.s8 %v3218
      %v3220 = vlaneseq
      %v3221 = vshrl.u32 %v3220, 7
      %v3222 = vsub.s32 %v3219, %v3221
      %v3223 = vrot.slane %v3209, %v3222
      %v3225 = vunpack.c.l.s4 1966171168
      %v3226 = vunpack.c.0.s8 %v3225
      %v3227 = vlaneseq
      %v3228 = vshrl.u32 %v3227, 7
      %v3229 = vsub.s32 %v3226, %v3228
      %v3230 = vrot.slane %v3051, %v3229
      %v3231 = vcombine.high %v3230, %v3230
      %v3233 = vunpack.c.l.s4 1966171168
      %v3234 = vunpack.c.0.s8 %v3233
      %v3235 = vlaneseq
      %v3236 = vshrl.u32 %v3235, 7
      %v3237 = vsub.s32 %v3234, %v3236
      %v3238 = vrot.slane %v3230, %v3237
      %v3240 = vunpack.c.l.s4 1966171168
      %v3241 = vunpack.c.0.s8 %v3240
      %v3242 = vlaneseq
      %v3243 = vshrl.u32 %v3242, 7
      %v3244 = vsub.s32 %v3241, %v3243
      %v3245 = vrot.slane %v3231, %v3244
      %v3246 = vcombine.high %v3238, %v3238
      %v3247 = vcombine.high %v3245, %v3245
      %v3249 = vunpack.c.l.s4 1966171168
      %v3250 = vunpack.c.0.s8 %v3249
      %v3251 = vlaneseq
      %v3252 = vshrl.u32 %v3251, 7
      %v3253 = vsub.s32 %v3250, %v3252
      %v3254 = vrot.slane %v3052, %v3253
      %v3255 = vcombine.high %v3254, %v3254
      %v3257 = vunpack.c.l.s4 1966171168
      %v3258 = vunpack.c.0.s8 %v3257
      %v3259 = vlaneseq
      %v3260 = vshrl.u32 %v3259, 7
      %v3261 = vsub.s32 %v3258, %v3260
      %v3262 = vrot.slane %v3254, %v3261
      %v3264 = vunpack.c.l.s4 1966171168
      %v3265 = vunpack.c.0.s8 %v3264
      %v3266 = vlaneseq
      %v3267 = vshrl.u32 %v3266, 7
      %v3268 = vsub.s32 %v3265, %v3267
      %v3269 = vrot.slane %v3255, %v3268
      %v3271 = vunpack.c.l.s4 1966171168
      %v3272 = vunpack.c.0.s8 %v3271
      %v3273 = vlaneseq
      %v3274 = vshrl.u32 %v3273, 7
      %v3275 = vsub.s32 %v3272, %v3274
      %v3276 = vrot.slane %v3053, %v3275
      %v3277 = vcombine.high %v3276, %v3276
      %v3279 = vunpack.c.l.s4 1966171168
      %v3280 = vunpack.c.0.s8 %v3279
      %v3281 = vlaneseq
      %v3282 = vshrl.u32 %v3281, 7
      %v3283 = vsub.s32 %v3280, %v3282
      %v3284 = vrot.slane %v3276, %v3283
      %v3286 = vunpack.c.l.s4 1966171168
      %v3287 = vunpack.c.0.s8 %v3286
      %v3288 = vlaneseq
      %v3289 = vshrl.u32 %v3288, 7
      %v3290 = vsub.s32 %v3287, %v3289
      %v3291 = vrot.slane %v3277, %v3290
      %v3292 = vcombine.high %v3284, %v3284
      %v3293 = vcombine.high %v3291, %v3291
      %v3295 = vunpack.c.l.s4 1966171168
      %v3296 = vunpack.c.0.s8 %v3295
      %v3297 = vlaneseq
      %v3298 = vshrl.u32 %v3297, 7
      %v3299 = vsub.s32 %v3296, %v3298
      %v3300 = vrot.slane %v3054, %v3299
      %v3301 = vcombine.high %v3300, %v3300
      %v3303 = vunpack.c.l.s4 1966171168
      %v3304 = vunpack.c.0.s8 %v3303
      %v3305 = vlaneseq
      %v3306 = vshrl.u32 %v3305, 7
      %v3307 = vsub.s32 %v3304, %v3306
      %v3308 = vrot.slane %v3300, %v3307
      %v3310 = vunpack.c.l.s4 1966171168
      %v3311 = vunpack.c.0.s8 %v3310
      %v3312 = vlaneseq
      %v3313 = vshrl.u32 %v3312, 7
      %v3314 = vsub.s32 %v3311, %v3313
      %v3315 = vrot.slane %v3301, %v3314
      %v3317 = vunpack.c.l.s4 1966171168
      %v3318 = vunpack.c.0.s8 %v3317
      %v3319 = vlaneseq
      %v3320 = vshrl.u32 %v3319, 7
      %v3321 = vsub.s32 %v3318, %v3320
      %v3322 = vrot.slane %v3055, %v3321
      %v3323 = vcombine.high %v3322, %v3322
      %v3325 = vunpack.c.l.s4 1966171168
      %v3326 = vunpack.c.0.s8 %v3325
      %v3327 = vlaneseq
      %v3328 = vshrl.u32 %v3327, 7
      %v3329 = vsub.s32 %v3326, %v3328
      %v3330 = vrot.slane %v3322, %v3329
      %v3332 = vunpack.c.l.s4 1966171168
      %v3333 = vunpack.c.0.s8 %v3332
      %v3334 = vlaneseq
      %v3335 = vshrl.u32 %v3334, 7
      %v3336 = vsub.s32 %v3333, %v3335
      %v3337 = vrot.slane %v3323, %v3336
      %v3338 = vcombine.high %v3330, %v3330
      %v3339 = vcombine.high %v3337, %v3337
      %v3341 = vunpack.c.l.s4 1966171168
      %v3342 = vunpack.c.0.s8 %v3341
      %v3343 = vlaneseq
      %v3344 = vshrl.u32 %v3343, 7
      %v3345 = vsub.s32 %v3342, %v3344
      %v3346 = vrot.slane %v3056, %v3345
      %v3347 = vcombine.high %v3346, %v3346
      %v3349 = vunpack.c.l.s4 1966171168
      %v3350 = vunpack.c.0.s8 %v3349
      %v3351 = vlaneseq
      %v3352 = vshrl.u32 %v3351, 7
      %v3353 = vsub.s32 %v3350, %v3352
      %v3354 = vrot.slane %v3346, %v3353
      %v3356 = vunpack.c.l.s4 1966171168
      %v3357 = vunpack.c.0.s8 %v3356
      %v3358 = vlaneseq
      %v3359 = vshrl.u32 %v3358, 7
      %v3360 = vsub.s32 %v3357, %v3359
      %v3361 = vrot.slane %v3347, %v3360
      %v3363 = vunpack.c.l.s4 1966171168
      %v3364 = vunpack.c.0.s8 %v3363
      %v3365 = vlaneseq
      %v3366 = vshrl.u32 %v3365, 7
      %v3367 = vsub.s32 %v3364, %v3366
      %v3368 = vrot.slane %v3057, %v3367
      %v3369 = vcombine.high %v3368, %v3368
      %v3371 = vunpack.c.l.s4 1966171168
      %v3372 = vunpack.c.0.s8 %v3371
      %v3373 = vlaneseq
      %v3374 = vshrl.u32 %v3373, 7
      %v3375 = vsub.s32 %v3372, %v3374
      %v3376 = vrot.slane %v3368, %v3375
      %v3378 = vunpack.c.l.s4 1966171168
      %v3379 = vunpack.c.0.s8 %v3378
      %v3380 = vlaneseq
      %v3381 = vshrl.u32 %v3380, 7
      %v3382 = vsub.s32 %v3379, %v3381
      %v3383 = vrot.slane %v3369, %v3382
      %v3384 = vcombine.high %v3376, %v3376
      %v3385 = vcombine.high %v3383, %v3383
      %v3387 = vunpack.c.l.s4 1966171168
      %v3388 = vunpack.c.0.s8 %v3387
      %v3389 = vlaneseq
      %v3390 = vshrl.u32 %v3389, 7
      %v3391 = vsub.s32 %v3388, %v3390
      %v3392 = vrot.slane %v3058, %v3391
      %v3393 = vcombine.high %v3392, %v3392
      %v3395 = vunpack.c.l.s4 1966171168
      %v3396 = vunpack.c.0.s8 %v3395
      %v3397 = vlaneseq
      %v3398 = vshrl.u32 %v3397, 7
      %v3399 = vsub.s32 %v3396, %v3398
      %v3400 = vrot.slane %v3392, %v3399
      %v3402 = vunpack.c.l.s4 1966171168
      %v3403 = vunpack.c.0.s8 %v3402
      %v3404 = vlaneseq
      %v3405 = vshrl.u32 %v3404, 7
      %v3406 = vsub.s32 %v3403, %v3405
      %v3407 = vrot.slane %v3393, %v3406
      %v3409 = vunpack.c.l.s4 1966171168
      %v3410 = vunpack.c.0.s8 %v3409
      %v3411 = vlaneseq
      %v3412 = vshrl.u32 %v3411, 7
      %v3413 = vsub.s32 %v3410, %v3412
      %v3414 = vrot.slane %v3059, %v3413
      %v3415 = vcombine.high %v3414, %v3414
      %v3417 = vunpack.c.l.s4 1966171168
      %v3418 = vunpack.c.0.s8 %v3417
      %v3419 = vlaneseq
      %v3420 = vshrl.u32 %v3419, 7
      %v3421 = vsub.s32 %v3418, %v3420
      %v3422 = vrot.slane %v3414, %v3421
      %v3424 = vunpack.c.l.s4 1966171168
      %v3425 = vunpack.c.0.s8 %v3424
      %v3426 = vlaneseq
      %v3427 = vshrl.u32 %v3426, 7
      %v3428 = vsub.s32 %v3425, %v3427
      %v3429 = vrot.slane %v3415, %v3428
      %v3430 = vcombine.high %v3422, %v3422
      %v3431 = vcombine.high %v3429, %v3429
      %v3433 = vunpack.c.l.s4 1966171168
      %v3434 = vunpack.c.0.s8 %v3433
      %v3435 = vlaneseq
      %v3436 = vshrl.u32 %v3435, 7
      %v3437 = vsub.s32 %v3434, %v3436
      %v3438 = vrot.slane %v3060, %v3437
      %v3439 = vcombine.high %v3438, %v3438
      %v3441 = vunpack.c.l.s4 1966171168
      %v3442 = vunpack.c.0.s8 %v3441
      %v3443 = vlaneseq
      %v3444 = vshrl.u32 %v3443, 7
      %v3445 = vsub.s32 %v3442, %v3444
      %v3446 = vrot.slane %v3438, %v3445
      %v3448 = vunpack.c.l.s4 1966171168
      %v3449 = vunpack.c.0.s8 %v3448
      %v3450 = vlaneseq
      %v3451 = vshrl.u32 %v3450, 7
      %v3452 = vsub.s32 %v3449, %v3451
      %v3453 = vrot.slane %v3439, %v3452
      %v3455 = vunpack.c.l.s4 1966171168
      %v3456 = vunpack.c.0.s8 %v3455
      %v3457 = vlaneseq
      %v3458 = vshrl.u32 %v3457, 7
      %v3459 = vsub.s32 %v3456, %v3458
      %v3460 = vrot.slane %v3061, %v3459
      %v3461 = vcombine.high %v3460, %v3460
      %v3463 = vunpack.c.l.s4 1966171168
      %v3464 = vunpack.c.0.s8 %v3463
      %v3465 = vlaneseq
      %v3466 = vshrl.u32 %v3465, 7
      %v3467 = vsub.s32 %v3464, %v3466
      %v3468 = vrot.slane %v3460, %v3467
      %v3470 = vunpack.c.l.s4 1966171168
      %v3471 = vunpack.c.0.s8 %v3470
      %v3472 = vlaneseq
      %v3473 = vshrl.u32 %v3472, 7
      %v3474 = vsub.s32 %v3471, %v3473
      %v3475 = vrot.slane %v3461, %v3474
      %v3476 = vcombine.high %v3468, %v3468
      %v3477 = vcombine.high %v3475, %v3475
      %v3479 = vunpack.c.l.s4 1966171168
      %v3480 = vunpack.c.0.s8 %v3479
      %v3481 = vlaneseq
      %v3482 = vshrl.u32 %v3481, 7
      %v3483 = vsub.s32 %v3480, %v3482
      %v3484 = vrot.slane %v3062, %v3483
      %v3485 = vcombine.high %v3484, %v3484
      %v3487 = vunpack.c.l.s4 1966171168
      %v3488 = vunpack.c.0.s8 %v3487
      %v3489 = vlaneseq
      %v3490 = vshrl.u32 %v3489, 7
      %v3491 = vsub.s32 %v3488, %v3490
      %v3492 = vrot.slane %v3484, %v3491
      %v3494 = vunpack.c.l.s4 1966171168
      %v3495 = vunpack.c.0.s8 %v3494
      %v3496 = vlaneseq
      %v3497 = vshrl.u32 %v3496, 7
      %v3498 = vsub.s32 %v3495, %v3497
      %v3499 = vrot.slane %v3485, %v3498
      %v3501 = vunpack.c.l.s4 1966171168
      %v3502 = vunpack.c.0.s8 %v3501
      %v3503 = vlaneseq
      %v3504 = vshrl.u32 %v3503, 7
      %v3505 = vsub.s32 %v3502, %v3504
      %v3506 = vrot.slane %v3063, %v3505
      %v3507 = vcombine.high %v3506, %v3506
      %v3509 = vunpack.c.l.s4 1966171168
      %v3510 = vunpack.c.0.s8 %v3509
      %v3511 = vlaneseq
      %v3512 = vshrl.u32 %v3511, 7
      %v3513 = vsub.s32 %v3510, %v3512
      %v3514 = vrot.slane %v3506, %v3513
      %v3516 = vunpack.c.l.s4 1966171168
      %v3517 = vunpack.c.0.s8 %v3516
      %v3518 = vlaneseq
      %v3519 = vshrl.u32 %v3518, 7
      %v3520 = vsub.s32 %v3517, %v3519
      %v3521 = vrot.slane %v3507, %v3520
      %v3522 = vcombine.high %v3514, %v3514
      %v3523 = vcombine.high %v3521, %v3521
      %v3525 = vunpack.c.l.s4 1966171168
      %v3526 = vunpack.c.0.s8 %v3525
      %v3527 = vlaneseq
      %v3528 = vshrl.u32 %v3527, 7
      %v3529 = vsub.s32 %v3526, %v3528
      %v3530 = vrot.slane %v3064, %v3529
      %v3531 = vcombine.high %v3530, %v3530
      %v3533 = vunpack.c.l.s4 1966171168
      %v3534 = vunpack.c.0.s8 %v3533
      %v3535 = vlaneseq
      %v3536 = vshrl.u32 %v3535, 7
      %v3537 = vsub.s32 %v3534, %v3536
      %v3538 = vrot.slane %v3530, %v3537
      %v3540 = vunpack.c.l.s4 1966171168
      %v3541 = vunpack.c.0.s8 %v3540
      %v3542 = vlaneseq
      %v3543 = vshrl.u32 %v3542, 7
      %v3544 = vsub.s32 %v3541, %v3543
      %v3545 = vrot.slane %v3531, %v3544
      %v3547 = vshrl.u32 %v3100, 16
      %v3549 = vrot.slane %v3547, 7
      %v3550 = vrot.slane %v3549, 1
      %v3552 = vshll.u32 %v3107, 16
      %v3554 = vsel %vm923, %v3550, %v3552
      %v3555 = vshrl.u32 %v3107, 16
      %v3557 = vrot.slane %v3555, 7
      %v3558 = vrot.slane %v3557, 1
      %v3560 = vshll.u32 %v3108, 16
      %v3562 = vsel %vm923, %v3558, %v3560
      %v3563 = vshrl.u32 %v3108, 16
      %v3565 = vrot.slane %v3563, 7
      %v3566 = vrot.slane %v3565, 1
      %v3568 = vshll.u32 %v3109, 16
      %v3570 = vsel %vm923, %v3566, %v3568
      %v3571 = vshrl.u32 %v3109, 16
      %v3573 = vrot.slane %v3571, 7
      %v3574 = vrot.slane %v3573, 1
      %v3576 = vshll.u32 %v3124, 16
      %v3578 = vsel %vm923, %v3574, %v3576
      %v3579 = vshrl.u32 %v3124, 16
      %v3581 = vrot.slane %v3579, 7
      %v3582 = vrot.slane %v3581, 1
      %v3584 = vshll.u32 %v3131, 16
      %v3586 = vsel %vm923, %v3582, %v3584
      %v3588 = vshrl.u32 %v3146, 16
      %v3590 = vrot.slane %v3588, 7
      %v3591 = vrot.slane %v3590, 1
      %v3593 = vshll.u32 %v3153, 16
      %v3595 = vsel %vm923, %v3591, %v3593
      %v3596 = vshrl.u32 %v3153, 16
      %v3598 = vrot.slane %v3596, 7
      %v3599 = vrot.slane %v3598, 1
      %v3601 = vshll.u32 %v3154, 16
      %v3603 = vsel %vm923, %v3599, %v3601
      %v3604 = vshrl.u32 %v3154, 16
      %v3606 = vrot.slane %v3604, 7
      %v3607 = vrot.slane %v3606, 1
      %v3609 = vshll.u32 %v3155, 16
      %v3611 = vsel %vm923, %v3607, %v3609
      %v3612 = vshrl.u32 %v3155, 16
      %v3614 = vrot.slane %v3612, 7
      %v3615 = vrot.slane %v3614, 1
      %v3617 = vshll.u32 %v3170, 16
      %v3619 = vsel %vm923, %v3615, %v3617
      %v3620 = vshrl.u32 %v3170, 16
      %v3622 = vrot.slane %v3620, 7
      %v3623 = vrot.slane %v3622, 1
      %v3625 = vshll.u32 %v3177, 16
      %v3627 = vsel %vm923, %v3623, %v3625
      %v3629 = vshrl.u32 %v3192, 16
      %v3631 = vrot.slane %v3629, 7
      %v3632 = vrot.slane %v3631, 1
      %v3634 = vshll.u32 %v3199, 16
      %v3636 = vsel %vm923, %v3632, %v3634
      %v3637 = vshrl.u32 %v3199, 16
      %v3639 = vrot.slane %v3637, 7
      %v3640 = vrot.slane %v3639, 1
      %v3642 = vshll.u32 %v3200, 16
      %v3644 = vsel %vm923, %v3640, %v3642
      %v3645 = vshrl.u32 %v3200, 16
      %v3647 = vrot.slane %v3645, 7
      %v3648 = vrot.slane %v3647, 1
      %v3650 = vshll.u32 %v3201, 16
      %v3652 = vsel %vm923, %v3648, %v3650
      %v3653 = vshrl.u32 %v3201, 16
      %v3655 = vrot.slane %v3653, 7
      %v3656 = vrot.slane %v3655, 1
      %v3658 = vshll.u32 %v3216, 16
      %v3660 = vsel %vm923, %v3656, %v3658
      %v3661 = vshrl.u32 %v3216, 16
      %v3663 = vrot.slane %v3661, 7
      %v3664 = vrot.slane %v3663, 1
      %v3666 = vshll.u32 %v3223, 16
      %v3668 = vsel %vm923, %v3664, %v3666
      %v3670 = vshrl.u32 %v3238, 16
      %v3672 = vrot.slane %v3670, 7
      %v3673 = vrot.slane %v3672, 1
      %v3675 = vshll.u32 %v3245, 16
      %v3677 = vsel %vm923, %v3673, %v3675
      %v3678 = vshrl.u32 %v3245, 16
      %v3680 = vrot.slane %v3678, 7
      %v3681 = vrot.slane %v3680, 1
      %v3683 = vshll.u32 %v3246, 16
      %v3685 = vsel %vm923, %v3681, %v3683
      %v3686 = vshrl.u32 %v3246, 16
      %v3688 = vrot.slane %v3686, 7
      %v3689 = vrot.slane %v3688, 1
      %v3691 = vshll.u32 %v3247, 16
      %v3693 = vsel %vm923, %v3689, %v3691
      %v3694 = vshrl.u32 %v3247, 16
      %v3696 = vrot.slane %v3694, 7
      %v3697 = vrot.slane %v3696, 1
      %v3699 = vshll.u32 %v3262, 16
      %v3701 = vsel %vm923, %v3697, %v3699
      %v3702 = vshrl.u32 %v3262, 16
      %v3704 = vrot.slane %v3702, 7
      %v3705 = vrot.slane %v3704, 1
      %v3707 = vshll.u32 %v3269, 16
      %v3709 = vsel %vm923, %v3705, %v3707
      %v3711 = vshrl.u32 %v3284, 16
      %v3713 = vrot.slane %v3711, 7
      %v3714 = vrot.slane %v3713, 1
      %v3716 = vshll.u32 %v3291, 16
      %v3718 = vsel %vm923, %v3714, %v3716
      %v3719 = vshrl.u32 %v3291, 16
      %v3721 = vrot.slane %v3719, 7
      %v3722 = vrot.slane %v3721, 1
      %v3724 = vshll.u32 %v3292, 16
      %v3726 = vsel %vm923, %v3722, %v3724
      %v3727 = vshrl.u32 %v3292, 16
      %v3729 = vrot.slane %v3727, 7
      %v3730 = vrot.slane %v3729, 1
      %v3732 = vshll.u32 %v3293, 16
      %v3734 = vsel %vm923, %v3730, %v3732
      %v3735 = vshrl.u32 %v3293, 16
      %v3737 = vrot.slane %v3735, 7
      %v3738 = vrot.slane %v3737, 1
      %v3740 = vshll.u32 %v3308, 16
      %v3742 = vsel %vm923, %v3738, %v3740
      %v3743 = vshrl.u32 %v3308, 16
      %v3745 = vrot.slane %v3743, 7
      %v3746 = vrot.slane %v3745, 1
      %v3748 = vshll.u32 %v3315, 16
      %v3750 = vsel %vm923, %v3746, %v3748
      %v3752 = vshrl.u32 %v3330, 16
      %v3754 = vrot.slane %v3752, 7
      %v3755 = vrot.slane %v3754, 1
      %v3757 = vshll.u32 %v3337, 16
      %v3759 = vsel %vm923, %v3755, %v3757
      %v3760 = vshrl.u32 %v3337, 16
      %v3762 = vrot.slane %v3760, 7
      %v3763 = vrot.slane %v3762, 1
      %v3765 = vshll.u32 %v3338, 16
      %v3767 = vsel %vm923, %v3763, %v3765
      %v3768 = vshrl.u32 %v3338, 16
      %v3770 = vrot.slane %v3768, 7
      %v3771 = vrot.slane %v3770, 1
      %v3773 = vshll.u32 %v3339, 16
      %v3775 = vsel %vm923, %v3771, %v3773
      %v3776 = vshrl.u32 %v3339, 16
      %v3778 = vrot.slane %v3776, 7
      %v3779 = vrot.slane %v3778, 1
      %v3781 = vshll.u32 %v3354, 16
      %v3783 = vsel %vm923, %v3779, %v3781
      %v3784 = vshrl.u32 %v3354, 16
      %v3786 = vrot.slane %v3784, 7
      %v3787 = vrot.slane %v3786, 1
      %v3789 = vshll.u32 %v3361, 16
      %v3791 = vsel %vm923, %v3787, %v3789
      %v3793 = vshrl.u32 %v3376, 16
      %v3795 = vrot.slane %v3793, 7
      %v3796 = vrot.slane %v3795, 1
      %v3798 = vshll.u32 %v3383, 16
      %v3800 = vsel %vm923, %v3796, %v3798
      %v3801 = vshrl.u32 %v3383, 16
      %v3803 = vrot.slane %v3801, 7
      %v3804 = vrot.slane %v3803, 1
      %v3806 = vshll.u32 %v3384, 16
      %v3808 = vsel %vm923, %v3804, %v3806
      %v3809 = vshrl.u32 %v3384, 16
      %v3811 = vrot.slane %v3809, 7
      %v3812 = vrot.slane %v3811, 1
      %v3814 = vshll.u32 %v3385, 16
      %v3816 = vsel %vm923, %v3812, %v3814
      %v3817 = vshrl.u32 %v3385, 16
      %v3819 = vrot.slane %v3817, 7
      %v3820 = vrot.slane %v3819, 1
      %v3822 = vshll.u32 %v3400, 16
      %v3824 = vsel %vm923, %v3820, %v3822
      %v3825 = vshrl.u32 %v3400, 16
      %v3827 = vrot.slane %v3825, 7
      %v3828 = vrot.slane %v3827, 1
      %v3830 = vshll.u32 %v3407, 16
      %v3832 = vsel %vm923, %v3828, %v3830
      %v3834 = vshrl.u32 %v3422, 16
      %v3836 = vrot.slane %v3834, 7
      %v3837 = vrot.slane %v3836, 1
      %v3839 = vshll.u32 %v3429, 16
      %v3841 = vsel %vm923, %v3837, %v3839
      %v3842 = vshrl.u32 %v3429, 16
      %v3844 = vrot.slane %v3842, 7
      %v3845 = vrot.slane %v3844, 1
      %v3847 = vshll.u32 %v3430, 16
      %v3849 = vsel %vm923, %v3845, %v3847
      %v3850 = vshrl.u32 %v3430, 16
      %v3852 = vrot.slane %v3850, 7
      %v3853 = vrot.slane %v3852, 1
      %v3855 = vshll.u32 %v3431, 16
      %v3857 = vsel %vm923, %v3853, %v3855
      %v3858 = vshrl.u32 %v3431, 16
      %v3860 = vrot.slane %v3858, 7
      %v3861 = vrot.slane %v3860, 1
      %v3863 = vshll.u32 %v3446, 16
      %v3865 = vsel %vm923, %v3861, %v3863
      %v3866 = vshrl.u32 %v3446, 16
      %v3868 = vrot.slane %v3866, 7
      %v3869 = vrot.slane %v3868, 1
      %v3871 = vshll.u32 %v3453, 16
      %v3873 = vsel %vm923, %v3869, %v3871
      %v3875 = vshrl.u32 %v3468, 16
      %v3877 = vrot.slane %v3875, 7
      %v3878 = vrot.slane %v3877, 1
      %v3880 = vshll.u32 %v3475, 16
      %v3882 = vsel %vm923, %v3878, %v3880
      %v3883 = vshrl.u32 %v3475, 16
      %v3885 = vrot.slane %v3883, 7
      %v3886 = vrot.slane %v3885, 1
      %v3888 = vshll.u32 %v3476, 16
      %v3890 = vsel %vm923, %v3886, %v3888
      %v3891 = vshrl.u32 %v3476, 16
      %v3893 = vrot.slane %v3891, 7
      %v3894 = vrot.slane %v3893, 1
      %v3896 = vshll.u32 %v3477, 16
      %v3898 = vsel %vm923, %v3894, %v3896
      %v3899 = vshrl.u32 %v3477, 16
      %v3901 = vrot.slane %v3899, 7
      %v3902 = vrot.slane %v3901, 1
      %v3904 = vshll.u32 %v3492, 16
      %v3906 = vsel %vm923, %v3902, %v3904
      %v3907 = vshrl.u32 %v3492, 16
      %v3909 = vrot.slane %v3907, 7
      %v3910 = vrot.slane %v3909, 1
      %v3912 = vshll.u32 %v3499, 16
      %v3914 = vsel %vm923, %v3910, %v3912
      %v3916 = vshrl.u32 %v3514, 16
      %v3918 = vrot.slane %v3916, 7
      %v3919 = vrot.slane %v3918, 1
      %v3921 = vshll.u32 %v3521, 16
      %v3923 = vsel %vm923, %v3919, %v3921
      %v3924 = vshrl.u32 %v3521, 16
      %v3926 = vrot.slane %v3924, 7
      %v3927 = vrot.slane %v3926, 1
      %v3929 = vshll.u32 %v3522, 16
      %v3931 = vsel %vm923, %v3927, %v3929
      %v3932 = vshrl.u32 %v3522, 16
      %v3934 = vrot.slane %v3932, 7
      %v3935 = vrot.slane %v3934, 1
      %v3937 = vshll.u32 %v3523, 16
      %v3939 = vsel %vm923, %v3935, %v3937
      %v3940 = vshrl.u32 %v3523, 16
      %v3942 = vrot.slane %v3940, 7
      %v3943 = vrot.slane %v3942, 1
      %v3945 = vshll.u32 %v3538, 16
      %v3947 = vsel %vm923, %v3943, %v3945
      %v3948 = vshrl.u32 %v3538, 16
      %v3950 = vrot.slane %v3948, 7
      %v3951 = vrot.slane %v3950, 1
      %v3953 = vshll.u32 %v3545, 16
      %v3955 = vsel %vm923, %v3951, %v3953
      %v3956 = vcombine.low %v3554, %v3562
      %v3957 = vcombine.low %v3570, %v3578
      %v3958 = vcombine.low %v3586, %v3595
      %v3959 = vcombine.low %v3603, %v3611
      %v3961 = vunpack.c.l.s4 1966171168
      %v3962 = vunpack.c.0.s8 %v3961
      %v3963 = vlaneseq
      %v3964 = vshrl.u32 %v3963, 7
      %v3965 = vsub.s32 %v3962, %v3964
      %v3966 = vrot.slane %v3956, %v3965
      %v3968 = vunpack.c.l.s4 1966171168
      %v3969 = vunpack.c.0.s8 %v3968
      %v3970 = vlaneseq
      %v3971 = vshrl.u32 %v3970, 7
      %v3972 = vsub.s32 %v3969, %v3971
      %v3973 = vrot.slane %v3957, %v3972
      %v3975 = vunpack.c.l.s4 1966171168
      %v3976 = vunpack.c.0.s8 %v3975
      %v3977 = vlaneseq
      %v3978 = vshrl.u32 %v3977, 7
      %v3979 = vsub.s32 %v3976, %v3978
      %v3980 = vrot.slane %v3958, %v3979
      %v3982 = vunpack.c.l.s4 1966171168
      %v3983 = vunpack.c.0.s8 %v3982
      %v3984 = vlaneseq
      %v3985 = vshrl.u32 %v3984, 7
      %v3986 = vsub.s32 %v3983, %v3985
      %v3987 = vrot.slane %v3959, %v3986
      %v3988 = vcombine.low %v3966, %v3973
      %v3989 = vcombine.low %v3980, %v3987
      %v3991 = vunpack.c.l.s4 1966171168
      %v3992 = vunpack.c.0.s8 %v3991
      %v3993 = vlaneseq
      %v3994 = vshrl.u32 %v3993, 7
      %v3995 = vsub.s32 %v3992, %v3994
      %v3996 = vrot.slane %v3988, %v3995
      %v3998 = vunpack.c.l.s4 1966171168
      %v3999 = vunpack.c.0.s8 %v3998
      %v4000 = vlaneseq
      %v4001 = vshrl.u32 %v4000, 7
      %v4002 = vsub.s32 %v3999, %v4001
      %v4003 = vrot.slane %v3989, %v4002
      %v4004 = vcombine.low %v3996, %v4003
      %v4005 = vcombine.low %v3619, %v3627
      %v4006 = vcombine.low %v3636, %v3644
      %v4007 = vcombine.low %v3652, %v3660
      %v4008 = vcombine.low %v3668, %v3677
      %v4010 = vunpack.c.l.s4 1966171168
      %v4011 = vunpack.c.0.s8 %v4010
      %v4012 = vlaneseq
      %v4013 = vshrl.u32 %v4012, 7
      %v4014 = vsub.s32 %v4011, %v4013
      %v4015 = vrot.slane %v4005, %v4014
      %v4017 = vunpack.c.l.s4 1966171168
      %v4018 = vunpack.c.0.s8 %v4017
      %v4019 = vlaneseq
      %v4020 = vshrl.u32 %v4019, 7
      %v4021 = vsub.s32 %v4018, %v4020
      %v4022 = vrot.slane %v4006, %v4021
      %v4024 = vunpack.c.l.s4 1966171168
      %v4025 = vunpack.c.0.s8 %v4024
      %v4026 = vlaneseq
      %v4027 = vshrl.u32 %v4026, 7
      %v4028 = vsub.s32 %v4025, %v4027
      %v4029 = vrot.slane %v4007, %v4028
      %v4031 = vunpack.c.l.s4 1966171168
      %v4032 = vunpack.c.0.s8 %v4031
      %v4033 = vlaneseq
      %v4034 = vshrl.u32 %v4033, 7
      %v4035 = vsub.s32 %v4032, %v4034
      %v4036 = vrot.slane %v4008, %v4035
      %v4037 = vcombine.low %v4015, %v4022
      %v4038 = vcombine.low %v4029, %v4036
      %v4040 = vunpack.c.l.s4 1966171168
      %v4041 = vunpack.c.0.s8 %v4040
      %v4042 = vlaneseq
      %v4043 = vshrl.u32 %v4042, 7
      %v4044 = vsub.s32 %v4041, %v4043
      %v4045 = vrot.slane %v4037, %v4044
      %v4047 = vunpack.c.l.s4 1966171168
      %v4048 = vunpack.c.0.s8 %v4047
      %v4049 = vlaneseq
      %v4050 = vshrl.u32 %v4049, 7
      %v4051 = vsub.s32 %v4048, %v4050
      %v4052 = vrot.slane %v4038, %v4051
      %v4053 = vcombine.low %v4045, %v4052
      %v4054 = vcombine.low %v3685, %v3693
      %v4055 = vcombine.low %v3701, %v3709
      %v4056 = vcombine.low %v3718, %v3726
      %v4057 = vcombine.low %v3734, %v3742
      %v4059 = vunpack.c.l.s4 1966171168
      %v4060 = vunpack.c.0.s8 %v4059
      %v4061 = vlaneseq
      %v4062 = vshrl.u32 %v4061, 7
      %v4063 = vsub.s32 %v4060, %v4062
      %v4064 = vrot.slane %v4054, %v4063
      %v4066 = vunpack.c.l.s4 1966171168
      %v4067 = vunpack.c.0.s8 %v4066
      %v4068 = vlaneseq
      %v4069 = vshrl.u32 %v4068, 7
      %v4070 = vsub.s32 %v4067, %v4069
      %v4071 = vrot.slane %v4055, %v4070
      %v4073 = vunpack.c.l.s4 1966171168
      %v4074 = vunpack.c.0.s8 %v4073
      %v4075 = vlaneseq
      %v4076 = vshrl.u32 %v4075, 7
      %v4077 = vsub.s32 %v4074, %v4076
      %v4078 = vrot.slane %v4056, %v4077
      %v4080 = vunpack.c.l.s4 1966171168
      %v4081 = vunpack.c.0.s8 %v4080
      %v4082 = vlaneseq
      %v4083 = vshrl.u32 %v4082, 7
      %v4084 = vsub.s32 %v4081, %v4083
      %v4085 = vrot.slane %v4057, %v4084
      %v4086 = vcombine.low %v4064, %v4071
      %v4087 = vcombine.low %v4078, %v4085
      %v4089 = vunpack.c.l.s4 1966171168
      %v4090 = vunpack.c.0.s8 %v4089
      %v4091 = vlaneseq
      %v4092 = vshrl.u32 %v4091, 7
      %v4093 = vsub.s32 %v4090, %v4092
      %v4094 = vrot.slane %v4086, %v4093
      %v4096 = vunpack.c.l.s4 1966171168
      %v4097 = vunpack.c.0.s8 %v4096
      %v4098 = vlaneseq
      %v4099 = vshrl.u32 %v4098, 7
      %v4100 = vsub.s32 %v4097, %v4099
      %v4101 = vrot.slane %v4087, %v4100
      %v4102 = vcombine.low %v4094, %v4101
      %v4103 = vcombine.low %v3750, %v3759
      %v4104 = vcombine.low %v3767, %v3775
      %v4105 = vcombine.low %v3783, %v3791
      %v4106 = vcombine.low %v3800, %v3808
      %v4108 = vunpack.c.l.s4 1966171168
      %v4109 = vunpack.c.0.s8 %v4108
      %v4110 = vlaneseq
      %v4111 = vshrl.u32 %v4110, 7
      %v4112 = vsub.s32 %v4109, %v4111
      %v4113 = vrot.slane %v4103, %v4112
      %v4115 = vunpack.c.l.s4 1966171168
      %v4116 = vunpack.c.0.s8 %v4115
      %v4117 = vlaneseq
      %v4118 = vshrl.u32 %v4117, 7
      %v4119 = vsub.s32 %v4116, %v4118
      %v4120 = vrot.slane %v4104, %v4119
      %v4122 = vunpack.c.l.s4 1966171168
      %v4123 = vunpack.c.0.s8 %v4122
      %v4124 = vlaneseq
      %v4125 = vshrl.u32 %v4124, 7
      %v4126 = vsub.s32 %v4123, %v4125
      %v4127 = vrot.slane %v4105, %v4126
      %v4129 = vunpack.c.l.s4 1966171168
      %v4130 = vunpack.c.0.s8 %v4129
      %v4131 = vlaneseq
      %v4132 = vshrl.u32 %v4131, 7
      %v4133 = vsub.s32 %v4130, %v4132
      %v4134 = vrot.slane %v4106, %v4133
      %v4135 = vcombine.low %v4113, %v4120
      %v4136 = vcombine.low %v4127, %v4134
      %v4138 = vunpack.c.l.s4 1966171168
      %v4139 = vunpack.c.0.s8 %v4138
      %v4140 = vlaneseq
      %v4141 = vshrl.u32 %v4140, 7
      %v4142 = vsub.s32 %v4139, %v4141
      %v4143 = vrot.slane %v4135, %v4142
      %v4145 = vunpack.c.l.s4 1966171168
      %v4146 = vunpack.c.0.s8 %v4145
      %v4147 = vlaneseq
      %v4148 = vshrl.u32 %v4147, 7
      %v4149 = vsub.s32 %v4146, %v4148
      %v4150 = vrot.slane %v4136, %v4149
      %v4151 = vcombine.low %v4143, %v4150
      %v4152 = vcombine.low %v3816, %v3824
      %v4153 = vcombine.low %v3832, %v3841
      %v4154 = vcombine.low %v3849, %v3857
      %v4155 = vcombine.low %v3865, %v3873
      %v4157 = vunpack.c.l.s4 1966171168
      %v4158 = vunpack.c.0.s8 %v4157
      %v4159 = vlaneseq
      %v4160 = vshrl.u32 %v4159, 7
      %v4161 = vsub.s32 %v4158, %v4160
      %v4162 = vrot.slane %v4152, %v4161
      %v4164 = vunpack.c.l.s4 1966171168
      %v4165 = vunpack.c.0.s8 %v4164
      %v4166 = vlaneseq
      %v4167 = vshrl.u32 %v4166, 7
      %v4168 = vsub.s32 %v4165, %v4167
      %v4169 = vrot.slane %v4153, %v4168
      %v4171 = vunpack.c.l.s4 1966171168
      %v4172 = vunpack.c.0.s8 %v4171
      %v4173 = vlaneseq
      %v4174 = vshrl.u32 %v4173, 7
      %v4175 = vsub.s32 %v4172, %v4174
      %v4176 = vrot.slane %v4154, %v4175
      %v4178 = vunpack.c.l.s4 1966171168
      %v4179 = vunpack.c.0.s8 %v4178
      %v4180 = vlaneseq
      %v4181 = vshrl.u32 %v4180, 7
      %v4182 = vsub.s32 %v4179, %v4181
      %v4183 = vrot.slane %v4155, %v4182
      %v4184 = vcombine.low %v4162, %v4169
      %v4185 = vcombine.low %v4176, %v4183
      %v4187 = vunpack.c.l.s4 1966171168
      %v4188 = vunpack.c.0.s8 %v4187
      %v4189 = vlaneseq
      %v4190 = vshrl.u32 %v4189, 7
      %v4191 = vsub.s32 %v4188, %v4190
      %v4192 = vrot.slane %v4184, %v4191
      %v4194 = vunpack.c.l.s4 1966171168
      %v4195 = vunpack.c.0.s8 %v4194
      %v4196 = vlaneseq
      %v4197 = vshrl.u32 %v4196, 7
      %v4198 = vsub.s32 %v4195, %v4197
      %v4199 = vrot.slane %v4185, %v4198
      %v4200 = vcombine.low %v4192, %v4199
      %v4201 = vcombine.low %v3882, %v3890
      %v4202 = vcombine.low %v3898, %v3906
      %v4203 = vcombine.low %v3914, %v3923
      %v4204 = vcombine.low %v3931, %v3939
      %v4206 = vunpack.c.l.s4 1966171168
      %v4207 = vunpack.c.0.s8 %v4206
      %v4208 = vlaneseq
      %v4209 = vshrl.u32 %v4208, 7
      %v4210 = vsub.s32 %v4207, %v4209
      %v4211 = vrot.slane %v4201, %v4210
      %v4213 = vunpack.c.l.s4 1966171168
      %v4214 = vunpack.c.0.s8 %v4213
      %v4215 = vlaneseq
      %v4216 = vshrl.u32 %v4215, 7
      %v4217 = vsub.s32 %v4214, %v4216
      %v4218 = vrot.slane %v4202, %v4217
      %v4220 = vunpack.c.l.s4 1966171168
      %v4221 = vunpack.c.0.s8 %v4220
      %v4222 = vlaneseq
      %v4223 = vshrl.u32 %v4222, 7
      %v4224 = vsub.s32 %v4221, %v4223
      %v4225 = vrot.slane %v4203, %v4224
      %v4227 = vunpack.c.l.s4 1966171168
      %v4228 = vunpack.c.0.s8 %v4227
      %v4229 = vlaneseq
      %v4230 = vshrl.u32 %v4229, 7
      %v4231 = vsub.s32 %v4228, %v4230
      %v4232 = vrot.slane %v4204, %v4231
      %v4233 = vcombine.low %v4211, %v4218
      %v4234 = vcombine.low %v4225, %v4232
      %v4236 = vunpack.c.l.s4 1966171168
      %v4237 = vunpack.c.0.s8 %v4236
      %v4238 = vlaneseq
      %v4239 = vshrl.u32 %v4238, 7
      %v4240 = vsub.s32 %v4237, %v4239
      %v4241 = vrot.slane %v4233, %v4240
      %v4243 = vunpack.c.l.s4 1966171168
      %v4244 = vunpack.c.0.s8 %v4243
      %v4245 = vlaneseq
      %v4246 = vshrl.u32 %v4245, 7
      %v4247 = vsub.s32 %v4244, %v4246
      %v4248 = vrot.slane %v4234, %v4247
      %v4249 = vcombine.low %v4241, %v4248
      %v4250 = vcombine.low %v3947, %v3955
      %v4252 = vunpack.c.l.s4 1966171168
      %v4253 = vunpack.c.0.s8 %v4252
      %v4254 = vlaneseq
      %v4255 = vshrl.u32 %v4254, 7
      %v4256 = vsub.s32 %v4253, %v4255
      %v4257 = vrot.slane %v4250, %v4256
      %v4259 = vunpack.c.l.s4 1966171168
      %v4260 = vunpack.c.0.s8 %v4259
      %v4261 = vlaneseq
      %v4262 = vshrl.u32 %v4261, 7
      %v4263 = vsub.s32 %v4260, %v4262
      %v4264 = vrot.slane %v4257, %v4263
      %v4266 = vunpack.c.l.b16 %v3065
      %v4267 = vpack.c.b16 %v4266, %v4266
      %v4268 = vrot.slane %v4267, 2
      %v4270 = vsel %vm1643, %v4004, 0
      %v4273 = vsel %vm1643, %v4053, 0
      %v4276 = vsel %vm1643, %v4102, 0
      %v4279 = vsel %vm1643, %v4151, 0
      %v4282 = vsel %vm1643, %v4200, 0
      %v4285 = vsel %vm1643, %v4249, 0
      %v4288 = vsel %vm1643, %v4264, 0
      %v4291 = vsel %vm1665, %v4268, 0
      %4293 = vmatprep.subr.bf16.mxu0 0
      %4294 = vmatpush1.bf16.msra.mxu0 0
      %4295 = vmatprep.subr.bf16.mxu0 0
      %4296 = vmatpush1.bf16.msra.mxu0 0
      %4297 = vmatprep.subr.bf16.mxu0 0
      %4298 = vmatpush1.bf16.msra.mxu0 0
      %4299 = vmatprep.subr.bf16.mxu0 0
      %4300 = vmatpush1.bf16.msra.mxu0 0
      %4301 = vmatprep.subr.bf16.mxu0 0
      %4302 = vmatpush1.bf16.msra.mxu0 0
      %4303 = vmatprep.subr.bf16.mxu0 0
      %4304 = vmatpush1.bf16.msra.mxu0 0
      %4305 = vmatprep.subr.bf16.mxu0 0
      %4306 = vmatpush1.bf16.msra.mxu0 0
      %4307 = vmatprep.subr.bf16.mxu0 0
      %4308 = vmatpush1.bf16.msra.mxu0 %v4291
      %4309 = vmatprep.subr.bf16.mxu0 0
      %4310 = vmatpush2.bf16.msra.mxu0 0
      %4311 = vmatprep.subr.bf16.mxu0 0
      %4312 = vmatpush2.bf16.msra.mxu0 0
      %4313 = vmatprep.subr.bf16.mxu0 0
      %4314 = vmatpush2.bf16.msra.mxu0 0
      %4315 = vmatprep.subr.bf16.mxu0 0
      %4316 = vmatpush2.bf16.msra.mxu0 0
      %4317 = vmatprep.subr.bf16.mxu0 0
      %4318 = vmatpush2.bf16.msra.mxu0 0
      %4319 = vmatprep.subr.bf16.mxu0 0
      %4320 = vmatpush2.bf16.msra.mxu0 0
      %4321 = vmatprep.subr.bf16.mxu0 0
      %4322 = vmatpush2.bf16.msra.mxu0 0
      %4323 = vmatprep.subr.bf16.mxu0 0
      %4324 = vmatpush2.bf16.msra.mxu0 0
      %4325 = vmatprep.mubr.bf16.mxu0 0
      %4326 = vmatmul.mubr.bf16.gmra.mxu0 %v4270
      %v4327 = vpop.f32.mrf.mxu0
      %v4328 = vadd.f32 0.0, %v4327
      %v4329 = vpop.f32.mrf.mxu0
      %v4330 = vpop.f32.mrf.mxu0
      %v4331 = vadd.f32 0.0, %v4330
      %v4332 = vpop.f32.mrf.mxu0
      %4333 = vmatprep.mubr.bf16.mxu0 0
      %4334 = vmatmul.mubr.bf16.gmra.mxu0 %v4273
      %v4335 = vpop.f32.mrf.mxu0
      %v4336 = vadd.f32 0.0, %v4335
      %v4337 = vpop.f32.mrf.mxu0
      %v4338 = vpop.f32.mrf.mxu0
      %v4339 = vadd.f32 0.0, %v4338
      %v4340 = vpop.f32.mrf.mxu0
      %4341 = vmatprep.mubr.bf16.mxu0 0
      %4342 = vmatmul.mubr.bf16.gmra.mxu0 %v4276
      %v4343 = vpop.f32.mrf.mxu0
      %v4344 = vadd.f32 0.0, %v4343
      %v4345 = vpop.f32.mrf.mxu0
      %v4346 = vpop.f32.mrf.mxu0
      %v4347 = vadd.f32 0.0, %v4346
      %v4348 = vpop.f32.mrf.mxu0
      %4349 = vmatprep.mubr.bf16.mxu0 0
      %4350 = vmatmul.mubr.bf16.gmra.mxu0 %v4279
      %v4351 = vpop.f32.mrf.mxu0
      %v4352 = vadd.f32 0.0, %v4351
      %v4353 = vpop.f32.mrf.mxu0
      %v4354 = vpop.f32.mrf.mxu0
      %v4355 = vadd.f32 0.0, %v4354
      %v4356 = vpop.f32.mrf.mxu0
      %4357 = vmatprep.mubr.bf16.mxu0 0
      %4358 = vmatmul.mubr.bf16.gmra.mxu0 %v4282
      %v4359 = vpop.f32.mrf.mxu0
      %v4360 = vadd.f32 0.0, %v4359
      %v4361 = vpop.f32.mrf.mxu0
      %v4362 = vpop.f32.mrf.mxu0
      %v4363 = vadd.f32 0.0, %v4362
      %v4364 = vpop.f32.mrf.mxu0
      %4365 = vmatprep.mubr.bf16.mxu0 0
      %4366 = vmatmul.mubr.bf16.gmra.mxu0 %v4285
      %v4367 = vpop.f32.mrf.mxu0
      %v4368 = vadd.f32 0.0, %v4367
      %v4369 = vpop.f32.mrf.mxu0
      %v4370 = vpop.f32.mrf.mxu0
      %v4371 = vadd.f32 0.0, %v4370
      %v4372 = vpop.f32.mrf.mxu0
      %4373 = vmatprep.mubr.bf16.mxu0 0
      %4374 = vmatmul.mubr.bf16.gmra.mxu0 %v4288
      %v4375 = vpop.f32.mrf.mxu0
      %v4376 = vadd.f32 0.0, %v4375
      %v4377 = vpop.f32.mrf.mxu0
      %v4378 = vpop.f32.mrf.mxu0
      %v4379 = vpop.f32.mrf.mxu0
      %4380 = vdwg.mxu0
      %v4381 = vadd.f32 %v3032, %v4328
      %v4382 = vadd.f32 %v3033, %v4331
      %v4383 = vadd.f32 %v3034, %v4336
      %v4384 = vadd.f32 %v3035, %v4339
      %v4385 = vadd.f32 %v3036, %v4344
      %v4386 = vadd.f32 %v3037, %v4347
      %v4387 = vadd.f32 %v3038, %v4352
      %v4388 = vadd.f32 %v3039, %v4355
      %v4389 = vadd.f32 %v3040, %v4360
      %v4390 = vadd.f32 %v3041, %v4363
      %v4391 = vadd.f32 %v3042, %v4368
      %v4392 = vadd.f32 %v3043, %v4371
      %v4393 = vadd.f32 %v3044, %v4376
      %s4394 = sadd.s32 %s243, 1
      %s4395 = smul.u32 %s4394, 4
      %s4396 = smul.addr %s4395, 4
      %s4397 = scalar_lea.vmem %s220, %s4396
      %v4398 = vld [vmem:[%s4397] sm:$0xf]
      %v4399 = vld [vmem:[%s4397 + $0x4] sm:$0x1]
      %v4400 = vld [vmem:[%s4397 + $0x10] sm:$0xf]
      %v4401 = vld [vmem:[%s4397 + $0x14] sm:$0x1]
      %v4402 = vld [vmem:[%s4397 + $0x20] sm:$0xf]
      %v4403 = vld [vmem:[%s4397 + $0x24] sm:$0x1]
      %v4404 = vld [vmem:[%s4397 + $0x30] sm:$0xf]
      %v4405 = vld [vmem:[%s4397 + $0x34] sm:$0x1]
      %v4406 = vld [vmem:[%s4397 + $0x40] sm:$0xf]
      %v4407 = vld [vmem:[%s4397 + $0x44] sm:$0x1]
      %v4408 = vld [vmem:[%s4397 + $0x50] sm:$0xf]
      %v4409 = vld [vmem:[%s4397 + $0x54] sm:$0x1]
      %v4410 = vld [vmem:[%s4397 + $0x60] sm:$0xf]
      %v4411 = vld [vmem:[%s4397 + $0x64] sm:$0x1]
      %v4412 = vld [vmem:[%s4397 + $0x70] sm:$0xf]
      %v4413 = vld [vmem:[%s4397 + $0x74] sm:$0x1]
      %v4414 = vld [vmem:[%s4397 + $0x80] sm:$0xf]
      %v4415 = vld [vmem:[%s4397 + $0x84] sm:$0x1]
      %v4416 = vld [vmem:[%s4397 + $0x90] sm:$0xf]
      %v4417 = vld [vmem:[%s4397 + $0x94] sm:$0x1]
      %v4418 = vld [vmem:[%s224 + $0xc] sm:$0xf]
      %v4440 = vunpack.c.l.s4 1966171168
      %v4441 = vunpack.c.0.s8 %v4440
      %v4442 = vlaneseq
      %v4443 = vshrl.u32 %v4442, 7
      %v4444 = vsub.s32 %v4441, %v4443
      %v4445 = vrot.slane %v4398, %v4444
      %v4446 = vcombine.high %v4445, %v4445
      %v4448 = vunpack.c.l.s4 1966171168
      %v4449 = vunpack.c.0.s8 %v4448
      %v4450 = vlaneseq
      %v4451 = vshrl.u32 %v4450, 7
      %v4452 = vsub.s32 %v4449, %v4451
      %v4453 = vrot.slane %v4445, %v4452
      %v4455 = vunpack.c.l.s4 1966171168
      %v4456 = vunpack.c.0.s8 %v4455
      %v4457 = vlaneseq
      %v4458 = vshrl.u32 %v4457, 7
      %v4459 = vsub.s32 %v4456, %v4458
      %v4460 = vrot.slane %v4446, %v4459
      %v4461 = vcombine.high %v4453, %v4453
      %v4462 = vcombine.high %v4460, %v4460
      %v4464 = vunpack.c.l.s4 1966171168
      %v4465 = vunpack.c.0.s8 %v4464
      %v4466 = vlaneseq
      %v4467 = vshrl.u32 %v4466, 7
      %v4468 = vsub.s32 %v4465, %v4467
      %v4469 = vrot.slane %v4399, %v4468
      %v4471 = vunpack.c.l.s4 1966171168
      %v4472 = vunpack.c.0.s8 %v4471
      %v4473 = vlaneseq
      %v4474 = vshrl.u32 %v4473, 7
      %v4475 = vsub.s32 %v4472, %v4474
      %v4476 = vrot.slane %v4469, %v4475
      %v4478 = vunpack.c.l.s4 1966171168
      %v4479 = vunpack.c.0.s8 %v4478
      %v4480 = vlaneseq
      %v4481 = vshrl.u32 %v4480, 7
      %v4482 = vsub.s32 %v4479, %v4481
      %v4483 = vrot.slane %v4400, %v4482
      %v4484 = vcombine.high %v4483, %v4483
      %v4486 = vunpack.c.l.s4 1966171168
      %v4487 = vunpack.c.0.s8 %v4486
      %v4488 = vlaneseq
      %v4489 = vshrl.u32 %v4488, 7
      %v4490 = vsub.s32 %v4487, %v4489
      %v4491 = vrot.slane %v4483, %v4490
      %v4493 = vunpack.c.l.s4 1966171168
      %v4494 = vunpack.c.0.s8 %v4493
      %v4495 = vlaneseq
      %v4496 = vshrl.u32 %v4495, 7
      %v4497 = vsub.s32 %v4494, %v4496
      %v4498 = vrot.slane %v4484, %v4497
      %v4499 = vcombine.high %v4491, %v4491
      %v4500 = vcombine.high %v4498, %v4498
      %v4502 = vunpack.c.l.s4 1966171168
      %v4503 = vunpack.c.0.s8 %v4502
      %v4504 = vlaneseq
      %v4505 = vshrl.u32 %v4504, 7
      %v4506 = vsub.s32 %v4503, %v4505
      %v4507 = vrot.slane %v4401, %v4506
      %v4509 = vunpack.c.l.s4 1966171168
      %v4510 = vunpack.c.0.s8 %v4509
      %v4511 = vlaneseq
      %v4512 = vshrl.u32 %v4511, 7
      %v4513 = vsub.s32 %v4510, %v4512
      %v4514 = vrot.slane %v4507, %v4513
      %v4516 = vunpack.c.l.s4 1966171168
      %v4517 = vunpack.c.0.s8 %v4516
      %v4518 = vlaneseq
      %v4519 = vshrl.u32 %v4518, 7
      %v4520 = vsub.s32 %v4517, %v4519
      %v4521 = vrot.slane %v4402, %v4520
      %v4522 = vcombine.high %v4521, %v4521
      %v4524 = vunpack.c.l.s4 1966171168
      %v4525 = vunpack.c.0.s8 %v4524
      %v4526 = vlaneseq
      %v4527 = vshrl.u32 %v4526, 7
      %v4528 = vsub.s32 %v4525, %v4527
      %v4529 = vrot.slane %v4521, %v4528
      %v4531 = vunpack.c.l.s4 1966171168
      %v4532 = vunpack.c.0.s8 %v4531
      %v4533 = vlaneseq
      %v4534 = vshrl.u32 %v4533, 7
      %v4535 = vsub.s32 %v4532, %v4534
      %v4536 = vrot.slane %v4522, %v4535
      %v4537 = vcombine.high %v4529, %v4529
      %v4538 = vcombine.high %v4536, %v4536
      %v4540 = vunpack.c.l.s4 1966171168
      %v4541 = vunpack.c.0.s8 %v4540
      %v4542 = vlaneseq
      %v4543 = vshrl.u32 %v4542, 7
      %v4544 = vsub.s32 %v4541, %v4543
      %v4545 = vrot.slane %v4403, %v4544
      %v4547 = vunpack.c.l.s4 1966171168
      %v4548 = vunpack.c.0.s8 %v4547
      %v4549 = vlaneseq
      %v4550 = vshrl.u32 %v4549, 7
      %v4551 = vsub.s32 %v4548, %v4550
      %v4552 = vrot.slane %v4545, %v4551
      %v4554 = vunpack.c.l.s4 1966171168
      %v4555 = vunpack.c.0.s8 %v4554
      %v4556 = vlaneseq
      %v4557 = vshrl.u32 %v4556, 7
      %v4558 = vsub.s32 %v4555, %v4557
      %v4559 = vrot.slane %v4404, %v4558
      %v4560 = vcombine.high %v4559, %v4559
      %v4562 = vunpack.c.l.s4 1966171168
      %v4563 = vunpack.c.0.s8 %v4562
      %v4564 = vlaneseq
      %v4565 = vshrl.u32 %v4564, 7
      %v4566 = vsub.s32 %v4563, %v4565
      %v4567 = vrot.slane %v4559, %v4566
      %v4569 = vunpack.c.l.s4 1966171168
      %v4570 = vunpack.c.0.s8 %v4569
      %v4571 = vlaneseq
      %v4572 = vshrl.u32 %v4571, 7
      %v4573 = vsub.s32 %v4570, %v4572
      %v4574 = vrot.slane %v4560, %v4573
      %v4575 = vcombine.high %v4567, %v4567
      %v4576 = vcombine.high %v4574, %v4574
      %v4578 = vunpack.c.l.s4 1966171168
      %v4579 = vunpack.c.0.s8 %v4578
      %v4580 = vlaneseq
      %v4581 = vshrl.u32 %v4580, 7
      %v4582 = vsub.s32 %v4579, %v4581
      %v4583 = vrot.slane %v4405, %v4582
      %v4585 = vunpack.c.l.s4 1966171168
      %v4586 = vunpack.c.0.s8 %v4585
      %v4587 = vlaneseq
      %v4588 = vshrl.u32 %v4587, 7
      %v4589 = vsub.s32 %v4586, %v4588
      %v4590 = vrot.slane %v4583, %v4589
      %v4592 = vunpack.c.l.s4 1966171168
      %v4593 = vunpack.c.0.s8 %v4592
      %v4594 = vlaneseq
      %v4595 = vshrl.u32 %v4594, 7
      %v4596 = vsub.s32 %v4593, %v4595
      %v4597 = vrot.slane %v4406, %v4596
      %v4598 = vcombine.high %v4597, %v4597
      %v4600 = vunpack.c.l.s4 1966171168
      %v4601 = vunpack.c.0.s8 %v4600
      %v4602 = vlaneseq
      %v4603 = vshrl.u32 %v4602, 7
      %v4604 = vsub.s32 %v4601, %v4603
      %v4605 = vrot.slane %v4597, %v4604
      %v4607 = vunpack.c.l.s4 1966171168
      %v4608 = vunpack.c.0.s8 %v4607
      %v4609 = vlaneseq
      %v4610 = vshrl.u32 %v4609, 7
      %v4611 = vsub.s32 %v4608, %v4610
      %v4612 = vrot.slane %v4598, %v4611
      %v4613 = vcombine.high %v4605, %v4605
      %v4614 = vcombine.high %v4612, %v4612
      %v4616 = vunpack.c.l.s4 1966171168
      %v4617 = vunpack.c.0.s8 %v4616
      %v4618 = vlaneseq
      %v4619 = vshrl.u32 %v4618, 7
      %v4620 = vsub.s32 %v4617, %v4619
      %v4621 = vrot.slane %v4407, %v4620
      %v4623 = vunpack.c.l.s4 1966171168
      %v4624 = vunpack.c.0.s8 %v4623
      %v4625 = vlaneseq
      %v4626 = vshrl.u32 %v4625, 7
      %v4627 = vsub.s32 %v4624, %v4626
      %v4628 = vrot.slane %v4621, %v4627
      %v4630 = vunpack.c.l.s4 1966171168
      %v4631 = vunpack.c.0.s8 %v4630
      %v4632 = vlaneseq
      %v4633 = vshrl.u32 %v4632, 7
      %v4634 = vsub.s32 %v4631, %v4633
      %v4635 = vrot.slane %v4408, %v4634
      %v4636 = vcombine.high %v4635, %v4635
      %v4638 = vunpack.c.l.s4 1966171168
      %v4639 = vunpack.c.0.s8 %v4638
      %v4640 = vlaneseq
      %v4641 = vshrl.u32 %v4640, 7
      %v4642 = vsub.s32 %v4639, %v4641
      %v4643 = vrot.slane %v4635, %v4642
      %v4645 = vunpack.c.l.s4 1966171168
      %v4646 = vunpack.c.0.s8 %v4645
      %v4647 = vlaneseq
      %v4648 = vshrl.u32 %v4647, 7
      %v4649 = vsub.s32 %v4646, %v4648
      %v4650 = vrot.slane %v4636, %v4649
      %v4651 = vcombine.high %v4643, %v4643
      %v4652 = vcombine.high %v4650, %v4650
      %v4654 = vunpack.c.l.s4 1966171168
      %v4655 = vunpack.c.0.s8 %v4654
      %v4656 = vlaneseq
      %v4657 = vshrl.u32 %v4656, 7
      %v4658 = vsub.s32 %v4655, %v4657
      %v4659 = vrot.slane %v4409, %v4658
      %v4661 = vunpack.c.l.s4 1966171168
      %v4662 = vunpack.c.0.s8 %v4661
      %v4663 = vlaneseq
      %v4664 = vshrl.u32 %v4663, 7
      %v4665 = vsub.s32 %v4662, %v4664
      %v4666 = vrot.slane %v4659, %v4665
      %v4668 = vunpack.c.l.s4 1966171168
      %v4669 = vunpack.c.0.s8 %v4668
      %v4670 = vlaneseq
      %v4671 = vshrl.u32 %v4670, 7
      %v4672 = vsub.s32 %v4669, %v4671
      %v4673 = vrot.slane %v4410, %v4672
      %v4674 = vcombine.high %v4673, %v4673
      %v4676 = vunpack.c.l.s4 1966171168
      %v4677 = vunpack.c.0.s8 %v4676
      %v4678 = vlaneseq
      %v4679 = vshrl.u32 %v4678, 7
      %v4680 = vsub.s32 %v4677, %v4679
      %v4681 = vrot.slane %v4673, %v4680
      %v4683 = vunpack.c.l.s4 1966171168
      %v4684 = vunpack.c.0.s8 %v4683
      %v4685 = vlaneseq
      %v4686 = vshrl.u32 %v4685, 7
      %v4687 = vsub.s32 %v4684, %v4686
      %v4688 = vrot.slane %v4674, %v4687
      %v4689 = vcombine.high %v4681, %v4681
      %v4690 = vcombine.high %v4688, %v4688
      %v4692 = vunpack.c.l.s4 1966171168
      %v4693 = vunpack.c.0.s8 %v4692
      %v4694 = vlaneseq
      %v4695 = vshrl.u32 %v4694, 7
      %v4696 = vsub.s32 %v4693, %v4695
      %v4697 = vrot.slane %v4411, %v4696
      %v4699 = vunpack.c.l.s4 1966171168
      %v4700 = vunpack.c.0.s8 %v4699
      %v4701 = vlaneseq
      %v4702 = vshrl.u32 %v4701, 7
      %v4703 = vsub.s32 %v4700, %v4702
      %v4704 = vrot.slane %v4697, %v4703
      %v4706 = vunpack.c.l.s4 1966171168
      %v4707 = vunpack.c.0.s8 %v4706
      %v4708 = vlaneseq
      %v4709 = vshrl.u32 %v4708, 7
      %v4710 = vsub.s32 %v4707, %v4709
      %v4711 = vrot.slane %v4412, %v4710
      %v4712 = vcombine.high %v4711, %v4711
      %v4714 = vunpack.c.l.s4 1966171168
      %v4715 = vunpack.c.0.s8 %v4714
      %v4716 = vlaneseq
      %v4717 = vshrl.u32 %v4716, 7
      %v4718 = vsub.s32 %v4715, %v4717
      %v4719 = vrot.slane %v4711, %v4718
      %v4721 = vunpack.c.l.s4 1966171168
      %v4722 = vunpack.c.0.s8 %v4721
      %v4723 = vlaneseq
      %v4724 = vshrl.u32 %v4723, 7
      %v4725 = vsub.s32 %v4722, %v4724
      %v4726 = vrot.slane %v4712, %v4725
      %v4727 = vcombine.high %v4719, %v4719
      %v4728 = vcombine.high %v4726, %v4726
      %v4730 = vunpack.c.l.s4 1966171168
      %v4731 = vunpack.c.0.s8 %v4730
      %v4732 = vlaneseq
      %v4733 = vshrl.u32 %v4732, 7
      %v4734 = vsub.s32 %v4731, %v4733
      %v4735 = vrot.slane %v4413, %v4734
      %v4737 = vunpack.c.l.s4 1966171168
      %v4738 = vunpack.c.0.s8 %v4737
      %v4739 = vlaneseq
      %v4740 = vshrl.u32 %v4739, 7
      %v4741 = vsub.s32 %v4738, %v4740
      %v4742 = vrot.slane %v4735, %v4741
      %v4744 = vunpack.c.l.s4 1966171168
      %v4745 = vunpack.c.0.s8 %v4744
      %v4746 = vlaneseq
      %v4747 = vshrl.u32 %v4746, 7
      %v4748 = vsub.s32 %v4745, %v4747
      %v4749 = vrot.slane %v4414, %v4748
      %v4750 = vcombine.high %v4749, %v4749
      %v4752 = vunpack.c.l.s4 1966171168
      %v4753 = vunpack.c.0.s8 %v4752
      %v4754 = vlaneseq
      %v4755 = vshrl.u32 %v4754, 7
      %v4756 = vsub.s32 %v4753, %v4755
      %v4757 = vrot.slane %v4749, %v4756
      %v4759 = vunpack.c.l.s4 1966171168
      %v4760 = vunpack.c.0.s8 %v4759
      %v4761 = vlaneseq
      %v4762 = vshrl.u32 %v4761, 7
      %v4763 = vsub.s32 %v4760, %v4762
      %v4764 = vrot.slane %v4750, %v4763
      %v4765 = vcombine.high %v4757, %v4757
      %v4766 = vcombine.high %v4764, %v4764
      %v4768 = vunpack.c.l.s4 1966171168
      %v4769 = vunpack.c.0.s8 %v4768
      %v4770 = vlaneseq
      %v4771 = vshrl.u32 %v4770, 7
      %v4772 = vsub.s32 %v4769, %v4771
      %v4773 = vrot.slane %v4415, %v4772
      %v4775 = vunpack.c.l.s4 1966171168
      %v4776 = vunpack.c.0.s8 %v4775
      %v4777 = vlaneseq
      %v4778 = vshrl.u32 %v4777, 7
      %v4779 = vsub.s32 %v4776, %v4778
      %v4780 = vrot.slane %v4773, %v4779
      %v4782 = vunpack.c.l.s4 1966171168
      %v4783 = vunpack.c.0.s8 %v4782
      %v4784 = vlaneseq
      %v4785 = vshrl.u32 %v4784, 7
      %v4786 = vsub.s32 %v4783, %v4785
      %v4787 = vrot.slane %v4416, %v4786
      %v4788 = vcombine.high %v4787, %v4787
      %v4790 = vunpack.c.l.s4 1966171168
      %v4791 = vunpack.c.0.s8 %v4790
      %v4792 = vlaneseq
      %v4793 = vshrl.u32 %v4792, 7
      %v4794 = vsub.s32 %v4791, %v4793
      %v4795 = vrot.slane %v4787, %v4794
      %v4797 = vunpack.c.l.s4 1966171168
      %v4798 = vunpack.c.0.s8 %v4797
      %v4799 = vlaneseq
      %v4800 = vshrl.u32 %v4799, 7
      %v4801 = vsub.s32 %v4798, %v4800
      %v4802 = vrot.slane %v4788, %v4801
      %v4803 = vcombine.high %v4795, %v4795
      %v4804 = vcombine.high %v4802, %v4802
      %v4806 = vunpack.c.l.s4 1966171168
      %v4807 = vunpack.c.0.s8 %v4806
      %v4808 = vlaneseq
      %v4809 = vshrl.u32 %v4808, 7
      %v4810 = vsub.s32 %v4807, %v4809
      %v4811 = vrot.slane %v4417, %v4810
      %v4813 = vunpack.c.l.s4 1966171168
      %v4814 = vunpack.c.0.s8 %v4813
      %v4815 = vlaneseq
      %v4816 = vshrl.u32 %v4815, 7
      %v4817 = vsub.s32 %v4814, %v4816
      %v4818 = vrot.slane %v4811, %v4817
      %v4819 = vcombine.low %v4453, %v4460
      %v4820 = vcombine.low %v4461, %v4462
      %v4821 = vcombine.low %v4476, %v4491
      %v4822 = vcombine.low %v4498, %v4499
      %v4824 = vunpack.c.l.s4 1966171168
      %v4825 = vunpack.c.0.s8 %v4824
      %v4826 = vlaneseq
      %v4827 = vshrl.u32 %v4826, 7
      %v4828 = vsub.s32 %v4825, %v4827
      %v4829 = vrot.slane %v4819, %v4828
      %v4831 = vunpack.c.l.s4 1966171168
      %v4832 = vunpack.c.0.s8 %v4831
      %v4833 = vlaneseq
      %v4834 = vshrl.u32 %v4833, 7
      %v4835 = vsub.s32 %v4832, %v4834
      %v4836 = vrot.slane %v4820, %v4835
      %v4838 = vunpack.c.l.s4 1966171168
      %v4839 = vunpack.c.0.s8 %v4838
      %v4840 = vlaneseq
      %v4841 = vshrl.u32 %v4840, 7
      %v4842 = vsub.s32 %v4839, %v4841
      %v4843 = vrot.slane %v4821, %v4842
      %v4845 = vunpack.c.l.s4 1966171168
      %v4846 = vunpack.c.0.s8 %v4845
      %v4847 = vlaneseq
      %v4848 = vshrl.u32 %v4847, 7
      %v4849 = vsub.s32 %v4846, %v4848
      %v4850 = vrot.slane %v4822, %v4849
      %v4851 = vcombine.low %v4829, %v4836
      %v4852 = vcombine.low %v4843, %v4850
      %v4854 = vunpack.c.l.s4 1966171168
      %v4855 = vunpack.c.0.s8 %v4854
      %v4856 = vlaneseq
      %v4857 = vshrl.u32 %v4856, 7
      %v4858 = vsub.s32 %v4855, %v4857
      %v4859 = vrot.slane %v4851, %v4858
      %v4861 = vunpack.c.l.s4 1966171168
      %v4862 = vunpack.c.0.s8 %v4861
      %v4863 = vlaneseq
      %v4864 = vshrl.u32 %v4863, 7
      %v4865 = vsub.s32 %v4862, %v4864
      %v4866 = vrot.slane %v4852, %v4865
      %v4867 = vcombine.low %v4859, %v4866
      %v4868 = vcombine.low %v4500, %v4514
      %v4869 = vcombine.low %v4529, %v4536
      %v4870 = vcombine.low %v4537, %v4538
      %v4871 = vcombine.low %v4552, %v4567
      %v4873 = vunpack.c.l.s4 1966171168
      %v4874 = vunpack.c.0.s8 %v4873
      %v4875 = vlaneseq
      %v4876 = vshrl.u32 %v4875, 7
      %v4877 = vsub.s32 %v4874, %v4876
      %v4878 = vrot.slane %v4868, %v4877
      %v4880 = vunpack.c.l.s4 1966171168
      %v4881 = vunpack.c.0.s8 %v4880
      %v4882 = vlaneseq
      %v4883 = vshrl.u32 %v4882, 7
      %v4884 = vsub.s32 %v4881, %v4883
      %v4885 = vrot.slane %v4869, %v4884
      %v4887 = vunpack.c.l.s4 1966171168
      %v4888 = vunpack.c.0.s8 %v4887
      %v4889 = vlaneseq
      %v4890 = vshrl.u32 %v4889, 7
      %v4891 = vsub.s32 %v4888, %v4890
      %v4892 = vrot.slane %v4870, %v4891
      %v4894 = vunpack.c.l.s4 1966171168
      %v4895 = vunpack.c.0.s8 %v4894
      %v4896 = vlaneseq
      %v4897 = vshrl.u32 %v4896, 7
      %v4898 = vsub.s32 %v4895, %v4897
      %v4899 = vrot.slane %v4871, %v4898
      %v4900 = vcombine.low %v4878, %v4885
      %v4901 = vcombine.low %v4892, %v4899
      %v4903 = vunpack.c.l.s4 1966171168
      %v4904 = vunpack.c.0.s8 %v4903
      %v4905 = vlaneseq
      %v4906 = vshrl.u32 %v4905, 7
      %v4907 = vsub.s32 %v4904, %v4906
      %v4908 = vrot.slane %v4900, %v4907
      %v4910 = vunpack.c.l.s4 1966171168
      %v4911 = vunpack.c.0.s8 %v4910
      %v4912 = vlaneseq
      %v4913 = vshrl.u32 %v4912, 7
      %v4914 = vsub.s32 %v4911, %v4913
      %v4915 = vrot.slane %v4901, %v4914
      %v4916 = vcombine.low %v4908, %v4915
      %v4917 = vcombine.low %v4574, %v4575
      %v4918 = vcombine.low %v4576, %v4590
      %v4919 = vcombine.low %v4605, %v4612
      %v4920 = vcombine.low %v4613, %v4614
      %v4922 = vunpack.c.l.s4 1966171168
      %v4923 = vunpack.c.0.s8 %v4922
      %v4924 = vlaneseq
      %v4925 = vshrl.u32 %v4924, 7
      %v4926 = vsub.s32 %v4923, %v4925
      %v4927 = vrot.slane %v4917, %v4926
      %v4929 = vunpack.c.l.s4 1966171168
      %v4930 = vunpack.c.0.s8 %v4929
      %v4931 = vlaneseq
      %v4932 = vshrl.u32 %v4931, 7
      %v4933 = vsub.s32 %v4930, %v4932
      %v4934 = vrot.slane %v4918, %v4933
      %v4936 = vunpack.c.l.s4 1966171168
      %v4937 = vunpack.c.0.s8 %v4936
      %v4938 = vlaneseq
      %v4939 = vshrl.u32 %v4938, 7
      %v4940 = vsub.s32 %v4937, %v4939
      %v4941 = vrot.slane %v4919, %v4940
      %v4943 = vunpack.c.l.s4 1966171168
      %v4944 = vunpack.c.0.s8 %v4943
      %v4945 = vlaneseq
      %v4946 = vshrl.u32 %v4945, 7
      %v4947 = vsub.s32 %v4944, %v4946
      %v4948 = vrot.slane %v4920, %v4947
      %v4949 = vcombine.low %v4927, %v4934
      %v4950 = vcombine.low %v4941, %v4948
      %v4952 = vunpack.c.l.s4 1966171168
      %v4953 = vunpack.c.0.s8 %v4952
      %v4954 = vlaneseq
      %v4955 = vshrl.u32 %v4954, 7
      %v4956 = vsub.s32 %v4953, %v4955
      %v4957 = vrot.slane %v4949, %v4956
      %v4959 = vunpack.c.l.s4 1966171168
      %v4960 = vunpack.c.0.s8 %v4959
      %v4961 = vlaneseq
      %v4962 = vshrl.u32 %v4961, 7
      %v4963 = vsub.s32 %v4960, %v4962
      %v4964 = vrot.slane %v4950, %v4963
      %v4965 = vcombine.low %v4957, %v4964
      %v4966 = vcombine.low %v4628, %v4643
      %v4967 = vcombine.low %v4650, %v4651
      %v4968 = vcombine.low %v4652, %v4666
      %v4969 = vcombine.low %v4681, %v4688
      %v4971 = vunpack.c.l.s4 1966171168
      %v4972 = vunpack.c.0.s8 %v4971
      %v4973 = vlaneseq
      %v4974 = vshrl.u32 %v4973, 7
      %v4975 = vsub.s32 %v4972, %v4974
      %v4976 = vrot.slane %v4966, %v4975
      %v4978 = vunpack.c.l.s4 1966171168
      %v4979 = vunpack.c.0.s8 %v4978
      %v4980 = vlaneseq
      %v4981 = vshrl.u32 %v4980, 7
      %v4982 = vsub.s32 %v4979, %v4981
      %v4983 = vrot.slane %v4967, %v4982
      %v4985 = vunpack.c.l.s4 1966171168
      %v4986 = vunpack.c.0.s8 %v4985
      %v4987 = vlaneseq
      %v4988 = vshrl.u32 %v4987, 7
      %v4989 = vsub.s32 %v4986, %v4988
      %v4990 = vrot.slane %v4968, %v4989
      %v4992 = vunpack.c.l.s4 1966171168
      %v4993 = vunpack.c.0.s8 %v4992
      %v4994 = vlaneseq
      %v4995 = vshrl.u32 %v4994, 7
      %v4996 = vsub.s32 %v4993, %v4995
      %v4997 = vrot.slane %v4969, %v4996
      %v4998 = vcombine.low %v4976, %v4983
      %v4999 = vcombine.low %v4990, %v4997
      %v5001 = vunpack.c.l.s4 1966171168
      %v5002 = vunpack.c.0.s8 %v5001
      %v5003 = vlaneseq
      %v5004 = vshrl.u32 %v5003, 7
      %v5005 = vsub.s32 %v5002, %v5004
      %v5006 = vrot.slane %v4998, %v5005
      %v5008 = vunpack.c.l.s4 1966171168
      %v5009 = vunpack.c.0.s8 %v5008
      %v5010 = vlaneseq
      %v5011 = vshrl.u32 %v5010, 7
      %v5012 = vsub.s32 %v5009, %v5011
      %v5013 = vrot.slane %v4999, %v5012
      %v5014 = vcombine.low %v5006, %v5013
      %v5015 = vcombine.low %v4689, %v4690
      %v5016 = vcombine.low %v4704, %v4719
      %v5017 = vcombine.low %v4726, %v4727
      %v5018 = vcombine.low %v4728, %v4742
      %v5020 = vunpack.c.l.s4 1966171168
      %v5021 = vunpack.c.0.s8 %v5020
      %v5022 = vlaneseq
      %v5023 = vshrl.u32 %v5022, 7
      %v5024 = vsub.s32 %v5021, %v5023
      %v5025 = vrot.slane %v5015, %v5024
      %v5027 = vunpack.c.l.s4 1966171168
      %v5028 = vunpack.c.0.s8 %v5027
      %v5029 = vlaneseq
      %v5030 = vshrl.u32 %v5029, 7
      %v5031 = vsub.s32 %v5028, %v5030
      %v5032 = vrot.slane %v5016, %v5031
      %v5034 = vunpack.c.l.s4 1966171168
      %v5035 = vunpack.c.0.s8 %v5034
      %v5036 = vlaneseq
      %v5037 = vshrl.u32 %v5036, 7
      %v5038 = vsub.s32 %v5035, %v5037
      %v5039 = vrot.slane %v5017, %v5038
      %v5041 = vunpack.c.l.s4 1966171168
      %v5042 = vunpack.c.0.s8 %v5041
      %v5043 = vlaneseq
      %v5044 = vshrl.u32 %v5043, 7
      %v5045 = vsub.s32 %v5042, %v5044
      %v5046 = vrot.slane %v5018, %v5045
      %v5047 = vcombine.low %v5025, %v5032
      %v5048 = vcombine.low %v5039, %v5046
      %v5050 = vunpack.c.l.s4 1966171168
      %v5051 = vunpack.c.0.s8 %v5050
      %v5052 = vlaneseq
      %v5053 = vshrl.u32 %v5052, 7
      %v5054 = vsub.s32 %v5051, %v5053
      %v5055 = vrot.slane %v5047, %v5054
      %v5057 = vunpack.c.l.s4 1966171168
      %v5058 = vunpack.c.0.s8 %v5057
      %v5059 = vlaneseq
      %v5060 = vshrl.u32 %v5059, 7
      %v5061 = vsub.s32 %v5058, %v5060
      %v5062 = vrot.slane %v5048, %v5061
      %v5063 = vcombine.low %v5055, %v5062
      %v5064 = vcombine.low %v4757, %v4764
      %v5065 = vcombine.low %v4765, %v4766
      %v5066 = vcombine.low %v4780, %v4795
      %v5067 = vcombine.low %v4802, %v4803
      %v5069 = vunpack.c.l.s4 1966171168
      %v5070 = vunpack.c.0.s8 %v5069
      %v5071 = vlaneseq
      %v5072 = vshrl.u32 %v5071, 7
      %v5073 = vsub.s32 %v5070, %v5072
      %v5074 = vrot.slane %v5064, %v5073
      %v5076 = vunpack.c.l.s4 1966171168
      %v5077 = vunpack.c.0.s8 %v5076
      %v5078 = vlaneseq
      %v5079 = vshrl.u32 %v5078, 7
      %v5080 = vsub.s32 %v5077, %v5079
      %v5081 = vrot.slane %v5065, %v5080
      %v5083 = vunpack.c.l.s4 1966171168
      %v5084 = vunpack.c.0.s8 %v5083
      %v5085 = vlaneseq
      %v5086 = vshrl.u32 %v5085, 7
      %v5087 = vsub.s32 %v5084, %v5086
      %v5088 = vrot.slane %v5066, %v5087
      %v5090 = vunpack.c.l.s4 1966171168
      %v5091 = vunpack.c.0.s8 %v5090
      %v5092 = vlaneseq
      %v5093 = vshrl.u32 %v5092, 7
      %v5094 = vsub.s32 %v5091, %v5093
      %v5095 = vrot.slane %v5067, %v5094
      %v5096 = vcombine.low %v5074, %v5081
      %v5097 = vcombine.low %v5088, %v5095
      %v5099 = vunpack.c.l.s4 1966171168
      %v5100 = vunpack.c.0.s8 %v5099
      %v5101 = vlaneseq
      %v5102 = vshrl.u32 %v5101, 7
      %v5103 = vsub.s32 %v5100, %v5102
      %v5104 = vrot.slane %v5096, %v5103
      %v5106 = vunpack.c.l.s4 1966171168
      %v5107 = vunpack.c.0.s8 %v5106
      %v5108 = vlaneseq
      %v5109 = vshrl.u32 %v5108, 7
      %v5110 = vsub.s32 %v5107, %v5109
      %v5111 = vrot.slane %v5097, %v5110
      %v5112 = vcombine.low %v5104, %v5111
      %v5113 = vcombine.low %v4804, %v4818
      %v5115 = vunpack.c.l.s4 1966171168
      %v5116 = vunpack.c.0.s8 %v5115
      %v5117 = vlaneseq
      %v5118 = vshrl.u32 %v5117, 7
      %v5119 = vsub.s32 %v5116, %v5118
      %v5120 = vrot.slane %v5113, %v5119
      %v5122 = vunpack.c.l.s4 1966171168
      %v5123 = vunpack.c.0.s8 %v5122
      %v5124 = vlaneseq
      %v5125 = vshrl.u32 %v5124, 7
      %v5126 = vsub.s32 %v5123, %v5125
      %v5127 = vrot.slane %v5120, %v5126
      %v5129 = vsel %vm2066, %v4867, 0
      %v5132 = vsel %vm2066, %v4916, 0
      %v5135 = vsel %vm2066, %v4965, 0
      %v5138 = vsel %vm2066, %v5014, 0
      %v5141 = vsel %vm2066, %v5063, 0
      %v5144 = vsel %vm2066, %v5112, 0
      %v5147 = vsel %vm2066, %v5127, 0
      %v5150 = vsel %vm2088, %v4418, 0
      %5152 = vmatprep.subr.bf16.mxu0 0
      %5153 = vmatpush1.bf16.msra.mxu0 0
      %5154 = vmatprep.subr.bf16.mxu0 0
      %5155 = vmatpush1.bf16.msra.mxu0 0
      %5156 = vmatprep.subr.bf16.mxu0 0
      %5157 = vmatpush1.bf16.msra.mxu0 0
      %5158 = vmatprep.subr.bf16.mxu0 0
      %5159 = vmatpush1.bf16.msra.mxu0 0
      %5160 = vmatprep.subr.bf16.mxu0 0
      %5161 = vmatpush1.bf16.msra.mxu0 0
      %5162 = vmatprep.subr.bf16.mxu0 0
      %5163 = vmatpush1.bf16.msra.mxu0 0
      %5164 = vmatprep.subr.bf16.mxu0 0
      %5165 = vmatpush1.bf16.msra.mxu0 0
      %5166 = vmatprep.subr.bf16.mxu0 0
      %5167 = vmatpush1.bf16.msra.mxu0 %v5150
      %5168 = vmatprep.subr.bf16.mxu0 0
      %5169 = vmatpush2.bf16.msra.mxu0 0
      %5170 = vmatprep.subr.bf16.mxu0 0
      %5171 = vmatpush2.bf16.msra.mxu0 0
      %5172 = vmatprep.subr.bf16.mxu0 0
      %5173 = vmatpush2.bf16.msra.mxu0 0
      %5174 = vmatprep.subr.bf16.mxu0 0
      %5175 = vmatpush2.bf16.msra.mxu0 0
      %5176 = vmatprep.subr.bf16.mxu0 0
      %5177 = vmatpush2.bf16.msra.mxu0 0
      %5178 = vmatprep.subr.bf16.mxu0 0
      %5179 = vmatpush2.bf16.msra.mxu0 0
      %5180 = vmatprep.subr.bf16.mxu0 0
      %5181 = vmatpush2.bf16.msra.mxu0 0
      %5182 = vmatprep.subr.bf16.mxu0 0
      %5183 = vmatpush2.bf16.msra.mxu0 0
      %5184 = vmatprep.mubr.bf16.mxu0 0
      %5185 = vmatmul.mubr.bf16.gmra.mxu0 %v5129
      %v5186 = vpop.f32.mrf.mxu0
      %v5187 = vadd.f32 0.0, %v5186
      %v5188 = vpop.f32.mrf.mxu0
      %v5189 = vpop.f32.mrf.mxu0
      %v5190 = vadd.f32 0.0, %v5189
      %v5191 = vpop.f32.mrf.mxu0
      %5192 = vmatprep.mubr.bf16.mxu0 0
      %5193 = vmatmul.mubr.bf16.gmra.mxu0 %v5132
      %v5194 = vpop.f32.mrf.mxu0
      %v5195 = vadd.f32 0.0, %v5194
      %v5196 = vpop.f32.mrf.mxu0
      %v5197 = vpop.f32.mrf.mxu0
      %v5198 = vadd.f32 0.0, %v5197
      %v5199 = vpop.f32.mrf.mxu0
      %5200 = vmatprep.mubr.bf16.mxu0 0
      %5201 = vmatmul.mubr.bf16.gmra.mxu0 %v5135
      %v5202 = vpop.f32.mrf.mxu0
      %v5203 = vadd.f32 0.0, %v5202
      %v5204 = vpop.f32.mrf.mxu0
      %v5205 = vpop.f32.mrf.mxu0
      %v5206 = vadd.f32 0.0, %v5205
      %v5207 = vpop.f32.mrf.mxu0
      %5208 = vmatprep.mubr.bf16.mxu0 0
      %5209 = vmatmul.mubr.bf16.gmra.mxu0 %v5138
      %v5210 = vpop.f32.mrf.mxu0
      %v5211 = vadd.f32 0.0, %v5210
      %v5212 = vpop.f32.mrf.mxu0
      %v5213 = vpop.f32.mrf.mxu0
      %v5214 = vadd.f32 0.0, %v5213
      %v5215 = vpop.f32.mrf.mxu0
      %5216 = vmatprep.mubr.bf16.mxu0 0
      %5217 = vmatmul.mubr.bf16.gmra.mxu0 %v5141
      %v5218 = vpop.f32.mrf.mxu0
      %v5219 = vadd.f32 0.0, %v5218
      %v5220 = vpop.f32.mrf.mxu0
      %v5221 = vpop.f32.mrf.mxu0
      %v5222 = vadd.f32 0.0, %v5221
      %v5223 = vpop.f32.mrf.mxu0
      %5224 = vmatprep.mubr.bf16.mxu0 0
      %5225 = vmatmul.mubr.bf16.gmra.mxu0 %v5144
      %v5226 = vpop.f32.mrf.mxu0
      %v5227 = vadd.f32 0.0, %v5226
      %v5228 = vpop.f32.mrf.mxu0
      %v5229 = vpop.f32.mrf.mxu0
      %v5230 = vadd.f32 0.0, %v5229
      %v5231 = vpop.f32.mrf.mxu0
      %5232 = vmatprep.mubr.bf16.mxu0 0
      %5233 = vmatmul.mubr.bf16.gmra.mxu0 %v5147
      %v5234 = vpop.f32.mrf.mxu0
      %v5235 = vadd.f32 0.0, %v5234
      %v5236 = vpop.f32.mrf.mxu0
      %v5237 = vpop.f32.mrf.mxu0
      %v5238 = vpop.f32.mrf.mxu0
      %5239 = vdwg.mxu0
      %v5240 = vadd.f32 %v4381, %v5187
      %v5241 = vadd.f32 %v4382, %v5190
      %v5242 = vadd.f32 %v4383, %v5195
      %v5243 = vadd.f32 %v4384, %v5198
      %v5244 = vadd.f32 %v4385, %v5203
      %v5245 = vadd.f32 %v4386, %v5206
      %v5246 = vadd.f32 %v4387, %v5211
      %v5247 = vadd.f32 %v4388, %v5214
      %v5248 = vadd.f32 %v4389, %v5219
      %v5249 = vadd.f32 %v4390, %v5222
      %v5250 = vadd.f32 %v4391, %v5227
      %v5251 = vadd.f32 %v4392, %v5230
      %v5252 = vadd.f32 %v4393, %v5235
      %v5253 = vld [vmem:[%s4397] sm:$0xf]
      %v5254 = vld [vmem:[%s4397 + $0x4] sm:$0x3]
      %v5255 = vld [vmem:[%s4397 + $0x10] sm:$0xf]
      %v5256 = vld [vmem:[%s4397 + $0x14] sm:$0x3]
      %v5257 = vld [vmem:[%s4397 + $0x20] sm:$0xf]
      %v5258 = vld [vmem:[%s4397 + $0x24] sm:$0x3]
      %v5259 = vld [vmem:[%s4397 + $0x30] sm:$0xf]
      %v5260 = vld [vmem:[%s4397 + $0x34] sm:$0x3]
      %v5261 = vld [vmem:[%s4397 + $0x40] sm:$0xf]
      %v5262 = vld [vmem:[%s4397 + $0x44] sm:$0x3]
      %v5263 = vld [vmem:[%s4397 + $0x50] sm:$0xf]
      %v5264 = vld [vmem:[%s4397 + $0x54] sm:$0x3]
      %v5265 = vld [vmem:[%s4397 + $0x60] sm:$0xf]
      %v5266 = vld [vmem:[%s4397 + $0x64] sm:$0x3]
      %v5267 = vld [vmem:[%s4397 + $0x70] sm:$0xf]
      %v5268 = vld [vmem:[%s4397 + $0x74] sm:$0x3]
      %v5269 = vld [vmem:[%s4397 + $0x80] sm:$0xf]
      %v5270 = vld [vmem:[%s4397 + $0x84] sm:$0x3]
      %v5271 = vld [vmem:[%s4397 + $0x90] sm:$0xf]
      %v5272 = vld [vmem:[%s4397 + $0x94] sm:$0x3]
      %v5273 = vld [vmem:[%s224 + $0x10] sm:$0x3]
      %v5295 = vunpack.c.l.s4 1966171168
      %v5296 = vunpack.c.0.s8 %v5295
      %v5297 = vlaneseq
      %v5298 = vshrl.u32 %v5297, 7
      %v5299 = vsub.s32 %v5296, %v5298
      %v5300 = vrot.slane %v5253, %v5299
      %v5301 = vcombine.high %v5300, %v5300
      %v5303 = vunpack.c.l.s4 1966171168
      %v5304 = vunpack.c.0.s8 %v5303
      %v5305 = vlaneseq
      %v5306 = vshrl.u32 %v5305, 7
      %v5307 = vsub.s32 %v5304, %v5306
      %v5308 = vrot.slane %v5300, %v5307
      %v5310 = vunpack.c.l.s4 1966171168
      %v5311 = vunpack.c.0.s8 %v5310
      %v5312 = vlaneseq
      %v5313 = vshrl.u32 %v5312, 7
      %v5314 = vsub.s32 %v5311, %v5313
      %v5315 = vrot.slane %v5301, %v5314
      %v5316 = vcombine.high %v5308, %v5308
      %v5317 = vcombine.high %v5315, %v5315
      %v5319 = vunpack.c.l.s4 1966171168
      %v5320 = vunpack.c.0.s8 %v5319
      %v5321 = vlaneseq
      %v5322 = vshrl.u32 %v5321, 7
      %v5323 = vsub.s32 %v5320, %v5322
      %v5324 = vrot.slane %v5254, %v5323
      %v5325 = vcombine.high %v5324, %v5324
      %v5327 = vunpack.c.l.s4 1966171168
      %v5328 = vunpack.c.0.s8 %v5327
      %v5329 = vlaneseq
      %v5330 = vshrl.u32 %v5329, 7
      %v5331 = vsub.s32 %v5328, %v5330
      %v5332 = vrot.slane %v5324, %v5331
      %v5334 = vunpack.c.l.s4 1966171168
      %v5335 = vunpack.c.0.s8 %v5334
      %v5336 = vlaneseq
      %v5337 = vshrl.u32 %v5336, 7
      %v5338 = vsub.s32 %v5335, %v5337
      %v5339 = vrot.slane %v5325, %v5338
      %v5341 = vunpack.c.l.s4 1966171168
      %v5342 = vunpack.c.0.s8 %v5341
      %v5343 = vlaneseq
      %v5344 = vshrl.u32 %v5343, 7
      %v5345 = vsub.s32 %v5342, %v5344
      %v5346 = vrot.slane %v5255, %v5345
      %v5347 = vcombine.high %v5346, %v5346
      %v5349 = vunpack.c.l.s4 1966171168
      %v5350 = vunpack.c.0.s8 %v5349
      %v5351 = vlaneseq
      %v5352 = vshrl.u32 %v5351, 7
      %v5353 = vsub.s32 %v5350, %v5352
      %v5354 = vrot.slane %v5346, %v5353
      %v5356 = vunpack.c.l.s4 1966171168
      %v5357 = vunpack.c.0.s8 %v5356
      %v5358 = vlaneseq
      %v5359 = vshrl.u32 %v5358, 7
      %v5360 = vsub.s32 %v5357, %v5359
      %v5361 = vrot.slane %v5347, %v5360
      %v5362 = vcombine.high %v5354, %v5354
      %v5363 = vcombine.high %v5361, %v5361
      %v5365 = vunpack.c.l.s4 1966171168
      %v5366 = vunpack.c.0.s8 %v5365
      %v5367 = vlaneseq
      %v5368 = vshrl.u32 %v5367, 7
      %v5369 = vsub.s32 %v5366, %v5368
      %v5370 = vrot.slane %v5256, %v5369
      %v5371 = vcombine.high %v5370, %v5370
      %v5373 = vunpack.c.l.s4 1966171168
      %v5374 = vunpack.c.0.s8 %v5373
      %v5375 = vlaneseq
      %v5376 = vshrl.u32 %v5375, 7
      %v5377 = vsub.s32 %v5374, %v5376
      %v5378 = vrot.slane %v5370, %v5377
      %v5380 = vunpack.c.l.s4 1966171168
      %v5381 = vunpack.c.0.s8 %v5380
      %v5382 = vlaneseq
      %v5383 = vshrl.u32 %v5382, 7
      %v5384 = vsub.s32 %v5381, %v5383
      %v5385 = vrot.slane %v5371, %v5384
      %v5387 = vunpack.c.l.s4 1966171168
      %v5388 = vunpack.c.0.s8 %v5387
      %v5389 = vlaneseq
      %v5390 = vshrl.u32 %v5389, 7
      %v5391 = vsub.s32 %v5388, %v5390
      %v5392 = vrot.slane %v5257, %v5391
      %v5393 = vcombine.high %v5392, %v5392
      %v5395 = vunpack.c.l.s4 1966171168
      %v5396 = vunpack.c.0.s8 %v5395
      %v5397 = vlaneseq
      %v5398 = vshrl.u32 %v5397, 7
      %v5399 = vsub.s32 %v5396, %v5398
      %v5400 = vrot.slane %v5392, %v5399
      %v5402 = vunpack.c.l.s4 1966171168
      %v5403 = vunpack.c.0.s8 %v5402
      %v5404 = vlaneseq
      %v5405 = vshrl.u32 %v5404, 7
      %v5406 = vsub.s32 %v5403, %v5405
      %v5407 = vrot.slane %v5393, %v5406
      %v5408 = vcombine.high %v5400, %v5400
      %v5409 = vcombine.high %v5407, %v5407
      %v5411 = vunpack.c.l.s4 1966171168
      %v5412 = vunpack.c.0.s8 %v5411
      %v5413 = vlaneseq
      %v5414 = vshrl.u32 %v5413, 7
      %v5415 = vsub.s32 %v5412, %v5414
      %v5416 = vrot.slane %v5258, %v5415
      %v5417 = vcombine.high %v5416, %v5416
      %v5419 = vunpack.c.l.s4 1966171168
      %v5420 = vunpack.c.0.s8 %v5419
      %v5421 = vlaneseq
      %v5422 = vshrl.u32 %v5421, 7
      %v5423 = vsub.s32 %v5420, %v5422
      %v5424 = vrot.slane %v5416, %v5423
      %v5426 = vunpack.c.l.s4 1966171168
      %v5427 = vunpack.c.0.s8 %v5426
      %v5428 = vlaneseq
      %v5429 = vshrl.u32 %v5428, 7
      %v5430 = vsub.s32 %v5427, %v5429
      %v5431 = vrot.slane %v5417, %v5430
      %v5433 = vunpack.c.l.s4 1966171168
      %v5434 = vunpack.c.0.s8 %v5433
      %v5435 = vlaneseq
      %v5436 = vshrl.u32 %v5435, 7
      %v5437 = vsub.s32 %v5434, %v5436
      %v5438 = vrot.slane %v5259, %v5437
      %v5439 = vcombine.high %v5438, %v5438
      %v5441 = vunpack.c.l.s4 1966171168
      %v5442 = vunpack.c.0.s8 %v5441
      %v5443 = vlaneseq
      %v5444 = vshrl.u32 %v5443, 7
      %v5445 = vsub.s32 %v5442, %v5444
      %v5446 = vrot.slane %v5438, %v5445
      %v5448 = vunpack.c.l.s4 1966171168
      %v5449 = vunpack.c.0.s8 %v5448
      %v5450 = vlaneseq
      %v5451 = vshrl.u32 %v5450, 7
      %v5452 = vsub.s32 %v5449, %v5451
      %v5453 = vrot.slane %v5439, %v5452
      %v5454 = vcombine.high %v5446, %v5446
      %v5455 = vcombine.high %v5453, %v5453
      %v5457 = vunpack.c.l.s4 1966171168
      %v5458 = vunpack.c.0.s8 %v5457
      %v5459 = vlaneseq
      %v5460 = vshrl.u32 %v5459, 7
      %v5461 = vsub.s32 %v5458, %v5460
      %v5462 = vrot.slane %v5260, %v5461
      %v5463 = vcombine.high %v5462, %v5462
      %v5465 = vunpack.c.l.s4 1966171168
      %v5466 = vunpack.c.0.s8 %v5465
      %v5467 = vlaneseq
      %v5468 = vshrl.u32 %v5467, 7
      %v5469 = vsub.s32 %v5466, %v5468
      %v5470 = vrot.slane %v5462, %v5469
      %v5472 = vunpack.c.l.s4 1966171168
      %v5473 = vunpack.c.0.s8 %v5472
      %v5474 = vlaneseq
      %v5475 = vshrl.u32 %v5474, 7
      %v5476 = vsub.s32 %v5473, %v5475
      %v5477 = vrot.slane %v5463, %v5476
      %v5479 = vunpack.c.l.s4 1966171168
      %v5480 = vunpack.c.0.s8 %v5479
      %v5481 = vlaneseq
      %v5482 = vshrl.u32 %v5481, 7
      %v5483 = vsub.s32 %v5480, %v5482
      %v5484 = vrot.slane %v5261, %v5483
      %v5485 = vcombine.high %v5484, %v5484
      %v5487 = vunpack.c.l.s4 1966171168
      %v5488 = vunpack.c.0.s8 %v5487
      %v5489 = vlaneseq
      %v5490 = vshrl.u32 %v5489, 7
      %v5491 = vsub.s32 %v5488, %v5490
      %v5492 = vrot.slane %v5484, %v5491
      %v5494 = vunpack.c.l.s4 1966171168
      %v5495 = vunpack.c.0.s8 %v5494
      %v5496 = vlaneseq
      %v5497 = vshrl.u32 %v5496, 7
      %v5498 = vsub.s32 %v5495, %v5497
      %v5499 = vrot.slane %v5485, %v5498
      %v5500 = vcombine.high %v5492, %v5492
      %v5501 = vcombine.high %v5499, %v5499
      %v5503 = vunpack.c.l.s4 1966171168
      %v5504 = vunpack.c.0.s8 %v5503
      %v5505 = vlaneseq
      %v5506 = vshrl.u32 %v5505, 7
      %v5507 = vsub.s32 %v5504, %v5506
      %v5508 = vrot.slane %v5262, %v5507
      %v5509 = vcombine.high %v5508, %v5508
      %v5511 = vunpack.c.l.s4 1966171168
      %v5512 = vunpack.c.0.s8 %v5511
      %v5513 = vlaneseq
      %v5514 = vshrl.u32 %v5513, 7
      %v5515 = vsub.s32 %v5512, %v5514
      %v5516 = vrot.slane %v5508, %v5515
      %v5518 = vunpack.c.l.s4 1966171168
      %v5519 = vunpack.c.0.s8 %v5518
      %v5520 = vlaneseq
      %v5521 = vshrl.u32 %v5520, 7
      %v5522 = vsub.s32 %v5519, %v5521
      %v5523 = vrot.slane %v5509, %v5522
      %v5525 = vunpack.c.l.s4 1966171168
      %v5526 = vunpack.c.0.s8 %v5525
      %v5527 = vlaneseq
      %v5528 = vshrl.u32 %v5527, 7
      %v5529 = vsub.s32 %v5526, %v5528
      %v5530 = vrot.slane %v5263, %v5529
      %v5531 = vcombine.high %v5530, %v5530
      %v5533 = vunpack.c.l.s4 1966171168
      %v5534 = vunpack.c.0.s8 %v5533
      %v5535 = vlaneseq
      %v5536 = vshrl.u32 %v5535, 7
      %v5537 = vsub.s32 %v5534, %v5536
      %v5538 = vrot.slane %v5530, %v5537
      %v5540 = vunpack.c.l.s4 1966171168
      %v5541 = vunpack.c.0.s8 %v5540
      %v5542 = vlaneseq
      %v5543 = vshrl.u32 %v5542, 7
      %v5544 = vsub.s32 %v5541, %v5543
      %v5545 = vrot.slane %v5531, %v5544
      %v5546 = vcombine.high %v5538, %v5538
      %v5547 = vcombine.high %v5545, %v5545
      %v5549 = vunpack.c.l.s4 1966171168
      %v5550 = vunpack.c.0.s8 %v5549
      %v5551 = vlaneseq
      %v5552 = vshrl.u32 %v5551, 7
      %v5553 = vsub.s32 %v5550, %v5552
      %v5554 = vrot.slane %v5264, %v5553
      %v5555 = vcombine.high %v5554, %v5554
      %v5557 = vunpack.c.l.s4 1966171168
      %v5558 = vunpack.c.0.s8 %v5557
      %v5559 = vlaneseq
      %v5560 = vshrl.u32 %v5559, 7
      %v5561 = vsub.s32 %v5558, %v5560
      %v5562 = vrot.slane %v5554, %v5561
      %v5564 = vunpack.c.l.s4 1966171168
      %v5565 = vunpack.c.0.s8 %v5564
      %v5566 = vlaneseq
      %v5567 = vshrl.u32 %v5566, 7
      %v5568 = vsub.s32 %v5565, %v5567
      %v5569 = vrot.slane %v5555, %v5568
      %v5571 = vunpack.c.l.s4 1966171168
      %v5572 = vunpack.c.0.s8 %v5571
      %v5573 = vlaneseq
      %v5574 = vshrl.u32 %v5573, 7
      %v5575 = vsub.s32 %v5572, %v5574
      %v5576 = vrot.slane %v5265, %v5575
      %v5577 = vcombine.high %v5576, %v5576
      %v5579 = vunpack.c.l.s4 1966171168
      %v5580 = vunpack.c.0.s8 %v5579
      %v5581 = vlaneseq
      %v5582 = vshrl.u32 %v5581, 7
      %v5583 = vsub.s32 %v5580, %v5582
      %v5584 = vrot.slane %v5576, %v5583
      %v5586 = vunpack.c.l.s4 1966171168
      %v5587 = vunpack.c.0.s8 %v5586
      %v5588 = vlaneseq
      %v5589 = vshrl.u32 %v5588, 7
      %v5590 = vsub.s32 %v5587, %v5589
      %v5591 = vrot.slane %v5577, %v5590
      %v5592 = vcombine.high %v5584, %v5584
      %v5593 = vcombine.high %v5591, %v5591
      %v5595 = vunpack.c.l.s4 1966171168
      %v5596 = vunpack.c.0.s8 %v5595
      %v5597 = vlaneseq
      %v5598 = vshrl.u32 %v5597, 7
      %v5599 = vsub.s32 %v5596, %v5598
      %v5600 = vrot.slane %v5266, %v5599
      %v5601 = vcombine.high %v5600, %v5600
      %v5603 = vunpack.c.l.s4 1966171168
      %v5604 = vunpack.c.0.s8 %v5603
      %v5605 = vlaneseq
      %v5606 = vshrl.u32 %v5605, 7
      %v5607 = vsub.s32 %v5604, %v5606
      %v5608 = vrot.slane %v5600, %v5607
      %v5610 = vunpack.c.l.s4 1966171168
      %v5611 = vunpack.c.0.s8 %v5610
      %v5612 = vlaneseq
      %v5613 = vshrl.u32 %v5612, 7
      %v5614 = vsub.s32 %v5611, %v5613
      %v5615 = vrot.slane %v5601, %v5614
      %v5617 = vunpack.c.l.s4 1966171168
      %v5618 = vunpack.c.0.s8 %v5617
      %v5619 = vlaneseq
      %v5620 = vshrl.u32 %v5619, 7
      %v5621 = vsub.s32 %v5618, %v5620
      %v5622 = vrot.slane %v5267, %v5621
      %v5623 = vcombine.high %v5622, %v5622
      %v5625 = vunpack.c.l.s4 1966171168
      %v5626 = vunpack.c.0.s8 %v5625
      %v5627 = vlaneseq
      %v5628 = vshrl.u32 %v5627, 7
      %v5629 = vsub.s32 %v5626, %v5628
      %v5630 = vrot.slane %v5622, %v5629
      %v5632 = vunpack.c.l.s4 1966171168
      %v5633 = vunpack.c.0.s8 %v5632
      %v5634 = vlaneseq
      %v5635 = vshrl.u32 %v5634, 7
      %v5636 = vsub.s32 %v5633, %v5635
      %v5637 = vrot.slane %v5623, %v5636
      %v5638 = vcombine.high %v5630, %v5630
      %v5639 = vcombine.high %v5637, %v5637
      %v5641 = vunpack.c.l.s4 1966171168
      %v5642 = vunpack.c.0.s8 %v5641
      %v5643 = vlaneseq
      %v5644 = vshrl.u32 %v5643, 7
      %v5645 = vsub.s32 %v5642, %v5644
      %v5646 = vrot.slane %v5268, %v5645
      %v5647 = vcombine.high %v5646, %v5646
      %v5649 = vunpack.c.l.s4 1966171168
      %v5650 = vunpack.c.0.s8 %v5649
      %v5651 = vlaneseq
      %v5652 = vshrl.u32 %v5651, 7
      %v5653 = vsub.s32 %v5650, %v5652
      %v5654 = vrot.slane %v5646, %v5653
      %v5656 = vunpack.c.l.s4 1966171168
      %v5657 = vunpack.c.0.s8 %v5656
      %v5658 = vlaneseq
      %v5659 = vshrl.u32 %v5658, 7
      %v5660 = vsub.s32 %v5657, %v5659
      %v5661 = vrot.slane %v5647, %v5660
      %v5663 = vunpack.c.l.s4 1966171168
      %v5664 = vunpack.c.0.s8 %v5663
      %v5665 = vlaneseq
      %v5666 = vshrl.u32 %v5665, 7
      %v5667 = vsub.s32 %v5664, %v5666
      %v5668 = vrot.slane %v5269, %v5667
      %v5669 = vcombine.high %v5668, %v5668
      %v5671 = vunpack.c.l.s4 1966171168
      %v5672 = vunpack.c.0.s8 %v5671
      %v5673 = vlaneseq
      %v5674 = vshrl.u32 %v5673, 7
      %v5675 = vsub.s32 %v5672, %v5674
      %v5676 = vrot.slane %v5668, %v5675
      %v5678 = vunpack.c.l.s4 1966171168
      %v5679 = vunpack.c.0.s8 %v5678
      %v5680 = vlaneseq
      %v5681 = vshrl.u32 %v5680, 7
      %v5682 = vsub.s32 %v5679, %v5681
      %v5683 = vrot.slane %v5669, %v5682
      %v5684 = vcombine.high %v5676, %v5676
      %v5685 = vcombine.high %v5683, %v5683
      %v5687 = vunpack.c.l.s4 1966171168
      %v5688 = vunpack.c.0.s8 %v5687
      %v5689 = vlaneseq
      %v5690 = vshrl.u32 %v5689, 7
      %v5691 = vsub.s32 %v5688, %v5690
      %v5692 = vrot.slane %v5270, %v5691
      %v5693 = vcombine.high %v5692, %v5692
      %v5695 = vunpack.c.l.s4 1966171168
      %v5696 = vunpack.c.0.s8 %v5695
      %v5697 = vlaneseq
      %v5698 = vshrl.u32 %v5697, 7
      %v5699 = vsub.s32 %v5696, %v5698
      %v5700 = vrot.slane %v5692, %v5699
      %v5702 = vunpack.c.l.s4 1966171168
      %v5703 = vunpack.c.0.s8 %v5702
      %v5704 = vlaneseq
      %v5705 = vshrl.u32 %v5704, 7
      %v5706 = vsub.s32 %v5703, %v5705
      %v5707 = vrot.slane %v5693, %v5706
      %v5709 = vunpack.c.l.s4 1966171168
      %v5710 = vunpack.c.0.s8 %v5709
      %v5711 = vlaneseq
      %v5712 = vshrl.u32 %v5711, 7
      %v5713 = vsub.s32 %v5710, %v5712
      %v5714 = vrot.slane %v5271, %v5713
      %v5715 = vcombine.high %v5714, %v5714
      %v5717 = vunpack.c.l.s4 1966171168
      %v5718 = vunpack.c.0.s8 %v5717
      %v5719 = vlaneseq
      %v5720 = vshrl.u32 %v5719, 7
      %v5721 = vsub.s32 %v5718, %v5720
      %v5722 = vrot.slane %v5714, %v5721
      %v5724 = vunpack.c.l.s4 1966171168
      %v5725 = vunpack.c.0.s8 %v5724
      %v5726 = vlaneseq
      %v5727 = vshrl.u32 %v5726, 7
      %v5728 = vsub.s32 %v5725, %v5727
      %v5729 = vrot.slane %v5715, %v5728
      %v5730 = vcombine.high %v5722, %v5722
      %v5731 = vcombine.high %v5729, %v5729
      %v5733 = vunpack.c.l.s4 1966171168
      %v5734 = vunpack.c.0.s8 %v5733
      %v5735 = vlaneseq
      %v5736 = vshrl.u32 %v5735, 7
      %v5737 = vsub.s32 %v5734, %v5736
      %v5738 = vrot.slane %v5272, %v5737
      %v5739 = vcombine.high %v5738, %v5738
      %v5741 = vunpack.c.l.s4 1966171168
      %v5742 = vunpack.c.0.s8 %v5741
      %v5743 = vlaneseq
      %v5744 = vshrl.u32 %v5743, 7
      %v5745 = vsub.s32 %v5742, %v5744
      %v5746 = vrot.slane %v5738, %v5745
      %v5748 = vunpack.c.l.s4 1966171168
      %v5749 = vunpack.c.0.s8 %v5748
      %v5750 = vlaneseq
      %v5751 = vshrl.u32 %v5750, 7
      %v5752 = vsub.s32 %v5749, %v5751
      %v5753 = vrot.slane %v5739, %v5752
      %v5755 = vshrl.u32 %v5308, 16
      %v5757 = vrot.slane %v5755, 7
      %v5758 = vrot.slane %v5757, 1
      %v5760 = vshll.u32 %v5315, 16
      %v5762 = vsel %vm923, %v5758, %v5760
      %v5763 = vshrl.u32 %v5315, 16
      %v5765 = vrot.slane %v5763, 7
      %v5766 = vrot.slane %v5765, 1
      %v5768 = vshll.u32 %v5316, 16
      %v5770 = vsel %vm923, %v5766, %v5768
      %v5771 = vshrl.u32 %v5316, 16
      %v5773 = vrot.slane %v5771, 7
      %v5774 = vrot.slane %v5773, 1
      %v5776 = vshll.u32 %v5317, 16
      %v5778 = vsel %vm923, %v5774, %v5776
      %v5779 = vshrl.u32 %v5317, 16
      %v5781 = vrot.slane %v5779, 7
      %v5782 = vrot.slane %v5781, 1
      %v5784 = vshll.u32 %v5332, 16
      %v5786 = vsel %vm923, %v5782, %v5784
      %v5787 = vshrl.u32 %v5332, 16
      %v5789 = vrot.slane %v5787, 7
      %v5790 = vrot.slane %v5789, 1
      %v5792 = vshll.u32 %v5339, 16
      %v5794 = vsel %vm923, %v5790, %v5792
      %v5796 = vshrl.u32 %v5354, 16
      %v5798 = vrot.slane %v5796, 7
      %v5799 = vrot.slane %v5798, 1
      %v5801 = vshll.u32 %v5361, 16
      %v5803 = vsel %vm923, %v5799, %v5801
      %v5804 = vshrl.u32 %v5361, 16
      %v5806 = vrot.slane %v5804, 7
      %v5807 = vrot.slane %v5806, 1
      %v5809 = vshll.u32 %v5362, 16
      %v5811 = vsel %vm923, %v5807, %v5809
      %v5812 = vshrl.u32 %v5362, 16
      %v5814 = vrot.slane %v5812, 7
      %v5815 = vrot.slane %v5814, 1
      %v5817 = vshll.u32 %v5363, 16
      %v5819 = vsel %vm923, %v5815, %v5817
      %v5820 = vshrl.u32 %v5363, 16
      %v5822 = vrot.slane %v5820, 7
      %v5823 = vrot.slane %v5822, 1
      %v5825 = vshll.u32 %v5378, 16
      %v5827 = vsel %vm923, %v5823, %v5825
      %v5828 = vshrl.u32 %v5378, 16
      %v5830 = vrot.slane %v5828, 7
      %v5831 = vrot.slane %v5830, 1
      %v5833 = vshll.u32 %v5385, 16
      %v5835 = vsel %vm923, %v5831, %v5833
      %v5837 = vshrl.u32 %v5400, 16
      %v5839 = vrot.slane %v5837, 7
      %v5840 = vrot.slane %v5839, 1
      %v5842 = vshll.u32 %v5407, 16
      %v5844 = vsel %vm923, %v5840, %v5842
      %v5845 = vshrl.u32 %v5407, 16
      %v5847 = vrot.slane %v5845, 7
      %v5848 = vrot.slane %v5847, 1
      %v5850 = vshll.u32 %v5408, 16
      %v5852 = vsel %vm923, %v5848, %v5850
      %v5853 = vshrl.u32 %v5408, 16
      %v5855 = vrot.slane %v5853, 7
      %v5856 = vrot.slane %v5855, 1
      %v5858 = vshll.u32 %v5409, 16
      %v5860 = vsel %vm923, %v5856, %v5858
      %v5861 = vshrl.u32 %v5409, 16
      %v5863 = vrot.slane %v5861, 7
      %v5864 = vrot.slane %v5863, 1
      %v5866 = vshll.u32 %v5424, 16
      %v5868 = vsel %vm923, %v5864, %v5866
      %v5869 = vshrl.u32 %v5424, 16
      %v5871 = vrot.slane %v5869, 7
      %v5872 = vrot.slane %v5871, 1
      %v5874 = vshll.u32 %v5431, 16
      %v5876 = vsel %vm923, %v5872, %v5874
      %v5878 = vshrl.u32 %v5446, 16
      %v5880 = vrot.slane %v5878, 7
      %v5881 = vrot.slane %v5880, 1
      %v5883 = vshll.u32 %v5453, 16
      %v5885 = vsel %vm923, %v5881, %v5883
      %v5886 = vshrl.u32 %v5453, 16
      %v5888 = vrot.slane %v5886, 7
      %v5889 = vrot.slane %v5888, 1
      %v5891 = vshll.u32 %v5454, 16
      %v5893 = vsel %vm923, %v5889, %v5891
      %v5894 = vshrl.u32 %v5454, 16
      %v5896 = vrot.slane %v5894, 7
      %v5897 = vrot.slane %v5896, 1
      %v5899 = vshll.u32 %v5455, 16
      %v5901 = vsel %vm923, %v5897, %v5899
      %v5902 = vshrl.u32 %v5455, 16
      %v5904 = vrot.slane %v5902, 7
      %v5905 = vrot.slane %v5904, 1
      %v5907 = vshll.u32 %v5470, 16
      %v5909 = vsel %vm923, %v5905, %v5907
      %v5910 = vshrl.u32 %v5470, 16
      %v5912 = vrot.slane %v5910, 7
      %v5913 = vrot.slane %v5912, 1
      %v5915 = vshll.u32 %v5477, 16
      %v5917 = vsel %vm923, %v5913, %v5915
      %v5919 = vshrl.u32 %v5492, 16
      %v5921 = vrot.slane %v5919, 7
      %v5922 = vrot.slane %v5921, 1
      %v5924 = vshll.u32 %v5499, 16
      %v5926 = vsel %vm923, %v5922, %v5924
      %v5927 = vshrl.u32 %v5499, 16
      %v5929 = vrot.slane %v5927, 7
      %v5930 = vrot.slane %v5929, 1
      %v5932 = vshll.u32 %v5500, 16
      %v5934 = vsel %vm923, %v5930, %v5932
      %v5935 = vshrl.u32 %v5500, 16
      %v5937 = vrot.slane %v5935, 7
      %v5938 = vrot.slane %v5937, 1
      %v5940 = vshll.u32 %v5501, 16
      %v5942 = vsel %vm923, %v5938, %v5940
      %v5943 = vshrl.u32 %v5501, 16
      %v5945 = vrot.slane %v5943, 7
      %v5946 = vrot.slane %v5945, 1
      %v5948 = vshll.u32 %v5516, 16
      %v5950 = vsel %vm923, %v5946, %v5948
      %v5951 = vshrl.u32 %v5516, 16
      %v5953 = vrot.slane %v5951, 7
      %v5954 = vrot.slane %v5953, 1
      %v5956 = vshll.u32 %v5523, 16
      %v5958 = vsel %vm923, %v5954, %v5956
      %v5960 = vshrl.u32 %v5538, 16
      %v5962 = vrot.slane %v5960, 7
      %v5963 = vrot.slane %v5962, 1
      %v5965 = vshll.u32 %v5545, 16
      %v5967 = vsel %vm923, %v5963, %v5965
      %v5968 = vshrl.u32 %v5545, 16
      %v5970 = vrot.slane %v5968, 7
      %v5971 = vrot.slane %v5970, 1
      %v5973 = vshll.u32 %v5546, 16
      %v5975 = vsel %vm923, %v5971, %v5973
      %v5976 = vshrl.u32 %v5546, 16
      %v5978 = vrot.slane %v5976, 7
      %v5979 = vrot.slane %v5978, 1
      %v5981 = vshll.u32 %v5547, 16
      %v5983 = vsel %vm923, %v5979, %v5981
      %v5984 = vshrl.u32 %v5547, 16
      %v5986 = vrot.slane %v5984, 7
      %v5987 = vrot.slane %v5986, 1
      %v5989 = vshll.u32 %v5562, 16
      %v5991 = vsel %vm923, %v5987, %v5989
      %v5992 = vshrl.u32 %v5562, 16
      %v5994 = vrot.slane %v5992, 7
      %v5995 = vrot.slane %v5994, 1
      %v5997 = vshll.u32 %v5569, 16
      %v5999 = vsel %vm923, %v5995, %v5997
      %v6001 = vshrl.u32 %v5584, 16
      %v6003 = vrot.slane %v6001, 7
      %v6004 = vrot.slane %v6003, 1
      %v6006 = vshll.u32 %v5591, 16
      %v6008 = vsel %vm923, %v6004, %v6006
      %v6009 = vshrl.u32 %v5591, 16
      %v6011 = vrot.slane %v6009, 7
      %v6012 = vrot.slane %v6011, 1
      %v6014 = vshll.u32 %v5592, 16
      %v6016 = vsel %vm923, %v6012, %v6014
      %v6017 = vshrl.u32 %v5592, 16
      %v6019 = vrot.slane %v6017, 7
      %v6020 = vrot.slane %v6019, 1
      %v6022 = vshll.u32 %v5593, 16
      %v6024 = vsel %vm923, %v6020, %v6022
      %v6025 = vshrl.u32 %v5593, 16
      %v6027 = vrot.slane %v6025, 7
      %v6028 = vrot.slane %v6027, 1
      %v6030 = vshll.u32 %v5608, 16
      %v6032 = vsel %vm923, %v6028, %v6030
      %v6033 = vshrl.u32 %v5608, 16
      %v6035 = vrot.slane %v6033, 7
      %v6036 = vrot.slane %v6035, 1
      %v6038 = vshll.u32 %v5615, 16
      %v6040 = vsel %vm923, %v6036, %v6038
      %v6042 = vshrl.u32 %v5630, 16
      %v6044 = vrot.slane %v6042, 7
      %v6045 = vrot.slane %v6044, 1
      %v6047 = vshll.u32 %v5637, 16
      %v6049 = vsel %vm923, %v6045, %v6047
      %v6050 = vshrl.u32 %v5637, 16
      %v6052 = vrot.slane %v6050, 7
      %v6053 = vrot.slane %v6052, 1
      %v6055 = vshll.u32 %v5638, 16
      %v6057 = vsel %vm923, %v6053, %v6055
      %v6058 = vshrl.u32 %v5638, 16
      %v6060 = vrot.slane %v6058, 7
      %v6061 = vrot.slane %v6060, 1
      %v6063 = vshll.u32 %v5639, 16
      %v6065 = vsel %vm923, %v6061, %v6063
      %v6066 = vshrl.u32 %v5639, 16
      %v6068 = vrot.slane %v6066, 7
      %v6069 = vrot.slane %v6068, 1
      %v6071 = vshll.u32 %v5654, 16
      %v6073 = vsel %vm923, %v6069, %v6071
      %v6074 = vshrl.u32 %v5654, 16
      %v6076 = vrot.slane %v6074, 7
      %v6077 = vrot.slane %v6076, 1
      %v6079 = vshll.u32 %v5661, 16
      %v6081 = vsel %vm923, %v6077, %v6079
      %v6083 = vshrl.u32 %v5676, 16
      %v6085 = vrot.slane %v6083, 7
      %v6086 = vrot.slane %v6085, 1
      %v6088 = vshll.u32 %v5683, 16
      %v6090 = vsel %vm923, %v6086, %v6088
      %v6091 = vshrl.u32 %v5683, 16
      %v6093 = vrot.slane %v6091, 7
      %v6094 = vrot.slane %v6093, 1
      %v6096 = vshll.u32 %v5684, 16
      %v6098 = vsel %vm923, %v6094, %v6096
      %v6099 = vshrl.u32 %v5684, 16
      %v6101 = vrot.slane %v6099, 7
      %v6102 = vrot.slane %v6101, 1
      %v6104 = vshll.u32 %v5685, 16
      %v6106 = vsel %vm923, %v6102, %v6104
      %v6107 = vshrl.u32 %v5685, 16
      %v6109 = vrot.slane %v6107, 7
      %v6110 = vrot.slane %v6109, 1
      %v6112 = vshll.u32 %v5700, 16
      %v6114 = vsel %vm923, %v6110, %v6112
      %v6115 = vshrl.u32 %v5700, 16
      %v6117 = vrot.slane %v6115, 7
      %v6118 = vrot.slane %v6117, 1
      %v6120 = vshll.u32 %v5707, 16
      %v6122 = vsel %vm923, %v6118, %v6120
      %v6124 = vshrl.u32 %v5722, 16
      %v6126 = vrot.slane %v6124, 7
      %v6127 = vrot.slane %v6126, 1
      %v6129 = vshll.u32 %v5729, 16
      %v6131 = vsel %vm923, %v6127, %v6129
      %v6132 = vshrl.u32 %v5729, 16
      %v6134 = vrot.slane %v6132, 7
      %v6135 = vrot.slane %v6134, 1
      %v6137 = vshll.u32 %v5730, 16
      %v6139 = vsel %vm923, %v6135, %v6137
      %v6140 = vshrl.u32 %v5730, 16
      %v6142 = vrot.slane %v6140, 7
      %v6143 = vrot.slane %v6142, 1
      %v6145 = vshll.u32 %v5731, 16
      %v6147 = vsel %vm923, %v6143, %v6145
      %v6148 = vshrl.u32 %v5731, 16
      %v6150 = vrot.slane %v6148, 7
      %v6151 = vrot.slane %v6150, 1
      %v6153 = vshll.u32 %v5746, 16
      %v6155 = vsel %vm923, %v6151, %v6153
      %v6156 = vshrl.u32 %v5746, 16
      %v6158 = vrot.slane %v6156, 7
      %v6159 = vrot.slane %v6158, 1
      %v6161 = vshll.u32 %v5753, 16
      %v6163 = vsel %vm923, %v6159, %v6161
      %v6164 = vcombine.low %v5762, %v5770
      %v6165 = vcombine.low %v5778, %v5786
      %v6166 = vcombine.low %v5794, %v5803
      %v6167 = vcombine.low %v5811, %v5819
      %v6169 = vunpack.c.l.s4 1966171168
      %v6170 = vunpack.c.0.s8 %v6169
      %v6171 = vlaneseq
      %v6172 = vshrl.u32 %v6171, 7
      %v6173 = vsub.s32 %v6170, %v6172
      %v6174 = vrot.slane %v6164, %v6173
      %v6176 = vunpack.c.l.s4 1966171168
      %v6177 = vunpack.c.0.s8 %v6176
      %v6178 = vlaneseq
      %v6179 = vshrl.u32 %v6178, 7
      %v6180 = vsub.s32 %v6177, %v6179
      %v6181 = vrot.slane %v6165, %v6180
      %v6183 = vunpack.c.l.s4 1966171168
      %v6184 = vunpack.c.0.s8 %v6183
      %v6185 = vlaneseq
      %v6186 = vshrl.u32 %v6185, 7
      %v6187 = vsub.s32 %v6184, %v6186
      %v6188 = vrot.slane %v6166, %v6187
      %v6190 = vunpack.c.l.s4 1966171168
      %v6191 = vunpack.c.0.s8 %v6190
      %v6192 = vlaneseq
      %v6193 = vshrl.u32 %v6192, 7
      %v6194 = vsub.s32 %v6191, %v6193
      %v6195 = vrot.slane %v6167, %v6194
      %v6196 = vcombine.low %v6174, %v6181
      %v6197 = vcombine.low %v6188, %v6195
      %v6199 = vunpack.c.l.s4 1966171168
      %v6200 = vunpack.c.0.s8 %v6199
      %v6201 = vlaneseq
      %v6202 = vshrl.u32 %v6201, 7
      %v6203 = vsub.s32 %v6200, %v6202
      %v6204 = vrot.slane %v6196, %v6203
      %v6206 = vunpack.c.l.s4 1966171168
      %v6207 = vunpack.c.0.s8 %v6206
      %v6208 = vlaneseq
      %v6209 = vshrl.u32 %v6208, 7
      %v6210 = vsub.s32 %v6207, %v6209
      %v6211 = vrot.slane %v6197, %v6210
      %v6212 = vcombine.low %v6204, %v6211
      %v6213 = vcombine.low %v5827, %v5835
      %v6214 = vcombine.low %v5844, %v5852
      %v6215 = vcombine.low %v5860, %v5868
      %v6216 = vcombine.low %v5876, %v5885
      %v6218 = vunpack.c.l.s4 1966171168
      %v6219 = vunpack.c.0.s8 %v6218
      %v6220 = vlaneseq
      %v6221 = vshrl.u32 %v6220, 7
      %v6222 = vsub.s32 %v6219, %v6221
      %v6223 = vrot.slane %v6213, %v6222
      %v6225 = vunpack.c.l.s4 1966171168
      %v6226 = vunpack.c.0.s8 %v6225
      %v6227 = vlaneseq
      %v6228 = vshrl.u32 %v6227, 7
      %v6229 = vsub.s32 %v6226, %v6228
      %v6230 = vrot.slane %v6214, %v6229
      %v6232 = vunpack.c.l.s4 1966171168
      %v6233 = vunpack.c.0.s8 %v6232
      %v6234 = vlaneseq
      %v6235 = vshrl.u32 %v6234, 7
      %v6236 = vsub.s32 %v6233, %v6235
      %v6237 = vrot.slane %v6215, %v6236
      %v6239 = vunpack.c.l.s4 1966171168
      %v6240 = vunpack.c.0.s8 %v6239
      %v6241 = vlaneseq
      %v6242 = vshrl.u32 %v6241, 7
      %v6243 = vsub.s32 %v6240, %v6242
      %v6244 = vrot.slane %v6216, %v6243
      %v6245 = vcombine.low %v6223, %v6230
      %v6246 = vcombine.low %v6237, %v6244
      %v6248 = vunpack.c.l.s4 1966171168
      %v6249 = vunpack.c.0.s8 %v6248
      %v6250 = vlaneseq
      %v6251 = vshrl.u32 %v6250, 7
      %v6252 = vsub.s32 %v6249, %v6251
      %v6253 = vrot.slane %v6245, %v6252
      %v6255 = vunpack.c.l.s4 1966171168
      %v6256 = vunpack.c.0.s8 %v6255
      %v6257 = vlaneseq
      %v6258 = vshrl.u32 %v6257, 7
      %v6259 = vsub.s32 %v6256, %v6258
      %v6260 = vrot.slane %v6246, %v6259
      %v6261 = vcombine.low %v6253, %v6260
      %v6262 = vcombine.low %v5893, %v5901
      %v6263 = vcombine.low %v5909, %v5917
      %v6264 = vcombine.low %v5926, %v5934
      %v6265 = vcombine.low %v5942, %v5950
      %v6267 = vunpack.c.l.s4 1966171168
      %v6268 = vunpack.c.0.s8 %v6267
      %v6269 = vlaneseq
      %v6270 = vshrl.u32 %v6269, 7
      %v6271 = vsub.s32 %v6268, %v6270
      %v6272 = vrot.slane %v6262, %v6271
      %v6274 = vunpack.c.l.s4 1966171168
      %v6275 = vunpack.c.0.s8 %v6274
      %v6276 = vlaneseq
      %v6277 = vshrl.u32 %v6276, 7
      %v6278 = vsub.s32 %v6275, %v6277
      %v6279 = vrot.slane %v6263, %v6278
      %v6281 = vunpack.c.l.s4 1966171168
      %v6282 = vunpack.c.0.s8 %v6281
      %v6283 = vlaneseq
      %v6284 = vshrl.u32 %v6283, 7
      %v6285 = vsub.s32 %v6282, %v6284
      %v6286 = vrot.slane %v6264, %v6285
      %v6288 = vunpack.c.l.s4 1966171168
      %v6289 = vunpack.c.0.s8 %v6288
      %v6290 = vlaneseq
      %v6291 = vshrl.u32 %v6290, 7
      %v6292 = vsub.s32 %v6289, %v6291
      %v6293 = vrot.slane %v6265, %v6292
      %v6294 = vcombine.low %v6272, %v6279
      %v6295 = vcombine.low %v6286, %v6293
      %v6297 = vunpack.c.l.s4 1966171168
      %v6298 = vunpack.c.0.s8 %v6297
      %v6299 = vlaneseq
      %v6300 = vshrl.u32 %v6299, 7
      %v6301 = vsub.s32 %v6298, %v6300
      %v6302 = vrot.slane %v6294, %v6301
      %v6304 = vunpack.c.l.s4 1966171168
      %v6305 = vunpack.c.0.s8 %v6304
      %v6306 = vlaneseq
      %v6307 = vshrl.u32 %v6306, 7
      %v6308 = vsub.s32 %v6305, %v6307
      %v6309 = vrot.slane %v6295, %v6308
      %v6310 = vcombine.low %v6302, %v6309
      %v6311 = vcombine.low %v5958, %v5967
      %v6312 = vcombine.low %v5975, %v5983
      %v6313 = vcombine.low %v5991, %v5999
      %v6314 = vcombine.low %v6008, %v6016
      %v6316 = vunpack.c.l.s4 1966171168
      %v6317 = vunpack.c.0.s8 %v6316
      %v6318 = vlaneseq
      %v6319 = vshrl.u32 %v6318, 7
      %v6320 = vsub.s32 %v6317, %v6319
      %v6321 = vrot.slane %v6311, %v6320
      %v6323 = vunpack.c.l.s4 1966171168
      %v6324 = vunpack.c.0.s8 %v6323
      %v6325 = vlaneseq
      %v6326 = vshrl.u32 %v6325, 7
      %v6327 = vsub.s32 %v6324, %v6326
      %v6328 = vrot.slane %v6312, %v6327
      %v6330 = vunpack.c.l.s4 1966171168
      %v6331 = vunpack.c.0.s8 %v6330
      %v6332 = vlaneseq
      %v6333 = vshrl.u32 %v6332, 7
      %v6334 = vsub.s32 %v6331, %v6333
      %v6335 = vrot.slane %v6313, %v6334
      %v6337 = vunpack.c.l.s4 1966171168
      %v6338 = vunpack.c.0.s8 %v6337
      %v6339 = vlaneseq
      %v6340 = vshrl.u32 %v6339, 7
      %v6341 = vsub.s32 %v6338, %v6340
      %v6342 = vrot.slane %v6314, %v6341
      %v6343 = vcombine.low %v6321, %v6328
      %v6344 = vcombine.low %v6335, %v6342
      %v6346 = vunpack.c.l.s4 1966171168
      %v6347 = vunpack.c.0.s8 %v6346
      %v6348 = vlaneseq
      %v6349 = vshrl.u32 %v6348, 7
      %v6350 = vsub.s32 %v6347, %v6349
      %v6351 = vrot.slane %v6343, %v6350
      %v6353 = vunpack.c.l.s4 1966171168
      %v6354 = vunpack.c.0.s8 %v6353
      %v6355 = vlaneseq
      %v6356 = vshrl.u32 %v6355, 7
      %v6357 = vsub.s32 %v6354, %v6356
      %v6358 = vrot.slane %v6344, %v6357
      %v6359 = vcombine.low %v6351, %v6358
      %v6360 = vcombine.low %v6024, %v6032
      %v6361 = vcombine.low %v6040, %v6049
      %v6362 = vcombine.low %v6057, %v6065
      %v6363 = vcombine.low %v6073, %v6081
      %v6365 = vunpack.c.l.s4 1966171168
      %v6366 = vunpack.c.0.s8 %v6365
      %v6367 = vlaneseq
      %v6368 = vshrl.u32 %v6367, 7
      %v6369 = vsub.s32 %v6366, %v6368
      %v6370 = vrot.slane %v6360, %v6369
      %v6372 = vunpack.c.l.s4 1966171168
      %v6373 = vunpack.c.0.s8 %v6372
      %v6374 = vlaneseq
      %v6375 = vshrl.u32 %v6374, 7
      %v6376 = vsub.s32 %v6373, %v6375
      %v6377 = vrot.slane %v6361, %v6376
      %v6379 = vunpack.c.l.s4 1966171168
      %v6380 = vunpack.c.0.s8 %v6379
      %v6381 = vlaneseq
      %v6382 = vshrl.u32 %v6381, 7
      %v6383 = vsub.s32 %v6380, %v6382
      %v6384 = vrot.slane %v6362, %v6383
      %v6386 = vunpack.c.l.s4 1966171168
      %v6387 = vunpack.c.0.s8 %v6386
      %v6388 = vlaneseq
      %v6389 = vshrl.u32 %v6388, 7
      %v6390 = vsub.s32 %v6387, %v6389
      %v6391 = vrot.slane %v6363, %v6390
      %v6392 = vcombine.low %v6370, %v6377
      %v6393 = vcombine.low %v6384, %v6391
      %v6395 = vunpack.c.l.s4 1966171168
      %v6396 = vunpack.c.0.s8 %v6395
      %v6397 = vlaneseq
      %v6398 = vshrl.u32 %v6397, 7
      %v6399 = vsub.s32 %v6396, %v6398
      %v6400 = vrot.slane %v6392, %v6399
      %v6402 = vunpack.c.l.s4 1966171168
      %v6403 = vunpack.c.0.s8 %v6402
      %v6404 = vlaneseq
      %v6405 = vshrl.u32 %v6404, 7
      %v6406 = vsub.s32 %v6403, %v6405
      %v6407 = vrot.slane %v6393, %v6406
      %v6408 = vcombine.low %v6400, %v6407
      %v6409 = vcombine.low %v6090, %v6098
      %v6410 = vcombine.low %v6106, %v6114
      %v6411 = vcombine.low %v6122, %v6131
      %v6412 = vcombine.low %v6139, %v6147
      %v6414 = vunpack.c.l.s4 1966171168
      %v6415 = vunpack.c.0.s8 %v6414
      %v6416 = vlaneseq
      %v6417 = vshrl.u32 %v6416, 7
      %v6418 = vsub.s32 %v6415, %v6417
      %v6419 = vrot.slane %v6409, %v6418
      %v6421 = vunpack.c.l.s4 1966171168
      %v6422 = vunpack.c.0.s8 %v6421
      %v6423 = vlaneseq
      %v6424 = vshrl.u32 %v6423, 7
      %v6425 = vsub.s32 %v6422, %v6424
      %v6426 = vrot.slane %v6410, %v6425
      %v6428 = vunpack.c.l.s4 1966171168
      %v6429 = vunpack.c.0.s8 %v6428
      %v6430 = vlaneseq
      %v6431 = vshrl.u32 %v6430, 7
      %v6432 = vsub.s32 %v6429, %v6431
      %v6433 = vrot.slane %v6411, %v6432
      %v6435 = vunpack.c.l.s4 1966171168
      %v6436 = vunpack.c.0.s8 %v6435
      %v6437 = vlaneseq
      %v6438 = vshrl.u32 %v6437, 7
      %v6439 = vsub.s32 %v6436, %v6438
      %v6440 = vrot.slane %v6412, %v6439
      %v6441 = vcombine.low %v6419, %v6426
      %v6442 = vcombine.low %v6433, %v6440
      %v6444 = vunpack.c.l.s4 1966171168
      %v6445 = vunpack.c.0.s8 %v6444
      %v6446 = vlaneseq
      %v6447 = vshrl.u32 %v6446, 7
      %v6448 = vsub.s32 %v6445, %v6447
      %v6449 = vrot.slane %v6441, %v6448
      %v6451 = vunpack.c.l.s4 1966171168
      %v6452 = vunpack.c.0.s8 %v6451
      %v6453 = vlaneseq
      %v6454 = vshrl.u32 %v6453, 7
      %v6455 = vsub.s32 %v6452, %v6454
      %v6456 = vrot.slane %v6442, %v6455
      %v6457 = vcombine.low %v6449, %v6456
      %v6458 = vcombine.low %v6155, %v6163
      %v6460 = vunpack.c.l.s4 1966171168
      %v6461 = vunpack.c.0.s8 %v6460
      %v6462 = vlaneseq
      %v6463 = vshrl.u32 %v6462, 7
      %v6464 = vsub.s32 %v6461, %v6463
      %v6465 = vrot.slane %v6458, %v6464
      %v6467 = vunpack.c.l.s4 1966171168
      %v6468 = vunpack.c.0.s8 %v6467
      %v6469 = vlaneseq
      %v6470 = vshrl.u32 %v6469, 7
      %v6471 = vsub.s32 %v6468, %v6470
      %v6472 = vrot.slane %v6465, %v6471
      %v6474 = vsel %vm1643, %v6212, 0
      %v6477 = vsel %vm1643, %v6261, 0
      %v6480 = vsel %vm1643, %v6310, 0
      %v6483 = vsel %vm1643, %v6359, 0
      %v6486 = vsel %vm1643, %v6408, 0
      %v6489 = vsel %vm1643, %v6457, 0
      %v6492 = vsel %vm1643, %v6472, 0
      %v6495 = vsel %vm1665, %v5273, 0
      %6497 = vmatprep.subr.bf16.mxu0 0
      %6498 = vmatpush1.bf16.msra.mxu0 0
      %6499 = vmatprep.subr.bf16.mxu0 0
      %6500 = vmatpush1.bf16.msra.mxu0 0
      %6501 = vmatprep.subr.bf16.mxu0 0
      %6502 = vmatpush1.bf16.msra.mxu0 0
      %6503 = vmatprep.subr.bf16.mxu0 0
      %6504 = vmatpush1.bf16.msra.mxu0 0
      %6505 = vmatprep.subr.bf16.mxu0 0
      %6506 = vmatpush1.bf16.msra.mxu0 0
      %6507 = vmatprep.subr.bf16.mxu0 0
      %6508 = vmatpush1.bf16.msra.mxu0 0
      %6509 = vmatprep.subr.bf16.mxu0 0
      %6510 = vmatpush1.bf16.msra.mxu0 0
      %6511 = vmatprep.subr.bf16.mxu0 0
      %6512 = vmatpush1.bf16.msra.mxu0 %v6495
      %6513 = vmatprep.subr.bf16.mxu0 0
      %6514 = vmatpush2.bf16.msra.mxu0 0
      %6515 = vmatprep.subr.bf16.mxu0 0
      %6516 = vmatpush2.bf16.msra.mxu0 0
      %6517 = vmatprep.subr.bf16.mxu0 0
      %6518 = vmatpush2.bf16.msra.mxu0 0
      %6519 = vmatprep.subr.bf16.mxu0 0
      %6520 = vmatpush2.bf16.msra.mxu0 0
      %6521 = vmatprep.subr.bf16.mxu0 0
      %6522 = vmatpush2.bf16.msra.mxu0 0
      %6523 = vmatprep.subr.bf16.mxu0 0
      %6524 = vmatpush2.bf16.msra.mxu0 0
      %6525 = vmatprep.subr.bf16.mxu0 0
      %6526 = vmatpush2.bf16.msra.mxu0 0
      %6527 = vmatprep.subr.bf16.mxu0 0
      %6528 = vmatpush2.bf16.msra.mxu0 0
      %6529 = vmatprep.mubr.bf16.mxu0 0
      %6530 = vmatmul.mubr.bf16.gmra.mxu0 %v6474
      %v6531 = vpop.f32.mrf.mxu0
      %v6532 = vadd.f32 0.0, %v6531
      %v6533 = vpop.f32.mrf.mxu0
      %v6534 = vpop.f32.mrf.mxu0
      %v6535 = vadd.f32 0.0, %v6534
      %v6536 = vpop.f32.mrf.mxu0
      %6537 = vmatprep.mubr.bf16.mxu0 0
      %6538 = vmatmul.mubr.bf16.gmra.mxu0 %v6477
      %v6539 = vpop.f32.mrf.mxu0
      %v6540 = vadd.f32 0.0, %v6539
      %v6541 = vpop.f32.mrf.mxu0
      %v6542 = vpop.f32.mrf.mxu0
      %v6543 = vadd.f32 0.0, %v6542
      %v6544 = vpop.f32.mrf.mxu0
      %6545 = vmatprep.mubr.bf16.mxu0 0
      %6546 = vmatmul.mubr.bf16.gmra.mxu0 %v6480
      %v6547 = vpop.f32.mrf.mxu0
      %v6548 = vadd.f32 0.0, %v6547
      %v6549 = vpop.f32.mrf.mxu0
      %v6550 = vpop.f32.mrf.mxu0
      %v6551 = vadd.f32 0.0, %v6550
      %v6552 = vpop.f32.mrf.mxu0
      %6553 = vmatprep.mubr.bf16.mxu0 0
      %6554 = vmatmul.mubr.bf16.gmra.mxu0 %v6483
      %v6555 = vpop.f32.mrf.mxu0
      %v6556 = vadd.f32 0.0, %v6555
      %v6557 = vpop.f32.mrf.mxu0
      %v6558 = vpop.f32.mrf.mxu0
      %v6559 = vadd.f32 0.0, %v6558
      %v6560 = vpop.f32.mrf.mxu0
      %6561 = vmatprep.mubr.bf16.mxu0 0
      %6562 = vmatmul.mubr.bf16.gmra.mxu0 %v6486
      %v6563 = vpop.f32.mrf.mxu0
      %v6564 = vadd.f32 0.0, %v6563
      %v6565 = vpop.f32.mrf.mxu0
      %v6566 = vpop.f32.mrf.mxu0
      %v6567 = vadd.f32 0.0, %v6566
      %v6568 = vpop.f32.mrf.mxu0
      %6569 = vmatprep.mubr.bf16.mxu0 0
      %6570 = vmatmul.mubr.bf16.gmra.mxu0 %v6489
      %v6571 = vpop.f32.mrf.mxu0
      %v6572 = vadd.f32 0.0, %v6571
      %v6573 = vpop.f32.mrf.mxu0
      %v6574 = vpop.f32.mrf.mxu0
      %v6575 = vadd.f32 0.0, %v6574
      %v6576 = vpop.f32.mrf.mxu0
      %6577 = vmatprep.mubr.bf16.mxu0 0
      %6578 = vmatmul.mubr.bf16.gmra.mxu0 %v6492
      %v6579 = vpop.f32.mrf.mxu0
      %v6580 = vadd.f32 0.0, %v6579
      %v6581 = vpop.f32.mrf.mxu0
      %v6582 = vpop.f32.mrf.mxu0
      %v6583 = vpop.f32.mrf.mxu0
      %6584 = vdwg.mxu0
      %v6585 = vadd.f32 %v5240, %v6532
      %v6586 = vadd.f32 %v5241, %v6535
      %v6587 = vadd.f32 %v5242, %v6540
      %v6588 = vadd.f32 %v5243, %v6543
      %v6589 = vadd.f32 %v5244, %v6548
      %v6590 = vadd.f32 %v5245, %v6551
      %v6591 = vadd.f32 %v5246, %v6556
      %v6592 = vadd.f32 %v5247, %v6559
      %v6593 = vadd.f32 %v5248, %v6564
      %v6594 = vadd.f32 %v5249, %v6567
      %v6595 = vadd.f32 %v5250, %v6572
      %v6596 = vadd.f32 %v5251, %v6575
      %v6597 = vadd.f32 %v5252, %v6580
      %v6598 = vld [vmem:[%s227] sm:$0x1]
      %v6600 = vlaneseq
      %v6601 = vshrl.u32 %v6600, 7
      %v6602 = vsub.s32 0, %v6601
      %v6603 = vrot.slane %v6598, %v6602
      %v6605 = vadd.f32 %v6585, %v6603
      %v6606 = vadd.f32 %v6586, %v6603
      %v6607 = vadd.f32 %v6587, %v6603
      %v6608 = vadd.f32 %v6588, %v6603
      %v6609 = vadd.f32 %v6589, %v6603
      %v6610 = vadd.f32 %v6590, %v6603
      %v6611 = vadd.f32 %v6591, %v6603
      %v6612 = vadd.f32 %v6592, %v6603
      %v6613 = vadd.f32 %v6593, %v6603
      %v6614 = vadd.f32 %v6594, %v6603
      %v6615 = vadd.f32 %v6595, %v6603
      %v6616 = vadd.f32 %v6596, %v6603
      %v6617 = vadd.f32 %v6597, %v6603
      %v6618 = vmax.f32 %v6605, 0.0
      %v6619 = vmax.f32 %v6606, 0.0
      %v6620 = vmax.f32 %v6607, 0.0
      %v6621 = vmax.f32 %v6608, 0.0
      %v6622 = vmax.f32 %v6609, 0.0
      %v6623 = vmax.f32 %v6610, 0.0
      %v6624 = vmax.f32 %v6611, 0.0
      %v6625 = vmax.f32 %v6612, 0.0
      %v6626 = vmax.f32 %v6613, 0.0
      %v6627 = vmax.f32 %v6614, 0.0
      %v6628 = vmax.f32 %v6615, 0.0
      %v6629 = vmax.f32 %v6616, 0.0
      %v6630 = vmax.f32 %v6617, 0.0
      %v6644 = vcombine.high %v6618, %v6618
      %v6646 = vunpack.c.l.s4 1983009808
      %v6647 = vunpack.c.0.s8 %v6646
      %v6648 = vlaneseq
      %v6649 = vshrl.u32 %v6648, 7
      %v6650 = vsub.s32 %v6647, %v6649
      %v6651 = vrot.slane %v6618, %v6650
      %v6653 = vunpack.c.l.s4 1983009808
      %v6654 = vunpack.c.0.s8 %v6653
      %v6655 = vlaneseq
      %v6656 = vshrl.u32 %v6655, 7
      %v6657 = vsub.s32 %v6654, %v6656
      %v6658 = vrot.slane %v6644, %v6657
      %v6659 = vcombine.high %v6651, %v6651
      %v6660 = vcombine.high %v6658, %v6658
      %v6661 = vcombine.high %v6619, %v6619
      %v6663 = vunpack.c.l.s4 1983009808
      %v6664 = vunpack.c.0.s8 %v6663
      %v6665 = vlaneseq
      %v6666 = vshrl.u32 %v6665, 7
      %v6667 = vsub.s32 %v6664, %v6666
      %v6668 = vrot.slane %v6619, %v6667
      %v6670 = vunpack.c.l.s4 1983009808
      %v6671 = vunpack.c.0.s8 %v6670
      %v6672 = vlaneseq
      %v6673 = vshrl.u32 %v6672, 7
      %v6674 = vsub.s32 %v6671, %v6673
      %v6675 = vrot.slane %v6661, %v6674
      %v6676 = vcombine.high %v6668, %v6668
      %v6677 = vcombine.high %v6675, %v6675
      %v6678 = vcombine.high %v6620, %v6620
      %v6680 = vunpack.c.l.s4 1983009808
      %v6681 = vunpack.c.0.s8 %v6680
      %v6682 = vlaneseq
      %v6683 = vshrl.u32 %v6682, 7
      %v6684 = vsub.s32 %v6681, %v6683
      %v6685 = vrot.slane %v6620, %v6684
      %v6687 = vunpack.c.l.s4 1983009808
      %v6688 = vunpack.c.0.s8 %v6687
      %v6689 = vlaneseq
      %v6690 = vshrl.u32 %v6689, 7
      %v6691 = vsub.s32 %v6688, %v6690
      %v6692 = vrot.slane %v6678, %v6691
      %v6693 = vcombine.high %v6685, %v6685
      %v6694 = vcombine.high %v6692, %v6692
      %v6695 = vcombine.high %v6621, %v6621
      %v6697 = vunpack.c.l.s4 1983009808
      %v6698 = vunpack.c.0.s8 %v6697
      %v6699 = vlaneseq
      %v6700 = vshrl.u32 %v6699, 7
      %v6701 = vsub.s32 %v6698, %v6700
      %v6702 = vrot.slane %v6621, %v6701
      %v6704 = vunpack.c.l.s4 1983009808
      %v6705 = vunpack.c.0.s8 %v6704
      %v6706 = vlaneseq
      %v6707 = vshrl.u32 %v6706, 7
      %v6708 = vsub.s32 %v6705, %v6707
      %v6709 = vrot.slane %v6695, %v6708
      %v6710 = vcombine.high %v6702, %v6702
      %v6711 = vcombine.high %v6709, %v6709
      %v6712 = vcombine.high %v6622, %v6622
      %v6714 = vunpack.c.l.s4 1983009808
      %v6715 = vunpack.c.0.s8 %v6714
      %v6716 = vlaneseq
      %v6717 = vshrl.u32 %v6716, 7
      %v6718 = vsub.s32 %v6715, %v6717
      %v6719 = vrot.slane %v6622, %v6718
      %v6721 = vunpack.c.l.s4 1983009808
      %v6722 = vunpack.c.0.s8 %v6721
      %v6723 = vlaneseq
      %v6724 = vshrl.u32 %v6723, 7
      %v6725 = vsub.s32 %v6722, %v6724
      %v6726 = vrot.slane %v6712, %v6725
      %v6727 = vcombine.high %v6719, %v6719
      %v6728 = vcombine.high %v6726, %v6726
      %v6729 = vcombine.high %v6623, %v6623
      %v6731 = vunpack.c.l.s4 1983009808
      %v6732 = vunpack.c.0.s8 %v6731
      %v6733 = vlaneseq
      %v6734 = vshrl.u32 %v6733, 7
      %v6735 = vsub.s32 %v6732, %v6734
      %v6736 = vrot.slane %v6623, %v6735
      %v6738 = vunpack.c.l.s4 1983009808
      %v6739 = vunpack.c.0.s8 %v6738
      %v6740 = vlaneseq
      %v6741 = vshrl.u32 %v6740, 7
      %v6742 = vsub.s32 %v6739, %v6741
      %v6743 = vrot.slane %v6729, %v6742
      %v6744 = vcombine.high %v6736, %v6736
      %v6745 = vcombine.high %v6743, %v6743
      %v6746 = vcombine.high %v6624, %v6624
      %v6748 = vunpack.c.l.s4 1983009808
      %v6749 = vunpack.c.0.s8 %v6748
      %v6750 = vlaneseq
      %v6751 = vshrl.u32 %v6750, 7
      %v6752 = vsub.s32 %v6749, %v6751
      %v6753 = vrot.slane %v6624, %v6752
      %v6755 = vunpack.c.l.s4 1983009808
      %v6756 = vunpack.c.0.s8 %v6755
      %v6757 = vlaneseq
      %v6758 = vshrl.u32 %v6757, 7
      %v6759 = vsub.s32 %v6756, %v6758
      %v6760 = vrot.slane %v6746, %v6759
      %v6761 = vcombine.high %v6753, %v6753
      %v6762 = vcombine.high %v6760, %v6760
      %v6763 = vcombine.high %v6625, %v6625
      %v6765 = vunpack.c.l.s4 1983009808
      %v6766 = vunpack.c.0.s8 %v6765
      %v6767 = vlaneseq
      %v6768 = vshrl.u32 %v6767, 7
      %v6769 = vsub.s32 %v6766, %v6768
      %v6770 = vrot.slane %v6625, %v6769
      %v6772 = vunpack.c.l.s4 1983009808
      %v6773 = vunpack.c.0.s8 %v6772
      %v6774 = vlaneseq
      %v6775 = vshrl.u32 %v6774, 7
      %v6776 = vsub.s32 %v6773, %v6775
      %v6777 = vrot.slane %v6763, %v6776
      %v6778 = vcombine.high %v6770, %v6770
      %v6779 = vcombine.high %v6777, %v6777
      %v6780 = vcombine.high %v6626, %v6626
      %v6782 = vunpack.c.l.s4 1983009808
      %v6783 = vunpack.c.0.s8 %v6782
      %v6784 = vlaneseq
      %v6785 = vshrl.u32 %v6784, 7
      %v6786 = vsub.s32 %v6783, %v6785
      %v6787 = vrot.slane %v6626, %v6786
      %v6789 = vunpack.c.l.s4 1983009808
      %v6790 = vunpack.c.0.s8 %v6789
      %v6791 = vlaneseq
      %v6792 = vshrl.u32 %v6791, 7
      %v6793 = vsub.s32 %v6790, %v6792
      %v6794 = vrot.slane %v6780, %v6793
      %v6795 = vcombine.high %v6787, %v6787
      %v6796 = vcombine.high %v6794, %v6794
      %v6797 = vcombine.high %v6627, %v6627
      %v6799 = vunpack.c.l.s4 1983009808
      %v6800 = vunpack.c.0.s8 %v6799
      %v6801 = vlaneseq
      %v6802 = vshrl.u32 %v6801, 7
      %v6803 = vsub.s32 %v6800, %v6802
      %v6804 = vrot.slane %v6627, %v6803
      %v6806 = vunpack.c.l.s4 1983009808
      %v6807 = vunpack.c.0.s8 %v6806
      %v6808 = vlaneseq
      %v6809 = vshrl.u32 %v6808, 7
      %v6810 = vsub.s32 %v6807, %v6809
      %v6811 = vrot.slane %v6797, %v6810
      %v6812 = vcombine.high %v6804, %v6804
      %v6813 = vcombine.high %v6811, %v6811
      %v6814 = vcombine.high %v6628, %v6628
      %v6816 = vunpack.c.l.s4 1983009808
      %v6817 = vunpack.c.0.s8 %v6816
      %v6818 = vlaneseq
      %v6819 = vshrl.u32 %v6818, 7
      %v6820 = vsub.s32 %v6817, %v6819
      %v6821 = vrot.slane %v6628, %v6820
      %v6823 = vunpack.c.l.s4 1983009808
      %v6824 = vunpack.c.0.s8 %v6823
      %v6825 = vlaneseq
      %v6826 = vshrl.u32 %v6825, 7
      %v6827 = vsub.s32 %v6824, %v6826
      %v6828 = vrot.slane %v6814, %v6827
      %v6829 = vcombine.high %v6821, %v6821
      %v6830 = vcombine.high %v6828, %v6828
      %v6831 = vcombine.high %v6629, %v6629
      %v6833 = vunpack.c.l.s4 1983009808
      %v6834 = vunpack.c.0.s8 %v6833
      %v6835 = vlaneseq
      %v6836 = vshrl.u32 %v6835, 7
      %v6837 = vsub.s32 %v6834, %v6836
      %v6838 = vrot.slane %v6629, %v6837
      %v6840 = vunpack.c.l.s4 1983009808
      %v6841 = vunpack.c.0.s8 %v6840
      %v6842 = vlaneseq
      %v6843 = vshrl.u32 %v6842, 7
      %v6844 = vsub.s32 %v6841, %v6843
      %v6845 = vrot.slane %v6831, %v6844
      %v6846 = vcombine.high %v6838, %v6838
      %v6847 = vcombine.high %v6845, %v6845
      %v6849 = vunpack.c.l.s4 1983009808
      %v6850 = vunpack.c.0.s8 %v6849
      %v6851 = vlaneseq
      %v6852 = vshrl.u32 %v6851, 7
      %v6853 = vsub.s32 %v6850, %v6852
      %v6854 = vrot.slane %v6630, %v6853
      %v6855 = vcombine.high %v6854, %v6854
      %v6856 = vstv %s243
      %v6857 = vadd.s32 %v6856, 1
      %v6858 = vadd.s32 %v6856, 2
      %v6859 = vadd.s32 %v6856, 3
      %v6860 = vadd.s32 %v6856, 4
      %v6861 = vadd.s32 %v6856, 5
      %v6862 = vadd.s32 %v6856, 6
      %v6863 = vadd.s32 %v6856, 7
      %v6864 = vadd.s32 %v6856, 8
      %v6865 = vadd.s32 %v6856, 9
      %v6866 = vlaneseq
      %v6867 = vshrl.u32 %v6866, 7
      %v6868 = vadd.s32 %v6867, 8
      %vm6869 = vcmp.ge.s32.totalorder %v6856, 1
      %vm6870 = vcmp.ge.s32.totalorder %v6857, 1
      %vm6871 = vcmp.ge.s32.totalorder %v6858, 1
      %vm6872 = vcmp.ge.s32.totalorder %v6859, 1
      %vm6873 = vcmp.ge.s32.totalorder %v6860, 1
      %vm6874 = vcmp.ge.s32.totalorder %v6861, 1
      %vm6875 = vcmp.ge.s32.totalorder %v6862, 1
      %vm6876 = vcmp.ge.s32.totalorder %v6863, 1
      %vm6877 = vcmp.ge.s32.totalorder %v6864, 1
      %vm6878 = vcmp.ge.s32.totalorder %v6865, 1
      %vm6879 = vcmp.le.s32.totalorder %v6856, 8
      %vm6880 = vcmp.le.s32.totalorder %v6857, 8
      %vm6881 = vcmp.le.s32.totalorder %v6858, 8
      %vm6882 = vcmp.le.s32.totalorder %v6859, 8
      %vm6883 = vcmp.le.s32.totalorder %v6860, 8
      %vm6884 = vcmp.le.s32.totalorder %v6861, 8
      %vm6885 = vcmp.le.s32.totalorder %v6862, 8
      %vm6886 = vcmp.le.s32.totalorder %v6863, 8
      %vm6887 = vcmp.le.s32.totalorder %v6864, 8
      %vm6888 = vcmp.le.s32.totalorder %v6865, 8
      %vm6889 = vmand %vm6869, %vm6879
      %vm6890 = vmand %vm6870, %vm6880
      %vm6891 = vmand %vm6871, %vm6881
      %vm6892 = vmand %vm6872, %vm6882
      %vm6893 = vmand %vm6873, %vm6883
      %vm6894 = vmand %vm6874, %vm6884
      %vm6895 = vmand %vm6875, %vm6885
      %vm6896 = vmand %vm6876, %vm6886
      %vm6897 = vmand %vm6877, %vm6887
      %vm6898 = vmand %vm6878, %vm6888
      %vm6899 = vcmp.ge.s32.totalorder %v6867, 1
      %vm6900 = vcmp.ge.s32.totalorder %v6868, 1
      %vm6901 = vmand %vm6889, %vm6899
      %vm6902 = vmand %vm6889, %vm6900
      %vm6903 = vmand %vm6890, %vm6899
      %vm6904 = vmand %vm6890, %vm6900
      %vm6905 = vmand %vm6891, %vm6899
      %vm6906 = vmand %vm6891, %vm6900
      %vm6907 = vmand %vm6892, %vm6899
      %vm6908 = vmand %vm6892, %vm6900
      %vm6909 = vmand %vm6893, %vm6899
      %vm6910 = vmand %vm6893, %vm6900
      %vm6911 = vmand %vm6894, %vm6899
      %vm6912 = vmand %vm6894, %vm6900
      %vm6913 = vmand %vm6895, %vm6899
      %vm6914 = vmand %vm6895, %vm6900
      %vm6915 = vmand %vm6896, %vm6899
      %vm6916 = vmand %vm6896, %vm6900
      %vm6917 = vmand %vm6897, %vm6899
      %vm6918 = vmand %vm6897, %vm6900
      %vm6919 = vmand %vm6898, %vm6899
      %vm6920 = vmand %vm6898, %vm6900
      %vm6921 = vcmp.le.s32.totalorder %v6867, 8
      %vm6922 = vcmp.le.s32.totalorder %v6868, 8
      %vm6923 = vmand %vm6901, %vm6921
      %vm6924 = vmand %vm6902, %vm6922
      %vm6925 = vmand %vm6903, %vm6921
      %vm6926 = vmand %vm6904, %vm6922
      %vm6927 = vmand %vm6905, %vm6921
      %vm6928 = vmand %vm6906, %vm6922
      %vm6929 = vmand %vm6907, %vm6921
      %vm6930 = vmand %vm6908, %vm6922
      %vm6931 = vmand %vm6909, %vm6921
      %vm6932 = vmand %vm6910, %vm6922
      %vm6933 = vmand %vm6911, %vm6921
      %vm6934 = vmand %vm6912, %vm6922
      %vm6935 = vmand %vm6913, %vm6921
      %vm6936 = vmand %vm6914, %vm6922
      %vm6937 = vmand %vm6915, %vm6921
      %vm6938 = vmand %vm6916, %vm6922
      %vm6939 = vmand %vm6917, %vm6921
      %vm6940 = vmand %vm6918, %vm6922
      %vm6941 = vmand %vm6919, %vm6921
      %vm6942 = vmand %vm6920, %vm6922
      %v6943 = vsel %vm6923, 1, 0
      %v6944 = vsel %vm6924, 1, 0
      %v6945 = vsel %vm6925, 1, 0
      %v6946 = vsel %vm6926, 1, 0
      %v6947 = vsel %vm6927, 1, 0
      %v6948 = vsel %vm6928, 1, 0
      %v6949 = vsel %vm6929, 1, 0
      %v6950 = vsel %vm6930, 1, 0
      %v6951 = vsel %vm6931, 1, 0
      %v6952 = vsel %vm6932, 1, 0
      %v6953 = vsel %vm6933, 1, 0
      %v6954 = vsel %vm6934, 1, 0
      %v6955 = vsel %vm6935, 1, 0
      %v6956 = vsel %vm6936, 1, 0
      %v6957 = vsel %vm6937, 1, 0
      %v6958 = vsel %vm6938, 1, 0
      %v6959 = vsel %vm6939, 1, 0
      %v6960 = vsel %vm6940, 1, 0
      %v6961 = vsel %vm6941, 1, 0
      %v6962 = vsel %vm6942, 1, 0
      %vm6963 = vcmp.eq.s32.totalorder %v6943, 1
      %vm6964 = vcmp.eq.s32.totalorder %v6944, 1
      %vm6965 = vcmp.eq.s32.totalorder %v6945, 1
      %vm6966 = vcmp.eq.s32.totalorder %v6946, 1
      %vm6967 = vcmp.eq.s32.totalorder %v6947, 1
      %vm6968 = vcmp.eq.s32.totalorder %v6948, 1
      %vm6969 = vcmp.eq.s32.totalorder %v6949, 1
      %vm6970 = vcmp.eq.s32.totalorder %v6950, 1
      %vm6971 = vcmp.eq.s32.totalorder %v6951, 1
      %vm6972 = vcmp.eq.s32.totalorder %v6952, 1
      %vm6973 = vcmp.eq.s32.totalorder %v6953, 1
      %vm6974 = vcmp.eq.s32.totalorder %v6954, 1
      %vm6975 = vcmp.eq.s32.totalorder %v6955, 1
      %vm6976 = vcmp.eq.s32.totalorder %v6956, 1
      %vm6977 = vcmp.eq.s32.totalorder %v6957, 1
      %vm6978 = vcmp.eq.s32.totalorder %v6958, 1
      %vm6979 = vcmp.eq.s32.totalorder %v6959, 1
      %vm6980 = vcmp.eq.s32.totalorder %v6960, 1
      %vm6981 = vcmp.eq.s32.totalorder %v6961, 1
      %vm6982 = vcmp.eq.s32.totalorder %v6962, 1
      %v6983 = vcombine.low %v6651, %v6659
      %v6984 = vcombine.low %v6658, %v6660
      %v6986 = vunpack.c.l.s4 1983009808
      %v6987 = vunpack.c.0.s8 %v6986
      %v6988 = vlaneseq
      %v6989 = vshrl.u32 %v6988, 7
      %v6990 = vsub.s32 %v6987, %v6989
      %v6991 = vrot.slane %v6983, %v6990
      %v6993 = vunpack.c.l.s4 1983009808
      %v6994 = vunpack.c.0.s8 %v6993
      %v6995 = vlaneseq
      %v6996 = vshrl.u32 %v6995, 7
      %v6997 = vsub.s32 %v6994, %v6996
      %v6998 = vrot.slane %v6984, %v6997
      %v6999 = vcombine.low %v6991, %v6998
      %v7001 = vunpack.c.l.s4 1983009808
      %v7002 = vunpack.c.0.s8 %v7001
      %v7003 = vlaneseq
      %v7004 = vshrl.u32 %v7003, 7
      %v7005 = vsub.s32 %v7002, %v7004
      %v7006 = vrot.slane %v6668, %v7005
      %v7007 = vcombine.low %v6676, %v6675
      %v7008 = vcombine.low %v6677, %v6685
      %v7010 = vunpack.c.l.s4 1983009808
      %v7011 = vunpack.c.0.s8 %v7010
      %v7012 = vlaneseq
      %v7013 = vshrl.u32 %v7012, 7
      %v7014 = vsub.s32 %v7011, %v7013
      %v7015 = vrot.slane %v7007, %v7014
      %v7017 = vunpack.c.l.s4 1983009808
      %v7018 = vunpack.c.0.s8 %v7017
      %v7019 = vlaneseq
      %v7020 = vshrl.u32 %v7019, 7
      %v7021 = vsub.s32 %v7018, %v7020
      %v7022 = vrot.slane %v7008, %v7021
      %v7023 = vcombine.low %v7015, %v7022
      %v7025 = vunpack.c.l.s4 1983009808
      %v7026 = vunpack.c.0.s8 %v7025
      %v7027 = vlaneseq
      %v7028 = vshrl.u32 %v7027, 7
      %v7029 = vsub.s32 %v7026, %v7028
      %v7030 = vrot.slane %v6693, %v7029
      %v7031 = vcombine.low %v6692, %v6694
      %v7032 = vcombine.low %v6702, %v6710
      %v7034 = vunpack.c.l.s4 1983009808
      %v7035 = vunpack.c.0.s8 %v7034
      %v7036 = vlaneseq
      %v7037 = vshrl.u32 %v7036, 7
      %v7038 = vsub.s32 %v7035, %v7037
      %v7039 = vrot.slane %v7031, %v7038
      %v7041 = vunpack.c.l.s4 1983009808
      %v7042 = vunpack.c.0.s8 %v7041
      %v7043 = vlaneseq
      %v7044 = vshrl.u32 %v7043, 7
      %v7045 = vsub.s32 %v7042, %v7044
      %v7046 = vrot.slane %v7032, %v7045
      %v7047 = vcombine.low %v7039, %v7046
      %v7049 = vunpack.c.l.s4 1983009808
      %v7050 = vunpack.c.0.s8 %v7049
      %v7051 = vlaneseq
      %v7052 = vshrl.u32 %v7051, 7
      %v7053 = vsub.s32 %v7050, %v7052
      %v7054 = vrot.slane %v6709, %v7053
      %v7055 = vcombine.low %v6711, %v6719
      %v7056 = vcombine.low %v6727, %v6726
      %v7058 = vunpack.c.l.s4 1983009808
      %v7059 = vunpack.c.0.s8 %v7058
      %v7060 = vlaneseq
      %v7061 = vshrl.u32 %v7060, 7
      %v7062 = vsub.s32 %v7059, %v7061
      %v7063 = vrot.slane %v7055, %v7062
      %v7065 = vunpack.c.l.s4 1983009808
      %v7066 = vunpack.c.0.s8 %v7065
      %v7067 = vlaneseq
      %v7068 = vshrl.u32 %v7067, 7
      %v7069 = vsub.s32 %v7066, %v7068
      %v7070 = vrot.slane %v7056, %v7069
      %v7071 = vcombine.low %v7063, %v7070
      %v7073 = vunpack.c.l.s4 1983009808
      %v7074 = vunpack.c.0.s8 %v7073
      %v7075 = vlaneseq
      %v7076 = vshrl.u32 %v7075, 7
      %v7077 = vsub.s32 %v7074, %v7076
      %v7078 = vrot.slane %v6728, %v7077
      %v7079 = vcombine.low %v6736, %v6744
      %v7080 = vcombine.low %v6743, %v6745
      %v7082 = vunpack.c.l.s4 1983009808
      %v7083 = vunpack.c.0.s8 %v7082
      %v7084 = vlaneseq
      %v7085 = vshrl.u32 %v7084, 7
      %v7086 = vsub.s32 %v7083, %v7085
      %v7087 = vrot.slane %v7079, %v7086
      %v7089 = vunpack.c.l.s4 1983009808
      %v7090 = vunpack.c.0.s8 %v7089
      %v7091 = vlaneseq
      %v7092 = vshrl.u32 %v7091, 7
      %v7093 = vsub.s32 %v7090, %v7092
      %v7094 = vrot.slane %v7080, %v7093
      %v7095 = vcombine.low %v7087, %v7094
      %v7097 = vunpack.c.l.s4 1983009808
      %v7098 = vunpack.c.0.s8 %v7097
      %v7099 = vlaneseq
      %v7100 = vshrl.u32 %v7099, 7
      %v7101 = vsub.s32 %v7098, %v7100
      %v7102 = vrot.slane %v6753, %v7101
      %v7103 = vcombine.low %v6761, %v6760
      %v7104 = vcombine.low %v6762, %v6770
      %v7106 = vunpack.c.l.s4 1983009808
      %v7107 = vunpack.c.0.s8 %v7106
      %v7108 = vlaneseq
      %v7109 = vshrl.u32 %v7108, 7
      %v7110 = vsub.s32 %v7107, %v7109
      %v7111 = vrot.slane %v7103, %v7110
      %v7113 = vunpack.c.l.s4 1983009808
      %v7114 = vunpack.c.0.s8 %v7113
      %v7115 = vlaneseq
      %v7116 = vshrl.u32 %v7115, 7
      %v7117 = vsub.s32 %v7114, %v7116
      %v7118 = vrot.slane %v7104, %v7117
      %v7119 = vcombine.low %v7111, %v7118
      %v7121 = vunpack.c.l.s4 1983009808
      %v7122 = vunpack.c.0.s8 %v7121
      %v7123 = vlaneseq
      %v7124 = vshrl.u32 %v7123, 7
      %v7125 = vsub.s32 %v7122, %v7124
      %v7126 = vrot.slane %v6778, %v7125
      %v7127 = vcombine.low %v6777, %v6779
      %v7128 = vcombine.low %v6787, %v6795
      %v7130 = vunpack.c.l.s4 1983009808
      %v7131 = vunpack.c.0.s8 %v7130
      %v7132 = vlaneseq
      %v7133 = vshrl.u32 %v7132, 7
      %v7134 = vsub.s32 %v7131, %v7133
      %v7135 = vrot.slane %v7127, %v7134
      %v7137 = vunpack.c.l.s4 1983009808
      %v7138 = vunpack.c.0.s8 %v7137
      %v7139 = vlaneseq
      %v7140 = vshrl.u32 %v7139, 7
      %v7141 = vsub.s32 %v7138, %v7140
      %v7142 = vrot.slane %v7128, %v7141
      %v7143 = vcombine.low %v7135, %v7142
      %v7145 = vunpack.c.l.s4 1983009808
      %v7146 = vunpack.c.0.s8 %v7145
      %v7147 = vlaneseq
      %v7148 = vshrl.u32 %v7147, 7
      %v7149 = vsub.s32 %v7146, %v7148
      %v7150 = vrot.slane %v6794, %v7149
      %v7151 = vcombine.low %v6796, %v6804
      %v7152 = vcombine.low %v6812, %v6811
      %v7154 = vunpack.c.l.s4 1983009808
      %v7155 = vunpack.c.0.s8 %v7154
      %v7156 = vlaneseq
      %v7157 = vshrl.u32 %v7156, 7
      %v7158 = vsub.s32 %v7155, %v7157
      %v7159 = vrot.slane %v7151, %v7158
      %v7161 = vunpack.c.l.s4 1983009808
      %v7162 = vunpack.c.0.s8 %v7161
      %v7163 = vlaneseq
      %v7164 = vshrl.u32 %v7163, 7
      %v7165 = vsub.s32 %v7162, %v7164
      %v7166 = vrot.slane %v7152, %v7165
      %v7167 = vcombine.low %v7159, %v7166
      %v7169 = vunpack.c.l.s4 1983009808
      %v7170 = vunpack.c.0.s8 %v7169
      %v7171 = vlaneseq
      %v7172 = vshrl.u32 %v7171, 7
      %v7173 = vsub.s32 %v7170, %v7172
      %v7174 = vrot.slane %v6813, %v7173
      %v7175 = vcombine.low %v6821, %v6829
      %v7176 = vcombine.low %v6828, %v6830
      %v7178 = vunpack.c.l.s4 1983009808
      %v7179 = vunpack.c.0.s8 %v7178
      %v7180 = vlaneseq
      %v7181 = vshrl.u32 %v7180, 7
      %v7182 = vsub.s32 %v7179, %v7181
      %v7183 = vrot.slane %v7175, %v7182
      %v7185 = vunpack.c.l.s4 1983009808
      %v7186 = vunpack.c.0.s8 %v7185
      %v7187 = vlaneseq
      %v7188 = vshrl.u32 %v7187, 7
      %v7189 = vsub.s32 %v7186, %v7188
      %v7190 = vrot.slane %v7176, %v7189
      %v7191 = vcombine.low %v7183, %v7190
      %v7193 = vunpack.c.l.s4 1983009808
      %v7194 = vunpack.c.0.s8 %v7193
      %v7195 = vlaneseq
      %v7196 = vshrl.u32 %v7195, 7
      %v7197 = vsub.s32 %v7194, %v7196
      %v7198 = vrot.slane %v6838, %v7197
      %v7199 = vcombine.low %v6846, %v6845
      %v7200 = vcombine.low %v6847, %v6854
      %v7202 = vunpack.c.l.s4 1983009808
      %v7203 = vunpack.c.0.s8 %v7202
      %v7204 = vlaneseq
      %v7205 = vshrl.u32 %v7204, 7
      %v7206 = vsub.s32 %v7203, %v7205
      %v7207 = vrot.slane %v7199, %v7206
      %v7209 = vunpack.c.l.s4 1983009808
      %v7210 = vunpack.c.0.s8 %v7209
      %v7211 = vlaneseq
      %v7212 = vshrl.u32 %v7211, 7
      %v7213 = vsub.s32 %v7210, %v7212
      %v7214 = vrot.slane %v7200, %v7213
      %v7215 = vcombine.low %v7207, %v7214
      %v7217 = vunpack.c.l.s4 1983009808
      %v7218 = vunpack.c.0.s8 %v7217
      %v7219 = vlaneseq
      %v7220 = vshrl.u32 %v7219, 7
      %v7221 = vsub.s32 %v7218, %v7220
      %v7222 = vrot.slane %v6855, %v7221
      %v7243 = vsel %vm6963, %v6999, 0.0
      %v7244 = vsel %vm6964, %v7006, 0.0
      %v7245 = vsel %vm6965, %v7023, 0.0
      %v7246 = vsel %vm6966, %v7030, 0.0
      %v7247 = vsel %vm6967, %v7047, 0.0
      %v7248 = vsel %vm6968, %v7054, 0.0
      %v7249 = vsel %vm6969, %v7071, 0.0
      %v7250 = vsel %vm6970, %v7078, 0.0
      %v7251 = vsel %vm6971, %v7095, 0.0
      %v7252 = vsel %vm6972, %v7102, 0.0
      %v7253 = vsel %vm6973, %v7119, 0.0
      %v7254 = vsel %vm6974, %v7126, 0.0
      %v7255 = vsel %vm6975, %v7143, 0.0
      %v7256 = vsel %vm6976, %v7150, 0.0
      %v7257 = vsel %vm6977, %v7167, 0.0
      %v7258 = vsel %vm6978, %v7174, 0.0
      %v7259 = vsel %vm6979, %v7191, 0.0
      %v7260 = vsel %vm6980, %v7198, 0.0
      %v7261 = vsel %vm6981, %v7215, 0.0
      %v7262 = vsel %vm6982, %v7222, 0.0
      %v7263 = vpack.c.bf16 %v7244, %v7243
      %v7264 = vpack.c.bf16 %v7246, %v7245
      %v7265 = vpack.c.bf16 %v7248, %v7247
      %v7266 = vpack.c.bf16 %v7250, %v7249
      %v7267 = vpack.c.bf16 %v7252, %v7251
      %v7268 = vpack.c.bf16 %v7254, %v7253
      %v7269 = vpack.c.bf16 %v7256, %v7255
      %v7270 = vpack.c.bf16 %v7258, %v7257
      %v7271 = vpack.c.bf16 %v7260, %v7259
      %v7272 = vpack.c.bf16 %v7262, %v7261
      %v7283 = vunpack.c.l.b16 %v7263
      %v7284 = vunpack.c.h.b16 %v7263
      %v7285 = vunpack.c.l.b16 %v7264
      %v7286 = vunpack.c.h.b16 %v7264
      %v7287 = vunpack.c.l.b16 %v7265
      %v7288 = vunpack.c.h.b16 %v7265
      %v7289 = vunpack.c.l.b16 %v7266
      %v7290 = vunpack.c.h.b16 %v7266
      %v7291 = vunpack.c.l.b16 %v7267
      %v7292 = vunpack.c.h.b16 %v7267
      %v7293 = vunpack.c.l.b16 %v7268
      %v7294 = vunpack.c.h.b16 %v7268
      %v7295 = vunpack.c.l.b16 %v7269
      %v7296 = vunpack.c.h.b16 %v7269
      %v7297 = vunpack.c.l.b16 %v7270
      %v7298 = vunpack.c.h.b16 %v7270
      %v7299 = vunpack.c.l.b16 %v7271
      %v7300 = vunpack.c.h.b16 %v7271
      %v7301 = vunpack.c.l.b16 %v7272
      %v7302 = vunpack.c.h.b16 %v7272
      %v7303 = vpack.c.b16 %v7283, %v7283
      %v7304 = vpack.c.b16 %v7284, %v7284
      %v7305 = vpack.c.b16 %v7285, %v7285
      %v7306 = vpack.c.b16 %v7286, %v7286
      %v7307 = vpack.c.b16 %v7287, %v7287
      %v7308 = vpack.c.b16 %v7288, %v7288
      %v7309 = vpack.c.b16 %v7289, %v7289
      %v7310 = vpack.c.b16 %v7290, %v7290
      %v7311 = vpack.c.b16 %v7291, %v7291
      %v7312 = vpack.c.b16 %v7292, %v7292
      %v7313 = vpack.c.b16 %v7293, %v7293
      %v7314 = vpack.c.b16 %v7294, %v7294
      %v7315 = vpack.c.b16 %v7295, %v7295
      %v7316 = vpack.c.b16 %v7296, %v7296
      %v7317 = vpack.c.b16 %v7297, %v7297
      %v7318 = vpack.c.b16 %v7298, %v7298
      %v7319 = vpack.c.b16 %v7299, %v7299
      %v7320 = vpack.c.b16 %v7300, %v7300
      %v7321 = vpack.c.b16 %v7301, %v7301
      %v7322 = vpack.c.b16 %v7302, %v7302
      %7343 = vst [vmem:[%s240] sm:$0xf] %v7303
      %7344 = vst [vmem:[%s240 + $0x4] sm:$0x1] %v7304
      %7345 = vst [vmem:[%s240 + $0x8] sm:$0xf] %v7305
      %7346 = vst [vmem:[%s240 + $0xc] sm:$0x1] %v7306
      %7347 = vst [vmem:[%s240 + $0x10] sm:$0xf] %v7307
      %7348 = vst [vmem:[%s240 + $0x14] sm:$0x1] %v7308
      %7349 = vst [vmem:[%s240 + $0x18] sm:$0xf] %v7309
      %7350 = vst [vmem:[%s240 + $0x1c] sm:$0x1] %v7310
      %7351 = vst [vmem:[%s240 + $0x20] sm:$0xf] %v7311
      %7352 = vst [vmem:[%s240 + $0x24] sm:$0x1] %v7312
      %7353 = vst [vmem:[%s240 + $0x28] sm:$0xf] %v7313
      %7354 = vst [vmem:[%s240 + $0x2c] sm:$0x1] %v7314
      %7355 = vst [vmem:[%s240 + $0x30] sm:$0xf] %v7315
      %7356 = vst [vmem:[%s240 + $0x34] sm:$0x1] %v7316
      %7357 = vst [vmem:[%s240 + $0x38] sm:$0xf] %v7317
      %7358 = vst [vmem:[%s240 + $0x3c] sm:$0x1] %v7318
      %7359 = vst [vmem:[%s240 + $0x40] sm:$0xf] %v7319
      %7360 = vst [vmem:[%s240 + $0x44] sm:$0x1] %v7320
      %7361 = vst [vmem:[%s240 + $0x48] sm:$0xf] %v7321
      %7362 = vst [vmem:[%s240 + $0x4c] sm:$0x1] %v7322
      %s7363 = smul.u32 10, %s21
      %p7364 = scmp.lt.s32.totalorder %s19, 1
      %s7365 = scalar_select %p7364, %s19, 1
      %p7366 = scmp.lt.s32.totalorder %s7363, 9
      %s7367 = scalar_select %p7366, %s7363, 9
      %p7368 = scmp.lt.s32.totalorder %s20, 0
      %s7369 = scalar_select %p7368, %s20, 0
      %s7370 = smul.addr %s7367, 2
      %s7371 = sadd.s32 %s7369, %s7370
      %s7372 = smul.addr %s7365, 20
      %s7373 = sadd.s32 %s7371, %s7372
      %s7374 = smul.addr %s7373, 4
      %s7375 = scalar_lea.vmem %s3, %s7374
      // Predicated region
      $region33: #{basic_block_forward.2} parent=31 // pred_check
        %p7376 = pneg %p133
      $region34: #{basic_block_forward.2} parent=31 // pred_check_branch
        %7378 = sbr.rel (%p7376) target = $region36
      $region35: #{basic_block_forward.2} parent=31 // pred_region
        %s7379 = smul.u32 10, %s21
      $region36: #{basic_block_forward.2} parent=31 // pred_fallthru
        _
    $region32: #{basic_block_forward.2} parent=5 // pred_fallthru
      _
    %p7380 = scmp.le.s32.totalorder 2, %s9
    // Predicated region
    $region37: #{basic_block_forward.2} parent=5 // pred_check
      %p7381 = pneg %p7380
    $region38: #{basic_block_forward.2} parent=5 // pred_check_branch
      %7383 = sbr.rel (%p7381) target = $region40
    $region39: #{basic_block_forward.2} parent=5 // pred_region
      %s7384 = ssub.s32 %s9, 2
      // Predicated region
      $region41: #{basic_block_forward.2} parent=39 // pred_check
        %p7385 = pneg %p139
      $region42: #{basic_block_forward.2} parent=39 // pred_check_branch
        %7387 = sbr.rel (%p7385) target = $region44
      $region43: #{basic_block_forward.2} parent=39 // pred_region
        %s7388 = smul.u32 10, %s24
        %p7389 = scmp.lt.s32.totalorder %s22, 1
        %s7390 = scalar_select %p7389, %s22, 1
        %p7391 = scmp.lt.s32.totalorder %s7388, 9
        %s7392 = scalar_select %p7391, %s7388, 9
        %p7393 = scmp.lt.s32.totalorder %s23, 0
        %s7394 = scalar_select %p7393, %s23, 0
        %s7395 = smul.addr %s7392, 2
        %s7396 = sadd.s32 %s7394, %s7395
        %s7397 = smul.addr %s7390, 20
        %s7398 = sadd.s32 %s7396, %s7397
        %s7399 = smul.addr %s7398, 4
        %s7400 = scalar_lea.vmem %s3, %s7399
      $region44: #{basic_block_forward.2} parent=39 // pred_fallthru
        _
    $region40: #{basic_block_forward.2} parent=5 // pred_fallthru
      _
  $region6: #{basic_block_forward.2} parent=0 // loop_footer
    %s13 = sadd.s32 1, %s9
  $region7: #{basic_block_forward.2} parent=0 // loop_footer_branch
    %8 = sbr.rel target = $region3
  $region8: #{basic_block_forward.2} parent=0 // loop_exit
    _

</llo_original>
